<compile_context>
chip_gen: v7x
topology: tpu7x:2x2x1
jax: 0.10.0
libtpu: 0.0.40
codegen_flags: <defaults>
</compile_context>

<pallas_src>
import functools
import math

import jax
import jax.numpy as jnp
from jax.experimental import pallas as pl
from jax.experimental.pallas import tpu as pltpu

_LN_EPS = 1e-12          # TF-style LayerNorm epsilon (inside the sqrt).
_FLASH_KV_TILE = 256     # KV block size for the online-softmax path.


# ----------------------------- in-kernel helpers -----------------------------

def _layernorm(x, gamma, beta, eps=_LN_EPS):
    # Single-pass statistics: sum(x) and sum(x*x) are independent XLU
    # reductions (var = E[x^2] - E[x]^2), rsqrt goes to the EUP slot.
    n = x.shape[-1]
    inv_n = 1.0 / n
    s1 = jnp.sum(x, axis=-1, keepdims=True)
    s2 = jnp.sum(x * x, axis=-1, keepdims=True)
    u = s1 * inv_n
    var = jnp.maximum(s2 * inv_n - u * u, 0.0)
    return gamma * ((x - u) * jax.lax.rsqrt(var + eps)) + beta


def _gelu(x):
    # tanh-form GELU (EUP tanh) approximating HF's erf-based gelu
    # (max abs deviation ~3e-3, well inside the test tolerance).
    # TODO(synk): swap to an exact-erf lowering if bit-parity with torch.erf
    # is required.
    c = math.sqrt(2.0 / math.pi)
    return 0.5 * x * (1.0 + jnp.tanh(c * (x + 0.044715 * (x * x * x))))


def _softmax(x):
    m = jnp.max(x, axis=-1, keepdims=True)
    e = jnp.exp(x - m)
    # approx reciprocal -> EUP slot; rows sum to 1 +/- ~1e-3 (inside tolerance).
    return e * pl.reciprocal(jnp.sum(e, axis=-1, keepdims=True), approx=True)


def _dot(a, b):
    return jnp.dot(a, b, preferred_element_type=jnp.float32)


def _attention(q, k, v):
    """q, k, v: (S, H, W) bf16; q is pre-scaled by 1/sqrt(W). Returns (S, H*W) f32."""
    S, H, W = q.shape
    # TODO(synk): audit the lowering (pl.lower_as_mlir) for vxpose/relayouts
    # from the head reshape / K transpose; pre-permute wqkv columns per head on
    # the host if the XLU slot saturates.
    if S <= _FLASH_KV_TILE or S % _FLASH_KV_TILE != 0:
        # Small-S path: full (H, S, S) scores fit comfortably in VMEM.
        scores = jnp.einsum('shw,thw->hst', q, k,
                            preferred_element_type=jnp.float32)
        probs = _softmax(scores)                           # (H, S, S) f32
        att = jnp.einsum('hst,thw->shw', probs.astype(v.dtype), v,
                         preferred_element_type=jnp.float32)
        return att.reshape(S, H * W)

    # Large-S path: flash-style online softmax over KV tiles.  Bounds the
    # scores intermediate to (H, S, kv_tile) and keeps the bf16 cast per-tile.
    kv_t = _FLASH_KV_TILE

    def body(i, carry):
        m, l, acc = carry
        t0 = pl.multiple_of(i * kv_t, kv_t)
        kb = jax.lax.dynamic_slice_in_dim(k, t0, kv_t, axis=0)
        vb = jax.lax.dynamic_slice_in_dim(v, t0, kv_t, axis=0)
        s = jnp.einsum('shw,thw->hst', q, kb,
                       preferred_element_type=jnp.float32)     # (H, S, kv_t)
        m_new = jnp.maximum(m, s.max(-1, keepdims=True))
        alpha = jnp.exp(m - m_new)
        p = jnp.exp(s - m_new)
        l_new = alpha * l + p.sum(-1, keepdims=True)
        acc_new = alpha * acc + jnp.einsum('hst,thw->hsw', p.astype(v.dtype), vb,
                                           preferred_element_type=jnp.float32)
        return m_new, l_new, acc_new

    m0 = jnp.full((H, S, 1), -jnp.inf, jnp.float32)
    l0 = jnp.zeros((H, S, 1), jnp.float32)
    a0 = jnp.zeros((H, S, W), jnp.float32)
    m, l, acc = jax.lax.fori_loop(0, S // kv_t, body, (m0, l0, a0))
    att = acc * pl.reciprocal(l, approx=True)                  # (H, S, W)
    return jnp.transpose(att, (1, 0, 2)).reshape(S, H * W)


# --------------------------------- kernel ------------------------------------

def _transformer_kernel(n_heads,
                        x_ref,
                        wl_ref, bl_ref, ge_ref, bee_ref, pos_ref,
                        wqkv_ref, bqkv_ref,
                        wp_ref, bp_ref, g1_ref, be1_ref,
                        w1_ref, b1_ref, w2_ref, b2_ref,
                        g2_ref, be2_ref,
                        out_ref,
                        act_ref):
    layer = pl.program_id(1)
    n_layers = pl.num_programs(1)
    bf16 = jnp.bfloat16

    # ---- embedding: only on the first layer step; the result becomes the
    # VMEM-scratch-resident activation carried across the layer axis. ----
    @pl.when(layer == 0)
    def _embed():
        x = x_ref[0].astype(bf16)                              # (S, F)
        e = _dot(x, wl_ref[...]) + bl_ref[...]
        e = _layernorm(e, ge_ref[...], bee_ref[...])
        e = e + pos_ref[...]                                   # pos rows 0..S-1
        act_ref[...] = _layernorm(e, ge_ref[...], bee_ref[...])

    # ---- one transformer block (same shared weights every layer) ------------
    h = act_ref[...]                                           # (S, D) f32
    S, D = h.shape
    H = n_heads
    W = D // H

    # fused Q/K/V projection: one MXU pass with N = 3D.
    # The 1/sqrt(W) attention scale is already folded into the Q columns.
    hb = h.astype(bf16)
    qkv = _dot(hb, wqkv_ref[...]) + bqkv_ref[...]              # (S, 3D) f32
    q = qkv[:, :D].reshape(S, H, W).astype(bf16)
    k = qkv[:, D:2 * D].reshape(S, H, W).astype(bf16)
    v = qkv[:, 2 * D:].reshape(S, H, W).astype(bf16)

    att = _attention(q, k, v)                                  # (S, D) f32

    # h = norm1(h + proj(h)) where h is the attention output
    proj = _dot(att.astype(bf16), wp_ref[...]) + bp_ref[...]
    x1 = _layernorm(att + proj, g1_ref[...], be1_ref[...])

    # h = norm2(h + pwff(h))
    # TODO(synk): tile the FFN over S row-blocks for large S so the (S, D_ff)
    # intermediate stays O(tile) instead of O(S).
    ff1 = _gelu(_dot(x1.astype(bf16), w1_ref[...]) + b1_ref[...])
    ff = _dot(ff1.astype(bf16), w2_ref[...]) + b2_ref[...]
    x2 = _layernorm(x1 + ff, g2_ref[...], be2_ref[...])

    act_ref[...] = x2                                          # layer carry

    @pl.when(layer == n_layers - 1)
    def _write_out():
        out_ref[0] = x2.astype(out_ref.dtype)


# --------------------------------- wrapper -----------------------------------

def _const_spec(arr, single_buffer):
    nd = arr.ndim
    idx = lambda b, l, _n=nd: (0,) * _n
    if single_buffer:
        # Constant index_map across the whole grid: double buffering buys zero
        # overlap and just doubles the VMEM footprint.
        return pl.BlockSpec(arr.shape, idx, pipeline_mode=pl.Buffered(1))
    return pl.BlockSpec(arr.shape, idx)


def _x_spec(S, F, single_buffer):
    idx = lambda b, l: (b, 0, 0)
    if single_buffer:
        return pl.BlockSpec((1, S, F), idx, pipeline_mode=pl.Buffered(1))
    return pl.BlockSpec((1, S, F), idx)


def _estimate_vmem_bytes(S, F, D, D_ff, H, weights):
    f32, bf16 = 4, 2
    w_bytes = sum(int(w.size) * w.dtype.itemsize for w in weights)  # single-buffered
    x_blk = S * F * f32
    out_blk = 2 * S * D * f32                       # double-buffered output block
    carry = S * D * f32                             # activation scratch
    scores = min(S, _FLASH_KV_TILE) * S * H * f32 * 2
    inter = (3 * S * D + 4 * S * D + S * D_ff) * f32 + 4 * S * D * bf16
    return w_bytes + x_blk + out_blk + carry + scores + inter


def _pick_vmem_limit(needed_bytes):
    cap = 100 * 1024 * 1024                         # v5e/v6e: 128 MiB physical
    try:
        # v7x has only 64 MiB VMEM per core; never request more than ~80% of it.
        cap = min(cap, int(pltpu.get_tpu_info().vmem_capacity_bytes * 0.8))
    except Exception:
        pass
    return int(min(max(int(needed_bytes * 1.5), 32 * 1024 * 1024), cap))


def transformer_forward(x, params, n_layers, n_heads):
    B, S, F = x.shape
    D = params["w_lin"].shape[1]
    D_ff = params["w1"].shape[1]
    H = n_heads
    W = D // H
    bf16 = jnp.bfloat16

    # Host-side, one-time weight prep: fuse Q|K|V, fold the attention scale
    # into the Q columns (weights *and* bias), cast matmul weights to bf16.
    scale = 1.0 / math.sqrt(W)
    wqkv = jnp.concatenate(
        [params["wq"] * scale, params["wk"], params["wv"]], axis=1).astype(bf16)
    bqkv = jnp.concatenate(
        [params["bq"] * scale, params["bk"], params["bv"]], axis=1)

    weights = [
        params["w_lin"].astype(bf16), params["b_lin"],
        params["gamma_e"], params["beta_e"], params["pos"][:S],
        wqkv, bqkv,
        params["wp"].astype(bf16), params["bp"],
        params["gamma1"], params["beta1"],
        params["w1"].astype(bf16), params["b1"],
        params["w2"].astype(bf16), params["b2"],
        params["gamma2"], params["beta2"],
    ]

    flops = (2 * B * S * F * D
             + 2 * B * n_layers * S * (3 * D * D + 2 * S * D + D * D + 2 * D * D_ff))
    transc = B * n_layers * (H * S * S + S * D_ff)
    bytes_acc = (int(x.size) * 4
                 + sum(int(w.size) * w.dtype.itemsize for w in weights)
                 + B * S * D * 4)
    cost = pl.CostEstimate(flops=int(flops), transcendentals=int(transc),
                           bytes_accessed=int(bytes_acc))

    vmem_limit = _pick_vmem_limit(_estimate_vmem_bytes(S, F, D, D_ff, H, weights))

    def build(single_buffer):
        in_specs = ([_x_spec(S, F, single_buffer)]
                    + [_const_spec(w, single_buffer) for w in weights])
        return pl.pallas_call(
            functools.partial(_transformer_kernel, n_heads),
            out_shape=jax.ShapeDtypeStruct((B, S, D), jnp.float32),
            grid=(B, n_layers),
            in_specs=in_specs,
            # output block written only on the last layer step of each b.
            out_specs=pl.BlockSpec((1, S, D), lambda b, l: (b, 0, 0)),
            scratch_shapes=[pltpu.VMEM((S, D), jnp.float32)],   # layer carry
            compiler_params=pltpu.CompilerParams(
                dimension_semantics=("parallel", "arbitrary"),
                vmem_limit_bytes=vmem_limit),
            cost_estimate=cost,
        )

    try:
        return build(single_buffer=True)(x, *weights)
    except Exception:
        # Fallback for jax versions without BlockSpec.pipeline_mode / Buffered(1).
        return build(single_buffer=False)(x, *weights)


# ----------------------------- parameter init --------------------------------

def init_params(key, feature_num, seq_len, hidden, hidden_ff):
    ks = jax.random.split(key, 16)

    def lin_w(k, fan_in, fan_out):  # stored pre-transposed: (in, out)
        return (jax.random.normal(k, (fan_in, fan_out), jnp.float32)
                / math.sqrt(fan_in))

    def lin_b(k, fan_out):
        return 0.01 * jax.random.normal(k, (1, fan_out), jnp.float32)

    p = {}
    p["w_lin"] = lin_w(ks[0], feature_num, hidden)
    p["b_lin"] = lin_b(ks[1], hidden)
    p["pos"] = 0.02 * jax.random.normal(ks[2], (seq_len, hidden), jnp.float32)
    p["gamma_e"] = jnp.ones((1, hidden), jnp.float32)
    p["beta_e"] = jnp.zeros((1, hidden), jnp.float32)
    p["wq"] = lin_w(ks[3], hidden, hidden); p["bq"] = lin_b(ks[4], hidden)
    p["wk"] = lin_w(ks[5], hidden, hidden); p["bk"] = lin_b(ks[6], hidden)
    p["wv"] = lin_w(ks[7], hidden, hidden); p["bv"] = lin_b(ks[8], hidden)
    p["wp"] = lin_w(ks[9], hidden, hidden); p["bp"] = lin_b(ks[10], hidden)
    p["gamma1"] = jnp.ones((1, hidden), jnp.float32)
    p["beta1"] = jnp.zeros((1, hidden), jnp.float32)
    p["w1"] = lin_w(ks[11], hidden, hidden_ff); p["b1"] = lin_b(ks[12], hidden_ff)
    p["w2"] = lin_w(ks[13], hidden_ff, hidden); p["b2"] = lin_b(ks[14], hidden)
    p["gamma2"] = jnp.ones((1, hidden), jnp.float32)
    p["beta2"] = jnp.zeros((1, hidden), jnp.float32)
    return p


# ------------------------------ pure-JAX reference ----------------------------

def reference_forward(x, params, n_layers, n_heads):
    from jax.scipy.special import erf

    def ln(z, g, b):
        u = z.mean(-1, keepdims=True)
        s = ((z - u) ** 2).mean(-1, keepdims=True)
        return g * ((z - u) / jnp.sqrt(s + _LN_EPS)) + b

    B, S, _ = x.shape
    e = x @ params["w_lin"] + params["b_lin"]
    e = ln(e, params["gamma_e"], params["beta_e"])
    e = e + params["pos"][:S][None]
    h = ln(e, params["gamma_e"], params["beta_e"])
    D = h.shape[-1]
    W = D // n_heads

    def split(t):
        return t.reshape(B, S, n_heads, W).transpose(0, 2, 1, 3)

    for _ in range(n_layers):
        q = h @ params["wq"] + params["bq"]
        k = h @ params["wk"] + params["bk"]
        v = h @ params["wv"] + params["bv"]
        qh, kh, vh = split(q), split(k), split(v)
        scores = jnp.einsum('bhsw,bhtw->bhst', qh, kh) / math.sqrt(W)
        probs = jax.nn.softmax(scores, axis=-1)
        a = jnp.einsum('bhst,bhtw->bhsw', probs, vh)
        a = a.transpose(0, 2, 1, 3).reshape(B, S, D)
        h1 = ln(a + (a @ params["wp"] + params["bp"]),
                params["gamma1"], params["beta1"])
        fc1 = h1 @ params["w1"] + params["b1"]
        g = fc1 * 0.5 * (1.0 + erf(fc1 / math.sqrt(2.0)))
        ff = g @ params["w2"] + params["b2"]
        h = ln(h1 + ff, params["gamma2"], params["beta2"])
    return h


# ----------------------------------- main -------------------------------------

if __name__ == "__main__":
    B, SEQ, FEAT, HID, HID_FF, N_LAYERS, N_HEADS = 2, 8, 16, 32, 64, 2, 4

    root = jax.random.PRNGKey(0)
    kx, kp = jax.random.split(root)
    x = jax.random.normal(kx, (B, SEQ, FEAT), dtype=jnp.float32)
    params = init_params(kp, FEAT, SEQ, HID, HID_FF)

    out = transformer_forward(x, params, N_LAYERS, N_HEADS)
    out = jax.block_until_ready(out)

    ref = reference_forward(x, params, N_LAYERS, N_HEADS)
    assert out.shape == (B, SEQ, HID)
    err = float(jnp.max(jnp.abs(out - ref)))
    assert err < 5e-2, f"mismatch vs pure-JAX reference (max abs err {err})"

    print("KERNEL_OK")
</pallas_src>

<mosaic_0001>
module attributes {stable_mosaic.version = 11 : i64} {
  func.func @_transformer_kernel(%arg0: i32, %arg1: i32, %arg2: memref<1x8x16xf32, #tpu.memory_space<vmem>>, %arg3: memref<16x32xbf16, #tpu.memory_space<vmem>>, %arg4: memref<1x32xf32, #tpu.memory_space<vmem>>, %arg5: memref<1x32xf32, #tpu.memory_space<vmem>>, %arg6: memref<1x32xf32, #tpu.memory_space<vmem>>, %arg7: memref<8x32xf32, #tpu.memory_space<vmem>>, %arg8: memref<32x96xbf16, #tpu.memory_space<vmem>>, %arg9: memref<1x96xf32, #tpu.memory_space<vmem>>, %arg10: memref<32x32xbf16, #tpu.memory_space<vmem>>, %arg11: memref<1x32xf32, #tpu.memory_space<vmem>>, %arg12: memref<1x32xf32, #tpu.memory_space<vmem>>, %arg13: memref<1x32xf32, #tpu.memory_space<vmem>>, %arg14: memref<32x64xbf16, #tpu.memory_space<vmem>>, %arg15: memref<1x64xf32, #tpu.memory_space<vmem>>, %arg16: memref<64x32xbf16, #tpu.memory_space<vmem>>, %arg17: memref<1x32xf32, #tpu.memory_space<vmem>>, %arg18: memref<1x32xf32, #tpu.memory_space<vmem>>, %arg19: memref<1x32xf32, #tpu.memory_space<vmem>>, %arg20: memref<1x8x32xf32, #tpu.memory_space<vmem>>, %arg21: memref<8x32xf32, #tpu.memory_space<vmem>>) attributes {dimension_semantics = [#tpu.dimension_semantics<parallel>, #tpu.dimension_semantics<arbitrary>], iteration_bounds = array<i64: 2, 2>, scalar_prefetch = 0 : i64, scratch_operands = 1 : i64, tpu.core_type = #tpu.core_type<tc>, window_params = [{pipeline_mode = #tpu.pipeline_mode<synchronous>, transform_indices = @transform_0, window_bounds = array<i64: 1, 8, 16>}, {pipeline_mode = #tpu.pipeline_mode<synchronous>, transform_indices = @transform_1, window_bounds = array<i64: 16, 32>}, {pipeline_mode = #tpu.pipeline_mode<synchronous>, transform_indices = @transform_2, window_bounds = array<i64: 1, 32>}, {pipeline_mode = #tpu.pipeline_mode<synchronous>, transform_indices = @transform_3, window_bounds = array<i64: 1, 32>}, {pipeline_mode = #tpu.pipeline_mode<synchronous>, transform_indices = @transform_4, window_bounds = array<i64: 1, 32>}, {pipeline_mode = #tpu.pipeline_mode<synchronous>, transform_indices = @transform_5, window_bounds = array<i64: 8, 32>}, {pipeline_mode = #tpu.pipeline_mode<synchronous>, transform_indices = @transform_6, window_bounds = array<i64: 32, 96>}, {pipeline_mode = #tpu.pipeline_mode<synchronous>, transform_indices = @transform_7, window_bounds = array<i64: 1, 96>}, {pipeline_mode = #tpu.pipeline_mode<synchronous>, transform_indices = @transform_8, window_bounds = array<i64: 32, 32>}, {pipeline_mode = #tpu.pipeline_mode<synchronous>, transform_indices = @transform_9, window_bounds = array<i64: 1, 32>}, {pipeline_mode = #tpu.pipeline_mode<synchronous>, transform_indices = @transform_10, window_bounds = array<i64: 1, 32>}, {pipeline_mode = #tpu.pipeline_mode<synchronous>, transform_indices = @transform_11, window_bounds = array<i64: 1, 32>}, {pipeline_mode = #tpu.pipeline_mode<synchronous>, transform_indices = @transform_12, window_bounds = array<i64: 32, 64>}, {pipeline_mode = #tpu.pipeline_mode<synchronous>, transform_indices = @transform_13, window_bounds = array<i64: 1, 64>}, {pipeline_mode = #tpu.pipeline_mode<synchronous>, transform_indices = @transform_14, window_bounds = array<i64: 64, 32>}, {pipeline_mode = #tpu.pipeline_mode<synchronous>, transform_indices = @transform_15, window_bounds = array<i64: 1, 32>}, {pipeline_mode = #tpu.pipeline_mode<synchronous>, transform_indices = @transform_16, window_bounds = array<i64: 1, 32>}, {pipeline_mode = #tpu.pipeline_mode<synchronous>, transform_indices = @transform_17, window_bounds = array<i64: 1, 32>}, {transform_indices = @transform_18, window_bounds = array<i64: 1, 8, 32>}]} {
    %c0_i32 = arith.constant 0 : i32
    %0 = arith.cmpi eq, %arg1, %c0_i32 : i32
    %1 = arith.extui %0 : i1 to i32
    %c0_i32_0 = arith.constant 0 : i32
    %2 = arith.cmpi ne, %1, %c0_i32_0 : i32
    scf.if %2 {
      %c0_52 = arith.constant 0 : index
      %c0_53 = arith.constant 0 : index
      %c0_54 = arith.constant 0 : index
      %123 = vector.load %arg2[%c0_52, %c0_53, %c0_54] : memref<1x8x16xf32, #tpu.memory_space<vmem>>, vector<1x8x16xf32>
      %124 = vector.shape_cast %123 : vector<1x8x16xf32> to vector<8x16xf32>
      %125 = arith.truncf %124 : vector<8x16xf32> to vector<8x16xbf16>
      %c0_55 = arith.constant 0 : index
      %c0_56 = arith.constant 0 : index
      %126 = vector.load %arg3[%c0_55, %c0_56] : memref<16x32xbf16, #tpu.memory_space<vmem>>, vector<16x32xbf16>
      %cst_57 = arith.constant dense<0.000000e+00> : vector<8x32xf32>
      %127 = tpu.matmul %125, %126, %cst_57 {dimension_numbers = #tpu.dot_dimension_numbers<[1], [0], [0], [1], [0, 0, 1, 1], [], []>} : vector<8x16xbf16>, vector<16x32xbf16>, vector<8x32xf32> -> vector<8x32xf32>
      %c0_58 = arith.constant 0 : index
      %c0_59 = arith.constant 0 : index
      %128 = vector.load %arg4[%c0_58, %c0_59] : memref<1x32xf32, #tpu.memory_space<vmem>>, vector<1x32xf32>
      %129 = vector.broadcast %128 : vector<1x32xf32> to vector<8x32xf32>
      %130 = arith.addf %127, %129 : vector<8x32xf32>
      %c0_60 = arith.constant 0 : index
      %c0_61 = arith.constant 0 : index
      %131 = vector.load %arg5[%c0_60, %c0_61] : memref<1x32xf32, #tpu.memory_space<vmem>>, vector<1x32xf32>
      %c0_62 = arith.constant 0 : index
      %c0_63 = arith.constant 0 : index
      %132 = vector.load %arg6[%c0_62, %c0_63] : memref<1x32xf32, #tpu.memory_space<vmem>>, vector<1x32xf32>
      %cst_64 = arith.constant dense<0.000000e+00> : vector<8xf32>
      %133 = vector.multi_reduction <add>, %130, %cst_64 [1] : vector<8x32xf32> to vector<8xf32>
      %134 = vector.shape_cast %133 : vector<8xf32> to vector<8x1xf32>
      %135 = arith.mulf %130, %130 : vector<8x32xf32>
      %cst_65 = arith.constant dense<0.000000e+00> : vector<8xf32>
      %136 = vector.multi_reduction <add>, %135, %cst_65 [1] : vector<8x32xf32> to vector<8xf32>
      %137 = vector.shape_cast %136 : vector<8xf32> to vector<8x1xf32>
      %cst_66 = arith.constant 3.125000e-02 : f32
      %138 = vector.broadcast %cst_66 : f32 to vector<8x1xf32>
      %139 = arith.mulf %134, %138 : vector<8x1xf32>
      %cst_67 = arith.constant 3.125000e-02 : f32
      %140 = vector.broadcast %cst_67 : f32 to vector<8x1xf32>
      %141 = arith.mulf %137, %140 : vector<8x1xf32>
      %142 = arith.mulf %139, %139 : vector<8x1xf32>
      %143 = arith.subf %141, %142 : vector<8x1xf32>
      %cst_68 = arith.constant 0.000000e+00 : f32
      %144 = vector.broadcast %cst_68 : f32 to vector<8x1xf32>
      %145 = arith.maximumf %143, %144 : vector<8x1xf32>
      %146 = vector.broadcast %139 : vector<8x1xf32> to vector<8x32xf32>
      %147 = arith.subf %130, %146 : vector<8x32xf32>
      %cst_69 = arith.constant 9.99999996E-13 : f32
      %148 = vector.broadcast %cst_69 : f32 to vector<8x1xf32>
      %149 = arith.addf %145, %148 : vector<8x1xf32>
      %150 = math.rsqrt %149 : vector<8x1xf32>
      %151 = vector.broadcast %150 : vector<8x1xf32> to vector<8x32xf32>
      %152 = arith.mulf %147, %151 : vector<8x32xf32>
      %153 = vector.broadcast %131 : vector<1x32xf32> to vector<8x32xf32>
      %154 = arith.mulf %153, %152 : vector<8x32xf32>
      %155 = vector.broadcast %132 : vector<1x32xf32> to vector<8x32xf32>
      %156 = arith.addf %154, %155 : vector<8x32xf32>
      %c0_70 = arith.constant 0 : index
      %c0_71 = arith.constant 0 : index
      %157 = vector.load %arg7[%c0_70, %c0_71] : memref<8x32xf32, #tpu.memory_space<vmem>>, vector<8x32xf32>
      %158 = arith.addf %156, %157 : vector<8x32xf32>
      %c0_72 = arith.constant 0 : index
      %c0_73 = arith.constant 0 : index
      %159 = vector.load %arg5[%c0_72, %c0_73] : memref<1x32xf32, #tpu.memory_space<vmem>>, vector<1x32xf32>
      %c0_74 = arith.constant 0 : index
      %c0_75 = arith.constant 0 : index
      %160 = vector.load %arg6[%c0_74, %c0_75] : memref<1x32xf32, #tpu.memory_space<vmem>>, vector<1x32xf32>
      %cst_76 = arith.constant dense<0.000000e+00> : vector<8xf32>
      %161 = vector.multi_reduction <add>, %158, %cst_76 [1] : vector<8x32xf32> to vector<8xf32>
      %162 = vector.shape_cast %161 : vector<8xf32> to vector<8x1xf32>
      %163 = arith.mulf %158, %158 : vector<8x32xf32>
      %cst_77 = arith.constant dense<0.000000e+00> : vector<8xf32>
      %164 = vector.multi_reduction <add>, %163, %cst_77 [1] : vector<8x32xf32> to vector<8xf32>
      %165 = vector.shape_cast %164 : vector<8xf32> to vector<8x1xf32>
      %cst_78 = arith.constant 3.125000e-02 : f32
      %166 = vector.broadcast %cst_78 : f32 to vector<8x1xf32>
      %167 = arith.mulf %162, %166 : vector<8x1xf32>
      %cst_79 = arith.constant 3.125000e-02 : f32
      %168 = vector.broadcast %cst_79 : f32 to vector<8x1xf32>
      %169 = arith.mulf %165, %168 : vector<8x1xf32>
      %170 = arith.mulf %167, %167 : vector<8x1xf32>
      %171 = arith.subf %169, %170 : vector<8x1xf32>
      %cst_80 = arith.constant 0.000000e+00 : f32
      %172 = vector.broadcast %cst_80 : f32 to vector<8x1xf32>
      %173 = arith.maximumf %171, %172 : vector<8x1xf32>
      %174 = vector.broadcast %167 : vector<8x1xf32> to vector<8x32xf32>
      %175 = arith.subf %158, %174 : vector<8x32xf32>
      %cst_81 = arith.constant 9.99999996E-13 : f32
      %176 = vector.broadcast %cst_81 : f32 to vector<8x1xf32>
      %177 = arith.addf %173, %176 : vector<8x1xf32>
      %178 = math.rsqrt %177 : vector<8x1xf32>
      %179 = vector.broadcast %178 : vector<8x1xf32> to vector<8x32xf32>
      %180 = arith.mulf %175, %179 : vector<8x32xf32>
      %181 = vector.broadcast %159 : vector<1x32xf32> to vector<8x32xf32>
      %182 = arith.mulf %181, %180 : vector<8x32xf32>
      %183 = vector.broadcast %160 : vector<1x32xf32> to vector<8x32xf32>
      %184 = arith.addf %182, %183 : vector<8x32xf32>
      %c0_82 = arith.constant 0 : index
      %c0_83 = arith.constant 0 : index
      %185 = vector.load %arg21[%c0_82, %c0_83] : memref<8x32xf32, #tpu.memory_space<vmem>>, vector<8x32xf32>
      tpu.vector_store %arg21[%c0_82, %c0_83], %184 {strides = array<i32>} : memref<8x32xf32, #tpu.memory_space<vmem>>, vector<8x32xf32>,
    } else {
    }
    %c0 = arith.constant 0 : index
    %c0_1 = arith.constant 0 : index
    %3 = vector.load %arg21[%c0, %c0_1] : memref<8x32xf32, #tpu.memory_space<vmem>>, vector<8x32xf32>
    %4 = arith.truncf %3 : vector<8x32xf32> to vector<8x32xbf16>
    %c0_2 = arith.constant 0 : index
    %c0_3 = arith.constant 0 : index
    %5 = vector.load %arg8[%c0_2, %c0_3] : memref<32x96xbf16, #tpu.memory_space<vmem>>, vector<32x96xbf16>
    %cst = arith.constant dense<0.000000e+00> : vector<8x96xf32>
    %6 = tpu.matmul %4, %5, %cst {dimension_numbers = #tpu.dot_dimension_numbers<[1], [0], [0], [1], [0, 0, 1, 1], [], []>} : vector<8x32xbf16>, vector<32x96xbf16>, vector<8x96xf32> -> vector<8x96xf32>
    %c0_4 = arith.constant 0 : index
    %c0_5 = arith.constant 0 : index
    %7 = vector.load %arg9[%c0_4, %c0_5] : memref<1x96xf32, #tpu.memory_space<vmem>>, vector<1x96xf32>
    %8 = vector.broadcast %7 : vector<1x96xf32> to vector<8x96xf32>
    %9 = arith.addf %6, %8 : vector<8x96xf32>
    %10 = vector.extract_strided_slice %9 {offsets = [0, 0], sizes = [8, 32], strides = [1, 1]} : vector<8x96xf32> to vector<8x32xf32>
    %11 = vector.shape_cast %10 : vector<8x32xf32> to vector<8x4x8xf32>
    %12 = arith.truncf %11 : vector<8x4x8xf32> to vector<8x4x8xbf16>
    %13 = vector.extract_strided_slice %9 {offsets = [0, 32], sizes = [8, 32], strides = [1, 1]} : vector<8x96xf32> to vector<8x32xf32>
    %14 = vector.shape_cast %13 : vector<8x32xf32> to vector<8x4x8xf32>
    %15 = arith.truncf %14 : vector<8x4x8xf32> to vector<8x4x8xbf16>
    %16 = vector.extract_strided_slice %9 {offsets = [0, 64], sizes = [8, 32], strides = [1, 1]} : vector<8x96xf32> to vector<8x32xf32>
    %17 = vector.shape_cast %16 : vector<8x32xf32> to vector<8x4x8xf32>
    %18 = arith.truncf %17 : vector<8x4x8xf32> to vector<8x4x8xbf16>
    "tpu.trace_start"() <{level = 10 : i32, message = "shw,thw->hst"}> : () -> ()
    %cst_6 = arith.constant dense<0.000000e+00> : vector<4x8x8xf32>
    %19 = tpu.matmul %12, %15, %cst_6 {dimension_numbers = #tpu.dot_dimension_numbers<[2], [2], [0], [0], [0, 1, 0, 0, 1, 0], [1], [1]>} : vector<8x4x8xbf16>, vector<8x4x8xbf16>, vector<4x8x8xf32> -> vector<4x8x8xf32>
    "tpu.trace_stop"() : () -> ()
    %cst_7 = arith.constant dense<0xFF800000> : vector<4x8xf32>
    %20 = vector.multi_reduction <maximumf>, %19, %cst_7 [2] : vector<4x8x8xf32> to vector<4x8xf32>
    %21 = vector.shape_cast %20 : vector<4x8xf32> to vector<4x8x1xf32>
    %22 = vector.broadcast %21 : vector<4x8x1xf32> to vector<4x8x8xf32>
    %23 = arith.subf %19, %22 : vector<4x8x8xf32>
    %24 = math.exp %23 : vector<4x8x8xf32>
    %cst_8 = arith.constant dense<0.000000e+00> : vector<4x8xf32>
    %25 = vector.multi_reduction <add>, %24, %cst_8 [2] : vector<4x8x8xf32> to vector<4x8xf32>
    %26 = vector.shape_cast %25 : vector<4x8xf32> to vector<4x8x1xf32>
    %27 = tpu.reciprocal %26 {approx = true} : vector<4x8x1xf32> -> vector<4x8x1xf32>
    %28 = vector.broadcast %27 : vector<4x8x1xf32> to vector<4x8x8xf32>
    %29 = arith.mulf %24, %28 : vector<4x8x8xf32>
    %30 = arith.truncf %29 : vector<4x8x8xf32> to vector<4x8x8xbf16>
    "tpu.trace_start"() <{level = 10 : i32, message = "hst,thw->shw"}> : () -> ()
    %cst_9 = arith.constant dense<0.000000e+00> : vector<4x8x8xf32>
    %31 = tpu.matmul %18, %30, %cst_9 {dimension_numbers = #tpu.dot_dimension_numbers<[0], [2], [2], [1], [0, 1, 0, 2, 1, 1], [1], [0]>} : vector<8x4x8xbf16>, vector<4x8x8xbf16>, vector<4x8x8xf32> -> vector<4x8x8xf32>
    %32 = tpu.transpose %31, [2, 0, 1] : vector<4x8x8xf32> -> vector<8x4x8xf32>
    "tpu.trace_stop"() : () -> ()
    %33 = vector.shape_cast %32 : vector<8x4x8xf32> to vector<8x32xf32>
    %34 = arith.truncf %33 : vector<8x32xf32> to vector<8x32xbf16>
    %c0_10 = arith.constant 0 : index
    %c0_11 = arith.constant 0 : index
    %35 = vector.load %arg10[%c0_10, %c0_11] : memref<32x32xbf16, #tpu.memory_space<vmem>>, vector<32x32xbf16>
    %cst_12 = arith.constant dense<0.000000e+00> : vector<8x32xf32>
    %36 = tpu.matmul %34, %35, %cst_12 {dimension_numbers = #tpu.dot_dimension_numbers<[1], [0], [0], [1], [0, 0, 1, 1], [], []>} : vector<8x32xbf16>, vector<32x32xbf16>, vector<8x32xf32> -> vector<8x32xf32>
    %c0_13 = arith.constant 0 : index
    %c0_14 = arith.constant 0 : index
    %37 = vector.load %arg11[%c0_13, %c0_14] : memref<1x32xf32, #tpu.memory_space<vmem>>, vector<1x32xf32>
    %38 = vector.broadcast %37 : vector<1x32xf32> to vector<8x32xf32>
    %39 = arith.addf %36, %38 : vector<8x32xf32>
    %40 = arith.addf %33, %39 : vector<8x32xf32>
    %c0_15 = arith.constant 0 : index
    %c0_16 = arith.constant 0 : index
    %41 = vector.load %arg12[%c0_15, %c0_16] : memref<1x32xf32, #tpu.memory_space<vmem>>, vector<1x32xf32>
    %c0_17 = arith.constant 0 : index
    %c0_18 = arith.constant 0 : index
    %42 = vector.load %arg13[%c0_17, %c0_18] : memref<1x32xf32, #tpu.memory_space<vmem>>, vector<1x32xf32>
    %cst_19 = arith.constant dense<0.000000e+00> : vector<8xf32>
    %43 = vector.multi_reduction <add>, %40, %cst_19 [1] : vector<8x32xf32> to vector<8xf32>
    %44 = vector.shape_cast %43 : vector<8xf32> to vector<8x1xf32>
    %45 = arith.mulf %40, %40 : vector<8x32xf32>
    %cst_20 = arith.constant dense<0.000000e+00> : vector<8xf32>
    %46 = vector.multi_reduction <add>, %45, %cst_20 [1] : vector<8x32xf32> to vector<8xf32>
    %47 = vector.shape_cast %46 : vector<8xf32> to vector<8x1xf32>
    %cst_21 = arith.constant 3.125000e-02 : f32
    %48 = vector.broadcast %cst_21 : f32 to vector<8x1xf32>
    %49 = arith.mulf %44, %48 : vector<8x1xf32>
    %cst_22 = arith.constant 3.125000e-02 : f32
    %50 = vector.broadcast %cst_22 : f32 to vector<8x1xf32>
    %51 = arith.mulf %47, %50 : vector<8x1xf32>
    %52 = arith.mulf %49, %49 : vector<8x1xf32>
    %53 = arith.subf %51, %52 : vector<8x1xf32>
    %cst_23 = arith.constant 0.000000e+00 : f32
    %54 = vector.broadcast %cst_23 : f32 to vector<8x1xf32>
    %55 = arith.maximumf %53, %54 : vector<8x1xf32>
    %56 = vector.broadcast %49 : vector<8x1xf32> to vector<8x32xf32>
    %57 = arith.subf %40, %56 : vector<8x32xf32>
    %cst_24 = arith.constant 9.99999996E-13 : f32
    %58 = vector.broadcast %cst_24 : f32 to vector<8x1xf32>
    %59 = arith.addf %55, %58 : vector<8x1xf32>
    %60 = math.rsqrt %59 : vector<8x1xf32>
    %61 = vector.broadcast %60 : vector<8x1xf32> to vector<8x32xf32>
    %62 = arith.mulf %57, %61 : vector<8x32xf32>
    %63 = vector.broadcast %41 : vector<1x32xf32> to vector<8x32xf32>
    %64 = arith.mulf %63, %62 : vector<8x32xf32>
    %65 = vector.broadcast %42 : vector<1x32xf32> to vector<8x32xf32>
    %66 = arith.addf %64, %65 : vector<8x32xf32>
    %67 = arith.truncf %66 : vector<8x32xf32> to vector<8x32xbf16>
    %c0_25 = arith.constant 0 : index
    %c0_26 = arith.constant 0 : index
    %68 = vector.load %arg14[%c0_25, %c0_26] : memref<32x64xbf16, #tpu.memory_space<vmem>>, vector<32x64xbf16>
    %cst_27 = arith.constant dense<0.000000e+00> : vector<8x64xf32>
    %69 = tpu.matmul %67, %68, %cst_27 {dimension_numbers = #tpu.dot_dimension_numbers<[1], [0], [0], [1], [0, 0, 1, 1], [], []>} : vector<8x32xbf16>, vector<32x64xbf16>, vector<8x64xf32> -> vector<8x64xf32>
    %c0_28 = arith.constant 0 : index
    %c0_29 = arith.constant 0 : index
    %70 = vector.load %arg15[%c0_28, %c0_29] : memref<1x64xf32, #tpu.memory_space<vmem>>, vector<1x64xf32>
    %71 = vector.broadcast %70 : vector<1x64xf32> to vector<8x64xf32>
    %72 = arith.addf %69, %71 : vector<8x64xf32>
    %cst_30 = arith.constant 5.000000e-01 : f32
    %73 = vector.broadcast %cst_30 : f32 to vector<8x64xf32>
    %74 = arith.mulf %73, %72 : vector<8x64xf32>
    %75 = arith.mulf %72, %72 : vector<8x64xf32>
    %76 = arith.mulf %75, %72 : vector<8x64xf32>
    %cst_31 = arith.constant 4.471500e-02 : f32
    %77 = vector.broadcast %cst_31 : f32 to vector<8x64xf32>
    %78 = arith.mulf %77, %76 : vector<8x64xf32>
    %79 = arith.addf %72, %78 : vector<8x64xf32>
    %cst_32 = arith.constant 0.797884583 : f32
    %80 = vector.broadcast %cst_32 : f32 to vector<8x64xf32>
    %81 = arith.mulf %80, %79 : vector<8x64xf32>
    %82 = math.tanh %81 : vector<8x64xf32>
    %cst_33 = arith.constant 1.000000e+00 : f32
    %83 = vector.broadcast %cst_33 : f32 to vector<8x64xf32>
    %84 = arith.addf %83, %82 : vector<8x64xf32>
    %85 = arith.mulf %74, %84 : vector<8x64xf32>
    %86 = arith.truncf %85 : vector<8x64xf32> to vector<8x64xbf16>
    %c0_34 = arith.constant 0 : index
    %c0_35 = arith.constant 0 : index
    %87 = vector.load %arg16[%c0_34, %c0_35] : memref<64x32xbf16, #tpu.memory_space<vmem>>, vector<64x32xbf16>
    %cst_36 = arith.constant dense<0.000000e+00> : vector<8x32xf32>
    %88 = tpu.matmul %86, %87, %cst_36 {dimension_numbers = #tpu.dot_dimension_numbers<[1], [0], [0], [1], [0, 0, 1, 1], [], []>} : vector<8x64xbf16>, vector<64x32xbf16>, vector<8x32xf32> -> vector<8x32xf32>
    %c0_37 = arith.constant 0 : index
    %c0_38 = arith.constant 0 : index
    %89 = vector.load %arg17[%c0_37, %c0_38] : memref<1x32xf32, #tpu.memory_space<vmem>>, vector<1x32xf32>
    %90 = vector.broadcast %89 : vector<1x32xf32> to vector<8x32xf32>
    %91 = arith.addf %88, %90 : vector<8x32xf32>
    %92 = arith.addf %66, %91 : vector<8x32xf32>
    %c0_39 = arith.constant 0 : index
    %c0_40 = arith.constant 0 : index
    %93 = vector.load %arg18[%c0_39, %c0_40] : memref<1x32xf32, #tpu.memory_space<vmem>>, vector<1x32xf32>
    %c0_41 = arith.constant 0 : index
    %c0_42 = arith.constant 0 : index
    %94 = vector.load %arg19[%c0_41, %c0_42] : memref<1x32xf32, #tpu.memory_space<vmem>>, vector<1x32xf32>
    %cst_43 = arith.constant dense<0.000000e+00> : vector<8xf32>
    %95 = vector.multi_reduction <add>, %92, %cst_43 [1] : vector<8x32xf32> to vector<8xf32>
    %96 = vector.shape_cast %95 : vector<8xf32> to vector<8x1xf32>
    %97 = arith.mulf %92, %92 : vector<8x32xf32>
    %cst_44 = arith.constant dense<0.000000e+00> : vector<8xf32>
    %98 = vector.multi_reduction <add>, %97, %cst_44 [1] : vector<8x32xf32> to vector<8xf32>
    %99 = vector.shape_cast %98 : vector<8xf32> to vector<8x1xf32>
    %cst_45 = arith.constant 3.125000e-02 : f32
    %100 = vector.broadcast %cst_45 : f32 to vector<8x1xf32>
    %101 = arith.mulf %96, %100 : vector<8x1xf32>
    %cst_46 = arith.constant 3.125000e-02 : f32
    %102 = vector.broadcast %cst_46 : f32 to vector<8x1xf32>
    %103 = arith.mulf %99, %102 : vector<8x1xf32>
    %104 = arith.mulf %101, %101 : vector<8x1xf32>
    %105 = arith.subf %103, %104 : vector<8x1xf32>
    %cst_47 = arith.constant 0.000000e+00 : f32
    %106 = vector.broadcast %cst_47 : f32 to vector<8x1xf32>
    %107 = arith.maximumf %105, %106 : vector<8x1xf32>
    %108 = vector.broadcast %101 : vector<8x1xf32> to vector<8x32xf32>
    %109 = arith.subf %92, %108 : vector<8x32xf32>
    %cst_48 = arith.constant 9.99999996E-13 : f32
    %110 = vector.broadcast %cst_48 : f32 to vector<8x1xf32>
    %111 = arith.addf %107, %110 : vector<8x1xf32>
    %112 = math.rsqrt %111 : vector<8x1xf32>
    %113 = vector.broadcast %112 : vector<8x1xf32> to vector<8x32xf32>
    %114 = arith.mulf %109, %113 : vector<8x32xf32>
    %115 = vector.broadcast %93 : vector<1x32xf32> to vector<8x32xf32>
    %116 = arith.mulf %115, %114 : vector<8x32xf32>
    %117 = vector.broadcast %94 : vector<1x32xf32> to vector<8x32xf32>
    %118 = arith.addf %116, %117 : vector<8x32xf32>
    %c0_49 = arith.constant 0 : index
    %c0_50 = arith.constant 0 : index
    %119 = vector.load %arg21[%c0_49, %c0_50] : memref<8x32xf32, #tpu.memory_space<vmem>>, vector<8x32xf32>
    tpu.vector_store %arg21[%c0_49, %c0_50], %118 {strides = array<i32>} : memref<8x32xf32, #tpu.memory_space<vmem>>, vector<8x32xf32>,
    %c1_i32 = arith.constant 1 : i32
    %120 = arith.cmpi eq, %arg1, %c1_i32 : i32
    %121 = arith.extui %120 : i1 to i32
    %c0_i32_51 = arith.constant 0 : i32
    %122 = arith.cmpi ne, %121, %c0_i32_51 : i32
    scf.if %122 {
      %c0_52 = arith.constant 0 : index
      %c0_53 = arith.constant 0 : index
      %c0_54 = arith.constant 0 : index
      %123 = vector.load %arg20[%c0_52, %c0_53, %c0_54] : memref<1x8x32xf32, #tpu.memory_space<vmem>>, vector<1x8x32xf32>
      %124 = vector.shape_cast %123 : vector<1x8x32xf32> to vector<8x32xf32>
      %125 = vector.shape_cast %118 : vector<8x32xf32> to vector<1x8x32xf32>
      tpu.vector_store %arg20[%c0_52, %c0_53, %c0_54], %125 {strides = array<i32>} : memref<1x8x32xf32, #tpu.memory_space<vmem>>, vector<1x8x32xf32>,
    } else {
    }
    return
  }
  func.func @transform_0(%arg0: i32, %arg1: i32) -> (i32, i32, i32) {
    %c0_i32 = arith.constant 0 : i32
    %c0_i32_0 = arith.constant 0 : i32
    %c0_i32_1 = arith.constant 0 : i32
    return %arg0, %c0_i32, %c0_i32_0 : i32, i32, i32
  }
  func.func @transform_1(%arg0: i32, %arg1: i32) -> (i32, i32) {
    %c0_i32 = arith.constant 0 : i32
    %c0_i32_0 = arith.constant 0 : i32
    %c0_i32_1 = arith.constant 0 : i32
    return %c0_i32, %c0_i32_0 : i32, i32
  }
  func.func @transform_2(%arg0: i32, %arg1: i32) -> (i32, i32) {
    %c0_i32 = arith.constant 0 : i32
    %c0_i32_0 = arith.constant 0 : i32
    %c0_i32_1 = arith.constant 0 : i32
    return %c0_i32, %c0_i32_0 : i32, i32
  }
  func.func @transform_3(%arg0: i32, %arg1: i32) -> (i32, i32) {
    %c0_i32 = arith.constant 0 : i32
    %c0_i32_0 = arith.constant 0 : i32
    %c0_i32_1 = arith.constant 0 : i32
    return %c0_i32, %c0_i32_0 : i32, i32
  }
  func.func @transform_4(%arg0: i32, %arg1: i32) -> (i32, i32) {
    %c0_i32 = arith.constant 0 : i32
    %c0_i32_0 = arith.constant 0 : i32
    %c0_i32_1 = arith.constant 0 : i32
    return %c0_i32, %c0_i32_0 : i32, i32
  }
  func.func @transform_5(%arg0: i32, %arg1: i32) -> (i32, i32) {
    %c0_i32 = arith.constant 0 : i32
    %c0_i32_0 = arith.constant 0 : i32
    %c0_i32_1 = arith.constant 0 : i32
    return %c0_i32, %c0_i32_0 : i32, i32
  }
  func.func @transform_6(%arg0: i32, %arg1: i32) -> (i32, i32) {
    %c0_i32 = arith.constant 0 : i32
    %c0_i32_0 = arith.constant 0 : i32
    %c0_i32_1 = arith.constant 0 : i32
    return %c0_i32, %c0_i32_0 : i32, i32
  }
  func.func @transform_7(%arg0: i32, %arg1: i32) -> (i32, i32) {
    %c0_i32 = arith.constant 0 : i32
    %c0_i32_0 = arith.constant 0 : i32
    %c0_i32_1 = arith.constant 0 : i32
    return %c0_i32, %c0_i32_0 : i32, i32
  }
  func.func @transform_8(%arg0: i32, %arg1: i32) -> (i32, i32) {
    %c0_i32 = arith.constant 0 : i32
    %c0_i32_0 = arith.constant 0 : i32
    %c0_i32_1 = arith.constant 0 : i32
    return %c0_i32, %c0_i32_0 : i32, i32
  }
  func.func @transform_9(%arg0: i32, %arg1: i32) -> (i32, i32) {
    %c0_i32 = arith.constant 0 : i32
    %c0_i32_0 = arith.constant 0 : i32
    %c0_i32_1 = arith.constant 0 : i32
    return %c0_i32, %c0_i32_0 : i32, i32
  }
  func.func @transform_10(%arg0: i32, %arg1: i32) -> (i32, i32) {
    %c0_i32 = arith.constant 0 : i32
    %c0_i32_0 = arith.constant 0 : i32
    %c0_i32_1 = arith.constant 0 : i32
    return %c0_i32, %c0_i32_0 : i32, i32
  }
  func.func @transform_11(%arg0: i32, %arg1: i32) -> (i32, i32) {
    %c0_i32 = arith.constant 0 : i32
    %c0_i32_0 = arith.constant 0 : i32
    %c0_i32_1 = arith.constant 0 : i32
    return %c0_i32, %c0_i32_0 : i32, i32
  }
  func.func @transform_12(%arg0: i32, %arg1: i32) -> (i32, i32) {
    %c0_i32 = arith.constant 0 : i32
    %c0_i32_0 = arith.constant 0 : i32
    %c0_i32_1 = arith.constant 0 : i32
    return %c0_i32, %c0_i32_0 : i32, i32
  }
  func.func @transform_13(%arg0: i32, %arg1: i32) -> (i32, i32) {
    %c0_i32 = arith.constant 0 : i32
    %c0_i32_0 = arith.constant 0 : i32
    %c0_i32_1 = arith.constant 0 : i32
    return %c0_i32, %c0_i32_0 : i32, i32
  }
  func.func @transform_14(%arg0: i32, %arg1: i32) -> (i32, i32) {
    %c0_i32 = arith.constant 0 : i32
    %c0_i32_0 = arith.constant 0 : i32
    %c0_i32_1 = arith.constant 0 : i32
    return %c0_i32, %c0_i32_0 : i32, i32
  }
  func.func @transform_15(%arg0: i32, %arg1: i32) -> (i32, i32) {
    %c0_i32 = arith.constant 0 : i32
    %c0_i32_0 = arith.constant 0 : i32
    %c0_i32_1 = arith.constant 0 : i32
    return %c0_i32, %c0_i32_0 : i32, i32
  }
  func.func @transform_16(%arg0: i32, %arg1: i32) -> (i32, i32) {
    %c0_i32 = arith.constant 0 : i32
    %c0_i32_0 = arith.constant 0 : i32
    %c0_i32_1 = arith.constant 0 : i32
    return %c0_i32, %c0_i32_0 : i32, i32
  }
  func.func @transform_17(%arg0: i32, %arg1: i32) -> (i32, i32) {
    %c0_i32 = arith.constant 0 : i32
    %c0_i32_0 = arith.constant 0 : i32
    %c0_i32_1 = arith.constant 0 : i32
    return %c0_i32, %c0_i32_0 : i32, i32
  }
  func.func @transform_18(%arg0: i32, %arg1: i32) -> (i32, i32, i32) {
    %c0_i32 = arith.constant 0 : i32
    %c0_i32_0 = arith.constant 0 : i32
    %c0_i32_1 = arith.constant 0 : i32
    return %arg0, %c0_i32, %c0_i32_0 : i32, i32, i32
  }
}

module attributes {stable_mosaic.version = 11 : i64} {
  func.func @_transformer_kernel(%arg0: i32, %arg1: i32, %arg2: memref<1x8x16xf32, #tpu.memory_space<vmem>>, %arg3: memref<16x32xbf16, #tpu.memory_space<vmem>>, %arg4: memref<1x32xf32, #tpu.memory_space<vmem>>, %arg5: memref<1x32xf32, #tpu.memory_space<vmem>>, %arg6: memref<1x32xf32, #tpu.memory_space<vmem>>, %arg7: memref<8x32xf32, #tpu.memory_space<vmem>>, %arg8: memref<32x96xbf16, #tpu.memory_space<vmem>>, %arg9: memref<1x96xf32, #tpu.memory_space<vmem>>, %arg10: memref<32x32xbf16, #tpu.memory_space<vmem>>, %arg11: memref<1x32xf32, #tpu.memory_space<vmem>>, %arg12: memref<1x32xf32, #tpu.memory_space<vmem>>, %arg13: memref<1x32xf32, #tpu.memory_space<vmem>>, %arg14: memref<32x64xbf16, #tpu.memory_space<vmem>>, %arg15: memref<1x64xf32, #tpu.memory_space<vmem>>, %arg16: memref<64x32xbf16, #tpu.memory_space<vmem>>, %arg17: memref<1x32xf32, #tpu.memory_space<vmem>>, %arg18: memref<1x32xf32, #tpu.memory_space<vmem>>, %arg19: memref<1x32xf32, #tpu.memory_space<vmem>>, %arg20: memref<1x8x32xf32, #tpu.memory_space<vmem>>, %arg21: memref<8x32xf32, #tpu.memory_space<vmem>>) attributes {dimension_semantics = [#tpu.dimension_semantics<parallel>, #tpu.dimension_semantics<arbitrary>], iteration_bounds = array<i64: 2, 2>, scalar_prefetch = 0 : i64, scratch_operands = 1 : i64, tpu.core_type = #tpu.core_type<tc>, window_params = [{transform_indices = @transform_0, window_bounds = array<i64: 1, 8, 16>}, {pipeline_mode = #tpu.pipeline_mode<synchronous>, transform_indices = @transform_1, window_bounds = array<i64: 16, 32>}, {pipeline_mode = #tpu.pipeline_mode<synchronous>, transform_indices = @transform_2, window_bounds = array<i64: 1, 32>}, {pipeline_mode = #tpu.pipeline_mode<synchronous>, transform_indices = @transform_3, window_bounds = array<i64: 1, 32>}, {pipeline_mode = #tpu.pipeline_mode<synchronous>, transform_indices = @transform_4, window_bounds = array<i64: 1, 32>}, {pipeline_mode = #tpu.pipeline_mode<synchronous>, transform_indices = @transform_5, window_bounds = array<i64: 8, 32>}, {pipeline_mode = #tpu.pipeline_mode<synchronous>, transform_indices = @transform_6, window_bounds = array<i64: 32, 96>}, {pipeline_mode = #tpu.pipeline_mode<synchronous>, transform_indices = @transform_7, window_bounds = array<i64: 1, 96>}, {pipeline_mode = #tpu.pipeline_mode<synchronous>, transform_indices = @transform_8, window_bounds = array<i64: 32, 32>}, {pipeline_mode = #tpu.pipeline_mode<synchronous>, transform_indices = @transform_9, window_bounds = array<i64: 1, 32>}, {pipeline_mode = #tpu.pipeline_mode<synchronous>, transform_indices = @transform_10, window_bounds = array<i64: 1, 32>}, {pipeline_mode = #tpu.pipeline_mode<synchronous>, transform_indices = @transform_11, window_bounds = array<i64: 1, 32>}, {pipeline_mode = #tpu.pipeline_mode<synchronous>, transform_indices = @transform_12, window_bounds = array<i64: 32, 64>}, {pipeline_mode = #tpu.pipeline_mode<synchronous>, transform_indices = @transform_13, window_bounds = array<i64: 1, 64>}, {pipeline_mode = #tpu.pipeline_mode<synchronous>, transform_indices = @transform_14, window_bounds = array<i64: 64, 32>}, {pipeline_mode = #tpu.pipeline_mode<synchronous>, transform_indices = @transform_15, window_bounds = array<i64: 1, 32>}, {pipeline_mode = #tpu.pipeline_mode<synchronous>, transform_indices = @transform_16, window_bounds = array<i64: 1, 32>}, {pipeline_mode = #tpu.pipeline_mode<synchronous>, transform_indices = @transform_17, window_bounds = array<i64: 1, 32>}, {transform_indices = @transform_18, window_bounds = array<i64: 1, 8, 32>}]} {
    %c0_i32 = arith.constant 0 : i32
    %0 = arith.cmpi eq, %arg1, %c0_i32 : i32
    %1 = arith.extui %0 : i1 to i32
    %c0_i32_0 = arith.constant 0 : i32
    %2 = arith.cmpi ne, %1, %c0_i32_0 : i32
    scf.if %2 {
      %c0_52 = arith.constant 0 : index
      %c0_53 = arith.constant 0 : index
      %c0_54 = arith.constant 0 : index
      %123 = vector.load %arg2[%c0_52, %c0_53, %c0_54] : memref<1x8x16xf32, #tpu.memory_space<vmem>>, vector<1x8x16xf32>
      %124 = vector.shape_cast %123 : vector<1x8x16xf32> to vector<8x16xf32>
      %125 = arith.truncf %124 : vector<8x16xf32> to vector<8x16xbf16>
      %c0_55 = arith.constant 0 : index
      %c0_56 = arith.constant 0 : index
      %126 = vector.load %arg3[%c0_55, %c0_56] : memref<16x32xbf16, #tpu.memory_space<vmem>>, vector<16x32xbf16>
      %cst_57 = arith.constant dense<0.000000e+00> : vector<8x32xf32>
      %127 = tpu.matmul %125, %126, %cst_57 {dimension_numbers = #tpu.dot_dimension_numbers<[1], [0], [0], [1], [0, 0, 1, 1], [], []>} : vector<8x16xbf16>, vector<16x32xbf16>, vector<8x32xf32> -> vector<8x32xf32>
      %c0_58 = arith.constant 0 : index
      %c0_59 = arith.constant 0 : index
      %128 = vector.load %arg4[%c0_58, %c0_59] : memref<1x32xf32, #tpu.memory_space<vmem>>, vector<1x32xf32>
      %129 = vector.broadcast %128 : vector<1x32xf32> to vector<8x32xf32>
      %130 = arith.addf %127, %129 : vector<8x32xf32>
      %c0_60 = arith.constant 0 : index
      %c0_61 = arith.constant 0 : index
      %131 = vector.load %arg5[%c0_60, %c0_61] : memref<1x32xf32, #tpu.memory_space<vmem>>, vector<1x32xf32>
      %c0_62 = arith.constant 0 : index
      %c0_63 = arith.constant 0 : index
      %132 = vector.load %arg6[%c0_62, %c0_63] : memref<1x32xf32, #tpu.memory_space<vmem>>, vector<1x32xf32>
      %cst_64 = arith.constant dense<0.000000e+00> : vector<8xf32>
      %133 = vector.multi_reduction <add>, %130, %cst_64 [1] : vector<8x32xf32> to vector<8xf32>
      %134 = vector.shape_cast %133 : vector<8xf32> to vector<8x1xf32>
      %135 = arith.mulf %130, %130 : vector<8x32xf32>
      %cst_65 = arith.constant dense<0.000000e+00> : vector<8xf32>
      %136 = vector.multi_reduction <add>, %135, %cst_65 [1] : vector<8x32xf32> to vector<8xf32>
      %137 = vector.shape_cast %136 : vector<8xf32> to vector<8x1xf32>
      %cst_66 = arith.constant 3.125000e-02 : f32
      %138 = vector.broadcast %cst_66 : f32 to vector<8x1xf32>
      %139 = arith.mulf %134, %138 : vector<8x1xf32>
      %cst_67 = arith.constant 3.125000e-02 : f32
      %140 = vector.broadcast %cst_67 : f32 to vector<8x1xf32>
      %141 = arith.mulf %137, %140 : vector<8x1xf32>
      %142 = arith.mulf %139, %139 : vector<8x1xf32>
      %143 = arith.subf %141, %142 : vector<8x1xf32>
      %cst_68 = arith.constant 0.000000e+00 : f32
      %144 = vector.broadcast %cst_68 : f32 to vector<8x1xf32>
      %145 = arith.maximumf %143, %144 : vector<8x1xf32>
      %146 = vector.broadcast %139 : vector<8x1xf32> to vector<8x32xf32>
      %147 = arith.subf %130, %146 : vector<8x32xf32>
      %cst_69 = arith.constant 9.99999996E-13 : f32
      %148 = vector.broadcast %cst_69 : f32 to vector<8x1xf32>
      %149 = arith.addf %145, %148 : vector<8x1xf32>
      %150 = math.rsqrt %149 : vector<8x1xf32>
      %151 = vector.broadcast %150 : vector<8x1xf32> to vector<8x32xf32>
      %152 = arith.mulf %147, %151 : vector<8x32xf32>
      %153 = vector.broadcast %131 : vector<1x32xf32> to vector<8x32xf32>
      %154 = arith.mulf %153, %152 : vector<8x32xf32>
      %155 = vector.broadcast %132 : vector<1x32xf32> to vector<8x32xf32>
      %156 = arith.addf %154, %155 : vector<8x32xf32>
      %c0_70 = arith.constant 0 : index
      %c0_71 = arith.constant 0 : index
      %157 = vector.load %arg7[%c0_70, %c0_71] : memref<8x32xf32, #tpu.memory_space<vmem>>, vector<8x32xf32>
      %158 = arith.addf %156, %157 : vector<8x32xf32>
      %c0_72 = arith.constant 0 : index
      %c0_73 = arith.constant 0 : index
      %159 = vector.load %arg5[%c0_72, %c0_73] : memref<1x32xf32, #tpu.memory_space<vmem>>, vector<1x32xf32>
      %c0_74 = arith.constant 0 : index
      %c0_75 = arith.constant 0 : index
      %160 = vector.load %arg6[%c0_74, %c0_75] : memref<1x32xf32, #tpu.memory_space<vmem>>, vector<1x32xf32>
      %cst_76 = arith.constant dense<0.000000e+00> : vector<8xf32>
      %161 = vector.multi_reduction <add>, %158, %cst_76 [1] : vector<8x32xf32> to vector<8xf32>
      %162 = vector.shape_cast %161 : vector<8xf32> to vector<8x1xf32>
      %163 = arith.mulf %158, %158 : vector<8x32xf32>
      %cst_77 = arith.constant dense<0.000000e+00> : vector<8xf32>
      %164 = vector.multi_reduction <add>, %163, %cst_77 [1] : vector<8x32xf32> to vector<8xf32>
      %165 = vector.shape_cast %164 : vector<8xf32> to vector<8x1xf32>
      %cst_78 = arith.constant 3.125000e-02 : f32
      %166 = vector.broadcast %cst_78 : f32 to vector<8x1xf32>
      %167 = arith.mulf %162, %166 : vector<8x1xf32>
      %cst_79 = arith.constant 3.125000e-02 : f32
      %168 = vector.broadcast %cst_79 : f32 to vector<8x1xf32>
      %169 = arith.mulf %165, %168 : vector<8x1xf32>
      %170 = arith.mulf %167, %167 : vector<8x1xf32>
      %171 = arith.subf %169, %170 : vector<8x1xf32>
      %cst_80 = arith.constant 0.000000e+00 : f32
      %172 = vector.broadcast %cst_80 : f32 to vector<8x1xf32>
      %173 = arith.maximumf %171, %172 : vector<8x1xf32>
      %174 = vector.broadcast %167 : vector<8x1xf32> to vector<8x32xf32>
      %175 = arith.subf %158, %174 : vector<8x32xf32>
      %cst_81 = arith.constant 9.99999996E-13 : f32
      %176 = vector.broadcast %cst_81 : f32 to vector<8x1xf32>
      %177 = arith.addf %173, %176 : vector<8x1xf32>
      %178 = math.rsqrt %177 : vector<8x1xf32>
      %179 = vector.broadcast %178 : vector<8x1xf32> to vector<8x32xf32>
      %180 = arith.mulf %175, %179 : vector<8x32xf32>
      %181 = vector.broadcast %159 : vector<1x32xf32> to vector<8x32xf32>
      %182 = arith.mulf %181, %180 : vector<8x32xf32>
      %183 = vector.broadcast %160 : vector<1x32xf32> to vector<8x32xf32>
      %184 = arith.addf %182, %183 : vector<8x32xf32>
      %c0_82 = arith.constant 0 : index
      %c0_83 = arith.constant 0 : index
      %185 = vector.load %arg21[%c0_82, %c0_83] : memref<8x32xf32, #tpu.memory_space<vmem>>, vector<8x32xf32>
      tpu.vector_store %arg21[%c0_82, %c0_83], %184 {strides = array<i32>} : memref<8x32xf32, #tpu.memory_space<vmem>>, vector<8x32xf32>,
    } else {
    }
    %c0 = arith.constant 0 : index
    %c0_1 = arith.constant 0 : index
    %3 = vector.load %arg21[%c0, %c0_1] : memref<8x32xf32, #tpu.memory_space<vmem>>, vector<8x32xf32>
    %4 = arith.truncf %3 : vector<8x32xf32> to vector<8x32xbf16>
    %c0_2 = arith.constant 0 : index
    %c0_3 = arith.constant 0 : index
    %5 = vector.load %arg8[%c0_2, %c0_3] : memref<32x96xbf16, #tpu.memory_space<vmem>>, vector<32x96xbf16>
    %cst = arith.constant dense<0.000000e+00> : vector<8x96xf32>
    %6 = tpu.matmul %4, %5, %cst {dimension_numbers = #tpu.dot_dimension_numbers<[1], [0], [0], [1], [0, 0, 1, 1], [], []>} : vector<8x32xbf16>, vector<32x96xbf16>, vector<8x96xf32> -> vector<8x96xf32>
    %c0_4 = arith.constant 0 : index
    %c0_5 = arith.constant 0 : index
    %7 = vector.load %arg9[%c0_4, %c0_5] : memref<1x96xf32, #tpu.memory_space<vmem>>, vector<1x96xf32>
    %8 = vector.broadcast %7 : vector<1x96xf32> to vector<8x96xf32>
    %9 = arith.addf %6, %8 : vector<8x96xf32>
    %10 = vector.extract_strided_slice %9 {offsets = [0, 0], sizes = [8, 32], strides = [1, 1]} : vector<8x96xf32> to vector<8x32xf32>
    %11 = vector.shape_cast %10 : vector<8x32xf32> to vector<8x4x8xf32>
    %12 = arith.truncf %11 : vector<8x4x8xf32> to vector<8x4x8xbf16>
    %13 = vector.extract_strided_slice %9 {offsets = [0, 32], sizes = [8, 32], strides = [1, 1]} : vector<8x96xf32> to vector<8x32xf32>
    %14 = vector.shape_cast %13 : vector<8x32xf32> to vector<8x4x8xf32>
    %15 = arith.truncf %14 : vector<8x4x8xf32> to vector<8x4x8xbf16>
    %16 = vector.extract_strided_slice %9 {offsets = [0, 64], sizes = [8, 32], strides = [1, 1]} : vector<8x96xf32> to vector<8x32xf32>
    %17 = vector.shape_cast %16 : vector<8x32xf32> to vector<8x4x8xf32>
    %18 = arith.truncf %17 : vector<8x4x8xf32> to vector<8x4x8xbf16>
    "tpu.trace_start"() <{level = 10 : i32, message = "shw,thw->hst"}> : () -> ()
    %cst_6 = arith.constant dense<0.000000e+00> : vector<4x8x8xf32>
    %19 = tpu.matmul %12, %15, %cst_6 {dimension_numbers = #tpu.dot_dimension_numbers<[2], [2], [0], [0], [0, 1, 0, 0, 1, 0], [1], [1]>} : vector<8x4x8xbf16>, vector<8x4x8xbf16>, vector<4x8x8xf32> -> vector<4x8x8xf32>
    "tpu.trace_stop"() : () -> ()
    %cst_7 = arith.constant dense<0xFF800000> : vector<4x8xf32>
    %20 = vector.multi_reduction <maximumf>, %19, %cst_7 [2] : vector<4x8x8xf32> to vector<4x8xf32>
    %21 = vector.shape_cast %20 : vector<4x8xf32> to vector<4x8x1xf32>
    %22 = vector.broadcast %21 : vector<4x8x1xf32> to vector<4x8x8xf32>
    %23 = arith.subf %19, %22 : vector<4x8x8xf32>
    %24 = math.exp %23 : vector<4x8x8xf32>
    %cst_8 = arith.constant dense<0.000000e+00> : vector<4x8xf32>
    %25 = vector.multi_reduction <add>, %24, %cst_8 [2] : vector<4x8x8xf32> to vector<4x8xf32>
    %26 = vector.shape_cast %25 : vector<4x8xf32> to vector<4x8x1xf32>
    %27 = tpu.reciprocal %26 {approx = true} : vector<4x8x1xf32> -> vector<4x8x1xf32>
    %28 = vector.broadcast %27 : vector<4x8x1xf32> to vector<4x8x8xf32>
    %29 = arith.mulf %24, %28 : vector<4x8x8xf32>
    %30 = arith.truncf %29 : vector<4x8x8xf32> to vector<4x8x8xbf16>
    "tpu.trace_start"() <{level = 10 : i32, message = "hst,thw->shw"}> : () -> ()
    %cst_9 = arith.constant dense<0.000000e+00> : vector<4x8x8xf32>
    %31 = tpu.matmul %18, %30, %cst_9 {dimension_numbers = #tpu.dot_dimension_numbers<[0], [2], [2], [1], [0, 1, 0, 2, 1, 1], [1], [0]>} : vector<8x4x8xbf16>, vector<4x8x8xbf16>, vector<4x8x8xf32> -> vector<4x8x8xf32>
    %32 = tpu.transpose %31, [2, 0, 1] : vector<4x8x8xf32> -> vector<8x4x8xf32>
    "tpu.trace_stop"() : () -> ()
    %33 = vector.shape_cast %32 : vector<8x4x8xf32> to vector<8x32xf32>
    %34 = arith.truncf %33 : vector<8x32xf32> to vector<8x32xbf16>
    %c0_10 = arith.constant 0 : index
    %c0_11 = arith.constant 0 : index
    %35 = vector.load %arg10[%c0_10, %c0_11] : memref<32x32xbf16, #tpu.memory_space<vmem>>, vector<32x32xbf16>
    %cst_12 = arith.constant dense<0.000000e+00> : vector<8x32xf32>
    %36 = tpu.matmul %34, %35, %cst_12 {dimension_numbers = #tpu.dot_dimension_numbers<[1], [0], [0], [1], [0, 0, 1, 1], [], []>} : vector<8x32xbf16>, vector<32x32xbf16>, vector<8x32xf32> -> vector<8x32xf32>
    %c0_13 = arith.constant 0 : index
    %c0_14 = arith.constant 0 : index
    %37 = vector.load %arg11[%c0_13, %c0_14] : memref<1x32xf32, #tpu.memory_space<vmem>>, vector<1x32xf32>
    %38 = vector.broadcast %37 : vector<1x32xf32> to vector<8x32xf32>
    %39 = arith.addf %36, %38 : vector<8x32xf32>
    %40 = arith.addf %33, %39 : vector<8x32xf32>
    %c0_15 = arith.constant 0 : index
    %c0_16 = arith.constant 0 : index
    %41 = vector.load %arg12[%c0_15, %c0_16] : memref<1x32xf32, #tpu.memory_space<vmem>>, vector<1x32xf32>
    %c0_17 = arith.constant 0 : index
    %c0_18 = arith.constant 0 : index
    %42 = vector.load %arg13[%c0_17, %c0_18] : memref<1x32xf32, #tpu.memory_space<vmem>>, vector<1x32xf32>
    %cst_19 = arith.constant dense<0.000000e+00> : vector<8xf32>
    %43 = vector.multi_reduction <add>, %40, %cst_19 [1] : vector<8x32xf32> to vector<8xf32>
    %44 = vector.shape_cast %43 : vector<8xf32> to vector<8x1xf32>
    %45 = arith.mulf %40, %40 : vector<8x32xf32>
    %cst_20 = arith.constant dense<0.000000e+00> : vector<8xf32>
    %46 = vector.multi_reduction <add>, %45, %cst_20 [1] : vector<8x32xf32> to vector<8xf32>
    %47 = vector.shape_cast %46 : vector<8xf32> to vector<8x1xf32>
    %cst_21 = arith.constant 3.125000e-02 : f32
    %48 = vector.broadcast %cst_21 : f32 to vector<8x1xf32>
    %49 = arith.mulf %44, %48 : vector<8x1xf32>
    %cst_22 = arith.constant 3.125000e-02 : f32
    %50 = vector.broadcast %cst_22 : f32 to vector<8x1xf32>
    %51 = arith.mulf %47, %50 : vector<8x1xf32>
    %52 = arith.mulf %49, %49 : vector<8x1xf32>
    %53 = arith.subf %51, %52 : vector<8x1xf32>
    %cst_23 = arith.constant 0.000000e+00 : f32
    %54 = vector.broadcast %cst_23 : f32 to vector<8x1xf32>
    %55 = arith.maximumf %53, %54 : vector<8x1xf32>
    %56 = vector.broadcast %49 : vector<8x1xf32> to vector<8x32xf32>
    %57 = arith.subf %40, %56 : vector<8x32xf32>
    %cst_24 = arith.constant 9.99999996E-13 : f32
    %58 = vector.broadcast %cst_24 : f32 to vector<8x1xf32>
    %59 = arith.addf %55, %58 : vector<8x1xf32>
    %60 = math.rsqrt %59 : vector<8x1xf32>
    %61 = vector.broadcast %60 : vector<8x1xf32> to vector<8x32xf32>
    %62 = arith.mulf %57, %61 : vector<8x32xf32>
    %63 = vector.broadcast %41 : vector<1x32xf32> to vector<8x32xf32>
    %64 = arith.mulf %63, %62 : vector<8x32xf32>
    %65 = vector.broadcast %42 : vector<1x32xf32> to vector<8x32xf32>
    %66 = arith.addf %64, %65 : vector<8x32xf32>
    %67 = arith.truncf %66 : vector<8x32xf32> to vector<8x32xbf16>
    %c0_25 = arith.constant 0 : index
    %c0_26 = arith.constant 0 : index
    %68 = vector.load %arg14[%c0_25, %c0_26] : memref<32x64xbf16, #tpu.memory_space<vmem>>, vector<32x64xbf16>
    %cst_27 = arith.constant dense<0.000000e+00> : vector<8x64xf32>
    %69 = tpu.matmul %67, %68, %cst_27 {dimension_numbers = #tpu.dot_dimension_numbers<[1], [0], [0], [1], [0, 0, 1, 1], [], []>} : vector<8x32xbf16>, vector<32x64xbf16>, vector<8x64xf32> -> vector<8x64xf32>
    %c0_28 = arith.constant 0 : index
    %c0_29 = arith.constant 0 : index
    %70 = vector.load %arg15[%c0_28, %c0_29] : memref<1x64xf32, #tpu.memory_space<vmem>>, vector<1x64xf32>
    %71 = vector.broadcast %70 : vector<1x64xf32> to vector<8x64xf32>
    %72 = arith.addf %69, %71 : vector<8x64xf32>
    %cst_30 = arith.constant 5.000000e-01 : f32
    %73 = vector.broadcast %cst_30 : f32 to vector<8x64xf32>
    %74 = arith.mulf %73, %72 : vector<8x64xf32>
    %75 = arith.mulf %72, %72 : vector<8x64xf32>
    %76 = arith.mulf %75, %72 : vector<8x64xf32>
    %cst_31 = arith.constant 4.471500e-02 : f32
    %77 = vector.broadcast %cst_31 : f32 to vector<8x64xf32>
    %78 = arith.mulf %77, %76 : vector<8x64xf32>
    %79 = arith.addf %72, %78 : vector<8x64xf32>
    %cst_32 = arith.constant 0.797884583 : f32
    %80 = vector.broadcast %cst_32 : f32 to vector<8x64xf32>
    %81 = arith.mulf %80, %79 : vector<8x64xf32>
    %82 = math.tanh %81 : vector<8x64xf32>
    %cst_33 = arith.constant 1.000000e+00 : f32
    %83 = vector.broadcast %cst_33 : f32 to vector<8x64xf32>
    %84 = arith.addf %83, %82 : vector<8x64xf32>
    %85 = arith.mulf %74, %84 : vector<8x64xf32>
    %86 = arith.truncf %85 : vector<8x64xf32> to vector<8x64xbf16>
    %c0_34 = arith.constant 0 : index
    %c0_35 = arith.constant 0 : index
    %87 = vector.load %arg16[%c0_34, %c0_35] : memref<64x32xbf16, #tpu.memory_space<vmem>>, vector<64x32xbf16>
    %cst_36 = arith.constant dense<0.000000e+00> : vector<8x32xf32>
    %88 = tpu.matmul %86, %87, %cst_36 {dimension_numbers = #tpu.dot_dimension_numbers<[1], [0], [0], [1], [0, 0, 1, 1], [], []>} : vector<8x64xbf16>, vector<64x32xbf16>, vector<8x32xf32> -> vector<8x32xf32>
    %c0_37 = arith.constant 0 : index
    %c0_38 = arith.constant 0 : index
    %89 = vector.load %arg17[%c0_37, %c0_38] : memref<1x32xf32, #tpu.memory_space<vmem>>, vector<1x32xf32>
    %90 = vector.broadcast %89 : vector<1x32xf32> to vector<8x32xf32>
    %91 = arith.addf %88, %90 : vector<8x32xf32>
    %92 = arith.addf %66, %91 : vector<8x32xf32>
    %c0_39 = arith.constant 0 : index
    %c0_40 = arith.constant 0 : index
    %93 = vector.load %arg18[%c0_39, %c0_40] : memref<1x32xf32, #tpu.memory_space<vmem>>, vector<1x32xf32>
    %c0_41 = arith.constant 0 : index
    %c0_42 = arith.constant 0 : index
    %94 = vector.load %arg19[%c0_41, %c0_42] : memref<1x32xf32, #tpu.memory_space<vmem>>, vector<1x32xf32>
    %cst_43 = arith.constant dense<0.000000e+00> : vector<8xf32>
    %95 = vector.multi_reduction <add>, %92, %cst_43 [1] : vector<8x32xf32> to vector<8xf32>
    %96 = vector.shape_cast %95 : vector<8xf32> to vector<8x1xf32>
    %97 = arith.mulf %92, %92 : vector<8x32xf32>
    %cst_44 = arith.constant dense<0.000000e+00> : vector<8xf32>
    %98 = vector.multi_reduction <add>, %97, %cst_44 [1] : vector<8x32xf32> to vector<8xf32>
    %99 = vector.shape_cast %98 : vector<8xf32> to vector<8x1xf32>
    %cst_45 = arith.constant 3.125000e-02 : f32
    %100 = vector.broadcast %cst_45 : f32 to vector<8x1xf32>
    %101 = arith.mulf %96, %100 : vector<8x1xf32>
    %cst_46 = arith.constant 3.125000e-02 : f32
    %102 = vector.broadcast %cst_46 : f32 to vector<8x1xf32>
    %103 = arith.mulf %99, %102 : vector<8x1xf32>
    %104 = arith.mulf %101, %101 : vector<8x1xf32>
    %105 = arith.subf %103, %104 : vector<8x1xf32>
    %cst_47 = arith.constant 0.000000e+00 : f32
    %106 = vector.broadcast %cst_47 : f32 to vector<8x1xf32>
    %107 = arith.maximumf %105, %106 : vector<8x1xf32>
    %108 = vector.broadcast %101 : vector<8x1xf32> to vector<8x32xf32>
    %109 = arith.subf %92, %108 : vector<8x32xf32>
    %cst_48 = arith.constant 9.99999996E-13 : f32
    %110 = vector.broadcast %cst_48 : f32 to vector<8x1xf32>
    %111 = arith.addf %107, %110 : vector<8x1xf32>
    %112 = math.rsqrt %111 : vector<8x1xf32>
    %113 = vector.broadcast %112 : vector<8x1xf32> to vector<8x32xf32>
    %114 = arith.mulf %109, %113 : vector<8x32xf32>
    %115 = vector.broadcast %93 : vector<1x32xf32> to vector<8x32xf32>
    %116 = arith.mulf %115, %114 : vector<8x32xf32>
    %117 = vector.broadcast %94 : vector<1x32xf32> to vector<8x32xf32>
    %118 = arith.addf %116, %117 : vector<8x32xf32>
    %c0_49 = arith.constant 0 : index
    %c0_50 = arith.constant 0 : index
    %119 = vector.load %arg21[%c0_49, %c0_50] : memref<8x32xf32, #tpu.memory_space<vmem>>, vector<8x32xf32>
    tpu.vector_store %arg21[%c0_49, %c0_50], %118 {strides = array<i32>} : memref<8x32xf32, #tpu.memory_space<vmem>>, vector<8x32xf32>,
    %c1_i32 = arith.constant 1 : i32
    %120 = arith.cmpi eq, %arg1, %c1_i32 : i32
    %121 = arith.extui %120 : i1 to i32
    %c0_i32_51 = arith.constant 0 : i32
    %122 = arith.cmpi ne, %121, %c0_i32_51 : i32
    scf.if %122 {
      %c0_52 = arith.constant 0 : index
      %c0_53 = arith.constant 0 : index
      %c0_54 = arith.constant 0 : index
      %123 = vector.load %arg20[%c0_52, %c0_53, %c0_54] : memref<1x8x32xf32, #tpu.memory_space<vmem>>, vector<1x8x32xf32>
      %124 = vector.shape_cast %123 : vector<1x8x32xf32> to vector<8x32xf32>
      %125 = vector.shape_cast %118 : vector<8x32xf32> to vector<1x8x32xf32>
      tpu.vector_store %arg20[%c0_52, %c0_53, %c0_54], %125 {strides = array<i32>} : memref<1x8x32xf32, #tpu.memory_space<vmem>>, vector<1x8x32xf32>,
    } else {
    }
    return
  }
  func.func @transform_0(%arg0: i32, %arg1: i32) -> (i32, i32, i32) {
    %c0_i32 = arith.constant 0 : i32
    %c0_i32_0 = arith.constant 0 : i32
    %c0_i32_1 = arith.constant 0 : i32
    return %arg0, %c0_i32, %c0_i32_0 : i32, i32, i32
  }
  func.func @transform_1(%arg0: i32, %arg1: i32) -> (i32, i32) {
    %c0_i32 = arith.constant 0 : i32
    %c0_i32_0 = arith.constant 0 : i32
    %c0_i32_1 = arith.constant 0 : i32
    return %c0_i32, %c0_i32_0 : i32, i32
  }
  func.func @transform_2(%arg0: i32, %arg1: i32) -> (i32, i32) {
    %c0_i32 = arith.constant 0 : i32
    %c0_i32_0 = arith.constant 0 : i32
    %c0_i32_1 = arith.constant 0 : i32
    return %c0_i32, %c0_i32_0 : i32, i32
  }
  func.func @transform_3(%arg0: i32, %arg1: i32) -> (i32, i32) {
    %c0_i32 = arith.constant 0 : i32
    %c0_i32_0 = arith.constant 0 : i32
    %c0_i32_1 = arith.constant 0 : i32
    return %c0_i32, %c0_i32_0 : i32, i32
  }
  func.func @transform_4(%arg0: i32, %arg1: i32) -> (i32, i32) {
    %c0_i32 = arith.constant 0 : i32
    %c0_i32_0 = arith.constant 0 : i32
    %c0_i32_1 = arith.constant 0 : i32
    return %c0_i32, %c0_i32_0 : i32, i32
  }
  func.func @transform_5(%arg0: i32, %arg1: i32) -> (i32, i32) {
    %c0_i32 = arith.constant 0 : i32
    %c0_i32_0 = arith.constant 0 : i32
    %c0_i32_1 = arith.constant 0 : i32
    return %c0_i32, %c0_i32_0 : i32, i32
  }
  func.func @transform_6(%arg0: i32, %arg1: i32) -> (i32, i32) {
    %c0_i32 = arith.constant 0 : i32
    %c0_i32_0 = arith.constant 0 : i32
    %c0_i32_1 = arith.constant 0 : i32
    return %c0_i32, %c0_i32_0 : i32, i32
  }
  func.func @transform_7(%arg0: i32, %arg1: i32) -> (i32, i32) {
    %c0_i32 = arith.constant 0 : i32
    %c0_i32_0 = arith.constant 0 : i32
    %c0_i32_1 = arith.constant 0 : i32
    return %c0_i32, %c0_i32_0 : i32, i32
  }
  func.func @transform_8(%arg0: i32, %arg1: i32) -> (i32, i32) {
    %c0_i32 = arith.constant 0 : i32
    %c0_i32_0 = arith.constant 0 : i32
    %c0_i32_1 = arith.constant 0 : i32
    return %c0_i32, %c0_i32_0 : i32, i32
  }
  func.func @transform_9(%arg0: i32, %arg1: i32) -> (i32, i32) {
    %c0_i32 = arith.constant 0 : i32
    %c0_i32_0 = arith.constant 0 : i32
    %c0_i32_1 = arith.constant 0 : i32
    return %c0_i32, %c0_i32_0 : i32, i32
  }
  func.func @transform_10(%arg0: i32, %arg1: i32) -> (i32, i32) {
    %c0_i32 = arith.constant 0 : i32
    %c0_i32_0 = arith.constant 0 : i32
    %c0_i32_1 = arith.constant 0 : i32
    return %c0_i32, %c0_i32_0 : i32, i32
  }
  func.func @transform_11(%arg0: i32, %arg1: i32) -> (i32, i32) {
    %c0_i32 = arith.constant 0 : i32
    %c0_i32_0 = arith.constant 0 : i32
    %c0_i32_1 = arith.constant 0 : i32
    return %c0_i32, %c0_i32_0 : i32, i32
  }
  func.func @transform_12(%arg0: i32, %arg1: i32) -> (i32, i32) {
    %c0_i32 = arith.constant 0 : i32
    %c0_i32_0 = arith.constant 0 : i32
    %c0_i32_1 = arith.constant 0 : i32
    return %c0_i32, %c0_i32_0 : i32, i32
  }
  func.func @transform_13(%arg0: i32, %arg1: i32) -> (i32, i32) {
    %c0_i32 = arith.constant 0 : i32
    %c0_i32_0 = arith.constant 0 : i32
    %c0_i32_1 = arith.constant 0 : i32
    return %c0_i32, %c0_i32_0 : i32, i32
  }
  func.func @transform_14(%arg0: i32, %arg1: i32) -> (i32, i32) {
    %c0_i32 = arith.constant 0 : i32
    %c0_i32_0 = arith.constant 0 : i32
    %c0_i32_1 = arith.constant 0 : i32
    return %c0_i32, %c0_i32_0 : i32, i32
  }
  func.func @transform_15(%arg0: i32, %arg1: i32) -> (i32, i32) {
    %c0_i32 = arith.constant 0 : i32
    %c0_i32_0 = arith.constant 0 : i32
    %c0_i32_1 = arith.constant 0 : i32
    return %c0_i32, %c0_i32_0 : i32, i32
  }
  func.func @transform_16(%arg0: i32, %arg1: i32) -> (i32, i32) {
    %c0_i32 = arith.constant 0 : i32
    %c0_i32_0 = arith.constant 0 : i32
    %c0_i32_1 = arith.constant 0 : i32
    return %c0_i32, %c0_i32_0 : i32, i32
  }
  func.func @transform_17(%arg0: i32, %arg1: i32) -> (i32, i32) {
    %c0_i32 = arith.constant 0 : i32
    %c0_i32_0 = arith.constant 0 : i32
    %c0_i32_1 = arith.constant 0 : i32
    return %c0_i32, %c0_i32_0 : i32, i32
  }
  func.func @transform_18(%arg0: i32, %arg1: i32) -> (i32, i32, i32) {
    %c0_i32 = arith.constant 0 : i32
    %c0_i32_0 = arith.constant 0 : i32
    %c0_i32_1 = arith.constant 0 : i32
    return %arg0, %c0_i32, %c0_i32_0 : i32, i32, i32
  }
}

</mosaic_0001>

<llo_original>
// kernel: tpu_custom_call.1
$region0: #{tpu_custom_call.1}
  #allocation0 [shape = 'u32[]', space=smem, size = 0x4, offset = 0x4, fixed_abs, tag = 'smem constant byte address 0x4 - core index']
  #allocation1 [shape = 'u32[144,128]{1,0:T(1,128)}', space=vmem, size = 0x12000, scoped, tag = 'internal scratch']
  #allocation2 [shape = 'f32[8,32]{1,0:T(8,128)}', space=vmem, size = 0x1000, scoped, tag = 'scratch operand']
  %s0 = inlined_call_operand.vmem [shape: f32[2,8,16], index: 0, kind: input, shape index: {}]
  %s1 = inlined_call_operand.hbm [shape: bf16[16,32], index: 1, kind: input, shape index: {}]
  %s2 = inlined_call_operand.vmem [shape: f32[1,32], index: 2, kind: input, shape index: {}]
  %s3 = inlined_call_operand.vmem [shape: f32[1,32], index: 3, kind: input, shape index: {}]
  %s4 = inlined_call_operand.hbm [shape: f32[1,32], index: 4, kind: input, shape index: {}]
  %s5 = inlined_call_operand.hbm [shape: f32[8,32], index: 5, kind: input, shape index: {}]
  %s6 = inlined_call_operand.vmem [shape: bf16[32,96], index: 6, kind: input, shape index: {}]
  %s7 = inlined_call_operand.hbm [shape: f32[1,96], index: 7, kind: input, shape index: {}]
  %s8 = inlined_call_operand.vmem [shape: bf16[32,32], index: 8, kind: input, shape index: {}]
  %s9 = inlined_call_operand.hbm [shape: f32[1,32], index: 9, kind: input, shape index: {}]
  %s10 = inlined_call_operand.vmem [shape: f32[1,32], index: 10, kind: input, shape index: {}]
  %s11 = inlined_call_operand.vmem [shape: f32[1,32], index: 11, kind: input, shape index: {}]
  %s12 = inlined_call_operand.vmem [shape: bf16[32,64], index: 12, kind: input, shape index: {}]
  %s13 = inlined_call_operand.vmem [shape: f32[1,64], index: 13, kind: input, shape index: {}]
  %s14 = inlined_call_operand.vmem [shape: bf16[64,32], index: 14, kind: input, shape index: {}]
  %s15 = inlined_call_operand.vmem [shape: f32[1,32], index: 15, kind: input, shape index: {}]
  %s16 = inlined_call_operand.vmem [shape: f32[1,32], index: 16, kind: input, shape index: {}]
  %s17 = inlined_call_operand.vmem [shape: f32[1,32], index: 17, kind: input, shape index: {}]
  %s18 = inlined_call_operand.hbm [shape: f32[2,8,32], index: 18, kind: output, shape index: {}]
  %s19 = sld [smem:[#allocation0]]
  $region133: #{tpu_custom_call.1} parent=0
    _
  %s21 = ssub.s32 1, %s19
  %s22 = scalar_select 0, %s21, %s19
  $region1: #{tpu_custom_call.1} parent=0
    #allocation3 [shape = 'u8[4096]{0}', space=vmem, size = 0x1000, scoped, tag = 'input window, operand 1, single buffered']
    #allocation4 [shape = 's32[2]{0}', space=sflag, size = 0x8, scoped, tag = 'scoped memory for tpu_custom_call.1']
    #allocation5 [shape = 's32[2]{0}', space=sflag, size = 0x8, scoped, tag = 'scoped memory for tpu_custom_call.1']
    #allocation6 [shape = 'u8[512]{0}', space=vmem, size = 0x400, scoped, tag = 'input window, operand 4, single buffered']
    #allocation7 [shape = 's32[1]{0}', space=sflag, size = 0x4, scoped, tag = 'scoped memory for tpu_custom_call.1']
    #allocation8 [shape = 'u8[4096]{0}', space=vmem, size = 0x1000, scoped, tag = 'input window, operand 5, single buffered']
    #allocation9 [shape = 'u8[512]{0}', space=vmem, size = 0x400, scoped, tag = 'input window, operand 7, single buffered']
    #allocation10 [shape = 's32[1]{0}', space=sflag, size = 0x4, scoped, tag = 'scoped memory for tpu_custom_call.1']
    #allocation11 [shape = 'u8[512]{0}', space=vmem, size = 0x400, scoped, tag = 'input window, operand 9, single buffered']
    #allocation12 [shape = 'u8[8192]{0}', space=vmem, size = 0x2000, scoped, tag = 'output window, operand 0']
    %23 = vsyncpa [#allocation4], 0
    %24 = vsyncpa [#allocation7], 0
    %25 = vsyncpa [#allocation10], 0
    %26 = vsyncpa [#allocation5], 0
    %s27 = scalar_lea.sflag [#allocation5], 1
    %28 = vsyncpa %s27, 0
    loop: start=0, step=1, limit=6
    $region2: #{tpu_custom_call.1} parent=1 // loop_pre_header
      _
    $region3: #{tpu_custom_call.1} parent=1 // loop_header
      %s30 = sphi 0, %s34
      %p31 = scmp.ge.s32.totalorder %s30, 6
      %s37 = sphi 0, %s49
      %s38 = sphi 0, %s45
      %s39 = sphi 0, %s37
      %s40 = sphi 0, %s38
      %s41 = sphi 0, %s39
      %s42 = sphi 0, %s40
      %s52 = sphi 0, %s54
      %s55 = sphi 0, %s52
      %s56 = sphi 0, %s55
      %s72 = sphi 0, %s56
      %s76 = sphi 0, %s76
      %s78 = sphi 0, %s76
      %s79 = sphi 0, %s78
      %s93 = sphi 0, %s79
      %s97 = sphi 0, %s97
      %s99 = sphi 0, %s97
      %s100 = sphi 0, %s99
      %s114 = sphi 0, %s100
      %s118 = sphi 0, %s118
      %s120 = sphi 0, %s118
      %s121 = sphi 0, %s120
      %s135 = sphi 0, %s121
      %s139 = sphi 0, %s139
      %s141 = sphi 0, %s139
      %s142 = sphi 0, %s141
      %s156 = sphi 0, %s142
      %s160 = sphi 0, %s160
      %s162 = sphi 0, %s160
      %s163 = sphi 0, %s162
      %s177 = sphi 0, %s163
      %s181 = sphi 0, %s181
      %s183 = sphi 0, %s181
      %s184 = sphi 0, %s183
      %s198 = sphi 0, %s184
      %s202 = sphi 0, %s202
      %s204 = sphi 0, %s202
      %s205 = sphi 0, %s204
      %s219 = sphi 0, %s205
      %s223 = sphi 0, %s223
      %s225 = sphi 0, %s223
      %s226 = sphi 0, %s225
      %s240 = sphi 0, %s226
      %s244 = sphi 0, %s244
      %s246 = sphi 0, %s244
      %s247 = sphi 0, %s246
      %s261 = sphi 0, %s247
      %s265 = sphi 0, %s265
      %s267 = sphi 0, %s265
      %s268 = sphi 0, %s267
      %s282 = sphi 0, %s268
      %s286 = sphi 0, %s286
      %s288 = sphi 0, %s286
      %s289 = sphi 0, %s288
      %s303 = sphi 0, %s289
      %s307 = sphi 0, %s307
      %s309 = sphi 0, %s307
      %s310 = sphi 0, %s309
      %s324 = sphi 0, %s310
      %s328 = sphi 0, %s328
      %s330 = sphi 0, %s328
      %s331 = sphi 0, %s330
      %s345 = sphi 0, %s331
      %s349 = sphi 0, %s349
      %s351 = sphi 0, %s349
      %s352 = sphi 0, %s351
      %s366 = sphi 0, %s352
      %s370 = sphi 0, %s370
      %s372 = sphi 0, %s370
      %s373 = sphi 0, %s372
      %s387 = sphi 0, %s373
      %s391 = sphi 0, %s391
      %s393 = sphi 0, %s391
      %s394 = sphi 0, %s393
      %s408 = sphi 0, %s394
      %s412 = sphi 0, %s412
      %s414 = sphi 0, %s412
      %s415 = sphi 0, %s414
      %s429 = sphi 0, %s415
      %s435 = sphi 0, %s437
      %s438 = sphi 0, %s435
      %s439 = sphi 0, %s438
      %s455 = sphi 0, %s439
    $region4: #{tpu_custom_call.1} parent=1 // loop_header_branch
      %33 = sbr.rel (%p31) target = $region8
    $region5: #{tpu_custom_call.1} parent=1 // loop_body
      %s35 = ssub.s32 %s30, 1
      %s36 = ssub.s32 %s30, 2
      %s43 = sadd.s32 1, %s38
      %p44 = scmp.ge.s32.totalorder %s43, 2
      %s45 = scalar_select %p44, 0, %s43
      %s46 = sadd.s32 1, %s37
      %s47 = scalar_select %p44, %s46, %s37
      %p48 = scmp.ge.s32.totalorder %s47, 2
      %s49 = scalar_select %p48, 0, %s47
      %s50 = ssub.s32 %s37, %s49
      %p51 = scmp.eq.s32.totalorder %s50, 0
      %s53 = sadd.s32 %s52, 1
      %s54 = scalar_select %p51, %s52, %s53
      %p57 = pneg %p51
      %p58 = scmp.eq.s32.totalorder %s30, 3
      %p59 = por %p57, %p58
      %p60 = scmp.ne.s32.totalorder %s52, %s55
      %p61 = scmp.eq.s32.totalorder %s30, 0
      %p62 = por %p60, %p61
      %p63 = scmp.ne.s32.totalorder %s52, %s55
      %p64 = scmp.eq.s32.totalorder %s35, 3
      %p65 = por %p63, %p64
      %p66 = scmp.ne.s32.totalorder %s55, %s56
      %p67 = scmp.eq.s32.totalorder %s35, 0
      %p68 = por %p66, %p67
      %p69 = scmp.ne.s32.totalorder %s55, %s56
      %p70 = scmp.eq.s32.totalorder %s36, 3
      %p71 = por %p69, %p70
      %p73 = scmp.ne.s32.totalorder %s56, %s72
      %p74 = scmp.eq.s32.totalorder %s36, 0
      %p75 = por %p73, %p74
      %s77 = sadd.s32 %s76, 1
      %p80 = scmp.eq.s32.totalorder %s30, 3
      %p81 = scmp.ne.s32.totalorder %s76, %s78
      %p82 = scmp.eq.s32.totalorder %s30, 0
      %p83 = por %p81, %p82
      %p84 = scmp.ne.s32.totalorder %s76, %s78
      %p85 = scmp.eq.s32.totalorder %s35, 3
      %p86 = por %p84, %p85
      %p87 = scmp.ne.s32.totalorder %s78, %s79
      %p88 = scmp.eq.s32.totalorder %s35, 0
      %p89 = por %p87, %p88
      %p90 = scmp.ne.s32.totalorder %s78, %s79
      %p91 = scmp.eq.s32.totalorder %s36, 3
      %p92 = por %p90, %p91
      %p94 = scmp.ne.s32.totalorder %s79, %s93
      %p95 = scmp.eq.s32.totalorder %s36, 0
      %p96 = por %p94, %p95
      %s98 = sadd.s32 %s97, 1
      %p101 = scmp.eq.s32.totalorder %s30, 3
      %p102 = scmp.ne.s32.totalorder %s97, %s99
      %p103 = scmp.eq.s32.totalorder %s30, 0
      %p104 = por %p102, %p103
      %p105 = scmp.ne.s32.totalorder %s97, %s99
      %p106 = scmp.eq.s32.totalorder %s35, 3
      %p107 = por %p105, %p106
      %p108 = scmp.ne.s32.totalorder %s99, %s100
      %p109 = scmp.eq.s32.totalorder %s35, 0
      %p110 = por %p108, %p109
      %p111 = scmp.ne.s32.totalorder %s99, %s100
      %p112 = scmp.eq.s32.totalorder %s36, 3
      %p113 = por %p111, %p112
      %p115 = scmp.ne.s32.totalorder %s100, %s114
      %p116 = scmp.eq.s32.totalorder %s36, 0
      %p117 = por %p115, %p116
      %s119 = sadd.s32 %s118, 1
      %p122 = scmp.eq.s32.totalorder %s30, 3
      %p123 = scmp.ne.s32.totalorder %s118, %s120
      %p124 = scmp.eq.s32.totalorder %s30, 0
      %p125 = por %p123, %p124
      %p126 = scmp.ne.s32.totalorder %s118, %s120
      %p127 = scmp.eq.s32.totalorder %s35, 3
      %p128 = por %p126, %p127
      %p129 = scmp.ne.s32.totalorder %s120, %s121
      %p130 = scmp.eq.s32.totalorder %s35, 0
      %p131 = por %p129, %p130
      %p132 = scmp.ne.s32.totalorder %s120, %s121
      %p133 = scmp.eq.s32.totalorder %s36, 3
      %p134 = por %p132, %p133
      %p136 = scmp.ne.s32.totalorder %s121, %s135
      %p137 = scmp.eq.s32.totalorder %s36, 0
      %p138 = por %p136, %p137
      %s140 = sadd.s32 %s139, 1
      %p143 = scmp.eq.s32.totalorder %s30, 3
      %p144 = scmp.ne.s32.totalorder %s139, %s141
      %p145 = scmp.eq.s32.totalorder %s30, 0
      %p146 = por %p144, %p145
      %p147 = scmp.ne.s32.totalorder %s139, %s141
      %p148 = scmp.eq.s32.totalorder %s35, 3
      %p149 = por %p147, %p148
      %p150 = scmp.ne.s32.totalorder %s141, %s142
      %p151 = scmp.eq.s32.totalorder %s35, 0
      %p152 = por %p150, %p151
      %p153 = scmp.ne.s32.totalorder %s141, %s142
      %p154 = scmp.eq.s32.totalorder %s36, 3
      %p155 = por %p153, %p154
      %p157 = scmp.ne.s32.totalorder %s142, %s156
      %p158 = scmp.eq.s32.totalorder %s36, 0
      %p159 = por %p157, %p158
      %s161 = sadd.s32 %s160, 1
      %p164 = scmp.eq.s32.totalorder %s30, 3
      %p165 = scmp.ne.s32.totalorder %s160, %s162
      %p166 = scmp.eq.s32.totalorder %s30, 0
      %p167 = por %p165, %p166
      %p168 = scmp.ne.s32.totalorder %s160, %s162
      %p169 = scmp.eq.s32.totalorder %s35, 3
      %p170 = por %p168, %p169
      %p171 = scmp.ne.s32.totalorder %s162, %s163
      %p172 = scmp.eq.s32.totalorder %s35, 0
      %p173 = por %p171, %p172
      %p174 = scmp.ne.s32.totalorder %s162, %s163
      %p175 = scmp.eq.s32.totalorder %s36, 3
      %p176 = por %p174, %p175
      %p178 = scmp.ne.s32.totalorder %s163, %s177
      %p179 = scmp.eq.s32.totalorder %s36, 0
      %p180 = por %p178, %p179
      %s182 = sadd.s32 %s181, 1
      %p185 = scmp.eq.s32.totalorder %s30, 3
      %p186 = scmp.ne.s32.totalorder %s181, %s183
      %p187 = scmp.eq.s32.totalorder %s30, 0
      %p188 = por %p186, %p187
      %p189 = scmp.ne.s32.totalorder %s181, %s183
      %p190 = scmp.eq.s32.totalorder %s35, 3
      %p191 = por %p189, %p190
      %p192 = scmp.ne.s32.totalorder %s183, %s184
      %p193 = scmp.eq.s32.totalorder %s35, 0
      %p194 = por %p192, %p193
      %p195 = scmp.ne.s32.totalorder %s183, %s184
      %p196 = scmp.eq.s32.totalorder %s36, 3
      %p197 = por %p195, %p196
      %p199 = scmp.ne.s32.totalorder %s184, %s198
      %p200 = scmp.eq.s32.totalorder %s36, 0
      %p201 = por %p199, %p200
      %s203 = sadd.s32 %s202, 1
      %p206 = scmp.eq.s32.totalorder %s30, 3
      %p207 = scmp.ne.s32.totalorder %s202, %s204
      %p208 = scmp.eq.s32.totalorder %s30, 0
      %p209 = por %p207, %p208
      %p210 = scmp.ne.s32.totalorder %s202, %s204
      %p211 = scmp.eq.s32.totalorder %s35, 3
      %p212 = por %p210, %p211
      %p213 = scmp.ne.s32.totalorder %s204, %s205
      %p214 = scmp.eq.s32.totalorder %s35, 0
      %p215 = por %p213, %p214
      %p216 = scmp.ne.s32.totalorder %s204, %s205
      %p217 = scmp.eq.s32.totalorder %s36, 3
      %p218 = por %p216, %p217
      %p220 = scmp.ne.s32.totalorder %s205, %s219
      %p221 = scmp.eq.s32.totalorder %s36, 0
      %p222 = por %p220, %p221
      %s224 = sadd.s32 %s223, 1
      %p227 = scmp.eq.s32.totalorder %s30, 3
      %p228 = scmp.ne.s32.totalorder %s223, %s225
      %p229 = scmp.eq.s32.totalorder %s30, 0
      %p230 = por %p228, %p229
      %p231 = scmp.ne.s32.totalorder %s223, %s225
      %p232 = scmp.eq.s32.totalorder %s35, 3
      %p233 = por %p231, %p232
      %p234 = scmp.ne.s32.totalorder %s225, %s226
      %p235 = scmp.eq.s32.totalorder %s35, 0
      %p236 = por %p234, %p235
      %p237 = scmp.ne.s32.totalorder %s225, %s226
      %p238 = scmp.eq.s32.totalorder %s36, 3
      %p239 = por %p237, %p238
      %p241 = scmp.ne.s32.totalorder %s226, %s240
      %p242 = scmp.eq.s32.totalorder %s36, 0
      %p243 = por %p241, %p242
      %s245 = sadd.s32 %s244, 1
      %p248 = scmp.eq.s32.totalorder %s30, 3
      %p249 = scmp.ne.s32.totalorder %s244, %s246
      %p250 = scmp.eq.s32.totalorder %s30, 0
      %p251 = por %p249, %p250
      %p252 = scmp.ne.s32.totalorder %s244, %s246
      %p253 = scmp.eq.s32.totalorder %s35, 3
      %p254 = por %p252, %p253
      %p255 = scmp.ne.s32.totalorder %s246, %s247
      %p256 = scmp.eq.s32.totalorder %s35, 0
      %p257 = por %p255, %p256
      %p258 = scmp.ne.s32.totalorder %s246, %s247
      %p259 = scmp.eq.s32.totalorder %s36, 3
      %p260 = por %p258, %p259
      %p262 = scmp.ne.s32.totalorder %s247, %s261
      %p263 = scmp.eq.s32.totalorder %s36, 0
      %p264 = por %p262, %p263
      %s266 = sadd.s32 %s265, 1
      %p269 = scmp.eq.s32.totalorder %s30, 3
      %p270 = scmp.ne.s32.totalorder %s265, %s267
      %p271 = scmp.eq.s32.totalorder %s30, 0
      %p272 = por %p270, %p271
      %p273 = scmp.ne.s32.totalorder %s265, %s267
      %p274 = scmp.eq.s32.totalorder %s35, 3
      %p275 = por %p273, %p274
      %p276 = scmp.ne.s32.totalorder %s267, %s268
      %p277 = scmp.eq.s32.totalorder %s35, 0
      %p278 = por %p276, %p277
      %p279 = scmp.ne.s32.totalorder %s267, %s268
      %p280 = scmp.eq.s32.totalorder %s36, 3
      %p281 = por %p279, %p280
      %p283 = scmp.ne.s32.totalorder %s268, %s282
      %p284 = scmp.eq.s32.totalorder %s36, 0
      %p285 = por %p283, %p284
      %s287 = sadd.s32 %s286, 1
      %p290 = scmp.eq.s32.totalorder %s30, 3
      %p291 = scmp.ne.s32.totalorder %s286, %s288
      %p292 = scmp.eq.s32.totalorder %s30, 0
      %p293 = por %p291, %p292
      %p294 = scmp.ne.s32.totalorder %s286, %s288
      %p295 = scmp.eq.s32.totalorder %s35, 3
      %p296 = por %p294, %p295
      %p297 = scmp.ne.s32.totalorder %s288, %s289
      %p298 = scmp.eq.s32.totalorder %s35, 0
      %p299 = por %p297, %p298
      %p300 = scmp.ne.s32.totalorder %s288, %s289
      %p301 = scmp.eq.s32.totalorder %s36, 3
      %p302 = por %p300, %p301
      %p304 = scmp.ne.s32.totalorder %s289, %s303
      %p305 = scmp.eq.s32.totalorder %s36, 0
      %p306 = por %p304, %p305
      %s308 = sadd.s32 %s307, 1
      %p311 = scmp.eq.s32.totalorder %s30, 3
      %p312 = scmp.ne.s32.totalorder %s307, %s309
      %p313 = scmp.eq.s32.totalorder %s30, 0
      %p314 = por %p312, %p313
      %p315 = scmp.ne.s32.totalorder %s307, %s309
      %p316 = scmp.eq.s32.totalorder %s35, 3
      %p317 = por %p315, %p316
      %p318 = scmp.ne.s32.totalorder %s309, %s310
      %p319 = scmp.eq.s32.totalorder %s35, 0
      %p320 = por %p318, %p319
      %p321 = scmp.ne.s32.totalorder %s309, %s310
      %p322 = scmp.eq.s32.totalorder %s36, 3
      %p323 = por %p321, %p322
      %p325 = scmp.ne.s32.totalorder %s310, %s324
      %p326 = scmp.eq.s32.totalorder %s36, 0
      %p327 = por %p325, %p326
      %s329 = sadd.s32 %s328, 1
      %p332 = scmp.eq.s32.totalorder %s30, 3
      %p333 = scmp.ne.s32.totalorder %s328, %s330
      %p334 = scmp.eq.s32.totalorder %s30, 0
      %p335 = por %p333, %p334
      %p336 = scmp.ne.s32.totalorder %s328, %s330
      %p337 = scmp.eq.s32.totalorder %s35, 3
      %p338 = por %p336, %p337
      %p339 = scmp.ne.s32.totalorder %s330, %s331
      %p340 = scmp.eq.s32.totalorder %s35, 0
      %p341 = por %p339, %p340
      %p342 = scmp.ne.s32.totalorder %s330, %s331
      %p343 = scmp.eq.s32.totalorder %s36, 3
      %p344 = por %p342, %p343
      %p346 = scmp.ne.s32.totalorder %s331, %s345
      %p347 = scmp.eq.s32.totalorder %s36, 0
      %p348 = por %p346, %p347
      %s350 = sadd.s32 %s349, 1
      %p353 = scmp.eq.s32.totalorder %s30, 3
      %p354 = scmp.ne.s32.totalorder %s349, %s351
      %p355 = scmp.eq.s32.totalorder %s30, 0
      %p356 = por %p354, %p355
      %p357 = scmp.ne.s32.totalorder %s349, %s351
      %p358 = scmp.eq.s32.totalorder %s35, 3
      %p359 = por %p357, %p358
      %p360 = scmp.ne.s32.totalorder %s351, %s352
      %p361 = scmp.eq.s32.totalorder %s35, 0
      %p362 = por %p360, %p361
      %p363 = scmp.ne.s32.totalorder %s351, %s352
      %p364 = scmp.eq.s32.totalorder %s36, 3
      %p365 = por %p363, %p364
      %p367 = scmp.ne.s32.totalorder %s352, %s366
      %p368 = scmp.eq.s32.totalorder %s36, 0
      %p369 = por %p367, %p368
      %s371 = sadd.s32 %s370, 1
      %p374 = scmp.eq.s32.totalorder %s30, 3
      %p375 = scmp.ne.s32.totalorder %s370, %s372
      %p376 = scmp.eq.s32.totalorder %s30, 0
      %p377 = por %p375, %p376
      %p378 = scmp.ne.s32.totalorder %s370, %s372
      %p379 = scmp.eq.s32.totalorder %s35, 3
      %p380 = por %p378, %p379
      %p381 = scmp.ne.s32.totalorder %s372, %s373
      %p382 = scmp.eq.s32.totalorder %s35, 0
      %p383 = por %p381, %p382
      %p384 = scmp.ne.s32.totalorder %s372, %s373
      %p385 = scmp.eq.s32.totalorder %s36, 3
      %p386 = por %p384, %p385
      %p388 = scmp.ne.s32.totalorder %s373, %s387
      %p389 = scmp.eq.s32.totalorder %s36, 0
      %p390 = por %p388, %p389
      %s392 = sadd.s32 %s391, 1
      %p395 = scmp.eq.s32.totalorder %s30, 3
      %p396 = scmp.ne.s32.totalorder %s391, %s393
      %p397 = scmp.eq.s32.totalorder %s30, 0
      %p398 = por %p396, %p397
      %p399 = scmp.ne.s32.totalorder %s391, %s393
      %p400 = scmp.eq.s32.totalorder %s35, 3
      %p401 = por %p399, %p400
      %p402 = scmp.ne.s32.totalorder %s393, %s394
      %p403 = scmp.eq.s32.totalorder %s35, 0
      %p404 = por %p402, %p403
      %p405 = scmp.ne.s32.totalorder %s393, %s394
      %p406 = scmp.eq.s32.totalorder %s36, 3
      %p407 = por %p405, %p406
      %p409 = scmp.ne.s32.totalorder %s394, %s408
      %p410 = scmp.eq.s32.totalorder %s36, 0
      %p411 = por %p409, %p410
      %s413 = sadd.s32 %s412, 1
      %p416 = scmp.eq.s32.totalorder %s30, 3
      %p417 = scmp.ne.s32.totalorder %s412, %s414
      %p418 = scmp.eq.s32.totalorder %s30, 0
      %p419 = por %p417, %p418
      %p420 = scmp.ne.s32.totalorder %s412, %s414
      %p421 = scmp.eq.s32.totalorder %s35, 3
      %p422 = por %p420, %p421
      %p423 = scmp.ne.s32.totalorder %s414, %s415
      %p424 = scmp.eq.s32.totalorder %s35, 0
      %p425 = por %p423, %p424
      %p426 = scmp.ne.s32.totalorder %s414, %s415
      %p427 = scmp.eq.s32.totalorder %s36, 3
      %p428 = por %p426, %p427
      %p430 = scmp.ne.s32.totalorder %s415, %s429
      %p431 = scmp.eq.s32.totalorder %s36, 0
      %p432 = por %p430, %p431
      %s433 = ssub.s32 %s37, %s49
      %p434 = scmp.eq.s32.totalorder %s433, 0
      %s436 = sadd.s32 %s435, 1
      %s437 = scalar_select %p434, %s435, %s436
      %p440 = pneg %p434
      %p441 = scmp.eq.s32.totalorder %s30, 3
      %p442 = por %p440, %p441
      %p443 = scmp.ne.s32.totalorder %s435, %s438
      %p444 = scmp.eq.s32.totalorder %s30, 0
      %p445 = por %p443, %p444
      %p446 = scmp.ne.s32.totalorder %s435, %s438
      %p447 = scmp.eq.s32.totalorder %s35, 3
      %p448 = por %p446, %p447
      %p449 = scmp.ne.s32.totalorder %s438, %s439
      %p450 = scmp.eq.s32.totalorder %s35, 0
      %p451 = por %p449, %p450
      %p452 = scmp.ne.s32.totalorder %s438, %s439
      %p453 = scmp.eq.s32.totalorder %s36, 3
      %p454 = por %p452, %p453
      %p456 = scmp.ne.s32.totalorder %s439, %s455
      %p457 = scmp.eq.s32.totalorder %s36, 0
      %p458 = por %p456, %p457
      %p459 = scmp.le.s32.totalorder 1, %s30
      %p460 = scmp.lt.s32.totalorder %s30, 5
      %p461 = pnand %p459, %p460
      %p462 = pneg %p461
      // Predicated region
      $region9: #{tpu_custom_call.1} parent=5 // pred_check
        _
      $region10: #{tpu_custom_call.1} parent=5 // pred_check_branch
        %464 = sbr.rel (%p461) target = $region12
      $region11: #{tpu_custom_call.1} parent=5 // pred_region
        %s465 = ssub.s32 %s30, 1
        // Predicated region
        $region13: #{tpu_custom_call.1} parent=11 // pred_check
          %p466 = pneg %p68
        $region14: #{tpu_custom_call.1} parent=11 // pred_check_branch
          %468 = sbr.rel (%p466) target = $region16
        $region15: #{tpu_custom_call.1} parent=11 // pred_region
          %p469 = scmp.lt.s32.totalorder %s39, 1
          %s470 = scalar_select %p469, %s39, 1
          %s471 = smul.addr %s470, 8
          %s472 = scalar_lea.vmem %s0, %s471
        $region16: #{tpu_custom_call.1} parent=11 // pred_fallthru
          _
        // Predicated region
        $region17: #{tpu_custom_call.1} parent=11 // pred_check
          %p473 = pneg %p89
        $region18: #{tpu_custom_call.1} parent=11 // pred_check_branch
          %475 = sbr.rel (%p473) target = $region20
        $region19: #{tpu_custom_call.1} parent=11 // pred_region
          %s477 = ssub.s32 128, 128
          %478 = vsyncadd [#allocation4], %s477
          %s479 = sshll.u32 [#allocation3], 4
          %s480 = int_to_ptr.vmem [resolvable:$true] %s479
          %485 = dma.hbm_to_vmem [thread:$0]  %s1, 128, %s480, [#allocation4], 64, 64, 4
        $region20: #{tpu_custom_call.1} parent=11 // pred_fallthru
          _
        // Predicated region
        $region21: #{tpu_custom_call.1} parent=11 // pred_check
          %p486 = pneg %p110
        $region22: #{tpu_custom_call.1} parent=11 // pred_check_branch
          %488 = sbr.rel (%p486) target = $region24
        $region23: #{tpu_custom_call.1} parent=11 // pred_region
          _
        $region24: #{tpu_custom_call.1} parent=11 // pred_fallthru
          _
        // Predicated region
        $region25: #{tpu_custom_call.1} parent=11 // pred_check
          %p489 = pneg %p131
        $region26: #{tpu_custom_call.1} parent=11 // pred_check_branch
          %491 = sbr.rel (%p489) target = $region28
        $region27: #{tpu_custom_call.1} parent=11 // pred_region
          _
        $region28: #{tpu_custom_call.1} parent=11 // pred_fallthru
          _
        // Predicated region
        $region29: #{tpu_custom_call.1} parent=11 // pred_check
          %p492 = pneg %p152
        $region30: #{tpu_custom_call.1} parent=11 // pred_check_branch
          %494 = sbr.rel (%p492) target = $region32
        $region31: #{tpu_custom_call.1} parent=11 // pred_region
          %s496 = ssub.s32 16, 16
          %497 = vsyncadd [#allocation7], %s496
          %s499 = sshll.u32 [#allocation6], 4
          %s500 = int_to_ptr.vmem [resolvable:$true] %s499
          %502 = dma.hbm_to_vmem [thread:$0]  %s4, 16, %s500, [#allocation7]
        $region32: #{tpu_custom_call.1} parent=11 // pred_fallthru
          _
        // Predicated region
        $region33: #{tpu_custom_call.1} parent=11 // pred_check
          %p503 = pneg %p173
        $region34: #{tpu_custom_call.1} parent=11 // pred_check_branch
          %505 = sbr.rel (%p503) target = $region36
        $region35: #{tpu_custom_call.1} parent=11 // pred_region
          %s507 = ssub.s32 128, 128
          %508 = vsyncadd [#allocation7], %s507
          %s510 = sshll.u32 [#allocation8], 4
          %s511 = int_to_ptr.vmem [resolvable:$true] %s510
          %513 = dma.hbm_to_vmem [thread:$0]  %s5, 128, %s511, [#allocation7]
        $region36: #{tpu_custom_call.1} parent=11 // pred_fallthru
          _
        // Predicated region
        $region37: #{tpu_custom_call.1} parent=11 // pred_check
          %p514 = pneg %p194
        $region38: #{tpu_custom_call.1} parent=11 // pred_check_branch
          %516 = sbr.rel (%p514) target = $region40
        $region39: #{tpu_custom_call.1} parent=11 // pred_region
          _
        $region40: #{tpu_custom_call.1} parent=11 // pred_fallthru
          _
        // Predicated region
        $region41: #{tpu_custom_call.1} parent=11 // pred_check
          %p517 = pneg %p215
        $region42: #{tpu_custom_call.1} parent=11 // pred_check_branch
          %519 = sbr.rel (%p517) target = $region44
        $region43: #{tpu_custom_call.1} parent=11 // pred_region
          %s521 = ssub.s32 16, 16
          %522 = vsyncadd [#allocation10], %s521
          %s524 = sshll.u32 [#allocation9], 4
          %s525 = int_to_ptr.vmem [resolvable:$true] %s524
          %527 = dma.hbm_to_vmem [thread:$0]  %s7, 16, %s525, [#allocation10]
        $region44: #{tpu_custom_call.1} parent=11 // pred_fallthru
          _
        // Predicated region
        $region45: #{tpu_custom_call.1} parent=11 // pred_check
          %p528 = pneg %p236
        $region46: #{tpu_custom_call.1} parent=11 // pred_check_branch
          %530 = sbr.rel (%p528) target = $region48
        $region47: #{tpu_custom_call.1} parent=11 // pred_region
          _
        $region48: #{tpu_custom_call.1} parent=11 // pred_fallthru
          _
        // Predicated region
        $region49: #{tpu_custom_call.1} parent=11 // pred_check
          %p531 = pneg %p257
        $region50: #{tpu_custom_call.1} parent=11 // pred_check_branch
          %533 = sbr.rel (%p531) target = $region52
        $region51: #{tpu_custom_call.1} parent=11 // pred_region
          %s535 = ssub.s32 16, 16
          %536 = vsyncadd [#allocation10], %s535
          %s538 = sshll.u32 [#allocation11], 4
          %s539 = int_to_ptr.vmem [resolvable:$true] %s538
          %541 = dma.hbm_to_vmem [thread:$0]  %s9, 16, %s539, [#allocation10]
        $region52: #{tpu_custom_call.1} parent=11 // pred_fallthru
          _
        // Predicated region
        $region53: #{tpu_custom_call.1} parent=11 // pred_check
          %p542 = pneg %p278
        $region54: #{tpu_custom_call.1} parent=11 // pred_check_branch
          %544 = sbr.rel (%p542) target = $region56
        $region55: #{tpu_custom_call.1} parent=11 // pred_region
          _
        $region56: #{tpu_custom_call.1} parent=11 // pred_fallthru
          _
        // Predicated region
        $region57: #{tpu_custom_call.1} parent=11 // pred_check
          %p545 = pneg %p299
        $region58: #{tpu_custom_call.1} parent=11 // pred_check_branch
          %547 = sbr.rel (%p545) target = $region60
        $region59: #{tpu_custom_call.1} parent=11 // pred_region
          _
        $region60: #{tpu_custom_call.1} parent=11 // pred_fallthru
          _
        // Predicated region
        $region61: #{tpu_custom_call.1} parent=11 // pred_check
          %p548 = pneg %p320
        $region62: #{tpu_custom_call.1} parent=11 // pred_check_branch
          %550 = sbr.rel (%p548) target = $region64
        $region63: #{tpu_custom_call.1} parent=11 // pred_region
          _
        $region64: #{tpu_custom_call.1} parent=11 // pred_fallthru
          _
        // Predicated region
        $region65: #{tpu_custom_call.1} parent=11 // pred_check
          %p551 = pneg %p341
        $region66: #{tpu_custom_call.1} parent=11 // pred_check_branch
          %553 = sbr.rel (%p551) target = $region68
        $region67: #{tpu_custom_call.1} parent=11 // pred_region
          _
        $region68: #{tpu_custom_call.1} parent=11 // pred_fallthru
          _
        // Predicated region
        $region69: #{tpu_custom_call.1} parent=11 // pred_check
          %p554 = pneg %p362
        $region70: #{tpu_custom_call.1} parent=11 // pred_check_branch
          %556 = sbr.rel (%p554) target = $region72
        $region71: #{tpu_custom_call.1} parent=11 // pred_region
          _
        $region72: #{tpu_custom_call.1} parent=11 // pred_fallthru
          _
        // Predicated region
        $region73: #{tpu_custom_call.1} parent=11 // pred_check
          %p557 = pneg %p383
        $region74: #{tpu_custom_call.1} parent=11 // pred_check_branch
          %559 = sbr.rel (%p557) target = $region76
        $region75: #{tpu_custom_call.1} parent=11 // pred_region
          _
        $region76: #{tpu_custom_call.1} parent=11 // pred_fallthru
          _
        // Predicated region
        $region77: #{tpu_custom_call.1} parent=11 // pred_check
          %p560 = pneg %p404
        $region78: #{tpu_custom_call.1} parent=11 // pred_check_branch
          %562 = sbr.rel (%p560) target = $region80
        $region79: #{tpu_custom_call.1} parent=11 // pred_region
          _
        $region80: #{tpu_custom_call.1} parent=11 // pred_fallthru
          _
        // Predicated region
        $region81: #{tpu_custom_call.1} parent=11 // pred_check
          %p563 = pneg %p425
        $region82: #{tpu_custom_call.1} parent=11 // pred_check_branch
          %565 = sbr.rel (%p563) target = $region84
        $region83: #{tpu_custom_call.1} parent=11 // pred_region
          _
        $region84: #{tpu_custom_call.1} parent=11 // pred_fallthru
          _
      $region12: #{tpu_custom_call.1} parent=5 // pred_fallthru
        _
      %p566 = scmp.lt.s32.totalorder %s30, 4
      // Predicated region
      $region85: #{tpu_custom_call.1} parent=5 // pred_check
        %p567 = pneg %p566
      $region86: #{tpu_custom_call.1} parent=5 // pred_check_branch
        %569 = sbr.rel (%p567) target = $region88
      $region87: #{tpu_custom_call.1} parent=5 // pred_region
        _
      $region88: #{tpu_custom_call.1} parent=5 // pred_fallthru
        _
      %p570 = scmp.le.s32.totalorder 1, %s30
      %p571 = scmp.lt.s32.totalorder %s30, 5
      %p572 = pnand %p570, %p571
      %p573 = pneg %p572
      // Predicated region
      $region89: #{tpu_custom_call.1} parent=5 // pred_check
        _
      $region90: #{tpu_custom_call.1} parent=5 // pred_check_branch
        %575 = sbr.rel (%p572) target = $region92
      $region91: #{tpu_custom_call.1} parent=5 // pred_region
        %s576 = ssub.s32 %s30, 1
        // Predicated region
        $region93: #{tpu_custom_call.1} parent=91 // pred_check
          %p577 = pneg %p89
        $region94: #{tpu_custom_call.1} parent=91 // pred_check_branch
          %579 = sbr.rel (%p577) target = $region96
        $region95: #{tpu_custom_call.1} parent=91 // pred_region
          %580 = dma.done [#allocation4], 128
        $region96: #{tpu_custom_call.1} parent=91 // pred_fallthru
          _
        // Predicated region
        $region97: #{tpu_custom_call.1} parent=91 // pred_check
          %p581 = pneg %p152
        $region98: #{tpu_custom_call.1} parent=91 // pred_check_branch
          %583 = sbr.rel (%p581) target = $region100
        $region99: #{tpu_custom_call.1} parent=91 // pred_region
          %584 = dma.done [#allocation7], 16
        $region100: #{tpu_custom_call.1} parent=91 // pred_fallthru
          _
        // Predicated region
        $region101: #{tpu_custom_call.1} parent=91 // pred_check
          %p585 = pneg %p173
        $region102: #{tpu_custom_call.1} parent=91 // pred_check_branch
          %587 = sbr.rel (%p585) target = $region104
        $region103: #{tpu_custom_call.1} parent=91 // pred_region
          %588 = dma.done [#allocation7], 128
        $region104: #{tpu_custom_call.1} parent=91 // pred_fallthru
          _
        // Predicated region
        $region105: #{tpu_custom_call.1} parent=91 // pred_check
          %p589 = pneg %p215
        $region106: #{tpu_custom_call.1} parent=91 // pred_check_branch
          %591 = sbr.rel (%p589) target = $region108
        $region107: #{tpu_custom_call.1} parent=91 // pred_region
          %592 = dma.done [#allocation10], 16
        $region108: #{tpu_custom_call.1} parent=91 // pred_fallthru
          _
        // Predicated region
        $region109: #{tpu_custom_call.1} parent=91 // pred_check
          %p593 = pneg %p257
        $region110: #{tpu_custom_call.1} parent=91 // pred_check_branch
          %595 = sbr.rel (%p593) target = $region112
        $region111: #{tpu_custom_call.1} parent=91 // pred_region
          %596 = dma.done [#allocation10], 16
        $region112: #{tpu_custom_call.1} parent=91 // pred_fallthru
          _
        %p597 = scmp.lt.s32.totalorder %s39, 1
        %s598 = scalar_select %p597, %s39, 1
        %s599 = smul.addr %s598, 8
        %s600 = scalar_lea.vmem %s0, %s599
        %p601 = pneg %p68
        %p602 = pneg %p65
        %p603 = pneg %p89
        %p604 = pneg %p86
        %p605 = pneg %p110
        %p606 = pneg %p107
        %p607 = pneg %p131
        %p608 = pneg %p128
        %p609 = pneg %p152
        %p610 = pneg %p149
        %p611 = pneg %p173
        %p612 = pneg %p170
        %p613 = pneg %p194
        %p614 = pneg %p191
        %p615 = pneg %p215
        %p616 = pneg %p212
        %p617 = pneg %p236
        %p618 = pneg %p233
        %p619 = pneg %p257
        %p620 = pneg %p254
        %p621 = pneg %p278
        %p622 = pneg %p275
        %p623 = pneg %p299
        %p624 = pneg %p296
        %p625 = pneg %p320
        %p626 = pneg %p317
        %p627 = pneg %p341
        %p628 = pneg %p338
        %p629 = pneg %p362
        %p630 = pneg %p359
        %p631 = pneg %p383
        %p632 = pneg %p380
        %p633 = pneg %p404
        %p634 = pneg %p401
        %p635 = pneg %p425
        %p636 = pneg %p422
        %p637 = pneg %p451
        %p638 = pneg %p448
        %s639 = sand.u32 %s438, 1
        %s640 = scalar_lea.sflag [#allocation5], %s639
        %s641 = sand.u32 %s438, 1
        %s642 = smul.addr %s641, 8
        %s643 = scalar_lea.vmem [#allocation12], %s642
        %p644 = scmp.lt.s32.totalorder %s39, 1
        %s645 = scalar_select %p644, %s39, 1
        %s646 = smul.addr %s645, 8
        %s647 = scalar_lea.vmem %s0, %s646
        %p649 = scmp.eq.s32.totalorder %s40, 0
        // Predicated region
        $region113: #{tpu_custom_call.1} parent=91 // pred_check
          %p650 = pneg %p649
        $region114: #{tpu_custom_call.1} parent=91 // pred_check_branch
          %652 = sbr.rel (%p650) target = $region116
        $region115: #{tpu_custom_call.1} parent=91 // pred_region
          %v653 = vld [vmem:[%s647] sm:$0xff]
          %v654 = vpack.c.bf16 %v653, %v653
          %v655 = vld [vmem:[#allocation3] sm:$0xf]
          %v656 = vld [vmem:[#allocation3 + $0x4] sm:$0xf]
          %v657 = vld [vmem:[%s2] sm:$0x1]
          %v659 = vlaneseq
          %v660 = vshrl.u32 %v659, 7
          %v661 = vsub.s32 0, %v660
          %v662 = vrot.slane %v657, %v661
          %v666 = vunpack.c.l.b16 %v655
          %v667 = vunpack.c.l.b16 %v656
          %v668 = vpack.c.b16 %v667, %v666
          %vm670 = vcmask 130048
          %v672 = vsel %vm670, %v654, 0
          %674 = vmatprep.subr.bf16.mxu0 0
          %675 = vmatpush1.bf16.msra.mxu0 %v668
          %676 = vmatprep.subr.bf16.mxu0 0
          %677 = vmatpush1.bf16.msra.mxu0 0
          %678 = vmatprep.subr.bf16.mxu0 0
          %679 = vmatpush1.bf16.msra.mxu0 0
          %680 = vmatprep.subr.bf16.mxu0 0
          %681 = vmatpush1.bf16.msra.mxu0 0
          %682 = vmatprep.subr.bf16.mxu0 0
          %683 = vmatpush1.bf16.msra.mxu0 0
          %684 = vmatprep.subr.bf16.mxu0 0
          %685 = vmatpush1.bf16.msra.mxu0 0
          %686 = vmatprep.subr.bf16.mxu0 0
          %687 = vmatpush1.bf16.msra.mxu0 0
          %688 = vmatprep.subr.bf16.mxu0 0
          %689 = vmatpush1.bf16.msra.mxu0 0
          %690 = vmatprep.subr.bf16.mxu0 0
          %691 = vmatpush1.bf16.msra.mxu0 0
          %692 = vmatprep.subr.bf16.mxu0 0
          %693 = vmatpush1.bf16.msra.mxu0 0
          %694 = vmatprep.subr.bf16.mxu0 0
          %695 = vmatpush1.bf16.msra.mxu0 0
          %696 = vmatprep.subr.bf16.mxu0 0
          %697 = vmatpush1.bf16.msra.mxu0 0
          %698 = vmatprep.subr.bf16.mxu0 0
          %699 = vmatpush1.bf16.msra.mxu0 0
          %700 = vmatprep.subr.bf16.mxu0 0
          %701 = vmatpush1.bf16.msra.mxu0 0
          %702 = vmatprep.subr.bf16.mxu0 0
          %703 = vmatpush1.bf16.msra.mxu0 0
          %704 = vmatprep.subr.bf16.mxu0 0
          %705 = vmatpush1.bf16.msra.mxu0 0
          %706 = vmatprep.mubr.bf16.mxu0 0
          %707 = vmatmul.mubr.bf16.gmra.mrb[0].mxu0 %v672
          %v708 = vpop.f32.mrb[0].mxu0
          %v709 = vadd.f32 %v662, %v708
          %v710 = vpop.f32.mrb[0].mxu0
          %v711 = vpop.f32.mrb[0].mxu0
          %v712 = vpop.f32.mrb[0].mxu0
          %713 = vdwg.mxu0
          %v714 = vld [vmem:[%s3] sm:$0x1]
          %v715 = vld [vmem:[#allocation6] sm:$0x1]
          %vm716 = vcmask 261120
          %v717 = vsel %vm716, %v709, 0.0
          %718 = vadd.xlane.f32.xlu0 %v717
          %v719 = vpop.xlane.xlu0 %718
          %v720 = vmul.f32 %v709, %v709
          %v721 = vsel %vm716, %v720, 0.0
          %722 = vadd.xlane.f32.xlu0 %v721
          %v723 = vpop.xlane.xlu0 %722
          %v724 = vmul.f32 %v719, 0.03125
          %v725 = vmul.f32 %v723, 0.03125
          %v726 = vmul.f32 %v724, %v724
          %v727 = vsub.f32 %v725, %v726
          %v728 = vmax.f32 %v727, 0.0
          %v729 = vsub.f32 %v709, %v724
          %v730 = vadd.f32 %v728, 1e-12
          %v731 = vrsqrt.pop %v730
          %v732 = vmul.f32 %v729, %v731
          %v734 = vlaneseq
          %v735 = vshrl.u32 %v734, 7
          %v736 = vsub.s32 0, %v735
          %v737 = vrot.slane %v714, %v736
          %v739 = vmul.f32 %v737, %v732
          %v741 = vlaneseq
          %v742 = vshrl.u32 %v741, 7
          %v743 = vsub.s32 0, %v742
          %v744 = vrot.slane %v715, %v743
          %v746 = vadd.f32 %v739, %v744
          %v747 = vld [vmem:[#allocation8] sm:$0xff]
          %v748 = vadd.f32 %v746, %v747
          %v749 = vsel %vm716, %v748, 0.0
          %750 = vadd.xlane.f32.xlu0 %v749
          %v751 = vpop.xlane.xlu0 %750
          %v752 = vmul.f32 %v748, %v748
          %v753 = vsel %vm716, %v752, 0.0
          %754 = vadd.xlane.f32.xlu0 %v753
          %v755 = vpop.xlane.xlu0 %754
          %v756 = vmul.f32 %v751, 0.03125
          %v757 = vmul.f32 %v755, 0.03125
          %v758 = vmul.f32 %v756, %v756
          %v759 = vsub.f32 %v757, %v758
          %v760 = vmax.f32 %v759, 0.0
          %v761 = vsub.f32 %v748, %v756
          %v762 = vadd.f32 %v760, 1e-12
          %v763 = vrsqrt.pop %v762
          %v764 = vmul.f32 %v761, %v763
          %v765 = vmul.f32 %v737, %v764
          %v766 = vadd.f32 %v765, %v744
          %767 = vst.msk [vmem:[#allocation2] sm:$0xff] %vm716, %v766
        $region116: #{tpu_custom_call.1} parent=91 // pred_fallthru
          _
        %v768 = vld [vmem:[#allocation2] sm:$0xff]
        %v769 = vpack.c.bf16 %v768, %v768
        %v770 = vld [vmem:[%s6] sm:$0xf]
        %v771 = vld [vmem:[%s6 + $0x4] sm:$0xf]
        %v772 = vld [vmem:[%s6 + $0x8] sm:$0xf]
        %v773 = vld [vmem:[%s6 + $0xc] sm:$0xf]
        %v774 = vld [vmem:[#allocation9] sm:$0x1]
        %v776 = vlaneseq
        %v777 = vshrl.u32 %v776, 7
        %v778 = vsub.s32 0, %v777
        %v779 = vrot.slane %v774, %v778
        %v785 = vunpack.c.l.b16 %v770
        %v786 = vunpack.c.l.b16 %v771
        %v787 = vunpack.c.l.b16 %v772
        %v788 = vunpack.c.l.b16 %v773
        %v789 = vpack.c.b16 %v786, %v785
        %v790 = vpack.c.b16 %v788, %v787
        %vm793 = vcmask 261120
        %v795 = vsel %vm793, %v769, 0
        %797 = vmatprep.subr.bf16.mxu0 0
        %798 = vmatpush1.bf16.msra.mxu0 %v789
        %799 = vmatprep.subr.bf16.mxu0 0
        %800 = vmatpush1.bf16.msra.mxu0 %v790
        %801 = vmatprep.subr.bf16.mxu0 0
        %802 = vmatpush1.bf16.msra.mxu0 0
        %803 = vmatprep.subr.bf16.mxu0 0
        %804 = vmatpush1.bf16.msra.mxu0 0
        %805 = vmatprep.subr.bf16.mxu0 0
        %806 = vmatpush1.bf16.msra.mxu0 0
        %807 = vmatprep.subr.bf16.mxu0 0
        %808 = vmatpush1.bf16.msra.mxu0 0
        %809 = vmatprep.subr.bf16.mxu0 0
        %810 = vmatpush1.bf16.msra.mxu0 0
        %811 = vmatprep.subr.bf16.mxu0 0
        %812 = vmatpush1.bf16.msra.mxu0 0
        %813 = vmatprep.subr.bf16.mxu0 0
        %814 = vmatpush1.bf16.msra.mxu0 0
        %815 = vmatprep.subr.bf16.mxu0 0
        %816 = vmatpush1.bf16.msra.mxu0 0
        %817 = vmatprep.subr.bf16.mxu0 0
        %818 = vmatpush1.bf16.msra.mxu0 0
        %819 = vmatprep.subr.bf16.mxu0 0
        %820 = vmatpush1.bf16.msra.mxu0 0
        %821 = vmatprep.subr.bf16.mxu0 0
        %822 = vmatpush1.bf16.msra.mxu0 0
        %823 = vmatprep.subr.bf16.mxu0 0
        %824 = vmatpush1.bf16.msra.mxu0 0
        %825 = vmatprep.subr.bf16.mxu0 0
        %826 = vmatpush1.bf16.msra.mxu0 0
        %827 = vmatprep.subr.bf16.mxu0 0
        %828 = vmatpush1.bf16.msra.mxu0 0
        %829 = vmatprep.mubr.bf16.mxu0 0
        %830 = vmatmul.mubr.bf16.gmra.mrb[0].mxu0 %v795
        %v831 = vpop.f32.mrb[0].mxu0
        %v832 = vadd.f32 %v779, %v831
        %v833 = vpop.f32.mrb[0].mxu0
        %v834 = vpop.f32.mrb[0].mxu0
        %v835 = vpop.f32.mrb[0].mxu0
        %836 = vdwg.mxu0
        %838 = vrot.lane.b32.xlu0 %v832, 120
        %v839 = vpop.permute.xlu0 %838
        %841 = vrot.lane.b32.xlu0 %v832, 112
        %v842 = vpop.permute.xlu0 %841
        %844 = vrot.lane.b32.xlu0 %v832, 104
        %v845 = vpop.permute.xlu0 %844
        %v847 = vcombine.low %v832, %v842
        %v848 = vcombine.high %v832, %v842
        %v850 = vunpack.c.l.s4 1983009808
        %v851 = vunpack.c.0.s8 %v850
        %v852 = vlaneseq
        %v853 = vshrl.u32 %v852, 7
        %v854 = vsub.s32 %v851, %v853
        %v855 = vrot.slane %v847, %v854
        %v857 = vunpack.c.l.s4 1983009808
        %v858 = vunpack.c.0.s8 %v857
        %v859 = vlaneseq
        %v860 = vshrl.u32 %v859, 7
        %v861 = vsub.s32 %v858, %v860
        %v862 = vrot.slane %v848, %v861
        %v863 = vcombine.low %v839, %v845
        %v864 = vcombine.high %v839, %v845
        %v866 = vunpack.c.l.s4 1983009808
        %v867 = vunpack.c.0.s8 %v866
        %v868 = vlaneseq
        %v869 = vshrl.u32 %v868, 7
        %v870 = vsub.s32 %v867, %v869
        %v871 = vrot.slane %v863, %v870
        %v873 = vunpack.c.l.s4 1983009808
        %v874 = vunpack.c.0.s8 %v873
        %v875 = vlaneseq
        %v876 = vshrl.u32 %v875, 7
        %v877 = vsub.s32 %v874, %v876
        %v878 = vrot.slane %v864, %v877
        %v879 = vcombine.low %v855, %v871
        %v880 = vcombine.high %v855, %v871
        %v882 = vunpack.c.l.s4 1934713408
        %v883 = vunpack.c.0.s8 %v882
        %v884 = vlaneseq
        %v885 = vshrl.u32 %v884, 7
        %v886 = vsub.s32 %v883, %v885
        %v887 = vrot.slane %v879, %v886
        %v889 = vunpack.c.l.s4 1934713408
        %v890 = vunpack.c.0.s8 %v889
        %v891 = vlaneseq
        %v892 = vshrl.u32 %v891, 7
        %v893 = vsub.s32 %v890, %v892
        %v894 = vrot.slane %v880, %v893
        %v895 = vcombine.low %v862, %v878
        %v896 = vcombine.high %v862, %v878
        %v898 = vunpack.c.l.s4 1934713408
        %v899 = vunpack.c.0.s8 %v898
        %v900 = vlaneseq
        %v901 = vshrl.u32 %v900, 7
        %v902 = vsub.s32 %v899, %v901
        %v903 = vrot.slane %v895, %v902
        %v905 = vunpack.c.l.s4 1934713408
        %v906 = vunpack.c.0.s8 %v905
        %v907 = vlaneseq
        %v908 = vshrl.u32 %v907, 7
        %v909 = vsub.s32 %v906, %v908
        %v910 = vrot.slane %v896, %v909
        %v911 = vcombine.high %v887, 0.0
        %v912 = vcombine.high %v894, 0.0
        %v913 = vcombine.high %v903, 0.0
        %v914 = vcombine.high %v910, 0.0
        %v915 = vpack.c.bf16 %v887, %v887
        %v916 = vpack.c.bf16 %v911, %v911
        %v917 = vpack.c.bf16 %v894, %v894
        %v918 = vpack.c.bf16 %v912, %v912
        %v919 = vpack.c.bf16 %v903, %v903
        %v920 = vpack.c.bf16 %v913, %v913
        %v921 = vpack.c.bf16 %v910, %v910
        %v922 = vpack.c.bf16 %v914, %v914
        %923 = vrot.lane.b32.xlu0 %v832, 96
        %v924 = vpop.permute.xlu0 %923
        %925 = vrot.lane.b32.xlu0 %v839, 96
        %v926 = vpop.permute.xlu0 %925
        %927 = vrot.lane.b32.xlu0 %v842, 96
        %v928 = vpop.permute.xlu0 %927
        %929 = vrot.lane.b32.xlu0 %v845, 96
        %v930 = vpop.permute.xlu0 %929
        %v935 = vcombine.low %v924, %v928
        %v936 = vcombine.high %v924, %v928
        %v938 = vunpack.c.l.s4 1983009808
        %v939 = vunpack.c.0.s8 %v938
        %v940 = vlaneseq
        %v941 = vshrl.u32 %v940, 7
        %v942 = vsub.s32 %v939, %v941
        %v943 = vrot.slane %v935, %v942
        %v945 = vunpack.c.l.s4 1983009808
        %v946 = vunpack.c.0.s8 %v945
        %v947 = vlaneseq
        %v948 = vshrl.u32 %v947, 7
        %v949 = vsub.s32 %v946, %v948
        %v950 = vrot.slane %v936, %v949
        %v951 = vcombine.low %v926, %v930
        %v952 = vcombine.high %v926, %v930
        %v954 = vunpack.c.l.s4 1983009808
        %v955 = vunpack.c.0.s8 %v954
        %v956 = vlaneseq
        %v957 = vshrl.u32 %v956, 7
        %v958 = vsub.s32 %v955, %v957
        %v959 = vrot.slane %v951, %v958
        %v961 = vunpack.c.l.s4 1983009808
        %v962 = vunpack.c.0.s8 %v961
        %v963 = vlaneseq
        %v964 = vshrl.u32 %v963, 7
        %v965 = vsub.s32 %v962, %v964
        %v966 = vrot.slane %v952, %v965
        %v967 = vcombine.low %v943, %v959
        %v968 = vcombine.high %v943, %v959
        %v970 = vunpack.c.l.s4 1934713408
        %v971 = vunpack.c.0.s8 %v970
        %v972 = vlaneseq
        %v973 = vshrl.u32 %v972, 7
        %v974 = vsub.s32 %v971, %v973
        %v975 = vrot.slane %v967, %v974
        %v977 = vunpack.c.l.s4 1934713408
        %v978 = vunpack.c.0.s8 %v977
        %v979 = vlaneseq
        %v980 = vshrl.u32 %v979, 7
        %v981 = vsub.s32 %v978, %v980
        %v982 = vrot.slane %v968, %v981
        %v983 = vcombine.low %v950, %v966
        %v984 = vcombine.high %v950, %v966
        %v986 = vunpack.c.l.s4 1934713408
        %v987 = vunpack.c.0.s8 %v986
        %v988 = vlaneseq
        %v989 = vshrl.u32 %v988, 7
        %v990 = vsub.s32 %v987, %v989
        %v991 = vrot.slane %v983, %v990
        %v993 = vunpack.c.l.s4 1934713408
        %v994 = vunpack.c.0.s8 %v993
        %v995 = vlaneseq
        %v996 = vshrl.u32 %v995, 7
        %v997 = vsub.s32 %v994, %v996
        %v998 = vrot.slane %v984, %v997
        %v999 = vcombine.high %v975, 0.0
        %v1000 = vcombine.high %v982, 0.0
        %v1001 = vcombine.high %v991, 0.0
        %v1002 = vcombine.high %v998, 0.0
        %v1003 = vpack.c.bf16 %v975, %v975
        %v1004 = vpack.c.bf16 %v999, %v999
        %v1005 = vpack.c.bf16 %v982, %v982
        %v1006 = vpack.c.bf16 %v1000, %v1000
        %v1007 = vpack.c.bf16 %v991, %v991
        %v1008 = vpack.c.bf16 %v1001, %v1001
        %v1009 = vpack.c.bf16 %v998, %v998
        %v1010 = vpack.c.bf16 %v1002, %v1002
        %1011 = vrot.lane.b32.xlu0 %v832, 64
        %v1012 = vpop.permute.xlu0 %1011
        %1013 = vrot.lane.b32.xlu0 %v839, 64
        %v1014 = vpop.permute.xlu0 %1013
        %1015 = vrot.lane.b32.xlu0 %v842, 64
        %v1016 = vpop.permute.xlu0 %1015
        %1017 = vrot.lane.b32.xlu0 %v845, 64
        %v1018 = vpop.permute.xlu0 %1017
        %v1023 = vcombine.low %v1012, %v1016
        %v1024 = vcombine.high %v1012, %v1016
        %v1026 = vunpack.c.l.s4 1983009808
        %v1027 = vunpack.c.0.s8 %v1026
        %v1028 = vlaneseq
        %v1029 = vshrl.u32 %v1028, 7
        %v1030 = vsub.s32 %v1027, %v1029
        %v1031 = vrot.slane %v1023, %v1030
        %v1033 = vunpack.c.l.s4 1983009808
        %v1034 = vunpack.c.0.s8 %v1033
        %v1035 = vlaneseq
        %v1036 = vshrl.u32 %v1035, 7
        %v1037 = vsub.s32 %v1034, %v1036
        %v1038 = vrot.slane %v1024, %v1037
        %v1039 = vcombine.low %v1014, %v1018
        %v1040 = vcombine.high %v1014, %v1018
        %v1042 = vunpack.c.l.s4 1983009808
        %v1043 = vunpack.c.0.s8 %v1042
        %v1044 = vlaneseq
        %v1045 = vshrl.u32 %v1044, 7
        %v1046 = vsub.s32 %v1043, %v1045
        %v1047 = vrot.slane %v1039, %v1046
        %v1049 = vunpack.c.l.s4 1983009808
        %v1050 = vunpack.c.0.s8 %v1049
        %v1051 = vlaneseq
        %v1052 = vshrl.u32 %v1051, 7
        %v1053 = vsub.s32 %v1050, %v1052
        %v1054 = vrot.slane %v1040, %v1053
        %v1055 = vcombine.low %v1031, %v1047
        %v1056 = vcombine.high %v1031, %v1047
        %v1058 = vunpack.c.l.s4 1934713408
        %v1059 = vunpack.c.0.s8 %v1058
        %v1060 = vlaneseq
        %v1061 = vshrl.u32 %v1060, 7
        %v1062 = vsub.s32 %v1059, %v1061
        %v1063 = vrot.slane %v1055, %v1062
        %v1065 = vunpack.c.l.s4 1934713408
        %v1066 = vunpack.c.0.s8 %v1065
        %v1067 = vlaneseq
        %v1068 = vshrl.u32 %v1067, 7
        %v1069 = vsub.s32 %v1066, %v1068
        %v1070 = vrot.slane %v1056, %v1069
        %v1071 = vcombine.low %v1038, %v1054
        %v1072 = vcombine.high %v1038, %v1054
        %v1074 = vunpack.c.l.s4 1934713408
        %v1075 = vunpack.c.0.s8 %v1074
        %v1076 = vlaneseq
        %v1077 = vshrl.u32 %v1076, 7
        %v1078 = vsub.s32 %v1075, %v1077
        %v1079 = vrot.slane %v1071, %v1078
        %v1081 = vunpack.c.l.s4 1934713408
        %v1082 = vunpack.c.0.s8 %v1081
        %v1083 = vlaneseq
        %v1084 = vshrl.u32 %v1083, 7
        %v1085 = vsub.s32 %v1082, %v1084
        %v1086 = vrot.slane %v1072, %v1085
        %v1087 = vcombine.high %v1063, 0.0
        %v1088 = vcombine.high %v1070, 0.0
        %v1089 = vcombine.high %v1079, 0.0
        %v1090 = vcombine.high %v1086, 0.0
        %v1091 = vpack.c.bf16 %v1063, %v1063
        %v1092 = vpack.c.bf16 %v1087, %v1087
        %v1093 = vpack.c.bf16 %v1070, %v1070
        %v1094 = vpack.c.bf16 %v1088, %v1088
        %v1095 = vpack.c.bf16 %v1079, %v1079
        %v1096 = vpack.c.bf16 %v1089, %v1089
        %v1097 = vpack.c.bf16 %v1086, %v1086
        %v1098 = vpack.c.bf16 %v1090, %v1090
        %v1099 = vcombine.low %v915, %v919
        %v1101 = vunpack.c.l.s4 1983009808
        %v1102 = vunpack.c.0.s8 %v1101
        %v1103 = vlaneseq
        %v1104 = vshrl.u32 %v1103, 7
        %v1105 = vsub.s32 %v1102, %v1104
        %v1106 = vrot.slane %v1099, %v1105
        %v1107 = vcombine.low %v917, %v921
        %v1109 = vunpack.c.l.s4 1983009808
        %v1110 = vunpack.c.0.s8 %v1109
        %v1111 = vlaneseq
        %v1112 = vshrl.u32 %v1111, 7
        %v1113 = vsub.s32 %v1110, %v1112
        %v1114 = vrot.slane %v1107, %v1113
        %v1115 = vcombine.low %v1106, %v1114
        %v1117 = vunpack.c.l.s4 1934713408
        %v1118 = vunpack.c.0.s8 %v1117
        %v1119 = vlaneseq
        %v1120 = vshrl.u32 %v1119, 7
        %v1121 = vsub.s32 %v1118, %v1120
        %v1122 = vrot.slane %v1115, %v1121
        %v1123 = vcombine.high %v1122, 0
        %v1124 = vcombine.low %v916, %v920
        %v1126 = vunpack.c.l.s4 1983009808
        %v1127 = vunpack.c.0.s8 %v1126
        %v1128 = vlaneseq
        %v1129 = vshrl.u32 %v1128, 7
        %v1130 = vsub.s32 %v1127, %v1129
        %v1131 = vrot.slane %v1124, %v1130
        %v1132 = vcombine.low %v918, %v922
        %v1134 = vunpack.c.l.s4 1983009808
        %v1135 = vunpack.c.0.s8 %v1134
        %v1136 = vlaneseq
        %v1137 = vshrl.u32 %v1136, 7
        %v1138 = vsub.s32 %v1135, %v1137
        %v1139 = vrot.slane %v1132, %v1138
        %v1140 = vcombine.low %v1131, %v1139
        %v1142 = vunpack.c.l.s4 1934713408
        %v1143 = vunpack.c.0.s8 %v1142
        %v1144 = vlaneseq
        %v1145 = vshrl.u32 %v1144, 7
        %v1146 = vsub.s32 %v1143, %v1145
        %v1147 = vrot.slane %v1140, %v1146
        %v1148 = vcombine.high %v1147, 0
        %v1151 = vpack.i.b16 %v1147, %v1122
        %v1152 = vshrl.u32 %v1122, 16
        %v1153 = vshrl.u32 %v1147, 16
        %v1154 = vpack.i.b16 %v1153, %v1152
        %v1157 = vpack.i.b16 %v1148, %v1123
        %v1158 = vshrl.u32 %v1123, 16
        %v1159 = vshrl.u32 %v1148, 16
        %v1160 = vpack.i.b16 %v1159, %v1158
        %1161 = vxpose.xlu0.c.b16.start [1/8] %v1003, 128
        %1162 = vxpose.xlu0.c.b16.cont [2/8] 0, 128
        %1163 = vxpose.xlu0.c.b16.cont [3/8] 0, 128
        %1164 = vxpose.xlu0.c.b16.cont [4/8] 0, 128
        %1165 = vxpose.xlu0.c.b16.cont [5/8] 0, 128
        %1166 = vxpose.xlu0.c.b16.cont [6/8] 0, 128
        %1167 = vxpose.xlu0.c.b16.cont [7/8] 0, 128
        %1168 = vxpose.xlu0.c.b16.end [8/8] 0, 128
        %v1169 = vpop.trf.xlu0
        %v1170 = vpop.trf.xlu0
        %v1171 = vpop.trf.xlu0
        %v1172 = vpop.trf.xlu0
        %v1173 = vpop.trf.xlu0
        %v1174 = vpop.trf.xlu0
        %v1175 = vpop.trf.xlu0
        %v1176 = vpop.trf.xlu0
        %1177 = vxpose.xlu0.c.b16.start [1/8] %v1004, 128
        %1178 = vxpose.xlu0.c.b16.cont [2/8] 0, 128
        %1179 = vxpose.xlu0.c.b16.cont [3/8] 0, 128
        %1180 = vxpose.xlu0.c.b16.cont [4/8] 0, 128
        %1181 = vxpose.xlu0.c.b16.cont [5/8] 0, 128
        %1182 = vxpose.xlu0.c.b16.cont [6/8] 0, 128
        %1183 = vxpose.xlu0.c.b16.cont [7/8] 0, 128
        %1184 = vxpose.xlu0.c.b16.end [8/8] 0, 128
        %v1185 = vpop.trf.xlu0
        %v1186 = vpop.trf.xlu0
        %v1187 = vpop.trf.xlu0
        %v1188 = vpop.trf.xlu0
        %v1189 = vpop.trf.xlu0
        %v1190 = vpop.trf.xlu0
        %v1191 = vpop.trf.xlu0
        %v1192 = vpop.trf.xlu0
        %1193 = vxpose.xlu0.c.b16.start [1/8] %v1005, 128
        %1194 = vxpose.xlu0.c.b16.cont [2/8] 0, 128
        %1195 = vxpose.xlu0.c.b16.cont [3/8] 0, 128
        %1196 = vxpose.xlu0.c.b16.cont [4/8] 0, 128
        %1197 = vxpose.xlu0.c.b16.cont [5/8] 0, 128
        %1198 = vxpose.xlu0.c.b16.cont [6/8] 0, 128
        %1199 = vxpose.xlu0.c.b16.cont [7/8] 0, 128
        %1200 = vxpose.xlu0.c.b16.end [8/8] 0, 128
        %v1201 = vpop.trf.xlu0
        %v1202 = vpop.trf.xlu0
        %v1203 = vpop.trf.xlu0
        %v1204 = vpop.trf.xlu0
        %v1205 = vpop.trf.xlu0
        %v1206 = vpop.trf.xlu0
        %v1207 = vpop.trf.xlu0
        %v1208 = vpop.trf.xlu0
        %1209 = vxpose.xlu0.c.b16.start [1/8] %v1006, 128
        %1210 = vxpose.xlu0.c.b16.cont [2/8] 0, 128
        %1211 = vxpose.xlu0.c.b16.cont [3/8] 0, 128
        %1212 = vxpose.xlu0.c.b16.cont [4/8] 0, 128
        %1213 = vxpose.xlu0.c.b16.cont [5/8] 0, 128
        %1214 = vxpose.xlu0.c.b16.cont [6/8] 0, 128
        %1215 = vxpose.xlu0.c.b16.cont [7/8] 0, 128
        %1216 = vxpose.xlu0.c.b16.end [8/8] 0, 128
        %v1217 = vpop.trf.xlu0
        %v1218 = vpop.trf.xlu0
        %v1219 = vpop.trf.xlu0
        %v1220 = vpop.trf.xlu0
        %v1221 = vpop.trf.xlu0
        %v1222 = vpop.trf.xlu0
        %v1223 = vpop.trf.xlu0
        %v1224 = vpop.trf.xlu0
        %1225 = vxpose.xlu0.c.b16.start [1/8] %v1007, 128
        %1226 = vxpose.xlu0.c.b16.cont [2/8] 0, 128
        %1227 = vxpose.xlu0.c.b16.cont [3/8] 0, 128
        %1228 = vxpose.xlu0.c.b16.cont [4/8] 0, 128
        %1229 = vxpose.xlu0.c.b16.cont [5/8] 0, 128
        %1230 = vxpose.xlu0.c.b16.cont [6/8] 0, 128
        %1231 = vxpose.xlu0.c.b16.cont [7/8] 0, 128
        %1232 = vxpose.xlu0.c.b16.end [8/8] 0, 128
        %v1233 = vpop.trf.xlu0
        %v1234 = vpop.trf.xlu0
        %v1235 = vpop.trf.xlu0
        %v1236 = vpop.trf.xlu0
        %v1237 = vpop.trf.xlu0
        %v1238 = vpop.trf.xlu0
        %v1239 = vpop.trf.xlu0
        %v1240 = vpop.trf.xlu0
        %1241 = vxpose.xlu0.c.b16.start [1/8] %v1008, 128
        %1242 = vxpose.xlu0.c.b16.cont [2/8] 0, 128
        %1243 = vxpose.xlu0.c.b16.cont [3/8] 0, 128
        %1244 = vxpose.xlu0.c.b16.cont [4/8] 0, 128
        %1245 = vxpose.xlu0.c.b16.cont [5/8] 0, 128
        %1246 = vxpose.xlu0.c.b16.cont [6/8] 0, 128
        %1247 = vxpose.xlu0.c.b16.cont [7/8] 0, 128
        %1248 = vxpose.xlu0.c.b16.end [8/8] 0, 128
        %v1249 = vpop.trf.xlu0
        %v1250 = vpop.trf.xlu0
        %v1251 = vpop.trf.xlu0
        %v1252 = vpop.trf.xlu0
        %v1253 = vpop.trf.xlu0
        %v1254 = vpop.trf.xlu0
        %v1255 = vpop.trf.xlu0
        %v1256 = vpop.trf.xlu0
        %1257 = vxpose.xlu0.c.b16.start [1/8] %v1009, 128
        %1258 = vxpose.xlu0.c.b16.cont [2/8] 0, 128
        %1259 = vxpose.xlu0.c.b16.cont [3/8] 0, 128
        %1260 = vxpose.xlu0.c.b16.cont [4/8] 0, 128
        %1261 = vxpose.xlu0.c.b16.cont [5/8] 0, 128
        %1262 = vxpose.xlu0.c.b16.cont [6/8] 0, 128
        %1263 = vxpose.xlu0.c.b16.cont [7/8] 0, 128
        %1264 = vxpose.xlu0.c.b16.end [8/8] 0, 128
        %v1265 = vpop.trf.xlu0
        %v1266 = vpop.trf.xlu0
        %v1267 = vpop.trf.xlu0
        %v1268 = vpop.trf.xlu0
        %v1269 = vpop.trf.xlu0
        %v1270 = vpop.trf.xlu0
        %v1271 = vpop.trf.xlu0
        %v1272 = vpop.trf.xlu0
        %1273 = vxpose.xlu0.c.b16.start [1/8] %v1010, 128
        %1274 = vxpose.xlu0.c.b16.cont [2/8] 0, 128
        %1275 = vxpose.xlu0.c.b16.cont [3/8] 0, 128
        %1276 = vxpose.xlu0.c.b16.cont [4/8] 0, 128
        %1277 = vxpose.xlu0.c.b16.cont [5/8] 0, 128
        %1278 = vxpose.xlu0.c.b16.cont [6/8] 0, 128
        %1279 = vxpose.xlu0.c.b16.cont [7/8] 0, 128
        %1280 = vxpose.xlu0.c.b16.end [8/8] 0, 128
        %v1281 = vpop.trf.xlu0
        %v1282 = vpop.trf.xlu0
        %v1283 = vpop.trf.xlu0
        %v1284 = vpop.trf.xlu0
        %v1285 = vpop.trf.xlu0
        %v1286 = vpop.trf.xlu0
        %v1287 = vpop.trf.xlu0
        %v1288 = vpop.trf.xlu0
        %v1289 = vcombine.low %v1169, %v1233
        %v1291 = vunpack.c.l.s4 1983009808
        %v1292 = vunpack.c.0.s8 %v1291
        %v1293 = vlaneseq
        %v1294 = vshrl.u32 %v1293, 7
        %v1295 = vsub.s32 %v1292, %v1294
        %v1296 = vrot.slane %v1289, %v1295
        %v1297 = vcombine.low %v1201, %v1265
        %v1299 = vunpack.c.l.s4 1983009808
        %v1300 = vunpack.c.0.s8 %v1299
        %v1301 = vlaneseq
        %v1302 = vshrl.u32 %v1301, 7
        %v1303 = vsub.s32 %v1300, %v1302
        %v1304 = vrot.slane %v1297, %v1303
        %v1305 = vcombine.low %v1296, %v1304
        %v1306 = vcombine.high %v1296, %v1304
        %v1308 = vunpack.c.l.s4 1934713408
        %v1309 = vunpack.c.0.s8 %v1308
        %v1310 = vlaneseq
        %v1311 = vshrl.u32 %v1310, 7
        %v1312 = vsub.s32 %v1309, %v1311
        %v1313 = vrot.slane %v1305, %v1312
        %v1315 = vunpack.c.l.s4 1934713408
        %v1316 = vunpack.c.0.s8 %v1315
        %v1317 = vlaneseq
        %v1318 = vshrl.u32 %v1317, 7
        %v1319 = vsub.s32 %v1316, %v1318
        %v1320 = vrot.slane %v1306, %v1319
        %v1321 = vcombine.high %v1313, 0
        %v1322 = vcombine.high %v1320, 0
        %v1323 = vcombine.low %v1185, %v1249
        %v1325 = vunpack.c.l.s4 1983009808
        %v1326 = vunpack.c.0.s8 %v1325
        %v1327 = vlaneseq
        %v1328 = vshrl.u32 %v1327, 7
        %v1329 = vsub.s32 %v1326, %v1328
        %v1330 = vrot.slane %v1323, %v1329
        %v1331 = vcombine.low %v1217, %v1281
        %v1333 = vunpack.c.l.s4 1983009808
        %v1334 = vunpack.c.0.s8 %v1333
        %v1335 = vlaneseq
        %v1336 = vshrl.u32 %v1335, 7
        %v1337 = vsub.s32 %v1334, %v1336
        %v1338 = vrot.slane %v1331, %v1337
        %v1339 = vcombine.low %v1330, %v1338
        %v1340 = vcombine.high %v1330, %v1338
        %v1342 = vunpack.c.l.s4 1934713408
        %v1343 = vunpack.c.0.s8 %v1342
        %v1344 = vlaneseq
        %v1345 = vshrl.u32 %v1344, 7
        %v1346 = vsub.s32 %v1343, %v1345
        %v1347 = vrot.slane %v1339, %v1346
        %v1349 = vunpack.c.l.s4 1934713408
        %v1350 = vunpack.c.0.s8 %v1349
        %v1351 = vlaneseq
        %v1352 = vshrl.u32 %v1351, 7
        %v1353 = vsub.s32 %v1350, %v1352
        %v1354 = vrot.slane %v1340, %v1353
        %v1355 = vcombine.high %v1347, 0
        %v1356 = vcombine.high %v1354, 0
        %v1359 = vpack.i.b16 %v1347, %v1313
        %v1361 = vshrl.u32 %v1313, 16
        %v1362 = vshrl.u32 %v1347, 16
        %v1363 = vpack.i.b16 %v1362, %v1361
        %v1367 = vpack.i.b16 %v1355, %v1321
        %v1369 = vshrl.u32 %v1321, 16
        %v1370 = vshrl.u32 %v1355, 16
        %v1371 = vpack.i.b16 %v1370, %v1369
        %v1375 = vpack.i.b16 %v1354, %v1320
        %v1377 = vshrl.u32 %v1320, 16
        %v1378 = vshrl.u32 %v1354, 16
        %v1379 = vpack.i.b16 %v1378, %v1377
        %v1383 = vpack.i.b16 %v1356, %v1322
        %v1385 = vshrl.u32 %v1322, 16
        %v1386 = vshrl.u32 %v1356, 16
        %v1387 = vpack.i.b16 %v1386, %v1385
        %1389 = vxpose.xlu0.c.b16.start [1/8] %v1359, 128
        %1390 = vxpose.xlu0.c.b16.cont [2/8] 0, 128
        %1391 = vxpose.xlu0.c.b16.cont [3/8] 0, 128
        %1392 = vxpose.xlu0.c.b16.cont [4/8] 0, 128
        %1393 = vxpose.xlu0.c.b16.cont [5/8] 0, 128
        %1394 = vxpose.xlu0.c.b16.cont [6/8] 0, 128
        %1395 = vxpose.xlu0.c.b16.cont [7/8] 0, 128
        %1396 = vxpose.xlu0.c.b16.end [8/8] 0, 128
        %v1397 = vpop.trf.xlu0
        %v1398 = vpop.trf.xlu0
        %v1399 = vpop.trf.xlu0
        %v1400 = vpop.trf.xlu0
        %v1401 = vpop.trf.xlu0
        %v1402 = vpop.trf.xlu0
        %v1403 = vpop.trf.xlu0
        %v1404 = vpop.trf.xlu0
        %1405 = vxpose.xlu0.c.b16.start [1/8] %v1363, 128
        %1406 = vxpose.xlu0.c.b16.cont [2/8] 0, 128
        %1407 = vxpose.xlu0.c.b16.cont [3/8] 0, 128
        %1408 = vxpose.xlu0.c.b16.cont [4/8] 0, 128
        %1409 = vxpose.xlu0.c.b16.cont [5/8] 0, 128
        %1410 = vxpose.xlu0.c.b16.cont [6/8] 0, 128
        %1411 = vxpose.xlu0.c.b16.cont [7/8] 0, 128
        %1412 = vxpose.xlu0.c.b16.end [8/8] 0, 128
        %v1413 = vpop.trf.xlu0
        %v1414 = vpop.trf.xlu0
        %v1415 = vpop.trf.xlu0
        %v1416 = vpop.trf.xlu0
        %v1417 = vpop.trf.xlu0
        %v1418 = vpop.trf.xlu0
        %v1419 = vpop.trf.xlu0
        %v1420 = vpop.trf.xlu0
        %1421 = vxpose.xlu0.c.b16.start [1/8] %v1367, 128
        %1422 = vxpose.xlu0.c.b16.cont [2/8] 0, 128
        %1423 = vxpose.xlu0.c.b16.cont [3/8] 0, 128
        %1424 = vxpose.xlu0.c.b16.cont [4/8] 0, 128
        %1425 = vxpose.xlu0.c.b16.cont [5/8] 0, 128
        %1426 = vxpose.xlu0.c.b16.cont [6/8] 0, 128
        %1427 = vxpose.xlu0.c.b16.cont [7/8] 0, 128
        %1428 = vxpose.xlu0.c.b16.end [8/8] 0, 128
        %v1429 = vpop.trf.xlu0
        %v1430 = vpop.trf.xlu0
        %v1431 = vpop.trf.xlu0
        %v1432 = vpop.trf.xlu0
        %v1433 = vpop.trf.xlu0
        %v1434 = vpop.trf.xlu0
        %v1435 = vpop.trf.xlu0
        %v1436 = vpop.trf.xlu0
        %1437 = vxpose.xlu0.c.b16.start [1/8] %v1371, 128
        %1438 = vxpose.xlu0.c.b16.cont [2/8] 0, 128
        %1439 = vxpose.xlu0.c.b16.cont [3/8] 0, 128
        %1440 = vxpose.xlu0.c.b16.cont [4/8] 0, 128
        %1441 = vxpose.xlu0.c.b16.cont [5/8] 0, 128
        %1442 = vxpose.xlu0.c.b16.cont [6/8] 0, 128
        %1443 = vxpose.xlu0.c.b16.cont [7/8] 0, 128
        %1444 = vxpose.xlu0.c.b16.end [8/8] 0, 128
        %v1445 = vpop.trf.xlu0
        %v1446 = vpop.trf.xlu0
        %v1447 = vpop.trf.xlu0
        %v1448 = vpop.trf.xlu0
        %v1449 = vpop.trf.xlu0
        %v1450 = vpop.trf.xlu0
        %v1451 = vpop.trf.xlu0
        %v1452 = vpop.trf.xlu0
        %1453 = vxpose.xlu0.c.b16.start [1/8] %v1375, 128
        %1454 = vxpose.xlu0.c.b16.cont [2/8] 0, 128
        %1455 = vxpose.xlu0.c.b16.cont [3/8] 0, 128
        %1456 = vxpose.xlu0.c.b16.cont [4/8] 0, 128
        %1457 = vxpose.xlu0.c.b16.cont [5/8] 0, 128
        %1458 = vxpose.xlu0.c.b16.cont [6/8] 0, 128
        %1459 = vxpose.xlu0.c.b16.cont [7/8] 0, 128
        %1460 = vxpose.xlu0.c.b16.end [8/8] 0, 128
        %v1461 = vpop.trf.xlu0
        %v1462 = vpop.trf.xlu0
        %v1463 = vpop.trf.xlu0
        %v1464 = vpop.trf.xlu0
        %v1465 = vpop.trf.xlu0
        %v1466 = vpop.trf.xlu0
        %v1467 = vpop.trf.xlu0
        %v1468 = vpop.trf.xlu0
        %1469 = vxpose.xlu0.c.b16.start [1/8] %v1379, 128
        %1470 = vxpose.xlu0.c.b16.cont [2/8] 0, 128
        %1471 = vxpose.xlu0.c.b16.cont [3/8] 0, 128
        %1472 = vxpose.xlu0.c.b16.cont [4/8] 0, 128
        %1473 = vxpose.xlu0.c.b16.cont [5/8] 0, 128
        %1474 = vxpose.xlu0.c.b16.cont [6/8] 0, 128
        %1475 = vxpose.xlu0.c.b16.cont [7/8] 0, 128
        %1476 = vxpose.xlu0.c.b16.end [8/8] 0, 128
        %v1477 = vpop.trf.xlu0
        %v1478 = vpop.trf.xlu0
        %v1479 = vpop.trf.xlu0
        %v1480 = vpop.trf.xlu0
        %v1481 = vpop.trf.xlu0
        %v1482 = vpop.trf.xlu0
        %v1483 = vpop.trf.xlu0
        %v1484 = vpop.trf.xlu0
        %1485 = vxpose.xlu0.c.b16.start [1/8] %v1383, 128
        %1486 = vxpose.xlu0.c.b16.cont [2/8] 0, 128
        %1487 = vxpose.xlu0.c.b16.cont [3/8] 0, 128
        %1488 = vxpose.xlu0.c.b16.cont [4/8] 0, 128
        %1489 = vxpose.xlu0.c.b16.cont [5/8] 0, 128
        %1490 = vxpose.xlu0.c.b16.cont [6/8] 0, 128
        %1491 = vxpose.xlu0.c.b16.cont [7/8] 0, 128
        %1492 = vxpose.xlu0.c.b16.end [8/8] 0, 128
        %v1493 = vpop.trf.xlu0
        %v1494 = vpop.trf.xlu0
        %v1495 = vpop.trf.xlu0
        %v1496 = vpop.trf.xlu0
        %v1497 = vpop.trf.xlu0
        %v1498 = vpop.trf.xlu0
        %v1499 = vpop.trf.xlu0
        %v1500 = vpop.trf.xlu0
        %1501 = vxpose.xlu0.c.b16.start [1/8] %v1387, 128
        %1502 = vxpose.xlu0.c.b16.cont [2/8] 0, 128
        %1503 = vxpose.xlu0.c.b16.cont [3/8] 0, 128
        %1504 = vxpose.xlu0.c.b16.cont [4/8] 0, 128
        %1505 = vxpose.xlu0.c.b16.cont [5/8] 0, 128
        %1506 = vxpose.xlu0.c.b16.cont [6/8] 0, 128
        %1507 = vxpose.xlu0.c.b16.cont [7/8] 0, 128
        %1508 = vxpose.xlu0.c.b16.end [8/8] 0, 128
        %v1509 = vpop.trf.xlu0
        %v1510 = vpop.trf.xlu0
        %v1511 = vpop.trf.xlu0
        %v1512 = vpop.trf.xlu0
        %v1513 = vpop.trf.xlu0
        %v1514 = vpop.trf.xlu0
        %v1515 = vpop.trf.xlu0
        %v1516 = vpop.trf.xlu0
        %v1517 = vcombine.low %v1397, %v1461
        %v1519 = vunpack.c.l.s4 1983009808
        %v1520 = vunpack.c.0.s8 %v1519
        %v1521 = vlaneseq
        %v1522 = vshrl.u32 %v1521, 7
        %v1523 = vsub.s32 %v1520, %v1522
        %v1524 = vrot.slane %v1517, %v1523
        %v1525 = vcombine.low %v1429, %v1493
        %v1527 = vunpack.c.l.s4 1983009808
        %v1528 = vunpack.c.0.s8 %v1527
        %v1529 = vlaneseq
        %v1530 = vshrl.u32 %v1529, 7
        %v1531 = vsub.s32 %v1528, %v1530
        %v1532 = vrot.slane %v1525, %v1531
        %v1533 = vcombine.low %v1524, %v1532
        %v1535 = vunpack.c.l.s4 1934713408
        %v1536 = vunpack.c.0.s8 %v1535
        %v1537 = vlaneseq
        %v1538 = vshrl.u32 %v1537, 7
        %v1539 = vsub.s32 %v1536, %v1538
        %v1540 = vrot.slane %v1533, %v1539
        %v1541 = vcombine.high %v1540, 0
        %v1542 = vcombine.low %v1413, %v1477
        %v1544 = vunpack.c.l.s4 1983009808
        %v1545 = vunpack.c.0.s8 %v1544
        %v1546 = vlaneseq
        %v1547 = vshrl.u32 %v1546, 7
        %v1548 = vsub.s32 %v1545, %v1547
        %v1549 = vrot.slane %v1542, %v1548
        %v1550 = vcombine.low %v1445, %v1509
        %v1552 = vunpack.c.l.s4 1983009808
        %v1553 = vunpack.c.0.s8 %v1552
        %v1554 = vlaneseq
        %v1555 = vshrl.u32 %v1554, 7
        %v1556 = vsub.s32 %v1553, %v1555
        %v1557 = vrot.slane %v1550, %v1556
        %v1558 = vcombine.low %v1549, %v1557
        %v1560 = vunpack.c.l.s4 1934713408
        %v1561 = vunpack.c.0.s8 %v1560
        %v1562 = vlaneseq
        %v1563 = vshrl.u32 %v1562, 7
        %v1564 = vsub.s32 %v1561, %v1563
        %v1565 = vrot.slane %v1558, %v1564
        %v1566 = vcombine.high %v1565, 0
        %v1569 = vpack.i.b16 %v1565, %v1540
        %v1570 = vshrl.u32 %v1540, 16
        %v1571 = vshrl.u32 %v1565, 16
        %v1572 = vpack.i.b16 %v1571, %v1570
        %v1575 = vpack.i.b16 %v1566, %v1541
        %v1576 = vshrl.u32 %v1541, 16
        %v1577 = vshrl.u32 %v1566, 16
        %v1578 = vpack.i.b16 %v1577, %v1576
        %vm1579 = vcmask 64512
        %v1581 = vsel %vm1579, %v1151, 0
        %vm1583 = vcmask 1043456
        %v1585 = vsel %vm1583, %v1569, 0
        %1587 = vmatprep.subr.bf16.mxu0 0
        %1588 = vmatpush1.bf16.msra.mxu0 %v1585
        %1589 = vmatprep.subr.bf16.mxu0 0
        %1590 = vmatpush1.bf16.msra.mxu0 0
        %1591 = vmatprep.subr.bf16.mxu0 0
        %1592 = vmatpush1.bf16.msra.mxu0 0
        %1593 = vmatprep.subr.bf16.mxu0 0
        %1594 = vmatpush1.bf16.msra.mxu0 0
        %1595 = vmatprep.subr.bf16.mxu0 0
        %1596 = vmatpush1.bf16.msra.mxu0 0
        %1597 = vmatprep.subr.bf16.mxu0 0
        %1598 = vmatpush1.bf16.msra.mxu0 0
        %1599 = vmatprep.subr.bf16.mxu0 0
        %1600 = vmatpush1.bf16.msra.mxu0 0
        %1601 = vmatprep.subr.bf16.mxu0 0
        %1602 = vmatpush1.bf16.msra.mxu0 0
        %1603 = vmatprep.subr.bf16.mxu0 0
        %1604 = vmatpush1.bf16.msra.mxu0 0
        %1605 = vmatprep.subr.bf16.mxu0 0
        %1606 = vmatpush1.bf16.msra.mxu0 0
        %1607 = vmatprep.subr.bf16.mxu0 0
        %1608 = vmatpush1.bf16.msra.mxu0 0
        %1609 = vmatprep.subr.bf16.mxu0 0
        %1610 = vmatpush1.bf16.msra.mxu0 0
        %1611 = vmatprep.subr.bf16.mxu0 0
        %1612 = vmatpush1.bf16.msra.mxu0 0
        %1613 = vmatprep.subr.bf16.mxu0 0
        %1614 = vmatpush1.bf16.msra.mxu0 0
        %1615 = vmatprep.subr.bf16.mxu0 0
        %1616 = vmatpush1.bf16.msra.mxu0 0
        %1617 = vmatprep.subr.bf16.mxu0 0
        %1618 = vmatpush1.bf16.msra.mxu0 0
        %1619 = vmatprep.mubr.bf16.mxu0 0
        %1620 = vmatmul.mubr.bf16.gmra.mrb[0].mxu0 %v1581
        %v1621 = vpop.f32.mrb[0].mxu0
        %v1622 = vadd.f32 0.0, %v1621
        %v1623 = vpop.f32.mrb[0].mxu0
        %v1624 = vpop.f32.mrb[0].mxu0
        %v1625 = vpop.f32.mrb[0].mxu0
        %1626 = vdwg.mxu0
        %v1628 = vsel %vm1579, %v1154, 0
        %v1631 = vsel %vm1583, %v1572, 0
        %1633 = vmatprep.subr.bf16.mxu0 0
        %1634 = vmatpush1.bf16.msra.mxu0 %v1631
        %1635 = vmatprep.subr.bf16.mxu0 0
        %1636 = vmatpush1.bf16.msra.mxu0 0
        %1637 = vmatprep.subr.bf16.mxu0 0
        %1638 = vmatpush1.bf16.msra.mxu0 0
        %1639 = vmatprep.subr.bf16.mxu0 0
        %1640 = vmatpush1.bf16.msra.mxu0 0
        %1641 = vmatprep.subr.bf16.mxu0 0
        %1642 = vmatpush1.bf16.msra.mxu0 0
        %1643 = vmatprep.subr.bf16.mxu0 0
        %1644 = vmatpush1.bf16.msra.mxu0 0
        %1645 = vmatprep.subr.bf16.mxu0 0
        %1646 = vmatpush1.bf16.msra.mxu0 0
        %1647 = vmatprep.subr.bf16.mxu0 0
        %1648 = vmatpush1.bf16.msra.mxu0 0
        %1649 = vmatprep.subr.bf16.mxu0 0
        %1650 = vmatpush1.bf16.msra.mxu0 0
        %1651 = vmatprep.subr.bf16.mxu0 0
        %1652 = vmatpush1.bf16.msra.mxu0 0
        %1653 = vmatprep.subr.bf16.mxu0 0
        %1654 = vmatpush1.bf16.msra.mxu0 0
        %1655 = vmatprep.subr.bf16.mxu0 0
        %1656 = vmatpush1.bf16.msra.mxu0 0
        %1657 = vmatprep.subr.bf16.mxu0 0
        %1658 = vmatpush1.bf16.msra.mxu0 0
        %1659 = vmatprep.subr.bf16.mxu0 0
        %1660 = vmatpush1.bf16.msra.mxu0 0
        %1661 = vmatprep.subr.bf16.mxu0 0
        %1662 = vmatpush1.bf16.msra.mxu0 0
        %1663 = vmatprep.subr.bf16.mxu0 0
        %1664 = vmatpush1.bf16.msra.mxu0 0
        %1665 = vmatprep.mubr.bf16.mxu0 0
        %1666 = vmatmul.mubr.bf16.gmra.mrb[0].mxu0 %v1628
        %v1667 = vpop.f32.mrb[0].mxu0
        %v1668 = vadd.f32 0.0, %v1667
        %v1669 = vpop.f32.mrb[0].mxu0
        %v1670 = vpop.f32.mrb[0].mxu0
        %v1671 = vpop.f32.mrb[0].mxu0
        %1672 = vdwg.mxu0
        %v1674 = vsel %vm1579, %v1157, 0
        %v1677 = vsel %vm1583, %v1575, 0
        %1679 = vmatprep.subr.bf16.mxu0 0
        %1680 = vmatpush1.bf16.msra.mxu0 %v1677
        %1681 = vmatprep.subr.bf16.mxu0 0
        %1682 = vmatpush1.bf16.msra.mxu0 0
        %1683 = vmatprep.subr.bf16.mxu0 0
        %1684 = vmatpush1.bf16.msra.mxu0 0
        %1685 = vmatprep.subr.bf16.mxu0 0
        %1686 = vmatpush1.bf16.msra.mxu0 0
        %1687 = vmatprep.subr.bf16.mxu0 0
        %1688 = vmatpush1.bf16.msra.mxu0 0
        %1689 = vmatprep.subr.bf16.mxu0 0
        %1690 = vmatpush1.bf16.msra.mxu0 0
        %1691 = vmatprep.subr.bf16.mxu0 0
        %1692 = vmatpush1.bf16.msra.mxu0 0
        %1693 = vmatprep.subr.bf16.mxu0 0
        %1694 = vmatpush1.bf16.msra.mxu0 0
        %1695 = vmatprep.subr.bf16.mxu0 0
        %1696 = vmatpush1.bf16.msra.mxu0 0
        %1697 = vmatprep.subr.bf16.mxu0 0
        %1698 = vmatpush1.bf16.msra.mxu0 0
        %1699 = vmatprep.subr.bf16.mxu0 0
        %1700 = vmatpush1.bf16.msra.mxu0 0
        %1701 = vmatprep.subr.bf16.mxu0 0
        %1702 = vmatpush1.bf16.msra.mxu0 0
        %1703 = vmatprep.subr.bf16.mxu0 0
        %1704 = vmatpush1.bf16.msra.mxu0 0
        %1705 = vmatprep.subr.bf16.mxu0 0
        %1706 = vmatpush1.bf16.msra.mxu0 0
        %1707 = vmatprep.subr.bf16.mxu0 0
        %1708 = vmatpush1.bf16.msra.mxu0 0
        %1709 = vmatprep.subr.bf16.mxu0 0
        %1710 = vmatpush1.bf16.msra.mxu0 0
        %1711 = vmatprep.mubr.bf16.mxu0 0
        %1712 = vmatmul.mubr.bf16.gmra.mrb[0].mxu0 %v1674
        %v1713 = vpop.f32.mrb[0].mxu0
        %v1714 = vadd.f32 0.0, %v1713
        %v1715 = vpop.f32.mrb[0].mxu0
        %v1716 = vpop.f32.mrb[0].mxu0
        %v1717 = vpop.f32.mrb[0].mxu0
        %1718 = vdwg.mxu0
        %v1720 = vsel %vm1579, %v1160, 0
        %v1723 = vsel %vm1583, %v1578, 0
        %1725 = vmatprep.subr.bf16.mxu0 0
        %1726 = vmatpush1.bf16.msra.mxu0 %v1723
        %1727 = vmatprep.subr.bf16.mxu0 0
        %1728 = vmatpush1.bf16.msra.mxu0 0
        %1729 = vmatprep.subr.bf16.mxu0 0
        %1730 = vmatpush1.bf16.msra.mxu0 0
        %1731 = vmatprep.subr.bf16.mxu0 0
        %1732 = vmatpush1.bf16.msra.mxu0 0
        %1733 = vmatprep.subr.bf16.mxu0 0
        %1734 = vmatpush1.bf16.msra.mxu0 0
        %1735 = vmatprep.subr.bf16.mxu0 0
        %1736 = vmatpush1.bf16.msra.mxu0 0
        %1737 = vmatprep.subr.bf16.mxu0 0
        %1738 = vmatpush1.bf16.msra.mxu0 0
        %1739 = vmatprep.subr.bf16.mxu0 0
        %1740 = vmatpush1.bf16.msra.mxu0 0
        %1741 = vmatprep.subr.bf16.mxu0 0
        %1742 = vmatpush1.bf16.msra.mxu0 0
        %1743 = vmatprep.subr.bf16.mxu0 0
        %1744 = vmatpush1.bf16.msra.mxu0 0
        %1745 = vmatprep.subr.bf16.mxu0 0
        %1746 = vmatpush1.bf16.msra.mxu0 0
        %1747 = vmatprep.subr.bf16.mxu0 0
        %1748 = vmatpush1.bf16.msra.mxu0 0
        %1749 = vmatprep.subr.bf16.mxu0 0
        %1750 = vmatpush1.bf16.msra.mxu0 0
        %1751 = vmatprep.subr.bf16.mxu0 0
        %1752 = vmatpush1.bf16.msra.mxu0 0
        %1753 = vmatprep.subr.bf16.mxu0 0
        %1754 = vmatpush1.bf16.msra.mxu0 0
        %1755 = vmatprep.subr.bf16.mxu0 0
        %1756 = vmatpush1.bf16.msra.mxu0 0
        %1757 = vmatprep.mubr.bf16.mxu0 0
        %1758 = vmatmul.mubr.bf16.gmra.mrb[0].mxu0 %v1720
        %v1759 = vpop.f32.mrb[0].mxu0
        %v1760 = vadd.f32 0.0, %v1759
        %v1761 = vpop.f32.mrb[0].mxu0
        %v1762 = vpop.f32.mrb[0].mxu0
        %v1763 = vpop.f32.mrb[0].mxu0
        %1764 = vdwg.mxu0
        %v1765 = vsel %vm1579, %v1622, -inf
        %1766 = vmax.xlane.f32.xlu0 %v1765
        %v1767 = vpop.xlane.xlu0 %1766
        %v1768 = vsel %vm1579, %v1668, -inf
        %1769 = vmax.xlane.f32.xlu0 %v1768
        %v1770 = vpop.xlane.xlu0 %1769
        %v1771 = vsel %vm1579, %v1714, -inf
        %1772 = vmax.xlane.f32.xlu0 %v1771
        %v1773 = vpop.xlane.xlu0 %1772
        %v1774 = vsel %vm1579, %v1760, -inf
        %1775 = vmax.xlane.f32.xlu0 %v1774
        %v1776 = vpop.xlane.xlu0 %1775
        %v1777 = vsub.f32 %v1622, %v1767
        %v1778 = vsub.f32 %v1668, %v1770
        %v1779 = vsub.f32 %v1714, %v1773
        %v1780 = vsub.f32 %v1760, %v1776
        %v1781 = vmul.f32 %v1777, 1.442695
        %v1782 = vpow.pop %v1781
        %v1783 = vmul.f32 %v1778, 1.442695
        %v1784 = vpow.pop %v1783
        %v1785 = vmul.f32 %v1779, 1.442695
        %v1786 = vpow.pop %v1785
        %v1787 = vmul.f32 %v1780, 1.442695
        %v1788 = vpow.pop %v1787
        %v1789 = vsel %vm1579, %v1782, 0.0
        %1790 = vadd.xlane.f32.xlu0 %v1789
        %v1791 = vpop.xlane.xlu0 %1790
        %v1792 = vsel %vm1579, %v1784, 0.0
        %1793 = vadd.xlane.f32.xlu0 %v1792
        %v1794 = vpop.xlane.xlu0 %1793
        %v1795 = vsel %vm1579, %v1786, 0.0
        %1796 = vadd.xlane.f32.xlu0 %v1795
        %v1797 = vpop.xlane.xlu0 %1796
        %v1798 = vsel %vm1579, %v1788, 0.0
        %1799 = vadd.xlane.f32.xlu0 %v1798
        %v1800 = vpop.xlane.xlu0 %1799
        %v1801 = vrcp.pop %v1791
        %v1802 = vrcp.pop %v1794
        %v1803 = vrcp.pop %v1797
        %v1804 = vrcp.pop %v1800
        %v1805 = vmul.f32 %v1782, %v1801
        %v1806 = vmul.f32 %v1784, %v1802
        %v1807 = vmul.f32 %v1786, %v1803
        %v1808 = vmul.f32 %v1788, %v1804
        %v1809 = vpack.c.bf16 %v1805, %v1805
        %v1810 = vpack.c.bf16 %v1806, %v1806
        %v1811 = vpack.c.bf16 %v1807, %v1807
        %v1812 = vpack.c.bf16 %v1808, %v1808
        %1813 = vxpose.xlu0.c.b16.start [1/8] %v1091, 128
        %1814 = vxpose.xlu0.c.b16.cont [2/8] 0, 128
        %1815 = vxpose.xlu0.c.b16.cont [3/8] 0, 128
        %1816 = vxpose.xlu0.c.b16.cont [4/8] 0, 128
        %1817 = vxpose.xlu0.c.b16.cont [5/8] 0, 128
        %1818 = vxpose.xlu0.c.b16.cont [6/8] 0, 128
        %1819 = vxpose.xlu0.c.b16.cont [7/8] 0, 128
        %1820 = vxpose.xlu0.c.b16.end [8/8] 0, 128
        %v1821 = vpop.trf.xlu0
        %v1822 = vpop.trf.xlu0
        %v1823 = vpop.trf.xlu0
        %v1824 = vpop.trf.xlu0
        %v1825 = vpop.trf.xlu0
        %v1826 = vpop.trf.xlu0
        %v1827 = vpop.trf.xlu0
        %v1828 = vpop.trf.xlu0
        %1829 = vxpose.xlu0.c.b16.start [1/8] %v1092, 128
        %1830 = vxpose.xlu0.c.b16.cont [2/8] 0, 128
        %1831 = vxpose.xlu0.c.b16.cont [3/8] 0, 128
        %1832 = vxpose.xlu0.c.b16.cont [4/8] 0, 128
        %1833 = vxpose.xlu0.c.b16.cont [5/8] 0, 128
        %1834 = vxpose.xlu0.c.b16.cont [6/8] 0, 128
        %1835 = vxpose.xlu0.c.b16.cont [7/8] 0, 128
        %1836 = vxpose.xlu0.c.b16.end [8/8] 0, 128
        %v1837 = vpop.trf.xlu0
        %v1838 = vpop.trf.xlu0
        %v1839 = vpop.trf.xlu0
        %v1840 = vpop.trf.xlu0
        %v1841 = vpop.trf.xlu0
        %v1842 = vpop.trf.xlu0
        %v1843 = vpop.trf.xlu0
        %v1844 = vpop.trf.xlu0
        %1845 = vxpose.xlu0.c.b16.start [1/8] %v1093, 128
        %1846 = vxpose.xlu0.c.b16.cont [2/8] 0, 128
        %1847 = vxpose.xlu0.c.b16.cont [3/8] 0, 128
        %1848 = vxpose.xlu0.c.b16.cont [4/8] 0, 128
        %1849 = vxpose.xlu0.c.b16.cont [5/8] 0, 128
        %1850 = vxpose.xlu0.c.b16.cont [6/8] 0, 128
        %1851 = vxpose.xlu0.c.b16.cont [7/8] 0, 128
        %1852 = vxpose.xlu0.c.b16.end [8/8] 0, 128
        %v1853 = vpop.trf.xlu0
        %v1854 = vpop.trf.xlu0
        %v1855 = vpop.trf.xlu0
        %v1856 = vpop.trf.xlu0
        %v1857 = vpop.trf.xlu0
        %v1858 = vpop.trf.xlu0
        %v1859 = vpop.trf.xlu0
        %v1860 = vpop.trf.xlu0
        %1861 = vxpose.xlu0.c.b16.start [1/8] %v1094, 128
        %1862 = vxpose.xlu0.c.b16.cont [2/8] 0, 128
        %1863 = vxpose.xlu0.c.b16.cont [3/8] 0, 128
        %1864 = vxpose.xlu0.c.b16.cont [4/8] 0, 128
        %1865 = vxpose.xlu0.c.b16.cont [5/8] 0, 128
        %1866 = vxpose.xlu0.c.b16.cont [6/8] 0, 128
        %1867 = vxpose.xlu0.c.b16.cont [7/8] 0, 128
        %1868 = vxpose.xlu0.c.b16.end [8/8] 0, 128
        %v1869 = vpop.trf.xlu0
        %v1870 = vpop.trf.xlu0
        %v1871 = vpop.trf.xlu0
        %v1872 = vpop.trf.xlu0
        %v1873 = vpop.trf.xlu0
        %v1874 = vpop.trf.xlu0
        %v1875 = vpop.trf.xlu0
        %v1876 = vpop.trf.xlu0
        %1877 = vxpose.xlu0.c.b16.start [1/8] %v1095, 128
        %1878 = vxpose.xlu0.c.b16.cont [2/8] 0, 128
        %1879 = vxpose.xlu0.c.b16.cont [3/8] 0, 128
        %1880 = vxpose.xlu0.c.b16.cont [4/8] 0, 128
        %1881 = vxpose.xlu0.c.b16.cont [5/8] 0, 128
        %1882 = vxpose.xlu0.c.b16.cont [6/8] 0, 128
        %1883 = vxpose.xlu0.c.b16.cont [7/8] 0, 128
        %1884 = vxpose.xlu0.c.b16.end [8/8] 0, 128
        %v1885 = vpop.trf.xlu0
        %v1886 = vpop.trf.xlu0
        %v1887 = vpop.trf.xlu0
        %v1888 = vpop.trf.xlu0
        %v1889 = vpop.trf.xlu0
        %v1890 = vpop.trf.xlu0
        %v1891 = vpop.trf.xlu0
        %v1892 = vpop.trf.xlu0
        %1893 = vxpose.xlu0.c.b16.start [1/8] %v1096, 128
        %1894 = vxpose.xlu0.c.b16.cont [2/8] 0, 128
        %1895 = vxpose.xlu0.c.b16.cont [3/8] 0, 128
        %1896 = vxpose.xlu0.c.b16.cont [4/8] 0, 128
        %1897 = vxpose.xlu0.c.b16.cont [5/8] 0, 128
        %1898 = vxpose.xlu0.c.b16.cont [6/8] 0, 128
        %1899 = vxpose.xlu0.c.b16.cont [7/8] 0, 128
        %1900 = vxpose.xlu0.c.b16.end [8/8] 0, 128
        %v1901 = vpop.trf.xlu0
        %v1902 = vpop.trf.xlu0
        %v1903 = vpop.trf.xlu0
        %v1904 = vpop.trf.xlu0
        %v1905 = vpop.trf.xlu0
        %v1906 = vpop.trf.xlu0
        %v1907 = vpop.trf.xlu0
        %v1908 = vpop.trf.xlu0
        %1909 = vxpose.xlu0.c.b16.start [1/8] %v1097, 128
        %1910 = vxpose.xlu0.c.b16.cont [2/8] 0, 128
        %1911 = vxpose.xlu0.c.b16.cont [3/8] 0, 128
        %1912 = vxpose.xlu0.c.b16.cont [4/8] 0, 128
        %1913 = vxpose.xlu0.c.b16.cont [5/8] 0, 128
        %1914 = vxpose.xlu0.c.b16.cont [6/8] 0, 128
        %1915 = vxpose.xlu0.c.b16.cont [7/8] 0, 128
        %1916 = vxpose.xlu0.c.b16.end [8/8] 0, 128
        %v1917 = vpop.trf.xlu0
        %v1918 = vpop.trf.xlu0
        %v1919 = vpop.trf.xlu0
        %v1920 = vpop.trf.xlu0
        %v1921 = vpop.trf.xlu0
        %v1922 = vpop.trf.xlu0
        %v1923 = vpop.trf.xlu0
        %v1924 = vpop.trf.xlu0
        %1925 = vxpose.xlu0.c.b16.start [1/8] %v1098, 128
        %1926 = vxpose.xlu0.c.b16.cont [2/8] 0, 128
        %1927 = vxpose.xlu0.c.b16.cont [3/8] 0, 128
        %1928 = vxpose.xlu0.c.b16.cont [4/8] 0, 128
        %1929 = vxpose.xlu0.c.b16.cont [5/8] 0, 128
        %1930 = vxpose.xlu0.c.b16.cont [6/8] 0, 128
        %1931 = vxpose.xlu0.c.b16.cont [7/8] 0, 128
        %1932 = vxpose.xlu0.c.b16.end [8/8] 0, 128
        %v1933 = vpop.trf.xlu0
        %v1934 = vpop.trf.xlu0
        %v1935 = vpop.trf.xlu0
        %v1936 = vpop.trf.xlu0
        %v1937 = vpop.trf.xlu0
        %v1938 = vpop.trf.xlu0
        %v1939 = vpop.trf.xlu0
        %v1940 = vpop.trf.xlu0
        %v1941 = vcombine.low %v1821, %v1885
        %v1943 = vunpack.c.l.s4 1983009808
        %v1944 = vunpack.c.0.s8 %v1943
        %v1945 = vlaneseq
        %v1946 = vshrl.u32 %v1945, 7
        %v1947 = vsub.s32 %v1944, %v1946
        %v1948 = vrot.slane %v1941, %v1947
        %v1949 = vcombine.low %v1853, %v1917
        %v1951 = vunpack.c.l.s4 1983009808
        %v1952 = vunpack.c.0.s8 %v1951
        %v1953 = vlaneseq
        %v1954 = vshrl.u32 %v1953, 7
        %v1955 = vsub.s32 %v1952, %v1954
        %v1956 = vrot.slane %v1949, %v1955
        %v1957 = vcombine.low %v1948, %v1956
        %v1958 = vcombine.high %v1948, %v1956
        %v1960 = vunpack.c.l.s4 1934713408
        %v1961 = vunpack.c.0.s8 %v1960
        %v1962 = vlaneseq
        %v1963 = vshrl.u32 %v1962, 7
        %v1964 = vsub.s32 %v1961, %v1963
        %v1965 = vrot.slane %v1957, %v1964
        %v1967 = vunpack.c.l.s4 1934713408
        %v1968 = vunpack.c.0.s8 %v1967
        %v1969 = vlaneseq
        %v1970 = vshrl.u32 %v1969, 7
        %v1971 = vsub.s32 %v1968, %v1970
        %v1972 = vrot.slane %v1958, %v1971
        %v1973 = vcombine.high %v1965, 0
        %v1974 = vcombine.high %v1972, 0
        %v1975 = vcombine.low %v1837, %v1901
        %v1977 = vunpack.c.l.s4 1983009808
        %v1978 = vunpack.c.0.s8 %v1977
        %v1979 = vlaneseq
        %v1980 = vshrl.u32 %v1979, 7
        %v1981 = vsub.s32 %v1978, %v1980
        %v1982 = vrot.slane %v1975, %v1981
        %v1983 = vcombine.low %v1869, %v1933
        %v1985 = vunpack.c.l.s4 1983009808
        %v1986 = vunpack.c.0.s8 %v1985
        %v1987 = vlaneseq
        %v1988 = vshrl.u32 %v1987, 7
        %v1989 = vsub.s32 %v1986, %v1988
        %v1990 = vrot.slane %v1983, %v1989
        %v1991 = vcombine.low %v1982, %v1990
        %v1992 = vcombine.high %v1982, %v1990
        %v1994 = vunpack.c.l.s4 1934713408
        %v1995 = vunpack.c.0.s8 %v1994
        %v1996 = vlaneseq
        %v1997 = vshrl.u32 %v1996, 7
        %v1998 = vsub.s32 %v1995, %v1997
        %v1999 = vrot.slane %v1991, %v1998
        %v2001 = vunpack.c.l.s4 1934713408
        %v2002 = vunpack.c.0.s8 %v2001
        %v2003 = vlaneseq
        %v2004 = vshrl.u32 %v2003, 7
        %v2005 = vsub.s32 %v2002, %v2004
        %v2006 = vrot.slane %v1992, %v2005
        %v2007 = vcombine.high %v1999, 0
        %v2008 = vcombine.high %v2006, 0
        %v2011 = vpack.i.b16 %v1999, %v1965
        %v2013 = vshrl.u32 %v1965, 16
        %v2014 = vshrl.u32 %v1999, 16
        %v2015 = vpack.i.b16 %v2014, %v2013
        %v2019 = vpack.i.b16 %v2007, %v1973
        %v2021 = vshrl.u32 %v1973, 16
        %v2022 = vshrl.u32 %v2007, 16
        %v2023 = vpack.i.b16 %v2022, %v2021
        %v2027 = vpack.i.b16 %v2006, %v1972
        %v2029 = vshrl.u32 %v1972, 16
        %v2030 = vshrl.u32 %v2006, 16
        %v2031 = vpack.i.b16 %v2030, %v2029
        %v2035 = vpack.i.b16 %v2008, %v1974
        %v2037 = vshrl.u32 %v1974, 16
        %v2038 = vshrl.u32 %v2008, 16
        %v2039 = vpack.i.b16 %v2038, %v2037
        %2041 = vxpose.xlu0.c.b16.start [1/8] %v2011, 128
        %2042 = vxpose.xlu0.c.b16.cont [2/8] 0, 128
        %2043 = vxpose.xlu0.c.b16.cont [3/8] 0, 128
        %2044 = vxpose.xlu0.c.b16.cont [4/8] 0, 128
        %2045 = vxpose.xlu0.c.b16.cont [5/8] 0, 128
        %2046 = vxpose.xlu0.c.b16.cont [6/8] 0, 128
        %2047 = vxpose.xlu0.c.b16.cont [7/8] 0, 128
        %2048 = vxpose.xlu0.c.b16.end [8/8] 0, 128
        %v2049 = vpop.trf.xlu0
        %v2050 = vpop.trf.xlu0
        %v2051 = vpop.trf.xlu0
        %v2052 = vpop.trf.xlu0
        %v2053 = vpop.trf.xlu0
        %v2054 = vpop.trf.xlu0
        %v2055 = vpop.trf.xlu0
        %v2056 = vpop.trf.xlu0
        %2057 = vxpose.xlu0.c.b16.start [1/8] %v2015, 128
        %2058 = vxpose.xlu0.c.b16.cont [2/8] 0, 128
        %2059 = vxpose.xlu0.c.b16.cont [3/8] 0, 128
        %2060 = vxpose.xlu0.c.b16.cont [4/8] 0, 128
        %2061 = vxpose.xlu0.c.b16.cont [5/8] 0, 128
        %2062 = vxpose.xlu0.c.b16.cont [6/8] 0, 128
        %2063 = vxpose.xlu0.c.b16.cont [7/8] 0, 128
        %2064 = vxpose.xlu0.c.b16.end [8/8] 0, 128
        %v2065 = vpop.trf.xlu0
        %v2066 = vpop.trf.xlu0
        %v2067 = vpop.trf.xlu0
        %v2068 = vpop.trf.xlu0
        %v2069 = vpop.trf.xlu0
        %v2070 = vpop.trf.xlu0
        %v2071 = vpop.trf.xlu0
        %v2072 = vpop.trf.xlu0
        %2073 = vxpose.xlu0.c.b16.start [1/8] %v2019, 128
        %2074 = vxpose.xlu0.c.b16.cont [2/8] 0, 128
        %2075 = vxpose.xlu0.c.b16.cont [3/8] 0, 128
        %2076 = vxpose.xlu0.c.b16.cont [4/8] 0, 128
        %2077 = vxpose.xlu0.c.b16.cont [5/8] 0, 128
        %2078 = vxpose.xlu0.c.b16.cont [6/8] 0, 128
        %2079 = vxpose.xlu0.c.b16.cont [7/8] 0, 128
        %2080 = vxpose.xlu0.c.b16.end [8/8] 0, 128
        %v2081 = vpop.trf.xlu0
        %v2082 = vpop.trf.xlu0
        %v2083 = vpop.trf.xlu0
        %v2084 = vpop.trf.xlu0
        %v2085 = vpop.trf.xlu0
        %v2086 = vpop.trf.xlu0
        %v2087 = vpop.trf.xlu0
        %v2088 = vpop.trf.xlu0
        %2089 = vxpose.xlu0.c.b16.start [1/8] %v2023, 128
        %2090 = vxpose.xlu0.c.b16.cont [2/8] 0, 128
        %2091 = vxpose.xlu0.c.b16.cont [3/8] 0, 128
        %2092 = vxpose.xlu0.c.b16.cont [4/8] 0, 128
        %2093 = vxpose.xlu0.c.b16.cont [5/8] 0, 128
        %2094 = vxpose.xlu0.c.b16.cont [6/8] 0, 128
        %2095 = vxpose.xlu0.c.b16.cont [7/8] 0, 128
        %2096 = vxpose.xlu0.c.b16.end [8/8] 0, 128
        %v2097 = vpop.trf.xlu0
        %v2098 = vpop.trf.xlu0
        %v2099 = vpop.trf.xlu0
        %v2100 = vpop.trf.xlu0
        %v2101 = vpop.trf.xlu0
        %v2102 = vpop.trf.xlu0
        %v2103 = vpop.trf.xlu0
        %v2104 = vpop.trf.xlu0
        %2105 = vxpose.xlu0.c.b16.start [1/8] %v2027, 128
        %2106 = vxpose.xlu0.c.b16.cont [2/8] 0, 128
        %2107 = vxpose.xlu0.c.b16.cont [3/8] 0, 128
        %2108 = vxpose.xlu0.c.b16.cont [4/8] 0, 128
        %2109 = vxpose.xlu0.c.b16.cont [5/8] 0, 128
        %2110 = vxpose.xlu0.c.b16.cont [6/8] 0, 128
        %2111 = vxpose.xlu0.c.b16.cont [7/8] 0, 128
        %2112 = vxpose.xlu0.c.b16.end [8/8] 0, 128
        %v2113 = vpop.trf.xlu0
        %v2114 = vpop.trf.xlu0
        %v2115 = vpop.trf.xlu0
        %v2116 = vpop.trf.xlu0
        %v2117 = vpop.trf.xlu0
        %v2118 = vpop.trf.xlu0
        %v2119 = vpop.trf.xlu0
        %v2120 = vpop.trf.xlu0
        %2121 = vxpose.xlu0.c.b16.start [1/8] %v2031, 128
        %2122 = vxpose.xlu0.c.b16.cont [2/8] 0, 128
        %2123 = vxpose.xlu0.c.b16.cont [3/8] 0, 128
        %2124 = vxpose.xlu0.c.b16.cont [4/8] 0, 128
        %2125 = vxpose.xlu0.c.b16.cont [5/8] 0, 128
        %2126 = vxpose.xlu0.c.b16.cont [6/8] 0, 128
        %2127 = vxpose.xlu0.c.b16.cont [7/8] 0, 128
        %2128 = vxpose.xlu0.c.b16.end [8/8] 0, 128
        %v2129 = vpop.trf.xlu0
        %v2130 = vpop.trf.xlu0
        %v2131 = vpop.trf.xlu0
        %v2132 = vpop.trf.xlu0
        %v2133 = vpop.trf.xlu0
        %v2134 = vpop.trf.xlu0
        %v2135 = vpop.trf.xlu0
        %v2136 = vpop.trf.xlu0
        %2137 = vxpose.xlu0.c.b16.start [1/8] %v2035, 128
        %2138 = vxpose.xlu0.c.b16.cont [2/8] 0, 128
        %2139 = vxpose.xlu0.c.b16.cont [3/8] 0, 128
        %2140 = vxpose.xlu0.c.b16.cont [4/8] 0, 128
        %2141 = vxpose.xlu0.c.b16.cont [5/8] 0, 128
        %2142 = vxpose.xlu0.c.b16.cont [6/8] 0, 128
        %2143 = vxpose.xlu0.c.b16.cont [7/8] 0, 128
        %2144 = vxpose.xlu0.c.b16.end [8/8] 0, 128
        %v2145 = vpop.trf.xlu0
        %v2146 = vpop.trf.xlu0
        %v2147 = vpop.trf.xlu0
        %v2148 = vpop.trf.xlu0
        %v2149 = vpop.trf.xlu0
        %v2150 = vpop.trf.xlu0
        %v2151 = vpop.trf.xlu0
        %v2152 = vpop.trf.xlu0
        %2153 = vxpose.xlu0.c.b16.start [1/8] %v2039, 128
        %2154 = vxpose.xlu0.c.b16.cont [2/8] 0, 128
        %2155 = vxpose.xlu0.c.b16.cont [3/8] 0, 128
        %2156 = vxpose.xlu0.c.b16.cont [4/8] 0, 128
        %2157 = vxpose.xlu0.c.b16.cont [5/8] 0, 128
        %2158 = vxpose.xlu0.c.b16.cont [6/8] 0, 128
        %2159 = vxpose.xlu0.c.b16.cont [7/8] 0, 128
        %2160 = vxpose.xlu0.c.b16.end [8/8] 0, 128
        %v2161 = vpop.trf.xlu0
        %v2162 = vpop.trf.xlu0
        %v2163 = vpop.trf.xlu0
        %v2164 = vpop.trf.xlu0
        %v2165 = vpop.trf.xlu0
        %v2166 = vpop.trf.xlu0
        %v2167 = vpop.trf.xlu0
        %v2168 = vpop.trf.xlu0
        %v2169 = vcombine.low %v2049, %v2113
        %v2171 = vunpack.c.l.s4 1983009808
        %v2172 = vunpack.c.0.s8 %v2171
        %v2173 = vlaneseq
        %v2174 = vshrl.u32 %v2173, 7
        %v2175 = vsub.s32 %v2172, %v2174
        %v2176 = vrot.slane %v2169, %v2175
        %v2177 = vcombine.low %v2081, %v2145
        %v2179 = vunpack.c.l.s4 1983009808
        %v2180 = vunpack.c.0.s8 %v2179
        %v2181 = vlaneseq
        %v2182 = vshrl.u32 %v2181, 7
        %v2183 = vsub.s32 %v2180, %v2182
        %v2184 = vrot.slane %v2177, %v2183
        %v2185 = vcombine.low %v2176, %v2184
        %v2187 = vunpack.c.l.s4 1934713408
        %v2188 = vunpack.c.0.s8 %v2187
        %v2189 = vlaneseq
        %v2190 = vshrl.u32 %v2189, 7
        %v2191 = vsub.s32 %v2188, %v2190
        %v2192 = vrot.slane %v2185, %v2191
        %v2193 = vcombine.high %v2192, 0
        %v2194 = vcombine.low %v2065, %v2129
        %v2196 = vunpack.c.l.s4 1983009808
        %v2197 = vunpack.c.0.s8 %v2196
        %v2198 = vlaneseq
        %v2199 = vshrl.u32 %v2198, 7
        %v2200 = vsub.s32 %v2197, %v2199
        %v2201 = vrot.slane %v2194, %v2200
        %v2202 = vcombine.low %v2097, %v2161
        %v2204 = vunpack.c.l.s4 1983009808
        %v2205 = vunpack.c.0.s8 %v2204
        %v2206 = vlaneseq
        %v2207 = vshrl.u32 %v2206, 7
        %v2208 = vsub.s32 %v2205, %v2207
        %v2209 = vrot.slane %v2202, %v2208
        %v2210 = vcombine.low %v2201, %v2209
        %v2212 = vunpack.c.l.s4 1934713408
        %v2213 = vunpack.c.0.s8 %v2212
        %v2214 = vlaneseq
        %v2215 = vshrl.u32 %v2214, 7
        %v2216 = vsub.s32 %v2213, %v2215
        %v2217 = vrot.slane %v2210, %v2216
        %v2218 = vcombine.high %v2217, 0
        %v2221 = vpack.i.b16 %v2217, %v2192
        %v2222 = vshrl.u32 %v2192, 16
        %v2223 = vshrl.u32 %v2217, 16
        %v2224 = vpack.i.b16 %v2223, %v2222
        %v2227 = vpack.i.b16 %v2218, %v2193
        %v2228 = vshrl.u32 %v2193, 16
        %v2229 = vshrl.u32 %v2218, 16
        %v2230 = vpack.i.b16 %v2229, %v2228
        %v2232 = vsel %vm1579, %v2221, 0
        %v2235 = vsel %vm1579, %v1809, 0
        %2237 = vmatprep.subr.bf16.mxu0 0
        %2238 = vmatpush1.bf16.xpose.msra.mxu0 %v2235
        %2239 = vmatprep.subr.bf16.mxu0 0
        %2240 = vmatpush1.bf16.xpose.msra.mxu0 0
        %2241 = vmatprep.subr.bf16.mxu0 0
        %2242 = vmatpush1.bf16.xpose.msra.mxu0 0
        %2243 = vmatprep.subr.bf16.mxu0 0
        %2244 = vmatpush1.bf16.xpose.msra.mxu0 0
        %2245 = vmatprep.subr.bf16.mxu0 0
        %2246 = vmatpush1.bf16.xpose.msra.mxu0 0
        %2247 = vmatprep.subr.bf16.mxu0 0
        %2248 = vmatpush1.bf16.xpose.msra.mxu0 0
        %2249 = vmatprep.subr.bf16.mxu0 0
        %2250 = vmatpush1.bf16.xpose.msra.mxu0 0
        %2251 = vmatprep.subr.bf16.mxu0 0
        %2252 = vmatpush1.bf16.xpose.msra.mxu0 0
        %2253 = vmatprep.subr.bf16.mxu0 0
        %2254 = vmatpush1.bf16.xpose.msra.mxu0 0
        %2255 = vmatprep.subr.bf16.mxu0 0
        %2256 = vmatpush1.bf16.xpose.msra.mxu0 0
        %2257 = vmatprep.subr.bf16.mxu0 0
        %2258 = vmatpush1.bf16.xpose.msra.mxu0 0
        %2259 = vmatprep.subr.bf16.mxu0 0
        %2260 = vmatpush1.bf16.xpose.msra.mxu0 0
        %2261 = vmatprep.subr.bf16.mxu0 0
        %2262 = vmatpush1.bf16.xpose.msra.mxu0 0
        %2263 = vmatprep.subr.bf16.mxu0 0
        %2264 = vmatpush1.bf16.xpose.msra.mxu0 0
        %2265 = vmatprep.subr.bf16.mxu0 0
        %2266 = vmatpush1.bf16.xpose.msra.mxu0 0
        %2267 = vmatprep.subr.bf16.mxu0 0
        %2268 = vmatpush1.bf16.xpose.msra.mxu0 0
        %2269 = vmatprep.mubr.bf16.mxu0 0
        %2270 = vmatmul.mubr.bf16.gmra.mrb[0].mxu0 %v2232
        %v2271 = vpop.f32.mrb[0].mxu0
        %v2272 = vadd.f32 0.0, %v2271
        %v2273 = vpop.f32.mrb[0].mxu0
        %v2274 = vpop.f32.mrb[0].mxu0
        %v2275 = vpop.f32.mrb[0].mxu0
        %2276 = vdwg.mxu0
        %v2278 = vsel %vm1579, %v2224, 0
        %v2281 = vsel %vm1579, %v1810, 0
        %2283 = vmatprep.subr.bf16.mxu0 0
        %2284 = vmatpush1.bf16.xpose.msra.mxu0 %v2281
        %2285 = vmatprep.subr.bf16.mxu0 0
        %2286 = vmatpush1.bf16.xpose.msra.mxu0 0
        %2287 = vmatprep.subr.bf16.mxu0 0
        %2288 = vmatpush1.bf16.xpose.msra.mxu0 0
        %2289 = vmatprep.subr.bf16.mxu0 0
        %2290 = vmatpush1.bf16.xpose.msra.mxu0 0
        %2291 = vmatprep.subr.bf16.mxu0 0
        %2292 = vmatpush1.bf16.xpose.msra.mxu0 0
        %2293 = vmatprep.subr.bf16.mxu0 0
        %2294 = vmatpush1.bf16.xpose.msra.mxu0 0
        %2295 = vmatprep.subr.bf16.mxu0 0
        %2296 = vmatpush1.bf16.xpose.msra.mxu0 0
        %2297 = vmatprep.subr.bf16.mxu0 0
        %2298 = vmatpush1.bf16.xpose.msra.mxu0 0
        %2299 = vmatprep.subr.bf16.mxu0 0
        %2300 = vmatpush1.bf16.xpose.msra.mxu0 0
        %2301 = vmatprep.subr.bf16.mxu0 0
        %2302 = vmatpush1.bf16.xpose.msra.mxu0 0
        %2303 = vmatprep.subr.bf16.mxu0 0
        %2304 = vmatpush1.bf16.xpose.msra.mxu0 0
        %2305 = vmatprep.subr.bf16.mxu0 0
        %2306 = vmatpush1.bf16.xpose.msra.mxu0 0
        %2307 = vmatprep.subr.bf16.mxu0 0
        %2308 = vmatpush1.bf16.xpose.msra.mxu0 0
        %2309 = vmatprep.subr.bf16.mxu0 0
        %2310 = vmatpush1.bf16.xpose.msra.mxu0 0
        %2311 = vmatprep.subr.bf16.mxu0 0
        %2312 = vmatpush1.bf16.xpose.msra.mxu0 0
        %2313 = vmatprep.subr.bf16.mxu0 0
        %2314 = vmatpush1.bf16.xpose.msra.mxu0 0
        %2315 = vmatprep.mubr.bf16.mxu0 0
        %2316 = vmatmul.mubr.bf16.gmra.mrb[0].mxu0 %v2278
        %v2317 = vpop.f32.mrb[0].mxu0
        %v2318 = vadd.f32 0.0, %v2317
        %v2319 = vpop.f32.mrb[0].mxu0
        %v2320 = vpop.f32.mrb[0].mxu0
        %v2321 = vpop.f32.mrb[0].mxu0
        %2322 = vdwg.mxu0
        %v2324 = vsel %vm1579, %v2227, 0
        %v2327 = vsel %vm1579, %v1811, 0
        %2329 = vmatprep.subr.bf16.mxu0 0
        %2330 = vmatpush1.bf16.xpose.msra.mxu0 %v2327
        %2331 = vmatprep.subr.bf16.mxu0 0
        %2332 = vmatpush1.bf16.xpose.msra.mxu0 0
        %2333 = vmatprep.subr.bf16.mxu0 0
        %2334 = vmatpush1.bf16.xpose.msra.mxu0 0
        %2335 = vmatprep.subr.bf16.mxu0 0
        %2336 = vmatpush1.bf16.xpose.msra.mxu0 0
        %2337 = vmatprep.subr.bf16.mxu0 0
        %2338 = vmatpush1.bf16.xpose.msra.mxu0 0
        %2339 = vmatprep.subr.bf16.mxu0 0
        %2340 = vmatpush1.bf16.xpose.msra.mxu0 0
        %2341 = vmatprep.subr.bf16.mxu0 0
        %2342 = vmatpush1.bf16.xpose.msra.mxu0 0
        %2343 = vmatprep.subr.bf16.mxu0 0
        %2344 = vmatpush1.bf16.xpose.msra.mxu0 0
        %2345 = vmatprep.subr.bf16.mxu0 0
        %2346 = vmatpush1.bf16.xpose.msra.mxu0 0
        %2347 = vmatprep.subr.bf16.mxu0 0
        %2348 = vmatpush1.bf16.xpose.msra.mxu0 0
        %2349 = vmatprep.subr.bf16.mxu0 0
        %2350 = vmatpush1.bf16.xpose.msra.mxu0 0
        %2351 = vmatprep.subr.bf16.mxu0 0
        %2352 = vmatpush1.bf16.xpose.msra.mxu0 0
        %2353 = vmatprep.subr.bf16.mxu0 0
        %2354 = vmatpush1.bf16.xpose.msra.mxu0 0
        %2355 = vmatprep.subr.bf16.mxu0 0
        %2356 = vmatpush1.bf16.xpose.msra.mxu0 0
        %2357 = vmatprep.subr.bf16.mxu0 0
        %2358 = vmatpush1.bf16.xpose.msra.mxu0 0
        %2359 = vmatprep.subr.bf16.mxu0 0
        %2360 = vmatpush1.bf16.xpose.msra.mxu0 0
        %2361 = vmatprep.mubr.bf16.mxu0 0
        %2362 = vmatmul.mubr.bf16.gmra.mrb[0].mxu0 %v2324
        %v2363 = vpop.f32.mrb[0].mxu0
        %v2364 = vadd.f32 0.0, %v2363
        %v2365 = vpop.f32.mrb[0].mxu0
        %v2366 = vpop.f32.mrb[0].mxu0
        %v2367 = vpop.f32.mrb[0].mxu0
        %2368 = vdwg.mxu0
        %v2370 = vsel %vm1579, %v2230, 0
        %v2373 = vsel %vm1579, %v1812, 0
        %2375 = vmatprep.subr.bf16.mxu0 0
        %2376 = vmatpush1.bf16.xpose.msra.mxu0 %v2373
        %2377 = vmatprep.subr.bf16.mxu0 0
        %2378 = vmatpush1.bf16.xpose.msra.mxu0 0
        %2379 = vmatprep.subr.bf16.mxu0 0
        %2380 = vmatpush1.bf16.xpose.msra.mxu0 0
        %2381 = vmatprep.subr.bf16.mxu0 0
        %2382 = vmatpush1.bf16.xpose.msra.mxu0 0
        %2383 = vmatprep.subr.bf16.mxu0 0
        %2384 = vmatpush1.bf16.xpose.msra.mxu0 0
        %2385 = vmatprep.subr.bf16.mxu0 0
        %2386 = vmatpush1.bf16.xpose.msra.mxu0 0
        %2387 = vmatprep.subr.bf16.mxu0 0
        %2388 = vmatpush1.bf16.xpose.msra.mxu0 0
        %2389 = vmatprep.subr.bf16.mxu0 0
        %2390 = vmatpush1.bf16.xpose.msra.mxu0 0
        %2391 = vmatprep.subr.bf16.mxu0 0
        %2392 = vmatpush1.bf16.xpose.msra.mxu0 0
        %2393 = vmatprep.subr.bf16.mxu0 0
        %2394 = vmatpush1.bf16.xpose.msra.mxu0 0
        %2395 = vmatprep.subr.bf16.mxu0 0
        %2396 = vmatpush1.bf16.xpose.msra.mxu0 0
        %2397 = vmatprep.subr.bf16.mxu0 0
        %2398 = vmatpush1.bf16.xpose.msra.mxu0 0
        %2399 = vmatprep.subr.bf16.mxu0 0
        %2400 = vmatpush1.bf16.xpose.msra.mxu0 0
        %2401 = vmatprep.subr.bf16.mxu0 0
        %2402 = vmatpush1.bf16.xpose.msra.mxu0 0
        %2403 = vmatprep.subr.bf16.mxu0 0
        %2404 = vmatpush1.bf16.xpose.msra.mxu0 0
        %2405 = vmatprep.subr.bf16.mxu0 0
        %2406 = vmatpush1.bf16.xpose.msra.mxu0 0
        %2407 = vmatprep.mubr.bf16.mxu0 0
        %2408 = vmatmul.mubr.bf16.gmra.mrb[0].mxu0 %v2370
        %v2409 = vpop.f32.mrb[0].mxu0
        %v2410 = vadd.f32 0.0, %v2409
        %v2411 = vpop.f32.mrb[0].mxu0
        %v2412 = vpop.f32.mrb[0].mxu0
        %v2413 = vpop.f32.mrb[0].mxu0
        %2414 = vdwg.mxu0
        %2415 = vxpose.xlu0.b32.start [1/16] %v2272, 128
        %2416 = vxpose.xlu0.b32.cont [2/16] 0.0, 128
        %2417 = vxpose.xlu0.b32.cont [3/16] 0.0, 128
        %2418 = vxpose.xlu0.b32.cont [4/16] 0.0, 128
        %2419 = vxpose.xlu0.b32.cont [5/16] 0.0, 128
        %2420 = vxpose.xlu0.b32.cont [6/16] 0.0, 128
        %2421 = vxpose.xlu0.b32.cont [7/16] 0.0, 128
        %2422 = vxpose.xlu0.b32.cont [8/16] 0.0, 128
        %2423 = vxpose.xlu0.b32.cont [9/16] 0.0, 128
        %2424 = vxpose.xlu0.b32.cont [10/16] 0.0, 128
        %2425 = vxpose.xlu0.b32.cont [11/16] 0.0, 128
        %2426 = vxpose.xlu0.b32.cont [12/16] 0.0, 128
        %2427 = vxpose.xlu0.b32.cont [13/16] 0.0, 128
        %2428 = vxpose.xlu0.b32.cont [14/16] 0.0, 128
        %2429 = vxpose.xlu0.b32.cont [15/16] 0.0, 128
        %2430 = vxpose.xlu0.b32.end [16/16] 0.0, 128
        %v2431 = vpop.trf.xlu0
        %v2432 = vpop.trf.xlu0
        %v2433 = vpop.trf.xlu0
        %v2434 = vpop.trf.xlu0
        %v2435 = vpop.trf.xlu0
        %v2436 = vpop.trf.xlu0
        %v2437 = vpop.trf.xlu0
        %v2438 = vpop.trf.xlu0
        %v2439 = vpop.trf.xlu0
        %v2440 = vpop.trf.xlu0
        %v2441 = vpop.trf.xlu0
        %v2442 = vpop.trf.xlu0
        %v2443 = vpop.trf.xlu0
        %v2444 = vpop.trf.xlu0
        %v2445 = vpop.trf.xlu0
        %v2446 = vpop.trf.xlu0
        %2447 = vxpose.xlu0.b32.start [1/16] %v2318, 128
        %2448 = vxpose.xlu0.b32.cont [2/16] 0.0, 128
        %2449 = vxpose.xlu0.b32.cont [3/16] 0.0, 128
        %2450 = vxpose.xlu0.b32.cont [4/16] 0.0, 128
        %2451 = vxpose.xlu0.b32.cont [5/16] 0.0, 128
        %2452 = vxpose.xlu0.b32.cont [6/16] 0.0, 128
        %2453 = vxpose.xlu0.b32.cont [7/16] 0.0, 128
        %2454 = vxpose.xlu0.b32.cont [8/16] 0.0, 128
        %2455 = vxpose.xlu0.b32.cont [9/16] 0.0, 128
        %2456 = vxpose.xlu0.b32.cont [10/16] 0.0, 128
        %2457 = vxpose.xlu0.b32.cont [11/16] 0.0, 128
        %2458 = vxpose.xlu0.b32.cont [12/16] 0.0, 128
        %2459 = vxpose.xlu0.b32.cont [13/16] 0.0, 128
        %2460 = vxpose.xlu0.b32.cont [14/16] 0.0, 128
        %2461 = vxpose.xlu0.b32.cont [15/16] 0.0, 128
        %2462 = vxpose.xlu0.b32.end [16/16] 0.0, 128
        %v2463 = vpop.trf.xlu0
        %v2464 = vpop.trf.xlu0
        %v2465 = vpop.trf.xlu0
        %v2466 = vpop.trf.xlu0
        %v2467 = vpop.trf.xlu0
        %v2468 = vpop.trf.xlu0
        %v2469 = vpop.trf.xlu0
        %v2470 = vpop.trf.xlu0
        %v2471 = vpop.trf.xlu0
        %v2472 = vpop.trf.xlu0
        %v2473 = vpop.trf.xlu0
        %v2474 = vpop.trf.xlu0
        %v2475 = vpop.trf.xlu0
        %v2476 = vpop.trf.xlu0
        %v2477 = vpop.trf.xlu0
        %v2478 = vpop.trf.xlu0
        %2479 = vxpose.xlu0.b32.start [1/16] %v2364, 128
        %2480 = vxpose.xlu0.b32.cont [2/16] 0.0, 128
        %2481 = vxpose.xlu0.b32.cont [3/16] 0.0, 128
        %2482 = vxpose.xlu0.b32.cont [4/16] 0.0, 128
        %2483 = vxpose.xlu0.b32.cont [5/16] 0.0, 128
        %2484 = vxpose.xlu0.b32.cont [6/16] 0.0, 128
        %2485 = vxpose.xlu0.b32.cont [7/16] 0.0, 128
        %2486 = vxpose.xlu0.b32.cont [8/16] 0.0, 128
        %2487 = vxpose.xlu0.b32.cont [9/16] 0.0, 128
        %2488 = vxpose.xlu0.b32.cont [10/16] 0.0, 128
        %2489 = vxpose.xlu0.b32.cont [11/16] 0.0, 128
        %2490 = vxpose.xlu0.b32.cont [12/16] 0.0, 128
        %2491 = vxpose.xlu0.b32.cont [13/16] 0.0, 128
        %2492 = vxpose.xlu0.b32.cont [14/16] 0.0, 128
        %2493 = vxpose.xlu0.b32.cont [15/16] 0.0, 128
        %2494 = vxpose.xlu0.b32.end [16/16] 0.0, 128
        %v2495 = vpop.trf.xlu0
        %v2496 = vpop.trf.xlu0
        %v2497 = vpop.trf.xlu0
        %v2498 = vpop.trf.xlu0
        %v2499 = vpop.trf.xlu0
        %v2500 = vpop.trf.xlu0
        %v2501 = vpop.trf.xlu0
        %v2502 = vpop.trf.xlu0
        %v2503 = vpop.trf.xlu0
        %v2504 = vpop.trf.xlu0
        %v2505 = vpop.trf.xlu0
        %v2506 = vpop.trf.xlu0
        %v2507 = vpop.trf.xlu0
        %v2508 = vpop.trf.xlu0
        %v2509 = vpop.trf.xlu0
        %v2510 = vpop.trf.xlu0
        %2511 = vxpose.xlu0.b32.start [1/16] %v2410, 128
        %2512 = vxpose.xlu0.b32.cont [2/16] 0.0, 128
        %2513 = vxpose.xlu0.b32.cont [3/16] 0.0, 128
        %2514 = vxpose.xlu0.b32.cont [4/16] 0.0, 128
        %2515 = vxpose.xlu0.b32.cont [5/16] 0.0, 128
        %2516 = vxpose.xlu0.b32.cont [6/16] 0.0, 128
        %2517 = vxpose.xlu0.b32.cont [7/16] 0.0, 128
        %2518 = vxpose.xlu0.b32.cont [8/16] 0.0, 128
        %2519 = vxpose.xlu0.b32.cont [9/16] 0.0, 128
        %2520 = vxpose.xlu0.b32.cont [10/16] 0.0, 128
        %2521 = vxpose.xlu0.b32.cont [11/16] 0.0, 128
        %2522 = vxpose.xlu0.b32.cont [12/16] 0.0, 128
        %2523 = vxpose.xlu0.b32.cont [13/16] 0.0, 128
        %2524 = vxpose.xlu0.b32.cont [14/16] 0.0, 128
        %2525 = vxpose.xlu0.b32.cont [15/16] 0.0, 128
        %2526 = vxpose.xlu0.b32.end [16/16] 0.0, 128
        %v2527 = vpop.trf.xlu0
        %v2528 = vpop.trf.xlu0
        %v2529 = vpop.trf.xlu0
        %v2530 = vpop.trf.xlu0
        %v2531 = vpop.trf.xlu0
        %v2532 = vpop.trf.xlu0
        %v2533 = vpop.trf.xlu0
        %v2534 = vpop.trf.xlu0
        %v2535 = vpop.trf.xlu0
        %v2536 = vpop.trf.xlu0
        %v2537 = vpop.trf.xlu0
        %v2538 = vpop.trf.xlu0
        %v2539 = vpop.trf.xlu0
        %v2540 = vpop.trf.xlu0
        %v2541 = vpop.trf.xlu0
        %v2542 = vpop.trf.xlu0
        %v2543 = vcombine.low %v2431, %v2495
        %v2544 = vcombine.high %v2431, %v2495
        %v2546 = vunpack.c.l.s4 1983009808
        %v2547 = vunpack.c.0.s8 %v2546
        %v2548 = vlaneseq
        %v2549 = vshrl.u32 %v2548, 7
        %v2550 = vsub.s32 %v2547, %v2549
        %v2551 = vrot.slane %v2543, %v2550
        %v2553 = vunpack.c.l.s4 1983009808
        %v2554 = vunpack.c.0.s8 %v2553
        %v2555 = vlaneseq
        %v2556 = vshrl.u32 %v2555, 7
        %v2557 = vsub.s32 %v2554, %v2556
        %v2558 = vrot.slane %v2544, %v2557
        %v2559 = vcombine.low %v2463, %v2527
        %v2560 = vcombine.high %v2463, %v2527
        %v2562 = vunpack.c.l.s4 1983009808
        %v2563 = vunpack.c.0.s8 %v2562
        %v2564 = vlaneseq
        %v2565 = vshrl.u32 %v2564, 7
        %v2566 = vsub.s32 %v2563, %v2565
        %v2567 = vrot.slane %v2559, %v2566
        %v2569 = vunpack.c.l.s4 1983009808
        %v2570 = vunpack.c.0.s8 %v2569
        %v2571 = vlaneseq
        %v2572 = vshrl.u32 %v2571, 7
        %v2573 = vsub.s32 %v2570, %v2572
        %v2574 = vrot.slane %v2560, %v2573
        %v2575 = vcombine.low %v2551, %v2567
        %v2576 = vcombine.high %v2551, %v2567
        %v2578 = vunpack.c.l.s4 1934713408
        %v2579 = vunpack.c.0.s8 %v2578
        %v2580 = vlaneseq
        %v2581 = vshrl.u32 %v2580, 7
        %v2582 = vsub.s32 %v2579, %v2581
        %v2583 = vrot.slane %v2575, %v2582
        %v2585 = vunpack.c.l.s4 1934713408
        %v2586 = vunpack.c.0.s8 %v2585
        %v2587 = vlaneseq
        %v2588 = vshrl.u32 %v2587, 7
        %v2589 = vsub.s32 %v2586, %v2588
        %v2590 = vrot.slane %v2576, %v2589
        %v2591 = vcombine.low %v2558, %v2574
        %v2592 = vcombine.high %v2558, %v2574
        %v2594 = vunpack.c.l.s4 1934713408
        %v2595 = vunpack.c.0.s8 %v2594
        %v2596 = vlaneseq
        %v2597 = vshrl.u32 %v2596, 7
        %v2598 = vsub.s32 %v2595, %v2597
        %v2599 = vrot.slane %v2591, %v2598
        %v2601 = vunpack.c.l.s4 1934713408
        %v2602 = vunpack.c.0.s8 %v2601
        %v2603 = vlaneseq
        %v2604 = vshrl.u32 %v2603, 7
        %v2605 = vsub.s32 %v2602, %v2604
        %v2606 = vrot.slane %v2592, %v2605
        %v2607 = vcombine.high %v2583, 0.0
        %v2608 = vcombine.high %v2590, 0.0
        %v2609 = vcombine.high %v2599, 0.0
        %v2610 = vcombine.high %v2606, 0.0
        %v2611 = vcombine.low %v2583, %v2590
        %v2613 = vunpack.c.l.s4 1983009808
        %v2614 = vunpack.c.0.s8 %v2613
        %v2615 = vlaneseq
        %v2616 = vshrl.u32 %v2615, 7
        %v2617 = vsub.s32 %v2614, %v2616
        %v2618 = vrot.slane %v2611, %v2617
        %v2619 = vcombine.low %v2607, %v2608
        %v2621 = vunpack.c.l.s4 1983009808
        %v2622 = vunpack.c.0.s8 %v2621
        %v2623 = vlaneseq
        %v2624 = vshrl.u32 %v2623, 7
        %v2625 = vsub.s32 %v2622, %v2624
        %v2626 = vrot.slane %v2619, %v2625
        %v2627 = vcombine.low %v2599, %v2606
        %v2629 = vunpack.c.l.s4 1983009808
        %v2630 = vunpack.c.0.s8 %v2629
        %v2631 = vlaneseq
        %v2632 = vshrl.u32 %v2631, 7
        %v2633 = vsub.s32 %v2630, %v2632
        %v2634 = vrot.slane %v2627, %v2633
        %v2635 = vcombine.low %v2609, %v2610
        %v2637 = vunpack.c.l.s4 1983009808
        %v2638 = vunpack.c.0.s8 %v2637
        %v2639 = vlaneseq
        %v2640 = vshrl.u32 %v2639, 7
        %v2641 = vsub.s32 %v2638, %v2640
        %v2642 = vrot.slane %v2635, %v2641
        %v2643 = vcombine.low %v2618, %v2626
        %v2644 = vcombine.high %v2618, %v2626
        %v2646 = vunpack.c.l.s4 1934713408
        %v2647 = vunpack.c.0.s8 %v2646
        %v2648 = vlaneseq
        %v2649 = vshrl.u32 %v2648, 7
        %v2650 = vsub.s32 %v2647, %v2649
        %v2651 = vrot.slane %v2643, %v2650
        %v2653 = vunpack.c.l.s4 1934713408
        %v2654 = vunpack.c.0.s8 %v2653
        %v2655 = vlaneseq
        %v2656 = vshrl.u32 %v2655, 7
        %v2657 = vsub.s32 %v2654, %v2656
        %v2658 = vrot.slane %v2644, %v2657
        %v2659 = vcombine.low %v2634, %v2642
        %v2660 = vcombine.high %v2634, %v2642
        %v2662 = vunpack.c.l.s4 1934713408
        %v2663 = vunpack.c.0.s8 %v2662
        %v2664 = vlaneseq
        %v2665 = vshrl.u32 %v2664, 7
        %v2666 = vsub.s32 %v2663, %v2665
        %v2667 = vrot.slane %v2659, %v2666
        %v2669 = vunpack.c.l.s4 1934713408
        %v2670 = vunpack.c.0.s8 %v2669
        %v2671 = vlaneseq
        %v2672 = vshrl.u32 %v2671, 7
        %v2673 = vsub.s32 %v2670, %v2672
        %v2674 = vrot.slane %v2660, %v2673
        %v2675 = vcombine.low %v2651, %v2667
        %v2676 = vcombine.high %v2651, %v2667
        %v2677 = vcombine.low %v2658, %v2674
        %v2678 = vcombine.high %v2658, %v2674
        %2680 = vrot.lane.b32.xlu0 %v2676, 8
        %v2681 = vpop.permute.xlu0 %2680
        %2684 = vrot.lane.b32.xlu0 %v2677, 16
        %v2685 = vpop.permute.xlu0 %2684
        %2688 = vrot.lane.b32.xlu0 %v2678, 24
        %v2689 = vpop.permute.xlu0 %2688
        %v2691 = vsel %vm1579, %v2675, %v2681
        %vm2692 = vcmask 130048
        %v2693 = vsel %vm2692, %v2691, %v2685
        %vm2694 = vcmask 195584
        %v2695 = vsel %vm2694, %v2693, %v2689
        %v2696 = vpack.c.bf16 %v2695, %v2695
        %v2697 = vld [vmem:[%s8] sm:$0xf]
        %v2698 = vld [vmem:[%s8 + $0x4] sm:$0xf]
        %v2699 = vld [vmem:[%s8 + $0x8] sm:$0xf]
        %v2700 = vld [vmem:[%s8 + $0xc] sm:$0xf]
        %v2701 = vld [vmem:[#allocation11] sm:$0x1]
        %v2703 = vlaneseq
        %v2704 = vshrl.u32 %v2703, 7
        %v2705 = vsub.s32 0, %v2704
        %v2706 = vrot.slane %v2701, %v2705
        %v2712 = vunpack.c.l.b16 %v2697
        %v2713 = vunpack.c.l.b16 %v2698
        %v2714 = vunpack.c.l.b16 %v2699
        %v2715 = vunpack.c.l.b16 %v2700
        %v2716 = vpack.c.b16 %v2713, %v2712
        %v2717 = vpack.c.b16 %v2715, %v2714
        %v2721 = vsel %vm793, %v2696, 0
        %2723 = vmatprep.subr.bf16.mxu0 0
        %2724 = vmatpush1.bf16.msra.mxu0 %v2716
        %2725 = vmatprep.subr.bf16.mxu0 0
        %2726 = vmatpush1.bf16.msra.mxu0 %v2717
        %2727 = vmatprep.subr.bf16.mxu0 0
        %2728 = vmatpush1.bf16.msra.mxu0 0
        %2729 = vmatprep.subr.bf16.mxu0 0
        %2730 = vmatpush1.bf16.msra.mxu0 0
        %2731 = vmatprep.subr.bf16.mxu0 0
        %2732 = vmatpush1.bf16.msra.mxu0 0
        %2733 = vmatprep.subr.bf16.mxu0 0
        %2734 = vmatpush1.bf16.msra.mxu0 0
        %2735 = vmatprep.subr.bf16.mxu0 0
        %2736 = vmatpush1.bf16.msra.mxu0 0
        %2737 = vmatprep.subr.bf16.mxu0 0
        %2738 = vmatpush1.bf16.msra.mxu0 0
        %2739 = vmatprep.subr.bf16.mxu0 0
        %2740 = vmatpush1.bf16.msra.mxu0 0
        %2741 = vmatprep.subr.bf16.mxu0 0
        %2742 = vmatpush1.bf16.msra.mxu0 0
        %2743 = vmatprep.subr.bf16.mxu0 0
        %2744 = vmatpush1.bf16.msra.mxu0 0
        %2745 = vmatprep.subr.bf16.mxu0 0
        %2746 = vmatpush1.bf16.msra.mxu0 0
        %2747 = vmatprep.subr.bf16.mxu0 0
        %2748 = vmatpush1.bf16.msra.mxu0 0
        %2749 = vmatprep.subr.bf16.mxu0 0
        %2750 = vmatpush1.bf16.msra.mxu0 0
        %2751 = vmatprep.subr.bf16.mxu0 0
        %2752 = vmatpush1.bf16.msra.mxu0 0
        %2753 = vmatprep.subr.bf16.mxu0 0
        %2754 = vmatpush1.bf16.msra.mxu0 0
        %2755 = vmatprep.mubr.bf16.mxu0 0
        %2756 = vmatmul.mubr.bf16.gmra.mrb[0].mxu0 %v2721
        %v2757 = vpop.f32.mrb[0].mxu0
        %v2758 = vadd.f32 %v2706, %v2757
        %v2759 = vpop.f32.mrb[0].mxu0
        %v2760 = vpop.f32.mrb[0].mxu0
        %v2761 = vpop.f32.mrb[0].mxu0
        %2762 = vdwg.mxu0
        %v2763 = vadd.f32 %v2695, %v2758
        %v2764 = vld [vmem:[%s10] sm:$0x1]
        %v2765 = vld [vmem:[%s11] sm:$0x1]
        %v2766 = vsel %vm793, %v2763, 0.0
        %2767 = vadd.xlane.f32.xlu0 %v2766
        %v2768 = vpop.xlane.xlu0 %2767
        %v2769 = vmul.f32 %v2763, %v2763
        %v2770 = vsel %vm793, %v2769, 0.0
        %2771 = vadd.xlane.f32.xlu0 %v2770
        %v2772 = vpop.xlane.xlu0 %2771
        %v2773 = vmul.f32 %v2768, 0.03125
        %v2774 = vmul.f32 %v2772, 0.03125
        %v2775 = vmul.f32 %v2773, %v2773
        %v2776 = vsub.f32 %v2774, %v2775
        %v2777 = vmax.f32 %v2776, 0.0
        %v2778 = vsub.f32 %v2763, %v2773
        %v2779 = vadd.f32 %v2777, 1e-12
        %v2780 = vrsqrt.pop %v2779
        %v2781 = vmul.f32 %v2778, %v2780
        %v2783 = vlaneseq
        %v2784 = vshrl.u32 %v2783, 7
        %v2785 = vsub.s32 0, %v2784
        %v2786 = vrot.slane %v2764, %v2785
        %v2788 = vmul.f32 %v2786, %v2781
        %v2790 = vlaneseq
        %v2791 = vshrl.u32 %v2790, 7
        %v2792 = vsub.s32 0, %v2791
        %v2793 = vrot.slane %v2765, %v2792
        %v2795 = vadd.f32 %v2788, %v2793
        %v2796 = vpack.c.bf16 %v2795, %v2795
        %v2797 = vld [vmem:[%s12] sm:$0xf]
        %v2798 = vld [vmem:[%s12 + $0x4] sm:$0xf]
        %v2799 = vld [vmem:[%s12 + $0x8] sm:$0xf]
        %v2800 = vld [vmem:[%s12 + $0xc] sm:$0xf]
        %v2801 = vld [vmem:[%s13] sm:$0x1]
        %v2803 = vlaneseq
        %v2804 = vshrl.u32 %v2803, 7
        %v2805 = vsub.s32 0, %v2804
        %v2806 = vrot.slane %v2801, %v2805
        %v2812 = vunpack.c.l.b16 %v2797
        %v2813 = vunpack.c.l.b16 %v2798
        %v2814 = vunpack.c.l.b16 %v2799
        %v2815 = vunpack.c.l.b16 %v2800
        %v2816 = vpack.c.b16 %v2813, %v2812
        %v2817 = vpack.c.b16 %v2815, %v2814
        %v2821 = vsel %vm793, %v2796, 0
        %2823 = vmatprep.subr.bf16.mxu0 0
        %2824 = vmatpush1.bf16.msra.mxu0 %v2816
        %2825 = vmatprep.subr.bf16.mxu0 0
        %2826 = vmatpush1.bf16.msra.mxu0 %v2817
        %2827 = vmatprep.subr.bf16.mxu0 0
        %2828 = vmatpush1.bf16.msra.mxu0 0
        %2829 = vmatprep.subr.bf16.mxu0 0
        %2830 = vmatpush1.bf16.msra.mxu0 0
        %2831 = vmatprep.subr.bf16.mxu0 0
        %2832 = vmatpush1.bf16.msra.mxu0 0
        %2833 = vmatprep.subr.bf16.mxu0 0
        %2834 = vmatpush1.bf16.msra.mxu0 0
        %2835 = vmatprep.subr.bf16.mxu0 0
        %2836 = vmatpush1.bf16.msra.mxu0 0
        %2837 = vmatprep.subr.bf16.mxu0 0
        %2838 = vmatpush1.bf16.msra.mxu0 0
        %2839 = vmatprep.subr.bf16.mxu0 0
        %2840 = vmatpush1.bf16.msra.mxu0 0
        %2841 = vmatprep.subr.bf16.mxu0 0
        %2842 = vmatpush1.bf16.msra.mxu0 0
        %2843 = vmatprep.subr.bf16.mxu0 0
        %2844 = vmatpush1.bf16.msra.mxu0 0
        %2845 = vmatprep.subr.bf16.mxu0 0
        %2846 = vmatpush1.bf16.msra.mxu0 0
        %2847 = vmatprep.subr.bf16.mxu0 0
        %2848 = vmatpush1.bf16.msra.mxu0 0
        %2849 = vmatprep.subr.bf16.mxu0 0
        %2850 = vmatpush1.bf16.msra.mxu0 0
        %2851 = vmatprep.subr.bf16.mxu0 0
        %2852 = vmatpush1.bf16.msra.mxu0 0
        %2853 = vmatprep.subr.bf16.mxu0 0
        %2854 = vmatpush1.bf16.msra.mxu0 0
        %2855 = vmatprep.mubr.bf16.mxu0 0
        %2856 = vmatmul.mubr.bf16.gmra.mrb[0].mxu0 %v2821
        %v2857 = vpop.f32.mrb[0].mxu0
        %v2858 = vadd.f32 %v2806, %v2857
        %v2859 = vpop.f32.mrb[0].mxu0
        %v2860 = vpop.f32.mrb[0].mxu0
        %v2861 = vpop.f32.mrb[0].mxu0
        %2862 = vdwg.mxu0
        %v2863 = vmul.f32 %v2858, 0.5
        %v2864 = vmul.f32 %v2858, %v2858
        %v2865 = vmul.f32 %v2864, %v2858
        %v2866 = vmul.f32 %v2865, 0.044715
        %v2867 = vadd.f32 %v2858, %v2866
        %v2868 = vmul.f32 %v2867, 0.7978846
        %v2869 = vtanh.pop %v2868
        %v2870 = vadd.f32 %v2869, 1.0
        %v2871 = vmul.f32 %v2863, %v2870
        %v2872 = vpack.c.bf16 %v2871, %v2871
        %v2873 = vld [vmem:[%s14] sm:$0xf]
        %v2874 = vld [vmem:[%s14 + $0x4] sm:$0xf]
        %v2875 = vld [vmem:[%s14 + $0x8] sm:$0xf]
        %v2876 = vld [vmem:[%s14 + $0xc] sm:$0xf]
        %v2877 = vld [vmem:[%s14 + $0x10] sm:$0xf]
        %v2878 = vld [vmem:[%s14 + $0x14] sm:$0xf]
        %v2879 = vld [vmem:[%s14 + $0x18] sm:$0xf]
        %v2880 = vld [vmem:[%s14 + $0x1c] sm:$0xf]
        %v2881 = vld [vmem:[%s15] sm:$0x1]
        %v2883 = vlaneseq
        %v2884 = vshrl.u32 %v2883, 7
        %v2885 = vsub.s32 0, %v2884
        %v2886 = vrot.slane %v2881, %v2885
        %v2896 = vunpack.c.l.b16 %v2873
        %v2897 = vunpack.c.l.b16 %v2874
        %v2898 = vunpack.c.l.b16 %v2875
        %v2899 = vunpack.c.l.b16 %v2876
        %v2900 = vunpack.c.l.b16 %v2877
        %v2901 = vunpack.c.l.b16 %v2878
        %v2902 = vunpack.c.l.b16 %v2879
        %v2903 = vunpack.c.l.b16 %v2880
        %v2904 = vpack.c.b16 %v2897, %v2896
        %v2905 = vpack.c.b16 %v2899, %v2898
        %v2906 = vpack.c.b16 %v2901, %v2900
        %v2907 = vpack.c.b16 %v2903, %v2902
        %vm2912 = vcmask 523264
        %v2914 = vsel %vm2912, %v2872, 0
        %2916 = vmatprep.subr.bf16.mxu0 0
        %2917 = vmatpush1.bf16.msra.mxu0 %v2904
        %2918 = vmatprep.subr.bf16.mxu0 0
        %2919 = vmatpush1.bf16.msra.mxu0 %v2905
        %2920 = vmatprep.subr.bf16.mxu0 0
        %2921 = vmatpush1.bf16.msra.mxu0 %v2906
        %2922 = vmatprep.subr.bf16.mxu0 0
        %2923 = vmatpush1.bf16.msra.mxu0 %v2907
        %2924 = vmatprep.subr.bf16.mxu0 0
        %2925 = vmatpush1.bf16.msra.mxu0 0
        %2926 = vmatprep.subr.bf16.mxu0 0
        %2927 = vmatpush1.bf16.msra.mxu0 0
        %2928 = vmatprep.subr.bf16.mxu0 0
        %2929 = vmatpush1.bf16.msra.mxu0 0
        %2930 = vmatprep.subr.bf16.mxu0 0
        %2931 = vmatpush1.bf16.msra.mxu0 0
        %2932 = vmatprep.subr.bf16.mxu0 0
        %2933 = vmatpush1.bf16.msra.mxu0 0
        %2934 = vmatprep.subr.bf16.mxu0 0
        %2935 = vmatpush1.bf16.msra.mxu0 0
        %2936 = vmatprep.subr.bf16.mxu0 0
        %2937 = vmatpush1.bf16.msra.mxu0 0
        %2938 = vmatprep.subr.bf16.mxu0 0
        %2939 = vmatpush1.bf16.msra.mxu0 0
        %2940 = vmatprep.subr.bf16.mxu0 0
        %2941 = vmatpush1.bf16.msra.mxu0 0
        %2942 = vmatprep.subr.bf16.mxu0 0
        %2943 = vmatpush1.bf16.msra.mxu0 0
        %2944 = vmatprep.subr.bf16.mxu0 0
        %2945 = vmatpush1.bf16.msra.mxu0 0
        %2946 = vmatprep.subr.bf16.mxu0 0
        %2947 = vmatpush1.bf16.msra.mxu0 0
        %2948 = vmatprep.mubr.bf16.mxu0 0
        %2949 = vmatmul.mubr.bf16.gmra.mrb[0].mxu0 %v2914
        %v2950 = vpop.f32.mrb[0].mxu0
        %v2951 = vadd.f32 %v2886, %v2950
        %v2952 = vpop.f32.mrb[0].mxu0
        %v2953 = vpop.f32.mrb[0].mxu0
        %v2954 = vpop.f32.mrb[0].mxu0
        %2955 = vdwg.mxu0
        %v2956 = vadd.f32 %v2795, %v2951
        %v2957 = vld [vmem:[%s16] sm:$0x1]
        %v2958 = vld [vmem:[%s17] sm:$0x1]
        %v2959 = vsel %vm793, %v2956, 0.0
        %2960 = vadd.xlane.f32.xlu0 %v2959
        %v2961 = vpop.xlane.xlu0 %2960
        %v2962 = vmul.f32 %v2956, %v2956
        %v2963 = vsel %vm793, %v2962, 0.0
        %2964 = vadd.xlane.f32.xlu0 %v2963
        %v2965 = vpop.xlane.xlu0 %2964
        %v2966 = vmul.f32 %v2961, 0.03125
        %v2967 = vmul.f32 %v2965, 0.03125
        %v2968 = vmul.f32 %v2966, %v2966
        %v2969 = vsub.f32 %v2967, %v2968
        %v2970 = vmax.f32 %v2969, 0.0
        %v2971 = vsub.f32 %v2956, %v2966
        %v2972 = vadd.f32 %v2970, 1e-12
        %v2973 = vrsqrt.pop %v2972
        %v2974 = vmul.f32 %v2971, %v2973
        %v2976 = vlaneseq
        %v2977 = vshrl.u32 %v2976, 7
        %v2978 = vsub.s32 0, %v2977
        %v2979 = vrot.slane %v2957, %v2978
        %v2981 = vmul.f32 %v2979, %v2974
        %v2983 = vlaneseq
        %v2984 = vshrl.u32 %v2983, 7
        %v2985 = vsub.s32 0, %v2984
        %v2986 = vrot.slane %v2958, %v2985
        %v2988 = vadd.f32 %v2981, %v2986
        %2989 = vst.msk [vmem:[#allocation2] sm:$0xff] %vm793, %v2988
        %p2990 = scmp.eq.s32.totalorder %s40, 1
        // Predicated region
        $region117: #{tpu_custom_call.1} parent=91 // pred_check
          %p2991 = pneg %p2990
        $region118: #{tpu_custom_call.1} parent=91 // pred_check_branch
          %2993 = sbr.rel (%p2991) target = $region120
        $region119: #{tpu_custom_call.1} parent=91 // pred_region
          %2994 = vst.msk [vmem:[%s643] sm:$0xff] %vm793, %v2988
        $region120: #{tpu_custom_call.1} parent=91 // pred_fallthru
          _
        %s2995 = sand.u32 %s438, 1
        %s2996 = scalar_lea.sflag [#allocation5], %s2995
        %s2997 = sand.u32 %s438, 1
        %s2998 = smul.addr %s2997, 8
        %s2999 = scalar_lea.vmem [#allocation12], %s2998
        // Predicated region
        $region121: #{tpu_custom_call.1} parent=91 // pred_check
          %p3000 = pneg %p448
        $region122: #{tpu_custom_call.1} parent=91 // pred_check_branch
          %3002 = sbr.rel (%p3000) target = $region124
        $region123: #{tpu_custom_call.1} parent=91 // pred_region
          %s3004 = ssub.s32 128, 128
          %3005 = vsyncadd %s2996, %s3004
          %s3006 = smul.addr %s39, 128
          %s3007 = scalar_lea.hbm %s18, %s3006
          %s3009 = sshll.u32 %s2999, 4
          %s3010 = int_to_ptr.vmem [resolvable:$true] %s3009
          %3012 = dma.vmem_to_hbm [thread:$0]  %s3010, 128, %s3007, %s2996
        $region124: #{tpu_custom_call.1} parent=91 // pred_fallthru
          _
      $region92: #{tpu_custom_call.1} parent=5 // pred_fallthru
        _
      %p3013 = scmp.le.s32.totalorder 2, %s30
      // Predicated region
      $region125: #{tpu_custom_call.1} parent=5 // pred_check
        %p3014 = pneg %p3013
      $region126: #{tpu_custom_call.1} parent=5 // pred_check_branch
        %3016 = sbr.rel (%p3014) target = $region128
      $region127: #{tpu_custom_call.1} parent=5 // pred_region
        %s3017 = ssub.s32 %s30, 2
        // Predicated region
        $region129: #{tpu_custom_call.1} parent=127 // pred_check
          %p3018 = pneg %p454
        $region130: #{tpu_custom_call.1} parent=127 // pred_check_branch
          %3020 = sbr.rel (%p3018) target = $region132
        $region131: #{tpu_custom_call.1} parent=127 // pred_region
          %s3021 = sand.u32 %s439, 1
          %s3022 = scalar_lea.sflag [#allocation5], %s3021
          %s3023 = sand.u32 %s439, 1
          %s3024 = smul.addr %s3023, 8
          %s3025 = scalar_lea.vmem [#allocation12], %s3024
          %3026 = dma.done %s3022, 128
        $region132: #{tpu_custom_call.1} parent=127 // pred_fallthru
          _
      $region128: #{tpu_custom_call.1} parent=5 // pred_fallthru
        _
    $region6: #{tpu_custom_call.1} parent=1 // loop_footer
      %s34 = sadd.s32 1, %s30
    $region7: #{tpu_custom_call.1} parent=1 // loop_footer_branch
      %29 = sbr.rel target = $region3
    $region8: #{tpu_custom_call.1} parent=1 // loop_exit
      _
    %3027 = vsyncpa [#allocation4], 1
    %s3028 = scalar_lea.sflag [#allocation4], 1
    %3029 = vsyncpa %s3028, 1
    %3030 = vsyncpa [#allocation7], 1
    %3031 = vsyncpa [#allocation10], 1
    %3032 = vsyncpa [#allocation5], 1
    %s3033 = scalar_lea.sflag [#allocation5], 1
    %3034 = vsyncpa %s3033, 1

// kernel: tpu_custom_call.1
$region0: #{tpu_custom_call.1}
  #allocation0 [shape = 'u32[]', space=smem, size = 0x4, offset = 0x4, fixed_abs, tag = 'smem constant byte address 0x4 - core index']
  #allocation1 [shape = 'u32[144,128]{1,0:T(1,128)}', space=vmem, size = 0x12000, scoped, tag = 'internal scratch']
  #allocation2 [shape = 'f32[8,32]{1,0:T(8,128)}', space=vmem, size = 0x1000, scoped, tag = 'scratch operand']
  %s0 = inlined_call_operand.vmem [shape: f32[2,8,16], index: 0, kind: input, shape index: {}]
  %s1 = inlined_call_operand.hbm [shape: bf16[16,32], index: 1, kind: input, shape index: {}]
  %s2 = inlined_call_operand.vmem [shape: f32[1,32], index: 2, kind: input, shape index: {}]
  %s3 = inlined_call_operand.vmem [shape: f32[1,32], index: 3, kind: input, shape index: {}]
  %s4 = inlined_call_operand.hbm [shape: f32[1,32], index: 4, kind: input, shape index: {}]
  %s5 = inlined_call_operand.hbm [shape: f32[8,32], index: 5, kind: input, shape index: {}]
  %s6 = inlined_call_operand.vmem [shape: bf16[32,96], index: 6, kind: input, shape index: {}]
  %s7 = inlined_call_operand.hbm [shape: f32[1,96], index: 7, kind: input, shape index: {}]
  %s8 = inlined_call_operand.vmem [shape: bf16[32,32], index: 8, kind: input, shape index: {}]
  %s9 = inlined_call_operand.hbm [shape: f32[1,32], index: 9, kind: input, shape index: {}]
  %s10 = inlined_call_operand.vmem [shape: f32[1,32], index: 10, kind: input, shape index: {}]
  %s11 = inlined_call_operand.vmem [shape: f32[1,32], index: 11, kind: input, shape index: {}]
  %s12 = inlined_call_operand.vmem [shape: bf16[32,64], index: 12, kind: input, shape index: {}]
  %s13 = inlined_call_operand.vmem [shape: f32[1,64], index: 13, kind: input, shape index: {}]
  %s14 = inlined_call_operand.vmem [shape: bf16[64,32], index: 14, kind: input, shape index: {}]
  %s15 = inlined_call_operand.vmem [shape: f32[1,32], index: 15, kind: input, shape index: {}]
  %s16 = inlined_call_operand.vmem [shape: f32[1,32], index: 16, kind: input, shape index: {}]
  %s17 = inlined_call_operand.vmem [shape: f32[1,32], index: 17, kind: input, shape index: {}]
  %s18 = inlined_call_operand.hbm [shape: f32[2,8,32], index: 18, kind: output, shape index: {}]
  %s19 = sld [smem:[#allocation0]]
  $region133: #{tpu_custom_call.1} parent=0
    _
  %s21 = ssub.s32 1, %s19
  %s22 = scalar_select 0, %s21, %s19
  $region1: #{tpu_custom_call.1} parent=0
    #allocation3 [shape = 'u8[4096]{0}', space=vmem, size = 0x1000, scoped, tag = 'input window, operand 1, single buffered']
    #allocation4 [shape = 's32[2]{0}', space=sflag, size = 0x8, scoped, tag = 'scoped memory for tpu_custom_call.1']
    #allocation5 [shape = 's32[2]{0}', space=sflag, size = 0x8, scoped, tag = 'scoped memory for tpu_custom_call.1']
    #allocation6 [shape = 'u8[512]{0}', space=vmem, size = 0x400, scoped, tag = 'input window, operand 4, single buffered']
    #allocation7 [shape = 's32[1]{0}', space=sflag, size = 0x4, scoped, tag = 'scoped memory for tpu_custom_call.1']
    #allocation8 [shape = 'u8[4096]{0}', space=vmem, size = 0x1000, scoped, tag = 'input window, operand 5, single buffered']
    #allocation9 [shape = 'u8[512]{0}', space=vmem, size = 0x400, scoped, tag = 'input window, operand 7, single buffered']
    #allocation10 [shape = 's32[1]{0}', space=sflag, size = 0x4, scoped, tag = 'scoped memory for tpu_custom_call.1']
    #allocation11 [shape = 'u8[512]{0}', space=vmem, size = 0x400, scoped, tag = 'input window, operand 9, single buffered']
    #allocation12 [shape = 'u8[8192]{0}', space=vmem, size = 0x2000, scoped, tag = 'output window, operand 0']
    %23 = vsyncpa [#allocation4], 0
    %24 = vsyncpa [#allocation7], 0
    %25 = vsyncpa [#allocation10], 0
    %26 = vsyncpa [#allocation5], 0
    %s27 = scalar_lea.sflag [#allocation5], 1
    %28 = vsyncpa %s27, 0
    loop: start=0, step=1, limit=6
    $region2: #{tpu_custom_call.1} parent=1 // loop_pre_header
      _
    $region3: #{tpu_custom_call.1} parent=1 // loop_header
      %s30 = sphi 0, %s34
      %p31 = scmp.ge.s32.totalorder %s30, 6
      %s37 = sphi 0, %s49
      %s38 = sphi 0, %s45
      %s39 = sphi 0, %s37
      %s40 = sphi 0, %s38
      %s41 = sphi 0, %s39
      %s42 = sphi 0, %s40
      %s52 = sphi 0, %s54
      %s55 = sphi 0, %s52
      %s56 = sphi 0, %s55
      %s72 = sphi 0, %s56
      %s76 = sphi 0, %s76
      %s78 = sphi 0, %s76
      %s79 = sphi 0, %s78
      %s93 = sphi 0, %s79
      %s97 = sphi 0, %s97
      %s99 = sphi 0, %s97
      %s100 = sphi 0, %s99
      %s114 = sphi 0, %s100
      %s118 = sphi 0, %s118
      %s120 = sphi 0, %s118
      %s121 = sphi 0, %s120
      %s135 = sphi 0, %s121
      %s139 = sphi 0, %s139
      %s141 = sphi 0, %s139
      %s142 = sphi 0, %s141
      %s156 = sphi 0, %s142
      %s160 = sphi 0, %s160
      %s162 = sphi 0, %s160
      %s163 = sphi 0, %s162
      %s177 = sphi 0, %s163
      %s181 = sphi 0, %s181
      %s183 = sphi 0, %s181
      %s184 = sphi 0, %s183
      %s198 = sphi 0, %s184
      %s202 = sphi 0, %s202
      %s204 = sphi 0, %s202
      %s205 = sphi 0, %s204
      %s219 = sphi 0, %s205
      %s223 = sphi 0, %s223
      %s225 = sphi 0, %s223
      %s226 = sphi 0, %s225
      %s240 = sphi 0, %s226
      %s244 = sphi 0, %s244
      %s246 = sphi 0, %s244
      %s247 = sphi 0, %s246
      %s261 = sphi 0, %s247
      %s265 = sphi 0, %s265
      %s267 = sphi 0, %s265
      %s268 = sphi 0, %s267
      %s282 = sphi 0, %s268
      %s286 = sphi 0, %s286
      %s288 = sphi 0, %s286
      %s289 = sphi 0, %s288
      %s303 = sphi 0, %s289
      %s307 = sphi 0, %s307
      %s309 = sphi 0, %s307
      %s310 = sphi 0, %s309
      %s324 = sphi 0, %s310
      %s328 = sphi 0, %s328
      %s330 = sphi 0, %s328
      %s331 = sphi 0, %s330
      %s345 = sphi 0, %s331
      %s349 = sphi 0, %s349
      %s351 = sphi 0, %s349
      %s352 = sphi 0, %s351
      %s366 = sphi 0, %s352
      %s370 = sphi 0, %s370
      %s372 = sphi 0, %s370
      %s373 = sphi 0, %s372
      %s387 = sphi 0, %s373
      %s391 = sphi 0, %s391
      %s393 = sphi 0, %s391
      %s394 = sphi 0, %s393
      %s408 = sphi 0, %s394
      %s412 = sphi 0, %s412
      %s414 = sphi 0, %s412
      %s415 = sphi 0, %s414
      %s429 = sphi 0, %s415
      %s435 = sphi 0, %s437
      %s438 = sphi 0, %s435
      %s439 = sphi 0, %s438
      %s455 = sphi 0, %s439
    $region4: #{tpu_custom_call.1} parent=1 // loop_header_branch
      %33 = sbr.rel (%p31) target = $region8
    $region5: #{tpu_custom_call.1} parent=1 // loop_body
      %s35 = ssub.s32 %s30, 1
      %s36 = ssub.s32 %s30, 2
      %s43 = sadd.s32 1, %s38
      %p44 = scmp.ge.s32.totalorder %s43, 2
      %s45 = scalar_select %p44, 0, %s43
      %s46 = sadd.s32 1, %s37
      %s47 = scalar_select %p44, %s46, %s37
      %p48 = scmp.ge.s32.totalorder %s47, 2
      %s49 = scalar_select %p48, 0, %s47
      %s50 = ssub.s32 %s37, %s49
      %p51 = scmp.eq.s32.totalorder %s50, 0
      %s53 = sadd.s32 %s52, 1
      %s54 = scalar_select %p51, %s52, %s53
      %p57 = pneg %p51
      %p58 = scmp.eq.s32.totalorder %s30, 3
      %p59 = por %p57, %p58
      %p60 = scmp.ne.s32.totalorder %s52, %s55
      %p61 = scmp.eq.s32.totalorder %s30, 0
      %p62 = por %p60, %p61
      %p63 = scmp.ne.s32.totalorder %s52, %s55
      %p64 = scmp.eq.s32.totalorder %s35, 3
      %p65 = por %p63, %p64
      %p66 = scmp.ne.s32.totalorder %s55, %s56
      %p67 = scmp.eq.s32.totalorder %s35, 0
      %p68 = por %p66, %p67
      %p69 = scmp.ne.s32.totalorder %s55, %s56
      %p70 = scmp.eq.s32.totalorder %s36, 3
      %p71 = por %p69, %p70
      %p73 = scmp.ne.s32.totalorder %s56, %s72
      %p74 = scmp.eq.s32.totalorder %s36, 0
      %p75 = por %p73, %p74
      %s77 = sadd.s32 %s76, 1
      %p80 = scmp.eq.s32.totalorder %s30, 3
      %p81 = scmp.ne.s32.totalorder %s76, %s78
      %p82 = scmp.eq.s32.totalorder %s30, 0
      %p83 = por %p81, %p82
      %p84 = scmp.ne.s32.totalorder %s76, %s78
      %p85 = scmp.eq.s32.totalorder %s35, 3
      %p86 = por %p84, %p85
      %p87 = scmp.ne.s32.totalorder %s78, %s79
      %p88 = scmp.eq.s32.totalorder %s35, 0
      %p89 = por %p87, %p88
      %p90 = scmp.ne.s32.totalorder %s78, %s79
      %p91 = scmp.eq.s32.totalorder %s36, 3
      %p92 = por %p90, %p91
      %p94 = scmp.ne.s32.totalorder %s79, %s93
      %p95 = scmp.eq.s32.totalorder %s36, 0
      %p96 = por %p94, %p95
      %s98 = sadd.s32 %s97, 1
      %p101 = scmp.eq.s32.totalorder %s30, 3
      %p102 = scmp.ne.s32.totalorder %s97, %s99
      %p103 = scmp.eq.s32.totalorder %s30, 0
      %p104 = por %p102, %p103
      %p105 = scmp.ne.s32.totalorder %s97, %s99
      %p106 = scmp.eq.s32.totalorder %s35, 3
      %p107 = por %p105, %p106
      %p108 = scmp.ne.s32.totalorder %s99, %s100
      %p109 = scmp.eq.s32.totalorder %s35, 0
      %p110 = por %p108, %p109
      %p111 = scmp.ne.s32.totalorder %s99, %s100
      %p112 = scmp.eq.s32.totalorder %s36, 3
      %p113 = por %p111, %p112
      %p115 = scmp.ne.s32.totalorder %s100, %s114
      %p116 = scmp.eq.s32.totalorder %s36, 0
      %p117 = por %p115, %p116
      %s119 = sadd.s32 %s118, 1
      %p122 = scmp.eq.s32.totalorder %s30, 3
      %p123 = scmp.ne.s32.totalorder %s118, %s120
      %p124 = scmp.eq.s32.totalorder %s30, 0
      %p125 = por %p123, %p124
      %p126 = scmp.ne.s32.totalorder %s118, %s120
      %p127 = scmp.eq.s32.totalorder %s35, 3
      %p128 = por %p126, %p127
      %p129 = scmp.ne.s32.totalorder %s120, %s121
      %p130 = scmp.eq.s32.totalorder %s35, 0
      %p131 = por %p129, %p130
      %p132 = scmp.ne.s32.totalorder %s120, %s121
      %p133 = scmp.eq.s32.totalorder %s36, 3
      %p134 = por %p132, %p133
      %p136 = scmp.ne.s32.totalorder %s121, %s135
      %p137 = scmp.eq.s32.totalorder %s36, 0
      %p138 = por %p136, %p137
      %s140 = sadd.s32 %s139, 1
      %p143 = scmp.eq.s32.totalorder %s30, 3
      %p144 = scmp.ne.s32.totalorder %s139, %s141
      %p145 = scmp.eq.s32.totalorder %s30, 0
      %p146 = por %p144, %p145
      %p147 = scmp.ne.s32.totalorder %s139, %s141
      %p148 = scmp.eq.s32.totalorder %s35, 3
      %p149 = por %p147, %p148
      %p150 = scmp.ne.s32.totalorder %s141, %s142
      %p151 = scmp.eq.s32.totalorder %s35, 0
      %p152 = por %p150, %p151
      %p153 = scmp.ne.s32.totalorder %s141, %s142
      %p154 = scmp.eq.s32.totalorder %s36, 3
      %p155 = por %p153, %p154
      %p157 = scmp.ne.s32.totalorder %s142, %s156
      %p158 = scmp.eq.s32.totalorder %s36, 0
      %p159 = por %p157, %p158
      %s161 = sadd.s32 %s160, 1
      %p164 = scmp.eq.s32.totalorder %s30, 3
      %p165 = scmp.ne.s32.totalorder %s160, %s162
      %p166 = scmp.eq.s32.totalorder %s30, 0
      %p167 = por %p165, %p166
      %p168 = scmp.ne.s32.totalorder %s160, %s162
      %p169 = scmp.eq.s32.totalorder %s35, 3
      %p170 = por %p168, %p169
      %p171 = scmp.ne.s32.totalorder %s162, %s163
      %p172 = scmp.eq.s32.totalorder %s35, 0
      %p173 = por %p171, %p172
      %p174 = scmp.ne.s32.totalorder %s162, %s163
      %p175 = scmp.eq.s32.totalorder %s36, 3
      %p176 = por %p174, %p175
      %p178 = scmp.ne.s32.totalorder %s163, %s177
      %p179 = scmp.eq.s32.totalorder %s36, 0
      %p180 = por %p178, %p179
      %s182 = sadd.s32 %s181, 1
      %p185 = scmp.eq.s32.totalorder %s30, 3
      %p186 = scmp.ne.s32.totalorder %s181, %s183
      %p187 = scmp.eq.s32.totalorder %s30, 0
      %p188 = por %p186, %p187
      %p189 = scmp.ne.s32.totalorder %s181, %s183
      %p190 = scmp.eq.s32.totalorder %s35, 3
      %p191 = por %p189, %p190
      %p192 = scmp.ne.s32.totalorder %s183, %s184
      %p193 = scmp.eq.s32.totalorder %s35, 0
      %p194 = por %p192, %p193
      %p195 = scmp.ne.s32.totalorder %s183, %s184
      %p196 = scmp.eq.s32.totalorder %s36, 3
      %p197 = por %p195, %p196
      %p199 = scmp.ne.s32.totalorder %s184, %s198
      %p200 = scmp.eq.s32.totalorder %s36, 0
      %p201 = por %p199, %p200
      %s203 = sadd.s32 %s202, 1
      %p206 = scmp.eq.s32.totalorder %s30, 3
      %p207 = scmp.ne.s32.totalorder %s202, %s204
      %p208 = scmp.eq.s32.totalorder %s30, 0
      %p209 = por %p207, %p208
      %p210 = scmp.ne.s32.totalorder %s202, %s204
      %p211 = scmp.eq.s32.totalorder %s35, 3
      %p212 = por %p210, %p211
      %p213 = scmp.ne.s32.totalorder %s204, %s205
      %p214 = scmp.eq.s32.totalorder %s35, 0
      %p215 = por %p213, %p214
      %p216 = scmp.ne.s32.totalorder %s204, %s205
      %p217 = scmp.eq.s32.totalorder %s36, 3
      %p218 = por %p216, %p217
      %p220 = scmp.ne.s32.totalorder %s205, %s219
      %p221 = scmp.eq.s32.totalorder %s36, 0
      %p222 = por %p220, %p221
      %s224 = sadd.s32 %s223, 1
      %p227 = scmp.eq.s32.totalorder %s30, 3
      %p228 = scmp.ne.s32.totalorder %s223, %s225
      %p229 = scmp.eq.s32.totalorder %s30, 0
      %p230 = por %p228, %p229
      %p231 = scmp.ne.s32.totalorder %s223, %s225
      %p232 = scmp.eq.s32.totalorder %s35, 3
      %p233 = por %p231, %p232
      %p234 = scmp.ne.s32.totalorder %s225, %s226
      %p235 = scmp.eq.s32.totalorder %s35, 0
      %p236 = por %p234, %p235
      %p237 = scmp.ne.s32.totalorder %s225, %s226
      %p238 = scmp.eq.s32.totalorder %s36, 3
      %p239 = por %p237, %p238
      %p241 = scmp.ne.s32.totalorder %s226, %s240
      %p242 = scmp.eq.s32.totalorder %s36, 0
      %p243 = por %p241, %p242
      %s245 = sadd.s32 %s244, 1
      %p248 = scmp.eq.s32.totalorder %s30, 3
      %p249 = scmp.ne.s32.totalorder %s244, %s246
      %p250 = scmp.eq.s32.totalorder %s30, 0
      %p251 = por %p249, %p250
      %p252 = scmp.ne.s32.totalorder %s244, %s246
      %p253 = scmp.eq.s32.totalorder %s35, 3
      %p254 = por %p252, %p253
      %p255 = scmp.ne.s32.totalorder %s246, %s247
      %p256 = scmp.eq.s32.totalorder %s35, 0
      %p257 = por %p255, %p256
      %p258 = scmp.ne.s32.totalorder %s246, %s247
      %p259 = scmp.eq.s32.totalorder %s36, 3
      %p260 = por %p258, %p259
      %p262 = scmp.ne.s32.totalorder %s247, %s261
      %p263 = scmp.eq.s32.totalorder %s36, 0
      %p264 = por %p262, %p263
      %s266 = sadd.s32 %s265, 1
      %p269 = scmp.eq.s32.totalorder %s30, 3
      %p270 = scmp.ne.s32.totalorder %s265, %s267
      %p271 = scmp.eq.s32.totalorder %s30, 0
      %p272 = por %p270, %p271
      %p273 = scmp.ne.s32.totalorder %s265, %s267
      %p274 = scmp.eq.s32.totalorder %s35, 3
      %p275 = por %p273, %p274
      %p276 = scmp.ne.s32.totalorder %s267, %s268
      %p277 = scmp.eq.s32.totalorder %s35, 0
      %p278 = por %p276, %p277
      %p279 = scmp.ne.s32.totalorder %s267, %s268
      %p280 = scmp.eq.s32.totalorder %s36, 3
      %p281 = por %p279, %p280
      %p283 = scmp.ne.s32.totalorder %s268, %s282
      %p284 = scmp.eq.s32.totalorder %s36, 0
      %p285 = por %p283, %p284
      %s287 = sadd.s32 %s286, 1
      %p290 = scmp.eq.s32.totalorder %s30, 3
      %p291 = scmp.ne.s32.totalorder %s286, %s288
      %p292 = scmp.eq.s32.totalorder %s30, 0
      %p293 = por %p291, %p292
      %p294 = scmp.ne.s32.totalorder %s286, %s288
      %p295 = scmp.eq.s32.totalorder %s35, 3
      %p296 = por %p294, %p295
      %p297 = scmp.ne.s32.totalorder %s288, %s289
      %p298 = scmp.eq.s32.totalorder %s35, 0
      %p299 = por %p297, %p298
      %p300 = scmp.ne.s32.totalorder %s288, %s289
      %p301 = scmp.eq.s32.totalorder %s36, 3
      %p302 = por %p300, %p301
      %p304 = scmp.ne.s32.totalorder %s289, %s303
      %p305 = scmp.eq.s32.totalorder %s36, 0
      %p306 = por %p304, %p305
      %s308 = sadd.s32 %s307, 1
      %p311 = scmp.eq.s32.totalorder %s30, 3
      %p312 = scmp.ne.s32.totalorder %s307, %s309
      %p313 = scmp.eq.s32.totalorder %s30, 0
      %p314 = por %p312, %p313
      %p315 = scmp.ne.s32.totalorder %s307, %s309
      %p316 = scmp.eq.s32.totalorder %s35, 3
      %p317 = por %p315, %p316
      %p318 = scmp.ne.s32.totalorder %s309, %s310
      %p319 = scmp.eq.s32.totalorder %s35, 0
      %p320 = por %p318, %p319
      %p321 = scmp.ne.s32.totalorder %s309, %s310
      %p322 = scmp.eq.s32.totalorder %s36, 3
      %p323 = por %p321, %p322
      %p325 = scmp.ne.s32.totalorder %s310, %s324
      %p326 = scmp.eq.s32.totalorder %s36, 0
      %p327 = por %p325, %p326
      %s329 = sadd.s32 %s328, 1
      %p332 = scmp.eq.s32.totalorder %s30, 3
      %p333 = scmp.ne.s32.totalorder %s328, %s330
      %p334 = scmp.eq.s32.totalorder %s30, 0
      %p335 = por %p333, %p334
      %p336 = scmp.ne.s32.totalorder %s328, %s330
      %p337 = scmp.eq.s32.totalorder %s35, 3
      %p338 = por %p336, %p337
      %p339 = scmp.ne.s32.totalorder %s330, %s331
      %p340 = scmp.eq.s32.totalorder %s35, 0
      %p341 = por %p339, %p340
      %p342 = scmp.ne.s32.totalorder %s330, %s331
      %p343 = scmp.eq.s32.totalorder %s36, 3
      %p344 = por %p342, %p343
      %p346 = scmp.ne.s32.totalorder %s331, %s345
      %p347 = scmp.eq.s32.totalorder %s36, 0
      %p348 = por %p346, %p347
      %s350 = sadd.s32 %s349, 1
      %p353 = scmp.eq.s32.totalorder %s30, 3
      %p354 = scmp.ne.s32.totalorder %s349, %s351
      %p355 = scmp.eq.s32.totalorder %s30, 0
      %p356 = por %p354, %p355
      %p357 = scmp.ne.s32.totalorder %s349, %s351
      %p358 = scmp.eq.s32.totalorder %s35, 3
      %p359 = por %p357, %p358
      %p360 = scmp.ne.s32.totalorder %s351, %s352
      %p361 = scmp.eq.s32.totalorder %s35, 0
      %p362 = por %p360, %p361
      %p363 = scmp.ne.s32.totalorder %s351, %s352
      %p364 = scmp.eq.s32.totalorder %s36, 3
      %p365 = por %p363, %p364
      %p367 = scmp.ne.s32.totalorder %s352, %s366
      %p368 = scmp.eq.s32.totalorder %s36, 0
      %p369 = por %p367, %p368
      %s371 = sadd.s32 %s370, 1
      %p374 = scmp.eq.s32.totalorder %s30, 3
      %p375 = scmp.ne.s32.totalorder %s370, %s372
      %p376 = scmp.eq.s32.totalorder %s30, 0
      %p377 = por %p375, %p376
      %p378 = scmp.ne.s32.totalorder %s370, %s372
      %p379 = scmp.eq.s32.totalorder %s35, 3
      %p380 = por %p378, %p379
      %p381 = scmp.ne.s32.totalorder %s372, %s373
      %p382 = scmp.eq.s32.totalorder %s35, 0
      %p383 = por %p381, %p382
      %p384 = scmp.ne.s32.totalorder %s372, %s373
      %p385 = scmp.eq.s32.totalorder %s36, 3
      %p386 = por %p384, %p385
      %p388 = scmp.ne.s32.totalorder %s373, %s387
      %p389 = scmp.eq.s32.totalorder %s36, 0
      %p390 = por %p388, %p389
      %s392 = sadd.s32 %s391, 1
      %p395 = scmp.eq.s32.totalorder %s30, 3
      %p396 = scmp.ne.s32.totalorder %s391, %s393
      %p397 = scmp.eq.s32.totalorder %s30, 0
      %p398 = por %p396, %p397
      %p399 = scmp.ne.s32.totalorder %s391, %s393
      %p400 = scmp.eq.s32.totalorder %s35, 3
      %p401 = por %p399, %p400
      %p402 = scmp.ne.s32.totalorder %s393, %s394
      %p403 = scmp.eq.s32.totalorder %s35, 0
      %p404 = por %p402, %p403
      %p405 = scmp.ne.s32.totalorder %s393, %s394
      %p406 = scmp.eq.s32.totalorder %s36, 3
      %p407 = por %p405, %p406
      %p409 = scmp.ne.s32.totalorder %s394, %s408
      %p410 = scmp.eq.s32.totalorder %s36, 0
      %p411 = por %p409, %p410
      %s413 = sadd.s32 %s412, 1
      %p416 = scmp.eq.s32.totalorder %s30, 3
      %p417 = scmp.ne.s32.totalorder %s412, %s414
      %p418 = scmp.eq.s32.totalorder %s30, 0
      %p419 = por %p417, %p418
      %p420 = scmp.ne.s32.totalorder %s412, %s414
      %p421 = scmp.eq.s32.totalorder %s35, 3
      %p422 = por %p420, %p421
      %p423 = scmp.ne.s32.totalorder %s414, %s415
      %p424 = scmp.eq.s32.totalorder %s35, 0
      %p425 = por %p423, %p424
      %p426 = scmp.ne.s32.totalorder %s414, %s415
      %p427 = scmp.eq.s32.totalorder %s36, 3
      %p428 = por %p426, %p427
      %p430 = scmp.ne.s32.totalorder %s415, %s429
      %p431 = scmp.eq.s32.totalorder %s36, 0
      %p432 = por %p430, %p431
      %s433 = ssub.s32 %s37, %s49
      %p434 = scmp.eq.s32.totalorder %s433, 0
      %s436 = sadd.s32 %s435, 1
      %s437 = scalar_select %p434, %s435, %s436
      %p440 = pneg %p434
      %p441 = scmp.eq.s32.totalorder %s30, 3
      %p442 = por %p440, %p441
      %p443 = scmp.ne.s32.totalorder %s435, %s438
      %p444 = scmp.eq.s32.totalorder %s30, 0
      %p445 = por %p443, %p444
      %p446 = scmp.ne.s32.totalorder %s435, %s438
      %p447 = scmp.eq.s32.totalorder %s35, 3
      %p448 = por %p446, %p447
      %p449 = scmp.ne.s32.totalorder %s438, %s439
      %p450 = scmp.eq.s32.totalorder %s35, 0
      %p451 = por %p449, %p450
      %p452 = scmp.ne.s32.totalorder %s438, %s439
      %p453 = scmp.eq.s32.totalorder %s36, 3
      %p454 = por %p452, %p453
      %p456 = scmp.ne.s32.totalorder %s439, %s455
      %p457 = scmp.eq.s32.totalorder %s36, 0
      %p458 = por %p456, %p457
      %p459 = scmp.le.s32.totalorder 1, %s30
      %p460 = scmp.lt.s32.totalorder %s30, 5
      %p461 = pnand %p459, %p460
      %p462 = pneg %p461
      // Predicated region
      $region9: #{tpu_custom_call.1} parent=5 // pred_check
        _
      $region10: #{tpu_custom_call.1} parent=5 // pred_check_branch
        %464 = sbr.rel (%p461) target = $region12
      $region11: #{tpu_custom_call.1} parent=5 // pred_region
        %s465 = ssub.s32 %s30, 1
        // Predicated region
        $region13: #{tpu_custom_call.1} parent=11 // pred_check
          %p466 = pneg %p89
        $region14: #{tpu_custom_call.1} parent=11 // pred_check_branch
          %468 = sbr.rel (%p466) target = $region16
        $region15: #{tpu_custom_call.1} parent=11 // pred_region
          %s470 = ssub.s32 128, 128
          %471 = vsyncadd [#allocation4], %s470
          %s472 = sshll.u32 [#allocation3], 4
          %s473 = int_to_ptr.vmem [resolvable:$true] %s472
          %478 = dma.hbm_to_vmem [thread:$0]  %s1, 128, %s473, [#allocation4], 64, 64, 4
        $region16: #{tpu_custom_call.1} parent=11 // pred_fallthru
          _
        // Predicated region
        $region17: #{tpu_custom_call.1} parent=11 // pred_check
          %p479 = pneg %p110
        $region18: #{tpu_custom_call.1} parent=11 // pred_check_branch
          %481 = sbr.rel (%p479) target = $region20
        $region19: #{tpu_custom_call.1} parent=11 // pred_region
          _
        $region20: #{tpu_custom_call.1} parent=11 // pred_fallthru
          _
        // Predicated region
        $region21: #{tpu_custom_call.1} parent=11 // pred_check
          %p482 = pneg %p131
        $region22: #{tpu_custom_call.1} parent=11 // pred_check_branch
          %484 = sbr.rel (%p482) target = $region24
        $region23: #{tpu_custom_call.1} parent=11 // pred_region
          _
        $region24: #{tpu_custom_call.1} parent=11 // pred_fallthru
          _
        // Predicated region
        $region25: #{tpu_custom_call.1} parent=11 // pred_check
          %p485 = pneg %p152
        $region26: #{tpu_custom_call.1} parent=11 // pred_check_branch
          %487 = sbr.rel (%p485) target = $region28
        $region27: #{tpu_custom_call.1} parent=11 // pred_region
          %s489 = ssub.s32 16, 16
          %490 = vsyncadd [#allocation7], %s489
          %s492 = sshll.u32 [#allocation6], 4
          %s493 = int_to_ptr.vmem [resolvable:$true] %s492
          %495 = dma.hbm_to_vmem [thread:$0]  %s4, 16, %s493, [#allocation7]
        $region28: #{tpu_custom_call.1} parent=11 // pred_fallthru
          _
        // Predicated region
        $region29: #{tpu_custom_call.1} parent=11 // pred_check
          %p496 = pneg %p173
        $region30: #{tpu_custom_call.1} parent=11 // pred_check_branch
          %498 = sbr.rel (%p496) target = $region32
        $region31: #{tpu_custom_call.1} parent=11 // pred_region
          %s500 = ssub.s32 128, 128
          %501 = vsyncadd [#allocation7], %s500
          %s503 = sshll.u32 [#allocation8], 4
          %s504 = int_to_ptr.vmem [resolvable:$true] %s503
          %506 = dma.hbm_to_vmem [thread:$0]  %s5, 128, %s504, [#allocation7]
        $region32: #{tpu_custom_call.1} parent=11 // pred_fallthru
          _
        // Predicated region
        $region33: #{tpu_custom_call.1} parent=11 // pred_check
          %p507 = pneg %p194
        $region34: #{tpu_custom_call.1} parent=11 // pred_check_branch
          %509 = sbr.rel (%p507) target = $region36
        $region35: #{tpu_custom_call.1} parent=11 // pred_region
          _
        $region36: #{tpu_custom_call.1} parent=11 // pred_fallthru
          _
        // Predicated region
        $region37: #{tpu_custom_call.1} parent=11 // pred_check
          %p510 = pneg %p215
        $region38: #{tpu_custom_call.1} parent=11 // pred_check_branch
          %512 = sbr.rel (%p510) target = $region40
        $region39: #{tpu_custom_call.1} parent=11 // pred_region
          %s514 = ssub.s32 16, 16
          %515 = vsyncadd [#allocation10], %s514
          %s517 = sshll.u32 [#allocation9], 4
          %s518 = int_to_ptr.vmem [resolvable:$true] %s517
          %520 = dma.hbm_to_vmem [thread:$0]  %s7, 16, %s518, [#allocation10]
        $region40: #{tpu_custom_call.1} parent=11 // pred_fallthru
          _
        // Predicated region
        $region41: #{tpu_custom_call.1} parent=11 // pred_check
          %p521 = pneg %p236
        $region42: #{tpu_custom_call.1} parent=11 // pred_check_branch
          %523 = sbr.rel (%p521) target = $region44
        $region43: #{tpu_custom_call.1} parent=11 // pred_region
          _
        $region44: #{tpu_custom_call.1} parent=11 // pred_fallthru
          _
        // Predicated region
        $region45: #{tpu_custom_call.1} parent=11 // pred_check
          %p524 = pneg %p257
        $region46: #{tpu_custom_call.1} parent=11 // pred_check_branch
          %526 = sbr.rel (%p524) target = $region48
        $region47: #{tpu_custom_call.1} parent=11 // pred_region
          %s528 = ssub.s32 16, 16
          %529 = vsyncadd [#allocation10], %s528
          %s531 = sshll.u32 [#allocation11], 4
          %s532 = int_to_ptr.vmem [resolvable:$true] %s531
          %534 = dma.hbm_to_vmem [thread:$0]  %s9, 16, %s532, [#allocation10]
        $region48: #{tpu_custom_call.1} parent=11 // pred_fallthru
          _
        // Predicated region
        $region49: #{tpu_custom_call.1} parent=11 // pred_check
          %p535 = pneg %p278
        $region50: #{tpu_custom_call.1} parent=11 // pred_check_branch
          %537 = sbr.rel (%p535) target = $region52
        $region51: #{tpu_custom_call.1} parent=11 // pred_region
          _
        $region52: #{tpu_custom_call.1} parent=11 // pred_fallthru
          _
        // Predicated region
        $region53: #{tpu_custom_call.1} parent=11 // pred_check
          %p538 = pneg %p299
        $region54: #{tpu_custom_call.1} parent=11 // pred_check_branch
          %540 = sbr.rel (%p538) target = $region56
        $region55: #{tpu_custom_call.1} parent=11 // pred_region
          _
        $region56: #{tpu_custom_call.1} parent=11 // pred_fallthru
          _
        // Predicated region
        $region57: #{tpu_custom_call.1} parent=11 // pred_check
          %p541 = pneg %p320
        $region58: #{tpu_custom_call.1} parent=11 // pred_check_branch
          %543 = sbr.rel (%p541) target = $region60
        $region59: #{tpu_custom_call.1} parent=11 // pred_region
          _
        $region60: #{tpu_custom_call.1} parent=11 // pred_fallthru
          _
        // Predicated region
        $region61: #{tpu_custom_call.1} parent=11 // pred_check
          %p544 = pneg %p341
        $region62: #{tpu_custom_call.1} parent=11 // pred_check_branch
          %546 = sbr.rel (%p544) target = $region64
        $region63: #{tpu_custom_call.1} parent=11 // pred_region
          _
        $region64: #{tpu_custom_call.1} parent=11 // pred_fallthru
          _
        // Predicated region
        $region65: #{tpu_custom_call.1} parent=11 // pred_check
          %p547 = pneg %p362
        $region66: #{tpu_custom_call.1} parent=11 // pred_check_branch
          %549 = sbr.rel (%p547) target = $region68
        $region67: #{tpu_custom_call.1} parent=11 // pred_region
          _
        $region68: #{tpu_custom_call.1} parent=11 // pred_fallthru
          _
        // Predicated region
        $region69: #{tpu_custom_call.1} parent=11 // pred_check
          %p550 = pneg %p383
        $region70: #{tpu_custom_call.1} parent=11 // pred_check_branch
          %552 = sbr.rel (%p550) target = $region72
        $region71: #{tpu_custom_call.1} parent=11 // pred_region
          _
        $region72: #{tpu_custom_call.1} parent=11 // pred_fallthru
          _
        // Predicated region
        $region73: #{tpu_custom_call.1} parent=11 // pred_check
          %p553 = pneg %p404
        $region74: #{tpu_custom_call.1} parent=11 // pred_check_branch
          %555 = sbr.rel (%p553) target = $region76
        $region75: #{tpu_custom_call.1} parent=11 // pred_region
          _
        $region76: #{tpu_custom_call.1} parent=11 // pred_fallthru
          _
        // Predicated region
        $region77: #{tpu_custom_call.1} parent=11 // pred_check
          %p556 = pneg %p425
        $region78: #{tpu_custom_call.1} parent=11 // pred_check_branch
          %558 = sbr.rel (%p556) target = $region80
        $region79: #{tpu_custom_call.1} parent=11 // pred_region
          _
        $region80: #{tpu_custom_call.1} parent=11 // pred_fallthru
          _
      $region12: #{tpu_custom_call.1} parent=5 // pred_fallthru
        _
      %p559 = scmp.lt.s32.totalorder %s30, 4
      // Predicated region
      $region81: #{tpu_custom_call.1} parent=5 // pred_check
        %p560 = pneg %p559
      $region82: #{tpu_custom_call.1} parent=5 // pred_check_branch
        %562 = sbr.rel (%p560) target = $region84
      $region83: #{tpu_custom_call.1} parent=5 // pred_region
        // Predicated region
        $region85: #{tpu_custom_call.1} parent=83 // pred_check
          %p563 = pneg %p62
        $region86: #{tpu_custom_call.1} parent=83 // pred_check_branch
          %565 = sbr.rel (%p563) target = $region88
        $region87: #{tpu_custom_call.1} parent=83 // pred_region
          %p566 = scmp.lt.s32.totalorder %s37, 1
          %s567 = scalar_select %p566, %s37, 1
          %s568 = smul.addr %s567, 8
          %s569 = scalar_lea.vmem %s0, %s568
        $region88: #{tpu_custom_call.1} parent=83 // pred_fallthru
          _
      $region84: #{tpu_custom_call.1} parent=5 // pred_fallthru
        _
      %p570 = scmp.le.s32.totalorder 1, %s30
      %p571 = scmp.lt.s32.totalorder %s30, 5
      %p572 = pnand %p570, %p571
      %p573 = pneg %p572
      // Predicated region
      $region89: #{tpu_custom_call.1} parent=5 // pred_check
        _
      $region90: #{tpu_custom_call.1} parent=5 // pred_check_branch
        %575 = sbr.rel (%p572) target = $region92
      $region91: #{tpu_custom_call.1} parent=5 // pred_region
        %s576 = ssub.s32 %s30, 1
        // Predicated region
        $region93: #{tpu_custom_call.1} parent=91 // pred_check
          %p577 = pneg %p89
        $region94: #{tpu_custom_call.1} parent=91 // pred_check_branch
          %579 = sbr.rel (%p577) target = $region96
        $region95: #{tpu_custom_call.1} parent=91 // pred_region
          %580 = dma.done [#allocation4], 128
        $region96: #{tpu_custom_call.1} parent=91 // pred_fallthru
          _
        // Predicated region
        $region97: #{tpu_custom_call.1} parent=91 // pred_check
          %p581 = pneg %p152
        $region98: #{tpu_custom_call.1} parent=91 // pred_check_branch
          %583 = sbr.rel (%p581) target = $region100
        $region99: #{tpu_custom_call.1} parent=91 // pred_region
          %584 = dma.done [#allocation7], 16
        $region100: #{tpu_custom_call.1} parent=91 // pred_fallthru
          _
        // Predicated region
        $region101: #{tpu_custom_call.1} parent=91 // pred_check
          %p585 = pneg %p173
        $region102: #{tpu_custom_call.1} parent=91 // pred_check_branch
          %587 = sbr.rel (%p585) target = $region104
        $region103: #{tpu_custom_call.1} parent=91 // pred_region
          %588 = dma.done [#allocation7], 128
        $region104: #{tpu_custom_call.1} parent=91 // pred_fallthru
          _
        // Predicated region
        $region105: #{tpu_custom_call.1} parent=91 // pred_check
          %p589 = pneg %p215
        $region106: #{tpu_custom_call.1} parent=91 // pred_check_branch
          %591 = sbr.rel (%p589) target = $region108
        $region107: #{tpu_custom_call.1} parent=91 // pred_region
          %592 = dma.done [#allocation10], 16
        $region108: #{tpu_custom_call.1} parent=91 // pred_fallthru
          _
        // Predicated region
        $region109: #{tpu_custom_call.1} parent=91 // pred_check
          %p593 = pneg %p257
        $region110: #{tpu_custom_call.1} parent=91 // pred_check_branch
          %595 = sbr.rel (%p593) target = $region112
        $region111: #{tpu_custom_call.1} parent=91 // pred_region
          %596 = dma.done [#allocation10], 16
        $region112: #{tpu_custom_call.1} parent=91 // pred_fallthru
          _
        %p597 = scmp.lt.s32.totalorder %s39, 1
        %s598 = scalar_select %p597, %s39, 1
        %s599 = smul.addr %s598, 8
        %s600 = scalar_lea.vmem %s0, %s599
        %p601 = pneg %p68
        %p602 = pneg %p65
        %p603 = pneg %p89
        %p604 = pneg %p86
        %p605 = pneg %p110
        %p606 = pneg %p107
        %p607 = pneg %p131
        %p608 = pneg %p128
        %p609 = pneg %p152
        %p610 = pneg %p149
        %p611 = pneg %p173
        %p612 = pneg %p170
        %p613 = pneg %p194
        %p614 = pneg %p191
        %p615 = pneg %p215
        %p616 = pneg %p212
        %p617 = pneg %p236
        %p618 = pneg %p233
        %p619 = pneg %p257
        %p620 = pneg %p254
        %p621 = pneg %p278
        %p622 = pneg %p275
        %p623 = pneg %p299
        %p624 = pneg %p296
        %p625 = pneg %p320
        %p626 = pneg %p317
        %p627 = pneg %p341
        %p628 = pneg %p338
        %p629 = pneg %p362
        %p630 = pneg %p359
        %p631 = pneg %p383
        %p632 = pneg %p380
        %p633 = pneg %p404
        %p634 = pneg %p401
        %p635 = pneg %p425
        %p636 = pneg %p422
        %p637 = pneg %p451
        %p638 = pneg %p448
        %s639 = sand.u32 %s438, 1
        %s640 = scalar_lea.sflag [#allocation5], %s639
        %s641 = sand.u32 %s438, 1
        %s642 = smul.addr %s641, 8
        %s643 = scalar_lea.vmem [#allocation12], %s642
        %p644 = scmp.lt.s32.totalorder %s39, 1
        %s645 = scalar_select %p644, %s39, 1
        %s646 = smul.addr %s645, 8
        %s647 = scalar_lea.vmem %s0, %s646
        %p649 = scmp.eq.s32.totalorder %s40, 0
        // Predicated region
        $region113: #{tpu_custom_call.1} parent=91 // pred_check
          %p650 = pneg %p649
        $region114: #{tpu_custom_call.1} parent=91 // pred_check_branch
          %652 = sbr.rel (%p650) target = $region116
        $region115: #{tpu_custom_call.1} parent=91 // pred_region
          %v653 = vld [vmem:[%s647] sm:$0xff]
          %v654 = vpack.c.bf16 %v653, %v653
          %v655 = vld [vmem:[#allocation3] sm:$0xf]
          %v656 = vld [vmem:[#allocation3 + $0x4] sm:$0xf]
          %v657 = vld [vmem:[%s2] sm:$0x1]
          %v659 = vlaneseq
          %v660 = vshrl.u32 %v659, 7
          %v661 = vsub.s32 0, %v660
          %v662 = vrot.slane %v657, %v661
          %v666 = vunpack.c.l.b16 %v655
          %v667 = vunpack.c.l.b16 %v656
          %v668 = vpack.c.b16 %v667, %v666
          %vm670 = vcmask 130048
          %v672 = vsel %vm670, %v654, 0
          %674 = vmatprep.subr.bf16.mxu0 0
          %675 = vmatpush1.bf16.msra.mxu0 %v668
          %676 = vmatprep.subr.bf16.mxu0 0
          %677 = vmatpush1.bf16.msra.mxu0 0
          %678 = vmatprep.subr.bf16.mxu0 0
          %679 = vmatpush1.bf16.msra.mxu0 0
          %680 = vmatprep.subr.bf16.mxu0 0
          %681 = vmatpush1.bf16.msra.mxu0 0
          %682 = vmatprep.subr.bf16.mxu0 0
          %683 = vmatpush1.bf16.msra.mxu0 0
          %684 = vmatprep.subr.bf16.mxu0 0
          %685 = vmatpush1.bf16.msra.mxu0 0
          %686 = vmatprep.subr.bf16.mxu0 0
          %687 = vmatpush1.bf16.msra.mxu0 0
          %688 = vmatprep.subr.bf16.mxu0 0
          %689 = vmatpush1.bf16.msra.mxu0 0
          %690 = vmatprep.subr.bf16.mxu0 0
          %691 = vmatpush1.bf16.msra.mxu0 0
          %692 = vmatprep.subr.bf16.mxu0 0
          %693 = vmatpush1.bf16.msra.mxu0 0
          %694 = vmatprep.subr.bf16.mxu0 0
          %695 = vmatpush1.bf16.msra.mxu0 0
          %696 = vmatprep.subr.bf16.mxu0 0
          %697 = vmatpush1.bf16.msra.mxu0 0
          %698 = vmatprep.subr.bf16.mxu0 0
          %699 = vmatpush1.bf16.msra.mxu0 0
          %700 = vmatprep.subr.bf16.mxu0 0
          %701 = vmatpush1.bf16.msra.mxu0 0
          %702 = vmatprep.subr.bf16.mxu0 0
          %703 = vmatpush1.bf16.msra.mxu0 0
          %704 = vmatprep.subr.bf16.mxu0 0
          %705 = vmatpush1.bf16.msra.mxu0 0
          %706 = vmatprep.mubr.bf16.mxu0 0
          %707 = vmatmul.mubr.bf16.gmra.mrb[0].mxu0 %v672
          %v708 = vpop.f32.mrb[0].mxu0
          %v709 = vadd.f32 %v662, %v708
          %v710 = vpop.f32.mrb[0].mxu0
          %v711 = vpop.f32.mrb[0].mxu0
          %v712 = vpop.f32.mrb[0].mxu0
          %713 = vdwg.mxu0
          %v714 = vld [vmem:[%s3] sm:$0x1]
          %v715 = vld [vmem:[#allocation6] sm:$0x1]
          %vm716 = vcmask 261120
          %v717 = vsel %vm716, %v709, 0.0
          %718 = vadd.xlane.f32.xlu0 %v717
          %v719 = vpop.xlane.xlu0 %718
          %v720 = vmul.f32 %v709, %v709
          %v721 = vsel %vm716, %v720, 0.0
          %722 = vadd.xlane.f32.xlu0 %v721
          %v723 = vpop.xlane.xlu0 %722
          %v724 = vmul.f32 %v719, 0.03125
          %v725 = vmul.f32 %v723, 0.03125
          %v726 = vmul.f32 %v724, %v724
          %v727 = vsub.f32 %v725, %v726
          %v728 = vmax.f32 %v727, 0.0
          %v729 = vsub.f32 %v709, %v724
          %v730 = vadd.f32 %v728, 1e-12
          %v731 = vrsqrt.pop %v730
          %v732 = vmul.f32 %v729, %v731
          %v734 = vlaneseq
          %v735 = vshrl.u32 %v734, 7
          %v736 = vsub.s32 0, %v735
          %v737 = vrot.slane %v714, %v736
          %v739 = vmul.f32 %v737, %v732
          %v741 = vlaneseq
          %v742 = vshrl.u32 %v741, 7
          %v743 = vsub.s32 0, %v742
          %v744 = vrot.slane %v715, %v743
          %v746 = vadd.f32 %v739, %v744
          %v747 = vld [vmem:[#allocation8] sm:$0xff]
          %v748 = vadd.f32 %v746, %v747
          %v749 = vsel %vm716, %v748, 0.0
          %750 = vadd.xlane.f32.xlu0 %v749
          %v751 = vpop.xlane.xlu0 %750
          %v752 = vmul.f32 %v748, %v748
          %v753 = vsel %vm716, %v752, 0.0
          %754 = vadd.xlane.f32.xlu0 %v753
          %v755 = vpop.xlane.xlu0 %754
          %v756 = vmul.f32 %v751, 0.03125
          %v757 = vmul.f32 %v755, 0.03125
          %v758 = vmul.f32 %v756, %v756
          %v759 = vsub.f32 %v757, %v758
          %v760 = vmax.f32 %v759, 0.0
          %v761 = vsub.f32 %v748, %v756
          %v762 = vadd.f32 %v760, 1e-12
          %v763 = vrsqrt.pop %v762
          %v764 = vmul.f32 %v761, %v763
          %v765 = vmul.f32 %v737, %v764
          %v766 = vadd.f32 %v765, %v744
          %767 = vst.msk [vmem:[#allocation2] sm:$0xff] %vm716, %v766
        $region116: #{tpu_custom_call.1} parent=91 // pred_fallthru
          _
        %v768 = vld [vmem:[#allocation2] sm:$0xff]
        %v769 = vpack.c.bf16 %v768, %v768
        %v770 = vld [vmem:[%s6] sm:$0xf]
        %v771 = vld [vmem:[%s6 + $0x4] sm:$0xf]
        %v772 = vld [vmem:[%s6 + $0x8] sm:$0xf]
        %v773 = vld [vmem:[%s6 + $0xc] sm:$0xf]
        %v774 = vld [vmem:[#allocation9] sm:$0x1]
        %v776 = vlaneseq
        %v777 = vshrl.u32 %v776, 7
        %v778 = vsub.s32 0, %v777
        %v779 = vrot.slane %v774, %v778
        %v785 = vunpack.c.l.b16 %v770
        %v786 = vunpack.c.l.b16 %v771
        %v787 = vunpack.c.l.b16 %v772
        %v788 = vunpack.c.l.b16 %v773
        %v789 = vpack.c.b16 %v786, %v785
        %v790 = vpack.c.b16 %v788, %v787
        %vm793 = vcmask 261120
        %v795 = vsel %vm793, %v769, 0
        %797 = vmatprep.subr.bf16.mxu0 0
        %798 = vmatpush1.bf16.msra.mxu0 %v789
        %799 = vmatprep.subr.bf16.mxu0 0
        %800 = vmatpush1.bf16.msra.mxu0 %v790
        %801 = vmatprep.subr.bf16.mxu0 0
        %802 = vmatpush1.bf16.msra.mxu0 0
        %803 = vmatprep.subr.bf16.mxu0 0
        %804 = vmatpush1.bf16.msra.mxu0 0
        %805 = vmatprep.subr.bf16.mxu0 0
        %806 = vmatpush1.bf16.msra.mxu0 0
        %807 = vmatprep.subr.bf16.mxu0 0
        %808 = vmatpush1.bf16.msra.mxu0 0
        %809 = vmatprep.subr.bf16.mxu0 0
        %810 = vmatpush1.bf16.msra.mxu0 0
        %811 = vmatprep.subr.bf16.mxu0 0
        %812 = vmatpush1.bf16.msra.mxu0 0
        %813 = vmatprep.subr.bf16.mxu0 0
        %814 = vmatpush1.bf16.msra.mxu0 0
        %815 = vmatprep.subr.bf16.mxu0 0
        %816 = vmatpush1.bf16.msra.mxu0 0
        %817 = vmatprep.subr.bf16.mxu0 0
        %818 = vmatpush1.bf16.msra.mxu0 0
        %819 = vmatprep.subr.bf16.mxu0 0
        %820 = vmatpush1.bf16.msra.mxu0 0
        %821 = vmatprep.subr.bf16.mxu0 0
        %822 = vmatpush1.bf16.msra.mxu0 0
        %823 = vmatprep.subr.bf16.mxu0 0
        %824 = vmatpush1.bf16.msra.mxu0 0
        %825 = vmatprep.subr.bf16.mxu0 0
        %826 = vmatpush1.bf16.msra.mxu0 0
        %827 = vmatprep.subr.bf16.mxu0 0
        %828 = vmatpush1.bf16.msra.mxu0 0
        %829 = vmatprep.mubr.bf16.mxu0 0
        %830 = vmatmul.mubr.bf16.gmra.mrb[0].mxu0 %v795
        %v831 = vpop.f32.mrb[0].mxu0
        %v832 = vadd.f32 %v779, %v831
        %v833 = vpop.f32.mrb[0].mxu0
        %v834 = vpop.f32.mrb[0].mxu0
        %v835 = vpop.f32.mrb[0].mxu0
        %836 = vdwg.mxu0
        %838 = vrot.lane.b32.xlu0 %v832, 120
        %v839 = vpop.permute.xlu0 %838
        %841 = vrot.lane.b32.xlu0 %v832, 112
        %v842 = vpop.permute.xlu0 %841
        %844 = vrot.lane.b32.xlu0 %v832, 104
        %v845 = vpop.permute.xlu0 %844
        %v847 = vcombine.low %v832, %v842
        %v848 = vcombine.high %v832, %v842
        %v850 = vunpack.c.l.s4 1983009808
        %v851 = vunpack.c.0.s8 %v850
        %v852 = vlaneseq
        %v853 = vshrl.u32 %v852, 7
        %v854 = vsub.s32 %v851, %v853
        %v855 = vrot.slane %v847, %v854
        %v857 = vunpack.c.l.s4 1983009808
        %v858 = vunpack.c.0.s8 %v857
        %v859 = vlaneseq
        %v860 = vshrl.u32 %v859, 7
        %v861 = vsub.s32 %v858, %v860
        %v862 = vrot.slane %v848, %v861
        %v863 = vcombine.low %v839, %v845
        %v864 = vcombine.high %v839, %v845
        %v866 = vunpack.c.l.s4 1983009808
        %v867 = vunpack.c.0.s8 %v866
        %v868 = vlaneseq
        %v869 = vshrl.u32 %v868, 7
        %v870 = vsub.s32 %v867, %v869
        %v871 = vrot.slane %v863, %v870
        %v873 = vunpack.c.l.s4 1983009808
        %v874 = vunpack.c.0.s8 %v873
        %v875 = vlaneseq
        %v876 = vshrl.u32 %v875, 7
        %v877 = vsub.s32 %v874, %v876
        %v878 = vrot.slane %v864, %v877
        %v879 = vcombine.low %v855, %v871
        %v880 = vcombine.high %v855, %v871
        %v882 = vunpack.c.l.s4 1934713408
        %v883 = vunpack.c.0.s8 %v882
        %v884 = vlaneseq
        %v885 = vshrl.u32 %v884, 7
        %v886 = vsub.s32 %v883, %v885
        %v887 = vrot.slane %v879, %v886
        %v889 = vunpack.c.l.s4 1934713408
        %v890 = vunpack.c.0.s8 %v889
        %v891 = vlaneseq
        %v892 = vshrl.u32 %v891, 7
        %v893 = vsub.s32 %v890, %v892
        %v894 = vrot.slane %v880, %v893
        %v895 = vcombine.low %v862, %v878
        %v896 = vcombine.high %v862, %v878
        %v898 = vunpack.c.l.s4 1934713408
        %v899 = vunpack.c.0.s8 %v898
        %v900 = vlaneseq
        %v901 = vshrl.u32 %v900, 7
        %v902 = vsub.s32 %v899, %v901
        %v903 = vrot.slane %v895, %v902
        %v905 = vunpack.c.l.s4 1934713408
        %v906 = vunpack.c.0.s8 %v905
        %v907 = vlaneseq
        %v908 = vshrl.u32 %v907, 7
        %v909 = vsub.s32 %v906, %v908
        %v910 = vrot.slane %v896, %v909
        %v911 = vcombine.high %v887, 0.0
        %v912 = vcombine.high %v894, 0.0
        %v913 = vcombine.high %v903, 0.0
        %v914 = vcombine.high %v910, 0.0
        %v915 = vpack.c.bf16 %v887, %v887
        %v916 = vpack.c.bf16 %v911, %v911
        %v917 = vpack.c.bf16 %v894, %v894
        %v918 = vpack.c.bf16 %v912, %v912
        %v919 = vpack.c.bf16 %v903, %v903
        %v920 = vpack.c.bf16 %v913, %v913
        %v921 = vpack.c.bf16 %v910, %v910
        %v922 = vpack.c.bf16 %v914, %v914
        %923 = vrot.lane.b32.xlu0 %v832, 96
        %v924 = vpop.permute.xlu0 %923
        %925 = vrot.lane.b32.xlu0 %v839, 96
        %v926 = vpop.permute.xlu0 %925
        %927 = vrot.lane.b32.xlu0 %v842, 96
        %v928 = vpop.permute.xlu0 %927
        %929 = vrot.lane.b32.xlu0 %v845, 96
        %v930 = vpop.permute.xlu0 %929
        %v935 = vcombine.low %v924, %v928
        %v936 = vcombine.high %v924, %v928
        %v938 = vunpack.c.l.s4 1983009808
        %v939 = vunpack.c.0.s8 %v938
        %v940 = vlaneseq
        %v941 = vshrl.u32 %v940, 7
        %v942 = vsub.s32 %v939, %v941
        %v943 = vrot.slane %v935, %v942
        %v945 = vunpack.c.l.s4 1983009808
        %v946 = vunpack.c.0.s8 %v945
        %v947 = vlaneseq
        %v948 = vshrl.u32 %v947, 7
        %v949 = vsub.s32 %v946, %v948
        %v950 = vrot.slane %v936, %v949
        %v951 = vcombine.low %v926, %v930
        %v952 = vcombine.high %v926, %v930
        %v954 = vunpack.c.l.s4 1983009808
        %v955 = vunpack.c.0.s8 %v954
        %v956 = vlaneseq
        %v957 = vshrl.u32 %v956, 7
        %v958 = vsub.s32 %v955, %v957
        %v959 = vrot.slane %v951, %v958
        %v961 = vunpack.c.l.s4 1983009808
        %v962 = vunpack.c.0.s8 %v961
        %v963 = vlaneseq
        %v964 = vshrl.u32 %v963, 7
        %v965 = vsub.s32 %v962, %v964
        %v966 = vrot.slane %v952, %v965
        %v967 = vcombine.low %v943, %v959
        %v968 = vcombine.high %v943, %v959
        %v970 = vunpack.c.l.s4 1934713408
        %v971 = vunpack.c.0.s8 %v970
        %v972 = vlaneseq
        %v973 = vshrl.u32 %v972, 7
        %v974 = vsub.s32 %v971, %v973
        %v975 = vrot.slane %v967, %v974
        %v977 = vunpack.c.l.s4 1934713408
        %v978 = vunpack.c.0.s8 %v977
        %v979 = vlaneseq
        %v980 = vshrl.u32 %v979, 7
        %v981 = vsub.s32 %v978, %v980
        %v982 = vrot.slane %v968, %v981
        %v983 = vcombine.low %v950, %v966
        %v984 = vcombine.high %v950, %v966
        %v986 = vunpack.c.l.s4 1934713408
        %v987 = vunpack.c.0.s8 %v986
        %v988 = vlaneseq
        %v989 = vshrl.u32 %v988, 7
        %v990 = vsub.s32 %v987, %v989
        %v991 = vrot.slane %v983, %v990
        %v993 = vunpack.c.l.s4 1934713408
        %v994 = vunpack.c.0.s8 %v993
        %v995 = vlaneseq
        %v996 = vshrl.u32 %v995, 7
        %v997 = vsub.s32 %v994, %v996
        %v998 = vrot.slane %v984, %v997
        %v999 = vcombine.high %v975, 0.0
        %v1000 = vcombine.high %v982, 0.0
        %v1001 = vcombine.high %v991, 0.0
        %v1002 = vcombine.high %v998, 0.0
        %v1003 = vpack.c.bf16 %v975, %v975
        %v1004 = vpack.c.bf16 %v999, %v999
        %v1005 = vpack.c.bf16 %v982, %v982
        %v1006 = vpack.c.bf16 %v1000, %v1000
        %v1007 = vpack.c.bf16 %v991, %v991
        %v1008 = vpack.c.bf16 %v1001, %v1001
        %v1009 = vpack.c.bf16 %v998, %v998
        %v1010 = vpack.c.bf16 %v1002, %v1002
        %1011 = vrot.lane.b32.xlu0 %v832, 64
        %v1012 = vpop.permute.xlu0 %1011
        %1013 = vrot.lane.b32.xlu0 %v839, 64
        %v1014 = vpop.permute.xlu0 %1013
        %1015 = vrot.lane.b32.xlu0 %v842, 64
        %v1016 = vpop.permute.xlu0 %1015
        %1017 = vrot.lane.b32.xlu0 %v845, 64
        %v1018 = vpop.permute.xlu0 %1017
        %v1023 = vcombine.low %v1012, %v1016
        %v1024 = vcombine.high %v1012, %v1016
        %v1026 = vunpack.c.l.s4 1983009808
        %v1027 = vunpack.c.0.s8 %v1026
        %v1028 = vlaneseq
        %v1029 = vshrl.u32 %v1028, 7
        %v1030 = vsub.s32 %v1027, %v1029
        %v1031 = vrot.slane %v1023, %v1030
        %v1033 = vunpack.c.l.s4 1983009808
        %v1034 = vunpack.c.0.s8 %v1033
        %v1035 = vlaneseq
        %v1036 = vshrl.u32 %v1035, 7
        %v1037 = vsub.s32 %v1034, %v1036
        %v1038 = vrot.slane %v1024, %v1037
        %v1039 = vcombine.low %v1014, %v1018
        %v1040 = vcombine.high %v1014, %v1018
        %v1042 = vunpack.c.l.s4 1983009808
        %v1043 = vunpack.c.0.s8 %v1042
        %v1044 = vlaneseq
        %v1045 = vshrl.u32 %v1044, 7
        %v1046 = vsub.s32 %v1043, %v1045
        %v1047 = vrot.slane %v1039, %v1046
        %v1049 = vunpack.c.l.s4 1983009808
        %v1050 = vunpack.c.0.s8 %v1049
        %v1051 = vlaneseq
        %v1052 = vshrl.u32 %v1051, 7
        %v1053 = vsub.s32 %v1050, %v1052
        %v1054 = vrot.slane %v1040, %v1053
        %v1055 = vcombine.low %v1031, %v1047
        %v1056 = vcombine.high %v1031, %v1047
        %v1058 = vunpack.c.l.s4 1934713408
        %v1059 = vunpack.c.0.s8 %v1058
        %v1060 = vlaneseq
        %v1061 = vshrl.u32 %v1060, 7
        %v1062 = vsub.s32 %v1059, %v1061
        %v1063 = vrot.slane %v1055, %v1062
        %v1065 = vunpack.c.l.s4 1934713408
        %v1066 = vunpack.c.0.s8 %v1065
        %v1067 = vlaneseq
        %v1068 = vshrl.u32 %v1067, 7
        %v1069 = vsub.s32 %v1066, %v1068
        %v1070 = vrot.slane %v1056, %v1069
        %v1071 = vcombine.low %v1038, %v1054
        %v1072 = vcombine.high %v1038, %v1054
        %v1074 = vunpack.c.l.s4 1934713408
        %v1075 = vunpack.c.0.s8 %v1074
        %v1076 = vlaneseq
        %v1077 = vshrl.u32 %v1076, 7
        %v1078 = vsub.s32 %v1075, %v1077
        %v1079 = vrot.slane %v1071, %v1078
        %v1081 = vunpack.c.l.s4 1934713408
        %v1082 = vunpack.c.0.s8 %v1081
        %v1083 = vlaneseq
        %v1084 = vshrl.u32 %v1083, 7
        %v1085 = vsub.s32 %v1082, %v1084
        %v1086 = vrot.slane %v1072, %v1085
        %v1087 = vcombine.high %v1063, 0.0
        %v1088 = vcombine.high %v1070, 0.0
        %v1089 = vcombine.high %v1079, 0.0
        %v1090 = vcombine.high %v1086, 0.0
        %v1091 = vpack.c.bf16 %v1063, %v1063
        %v1092 = vpack.c.bf16 %v1087, %v1087
        %v1093 = vpack.c.bf16 %v1070, %v1070
        %v1094 = vpack.c.bf16 %v1088, %v1088
        %v1095 = vpack.c.bf16 %v1079, %v1079
        %v1096 = vpack.c.bf16 %v1089, %v1089
        %v1097 = vpack.c.bf16 %v1086, %v1086
        %v1098 = vpack.c.bf16 %v1090, %v1090
        %v1099 = vcombine.low %v915, %v919
        %v1101 = vunpack.c.l.s4 1983009808
        %v1102 = vunpack.c.0.s8 %v1101
        %v1103 = vlaneseq
        %v1104 = vshrl.u32 %v1103, 7
        %v1105 = vsub.s32 %v1102, %v1104
        %v1106 = vrot.slane %v1099, %v1105
        %v1107 = vcombine.low %v917, %v921
        %v1109 = vunpack.c.l.s4 1983009808
        %v1110 = vunpack.c.0.s8 %v1109
        %v1111 = vlaneseq
        %v1112 = vshrl.u32 %v1111, 7
        %v1113 = vsub.s32 %v1110, %v1112
        %v1114 = vrot.slane %v1107, %v1113
        %v1115 = vcombine.low %v1106, %v1114
        %v1117 = vunpack.c.l.s4 1934713408
        %v1118 = vunpack.c.0.s8 %v1117
        %v1119 = vlaneseq
        %v1120 = vshrl.u32 %v1119, 7
        %v1121 = vsub.s32 %v1118, %v1120
        %v1122 = vrot.slane %v1115, %v1121
        %v1123 = vcombine.high %v1122, 0
        %v1124 = vcombine.low %v916, %v920
        %v1126 = vunpack.c.l.s4 1983009808
        %v1127 = vunpack.c.0.s8 %v1126
        %v1128 = vlaneseq
        %v1129 = vshrl.u32 %v1128, 7
        %v1130 = vsub.s32 %v1127, %v1129
        %v1131 = vrot.slane %v1124, %v1130
        %v1132 = vcombine.low %v918, %v922
        %v1134 = vunpack.c.l.s4 1983009808
        %v1135 = vunpack.c.0.s8 %v1134
        %v1136 = vlaneseq
        %v1137 = vshrl.u32 %v1136, 7
        %v1138 = vsub.s32 %v1135, %v1137
        %v1139 = vrot.slane %v1132, %v1138
        %v1140 = vcombine.low %v1131, %v1139
        %v1142 = vunpack.c.l.s4 1934713408
        %v1143 = vunpack.c.0.s8 %v1142
        %v1144 = vlaneseq
        %v1145 = vshrl.u32 %v1144, 7
        %v1146 = vsub.s32 %v1143, %v1145
        %v1147 = vrot.slane %v1140, %v1146
        %v1148 = vcombine.high %v1147, 0
        %v1151 = vpack.i.b16 %v1147, %v1122
        %v1152 = vshrl.u32 %v1122, 16
        %v1153 = vshrl.u32 %v1147, 16
        %v1154 = vpack.i.b16 %v1153, %v1152
        %v1157 = vpack.i.b16 %v1148, %v1123
        %v1158 = vshrl.u32 %v1123, 16
        %v1159 = vshrl.u32 %v1148, 16
        %v1160 = vpack.i.b16 %v1159, %v1158
        %1161 = vxpose.xlu0.c.b16.start [1/8] %v1003, 128
        %1162 = vxpose.xlu0.c.b16.cont [2/8] 0, 128
        %1163 = vxpose.xlu0.c.b16.cont [3/8] 0, 128
        %1164 = vxpose.xlu0.c.b16.cont [4/8] 0, 128
        %1165 = vxpose.xlu0.c.b16.cont [5/8] 0, 128
        %1166 = vxpose.xlu0.c.b16.cont [6/8] 0, 128
        %1167 = vxpose.xlu0.c.b16.cont [7/8] 0, 128
        %1168 = vxpose.xlu0.c.b16.end [8/8] 0, 128
        %v1169 = vpop.trf.xlu0
        %v1170 = vpop.trf.xlu0
        %v1171 = vpop.trf.xlu0
        %v1172 = vpop.trf.xlu0
        %v1173 = vpop.trf.xlu0
        %v1174 = vpop.trf.xlu0
        %v1175 = vpop.trf.xlu0
        %v1176 = vpop.trf.xlu0
        %1177 = vxpose.xlu0.c.b16.start [1/8] %v1004, 128
        %1178 = vxpose.xlu0.c.b16.cont [2/8] 0, 128
        %1179 = vxpose.xlu0.c.b16.cont [3/8] 0, 128
        %1180 = vxpose.xlu0.c.b16.cont [4/8] 0, 128
        %1181 = vxpose.xlu0.c.b16.cont [5/8] 0, 128
        %1182 = vxpose.xlu0.c.b16.cont [6/8] 0, 128
        %1183 = vxpose.xlu0.c.b16.cont [7/8] 0, 128
        %1184 = vxpose.xlu0.c.b16.end [8/8] 0, 128
        %v1185 = vpop.trf.xlu0
        %v1186 = vpop.trf.xlu0
        %v1187 = vpop.trf.xlu0
        %v1188 = vpop.trf.xlu0
        %v1189 = vpop.trf.xlu0
        %v1190 = vpop.trf.xlu0
        %v1191 = vpop.trf.xlu0
        %v1192 = vpop.trf.xlu0
        %1193 = vxpose.xlu0.c.b16.start [1/8] %v1005, 128
        %1194 = vxpose.xlu0.c.b16.cont [2/8] 0, 128
        %1195 = vxpose.xlu0.c.b16.cont [3/8] 0, 128
        %1196 = vxpose.xlu0.c.b16.cont [4/8] 0, 128
        %1197 = vxpose.xlu0.c.b16.cont [5/8] 0, 128
        %1198 = vxpose.xlu0.c.b16.cont [6/8] 0, 128
        %1199 = vxpose.xlu0.c.b16.cont [7/8] 0, 128
        %1200 = vxpose.xlu0.c.b16.end [8/8] 0, 128
        %v1201 = vpop.trf.xlu0
        %v1202 = vpop.trf.xlu0
        %v1203 = vpop.trf.xlu0
        %v1204 = vpop.trf.xlu0
        %v1205 = vpop.trf.xlu0
        %v1206 = vpop.trf.xlu0
        %v1207 = vpop.trf.xlu0
        %v1208 = vpop.trf.xlu0
        %1209 = vxpose.xlu0.c.b16.start [1/8] %v1006, 128
        %1210 = vxpose.xlu0.c.b16.cont [2/8] 0, 128
        %1211 = vxpose.xlu0.c.b16.cont [3/8] 0, 128
        %1212 = vxpose.xlu0.c.b16.cont [4/8] 0, 128
        %1213 = vxpose.xlu0.c.b16.cont [5/8] 0, 128
        %1214 = vxpose.xlu0.c.b16.cont [6/8] 0, 128
        %1215 = vxpose.xlu0.c.b16.cont [7/8] 0, 128
        %1216 = vxpose.xlu0.c.b16.end [8/8] 0, 128
        %v1217 = vpop.trf.xlu0
        %v1218 = vpop.trf.xlu0
        %v1219 = vpop.trf.xlu0
        %v1220 = vpop.trf.xlu0
        %v1221 = vpop.trf.xlu0
        %v1222 = vpop.trf.xlu0
        %v1223 = vpop.trf.xlu0
        %v1224 = vpop.trf.xlu0
        %1225 = vxpose.xlu0.c.b16.start [1/8] %v1007, 128
        %1226 = vxpose.xlu0.c.b16.cont [2/8] 0, 128
        %1227 = vxpose.xlu0.c.b16.cont [3/8] 0, 128
        %1228 = vxpose.xlu0.c.b16.cont [4/8] 0, 128
        %1229 = vxpose.xlu0.c.b16.cont [5/8] 0, 128
        %1230 = vxpose.xlu0.c.b16.cont [6/8] 0, 128
        %1231 = vxpose.xlu0.c.b16.cont [7/8] 0, 128
        %1232 = vxpose.xlu0.c.b16.end [8/8] 0, 128
        %v1233 = vpop.trf.xlu0
        %v1234 = vpop.trf.xlu0
        %v1235 = vpop.trf.xlu0
        %v1236 = vpop.trf.xlu0
        %v1237 = vpop.trf.xlu0
        %v1238 = vpop.trf.xlu0
        %v1239 = vpop.trf.xlu0
        %v1240 = vpop.trf.xlu0
        %1241 = vxpose.xlu0.c.b16.start [1/8] %v1008, 128
        %1242 = vxpose.xlu0.c.b16.cont [2/8] 0, 128
        %1243 = vxpose.xlu0.c.b16.cont [3/8] 0, 128
        %1244 = vxpose.xlu0.c.b16.cont [4/8] 0, 128
        %1245 = vxpose.xlu0.c.b16.cont [5/8] 0, 128
        %1246 = vxpose.xlu0.c.b16.cont [6/8] 0, 128
        %1247 = vxpose.xlu0.c.b16.cont [7/8] 0, 128
        %1248 = vxpose.xlu0.c.b16.end [8/8] 0, 128
        %v1249 = vpop.trf.xlu0
        %v1250 = vpop.trf.xlu0
        %v1251 = vpop.trf.xlu0
        %v1252 = vpop.trf.xlu0
        %v1253 = vpop.trf.xlu0
        %v1254 = vpop.trf.xlu0
        %v1255 = vpop.trf.xlu0
        %v1256 = vpop.trf.xlu0
        %1257 = vxpose.xlu0.c.b16.start [1/8] %v1009, 128
        %1258 = vxpose.xlu0.c.b16.cont [2/8] 0, 128
        %1259 = vxpose.xlu0.c.b16.cont [3/8] 0, 128
        %1260 = vxpose.xlu0.c.b16.cont [4/8] 0, 128
        %1261 = vxpose.xlu0.c.b16.cont [5/8] 0, 128
        %1262 = vxpose.xlu0.c.b16.cont [6/8] 0, 128
        %1263 = vxpose.xlu0.c.b16.cont [7/8] 0, 128
        %1264 = vxpose.xlu0.c.b16.end [8/8] 0, 128
        %v1265 = vpop.trf.xlu0
        %v1266 = vpop.trf.xlu0
        %v1267 = vpop.trf.xlu0
        %v1268 = vpop.trf.xlu0
        %v1269 = vpop.trf.xlu0
        %v1270 = vpop.trf.xlu0
        %v1271 = vpop.trf.xlu0
        %v1272 = vpop.trf.xlu0
        %1273 = vxpose.xlu0.c.b16.start [1/8] %v1010, 128
        %1274 = vxpose.xlu0.c.b16.cont [2/8] 0, 128
        %1275 = vxpose.xlu0.c.b16.cont [3/8] 0, 128
        %1276 = vxpose.xlu0.c.b16.cont [4/8] 0, 128
        %1277 = vxpose.xlu0.c.b16.cont [5/8] 0, 128
        %1278 = vxpose.xlu0.c.b16.cont [6/8] 0, 128
        %1279 = vxpose.xlu0.c.b16.cont [7/8] 0, 128
        %1280 = vxpose.xlu0.c.b16.end [8/8] 0, 128
        %v1281 = vpop.trf.xlu0
        %v1282 = vpop.trf.xlu0
        %v1283 = vpop.trf.xlu0
        %v1284 = vpop.trf.xlu0
        %v1285 = vpop.trf.xlu0
        %v1286 = vpop.trf.xlu0
        %v1287 = vpop.trf.xlu0
        %v1288 = vpop.trf.xlu0
        %v1289 = vcombine.low %v1169, %v1233
        %v1291 = vunpack.c.l.s4 1983009808
        %v1292 = vunpack.c.0.s8 %v1291
        %v1293 = vlaneseq
        %v1294 = vshrl.u32 %v1293, 7
        %v1295 = vsub.s32 %v1292, %v1294
        %v1296 = vrot.slane %v1289, %v1295
        %v1297 = vcombine.low %v1201, %v1265
        %v1299 = vunpack.c.l.s4 1983009808
        %v1300 = vunpack.c.0.s8 %v1299
        %v1301 = vlaneseq
        %v1302 = vshrl.u32 %v1301, 7
        %v1303 = vsub.s32 %v1300, %v1302
        %v1304 = vrot.slane %v1297, %v1303
        %v1305 = vcombine.low %v1296, %v1304
        %v1306 = vcombine.high %v1296, %v1304
        %v1308 = vunpack.c.l.s4 1934713408
        %v1309 = vunpack.c.0.s8 %v1308
        %v1310 = vlaneseq
        %v1311 = vshrl.u32 %v1310, 7
        %v1312 = vsub.s32 %v1309, %v1311
        %v1313 = vrot.slane %v1305, %v1312
        %v1315 = vunpack.c.l.s4 1934713408
        %v1316 = vunpack.c.0.s8 %v1315
        %v1317 = vlaneseq
        %v1318 = vshrl.u32 %v1317, 7
        %v1319 = vsub.s32 %v1316, %v1318
        %v1320 = vrot.slane %v1306, %v1319
        %v1321 = vcombine.high %v1313, 0
        %v1322 = vcombine.high %v1320, 0
        %v1323 = vcombine.low %v1185, %v1249
        %v1325 = vunpack.c.l.s4 1983009808
        %v1326 = vunpack.c.0.s8 %v1325
        %v1327 = vlaneseq
        %v1328 = vshrl.u32 %v1327, 7
        %v1329 = vsub.s32 %v1326, %v1328
        %v1330 = vrot.slane %v1323, %v1329
        %v1331 = vcombine.low %v1217, %v1281
        %v1333 = vunpack.c.l.s4 1983009808
        %v1334 = vunpack.c.0.s8 %v1333
        %v1335 = vlaneseq
        %v1336 = vshrl.u32 %v1335, 7
        %v1337 = vsub.s32 %v1334, %v1336
        %v1338 = vrot.slane %v1331, %v1337
        %v1339 = vcombine.low %v1330, %v1338
        %v1340 = vcombine.high %v1330, %v1338
        %v1342 = vunpack.c.l.s4 1934713408
        %v1343 = vunpack.c.0.s8 %v1342
        %v1344 = vlaneseq
        %v1345 = vshrl.u32 %v1344, 7
        %v1346 = vsub.s32 %v1343, %v1345
        %v1347 = vrot.slane %v1339, %v1346
        %v1349 = vunpack.c.l.s4 1934713408
        %v1350 = vunpack.c.0.s8 %v1349
        %v1351 = vlaneseq
        %v1352 = vshrl.u32 %v1351, 7
        %v1353 = vsub.s32 %v1350, %v1352
        %v1354 = vrot.slane %v1340, %v1353
        %v1355 = vcombine.high %v1347, 0
        %v1356 = vcombine.high %v1354, 0
        %v1359 = vpack.i.b16 %v1347, %v1313
        %v1361 = vshrl.u32 %v1313, 16
        %v1362 = vshrl.u32 %v1347, 16
        %v1363 = vpack.i.b16 %v1362, %v1361
        %v1367 = vpack.i.b16 %v1355, %v1321
        %v1369 = vshrl.u32 %v1321, 16
        %v1370 = vshrl.u32 %v1355, 16
        %v1371 = vpack.i.b16 %v1370, %v1369
        %v1375 = vpack.i.b16 %v1354, %v1320
        %v1377 = vshrl.u32 %v1320, 16
        %v1378 = vshrl.u32 %v1354, 16
        %v1379 = vpack.i.b16 %v1378, %v1377
        %v1383 = vpack.i.b16 %v1356, %v1322
        %v1385 = vshrl.u32 %v1322, 16
        %v1386 = vshrl.u32 %v1356, 16
        %v1387 = vpack.i.b16 %v1386, %v1385
        %1389 = vxpose.xlu0.c.b16.start [1/8] %v1359, 128
        %1390 = vxpose.xlu0.c.b16.cont [2/8] 0, 128
        %1391 = vxpose.xlu0.c.b16.cont [3/8] 0, 128
        %1392 = vxpose.xlu0.c.b16.cont [4/8] 0, 128
        %1393 = vxpose.xlu0.c.b16.cont [5/8] 0, 128
        %1394 = vxpose.xlu0.c.b16.cont [6/8] 0, 128
        %1395 = vxpose.xlu0.c.b16.cont [7/8] 0, 128
        %1396 = vxpose.xlu0.c.b16.end [8/8] 0, 128
        %v1397 = vpop.trf.xlu0
        %v1398 = vpop.trf.xlu0
        %v1399 = vpop.trf.xlu0
        %v1400 = vpop.trf.xlu0
        %v1401 = vpop.trf.xlu0
        %v1402 = vpop.trf.xlu0
        %v1403 = vpop.trf.xlu0
        %v1404 = vpop.trf.xlu0
        %1405 = vxpose.xlu0.c.b16.start [1/8] %v1363, 128
        %1406 = vxpose.xlu0.c.b16.cont [2/8] 0, 128
        %1407 = vxpose.xlu0.c.b16.cont [3/8] 0, 128
        %1408 = vxpose.xlu0.c.b16.cont [4/8] 0, 128
        %1409 = vxpose.xlu0.c.b16.cont [5/8] 0, 128
        %1410 = vxpose.xlu0.c.b16.cont [6/8] 0, 128
        %1411 = vxpose.xlu0.c.b16.cont [7/8] 0, 128
        %1412 = vxpose.xlu0.c.b16.end [8/8] 0, 128
        %v1413 = vpop.trf.xlu0
        %v1414 = vpop.trf.xlu0
        %v1415 = vpop.trf.xlu0
        %v1416 = vpop.trf.xlu0
        %v1417 = vpop.trf.xlu0
        %v1418 = vpop.trf.xlu0
        %v1419 = vpop.trf.xlu0
        %v1420 = vpop.trf.xlu0
        %1421 = vxpose.xlu0.c.b16.start [1/8] %v1367, 128
        %1422 = vxpose.xlu0.c.b16.cont [2/8] 0, 128
        %1423 = vxpose.xlu0.c.b16.cont [3/8] 0, 128
        %1424 = vxpose.xlu0.c.b16.cont [4/8] 0, 128
        %1425 = vxpose.xlu0.c.b16.cont [5/8] 0, 128
        %1426 = vxpose.xlu0.c.b16.cont [6/8] 0, 128
        %1427 = vxpose.xlu0.c.b16.cont [7/8] 0, 128
        %1428 = vxpose.xlu0.c.b16.end [8/8] 0, 128
        %v1429 = vpop.trf.xlu0
        %v1430 = vpop.trf.xlu0
        %v1431 = vpop.trf.xlu0
        %v1432 = vpop.trf.xlu0
        %v1433 = vpop.trf.xlu0
        %v1434 = vpop.trf.xlu0
        %v1435 = vpop.trf.xlu0
        %v1436 = vpop.trf.xlu0
        %1437 = vxpose.xlu0.c.b16.start [1/8] %v1371, 128
        %1438 = vxpose.xlu0.c.b16.cont [2/8] 0, 128
        %1439 = vxpose.xlu0.c.b16.cont [3/8] 0, 128
        %1440 = vxpose.xlu0.c.b16.cont [4/8] 0, 128
        %1441 = vxpose.xlu0.c.b16.cont [5/8] 0, 128
        %1442 = vxpose.xlu0.c.b16.cont [6/8] 0, 128
        %1443 = vxpose.xlu0.c.b16.cont [7/8] 0, 128
        %1444 = vxpose.xlu0.c.b16.end [8/8] 0, 128
        %v1445 = vpop.trf.xlu0
        %v1446 = vpop.trf.xlu0
        %v1447 = vpop.trf.xlu0
        %v1448 = vpop.trf.xlu0
        %v1449 = vpop.trf.xlu0
        %v1450 = vpop.trf.xlu0
        %v1451 = vpop.trf.xlu0
        %v1452 = vpop.trf.xlu0
        %1453 = vxpose.xlu0.c.b16.start [1/8] %v1375, 128
        %1454 = vxpose.xlu0.c.b16.cont [2/8] 0, 128
        %1455 = vxpose.xlu0.c.b16.cont [3/8] 0, 128
        %1456 = vxpose.xlu0.c.b16.cont [4/8] 0, 128
        %1457 = vxpose.xlu0.c.b16.cont [5/8] 0, 128
        %1458 = vxpose.xlu0.c.b16.cont [6/8] 0, 128
        %1459 = vxpose.xlu0.c.b16.cont [7/8] 0, 128
        %1460 = vxpose.xlu0.c.b16.end [8/8] 0, 128
        %v1461 = vpop.trf.xlu0
        %v1462 = vpop.trf.xlu0
        %v1463 = vpop.trf.xlu0
        %v1464 = vpop.trf.xlu0
        %v1465 = vpop.trf.xlu0
        %v1466 = vpop.trf.xlu0
        %v1467 = vpop.trf.xlu0
        %v1468 = vpop.trf.xlu0
        %1469 = vxpose.xlu0.c.b16.start [1/8] %v1379, 128
        %1470 = vxpose.xlu0.c.b16.cont [2/8] 0, 128
        %1471 = vxpose.xlu0.c.b16.cont [3/8] 0, 128
        %1472 = vxpose.xlu0.c.b16.cont [4/8] 0, 128
        %1473 = vxpose.xlu0.c.b16.cont [5/8] 0, 128
        %1474 = vxpose.xlu0.c.b16.cont [6/8] 0, 128
        %1475 = vxpose.xlu0.c.b16.cont [7/8] 0, 128
        %1476 = vxpose.xlu0.c.b16.end [8/8] 0, 128
        %v1477 = vpop.trf.xlu0
        %v1478 = vpop.trf.xlu0
        %v1479 = vpop.trf.xlu0
        %v1480 = vpop.trf.xlu0
        %v1481 = vpop.trf.xlu0
        %v1482 = vpop.trf.xlu0
        %v1483 = vpop.trf.xlu0
        %v1484 = vpop.trf.xlu0
        %1485 = vxpose.xlu0.c.b16.start [1/8] %v1383, 128
        %1486 = vxpose.xlu0.c.b16.cont [2/8] 0, 128
        %1487 = vxpose.xlu0.c.b16.cont [3/8] 0, 128
        %1488 = vxpose.xlu0.c.b16.cont [4/8] 0, 128
        %1489 = vxpose.xlu0.c.b16.cont [5/8] 0, 128
        %1490 = vxpose.xlu0.c.b16.cont [6/8] 0, 128
        %1491 = vxpose.xlu0.c.b16.cont [7/8] 0, 128
        %1492 = vxpose.xlu0.c.b16.end [8/8] 0, 128
        %v1493 = vpop.trf.xlu0
        %v1494 = vpop.trf.xlu0
        %v1495 = vpop.trf.xlu0
        %v1496 = vpop.trf.xlu0
        %v1497 = vpop.trf.xlu0
        %v1498 = vpop.trf.xlu0
        %v1499 = vpop.trf.xlu0
        %v1500 = vpop.trf.xlu0
        %1501 = vxpose.xlu0.c.b16.start [1/8] %v1387, 128
        %1502 = vxpose.xlu0.c.b16.cont [2/8] 0, 128
        %1503 = vxpose.xlu0.c.b16.cont [3/8] 0, 128
        %1504 = vxpose.xlu0.c.b16.cont [4/8] 0, 128
        %1505 = vxpose.xlu0.c.b16.cont [5/8] 0, 128
        %1506 = vxpose.xlu0.c.b16.cont [6/8] 0, 128
        %1507 = vxpose.xlu0.c.b16.cont [7/8] 0, 128
        %1508 = vxpose.xlu0.c.b16.end [8/8] 0, 128
        %v1509 = vpop.trf.xlu0
        %v1510 = vpop.trf.xlu0
        %v1511 = vpop.trf.xlu0
        %v1512 = vpop.trf.xlu0
        %v1513 = vpop.trf.xlu0
        %v1514 = vpop.trf.xlu0
        %v1515 = vpop.trf.xlu0
        %v1516 = vpop.trf.xlu0
        %v1517 = vcombine.low %v1397, %v1461
        %v1519 = vunpack.c.l.s4 1983009808
        %v1520 = vunpack.c.0.s8 %v1519
        %v1521 = vlaneseq
        %v1522 = vshrl.u32 %v1521, 7
        %v1523 = vsub.s32 %v1520, %v1522
        %v1524 = vrot.slane %v1517, %v1523
        %v1525 = vcombine.low %v1429, %v1493
        %v1527 = vunpack.c.l.s4 1983009808
        %v1528 = vunpack.c.0.s8 %v1527
        %v1529 = vlaneseq
        %v1530 = vshrl.u32 %v1529, 7
        %v1531 = vsub.s32 %v1528, %v1530
        %v1532 = vrot.slane %v1525, %v1531
        %v1533 = vcombine.low %v1524, %v1532
        %v1535 = vunpack.c.l.s4 1934713408
        %v1536 = vunpack.c.0.s8 %v1535
        %v1537 = vlaneseq
        %v1538 = vshrl.u32 %v1537, 7
        %v1539 = vsub.s32 %v1536, %v1538
        %v1540 = vrot.slane %v1533, %v1539
        %v1541 = vcombine.high %v1540, 0
        %v1542 = vcombine.low %v1413, %v1477
        %v1544 = vunpack.c.l.s4 1983009808
        %v1545 = vunpack.c.0.s8 %v1544
        %v1546 = vlaneseq
        %v1547 = vshrl.u32 %v1546, 7
        %v1548 = vsub.s32 %v1545, %v1547
        %v1549 = vrot.slane %v1542, %v1548
        %v1550 = vcombine.low %v1445, %v1509
        %v1552 = vunpack.c.l.s4 1983009808
        %v1553 = vunpack.c.0.s8 %v1552
        %v1554 = vlaneseq
        %v1555 = vshrl.u32 %v1554, 7
        %v1556 = vsub.s32 %v1553, %v1555
        %v1557 = vrot.slane %v1550, %v1556
        %v1558 = vcombine.low %v1549, %v1557
        %v1560 = vunpack.c.l.s4 1934713408
        %v1561 = vunpack.c.0.s8 %v1560
        %v1562 = vlaneseq
        %v1563 = vshrl.u32 %v1562, 7
        %v1564 = vsub.s32 %v1561, %v1563
        %v1565 = vrot.slane %v1558, %v1564
        %v1566 = vcombine.high %v1565, 0
        %v1569 = vpack.i.b16 %v1565, %v1540
        %v1570 = vshrl.u32 %v1540, 16
        %v1571 = vshrl.u32 %v1565, 16
        %v1572 = vpack.i.b16 %v1571, %v1570
        %v1575 = vpack.i.b16 %v1566, %v1541
        %v1576 = vshrl.u32 %v1541, 16
        %v1577 = vshrl.u32 %v1566, 16
        %v1578 = vpack.i.b16 %v1577, %v1576
        %vm1579 = vcmask 64512
        %v1581 = vsel %vm1579, %v1151, 0
        %vm1583 = vcmask 1043456
        %v1585 = vsel %vm1583, %v1569, 0
        %1587 = vmatprep.subr.bf16.mxu0 0
        %1588 = vmatpush1.bf16.msra.mxu0 %v1585
        %1589 = vmatprep.subr.bf16.mxu0 0
        %1590 = vmatpush1.bf16.msra.mxu0 0
        %1591 = vmatprep.subr.bf16.mxu0 0
        %1592 = vmatpush1.bf16.msra.mxu0 0
        %1593 = vmatprep.subr.bf16.mxu0 0
        %1594 = vmatpush1.bf16.msra.mxu0 0
        %1595 = vmatprep.subr.bf16.mxu0 0
        %1596 = vmatpush1.bf16.msra.mxu0 0
        %1597 = vmatprep.subr.bf16.mxu0 0
        %1598 = vmatpush1.bf16.msra.mxu0 0
        %1599 = vmatprep.subr.bf16.mxu0 0
        %1600 = vmatpush1.bf16.msra.mxu0 0
        %1601 = vmatprep.subr.bf16.mxu0 0
        %1602 = vmatpush1.bf16.msra.mxu0 0
        %1603 = vmatprep.subr.bf16.mxu0 0
        %1604 = vmatpush1.bf16.msra.mxu0 0
        %1605 = vmatprep.subr.bf16.mxu0 0
        %1606 = vmatpush1.bf16.msra.mxu0 0
        %1607 = vmatprep.subr.bf16.mxu0 0
        %1608 = vmatpush1.bf16.msra.mxu0 0
        %1609 = vmatprep.subr.bf16.mxu0 0
        %1610 = vmatpush1.bf16.msra.mxu0 0
        %1611 = vmatprep.subr.bf16.mxu0 0
        %1612 = vmatpush1.bf16.msra.mxu0 0
        %1613 = vmatprep.subr.bf16.mxu0 0
        %1614 = vmatpush1.bf16.msra.mxu0 0
        %1615 = vmatprep.subr.bf16.mxu0 0
        %1616 = vmatpush1.bf16.msra.mxu0 0
        %1617 = vmatprep.subr.bf16.mxu0 0
        %1618 = vmatpush1.bf16.msra.mxu0 0
        %1619 = vmatprep.mubr.bf16.mxu0 0
        %1620 = vmatmul.mubr.bf16.gmra.mrb[0].mxu0 %v1581
        %v1621 = vpop.f32.mrb[0].mxu0
        %v1622 = vadd.f32 0.0, %v1621
        %v1623 = vpop.f32.mrb[0].mxu0
        %v1624 = vpop.f32.mrb[0].mxu0
        %v1625 = vpop.f32.mrb[0].mxu0
        %1626 = vdwg.mxu0
        %v1628 = vsel %vm1579, %v1154, 0
        %v1631 = vsel %vm1583, %v1572, 0
        %1633 = vmatprep.subr.bf16.mxu0 0
        %1634 = vmatpush1.bf16.msra.mxu0 %v1631
        %1635 = vmatprep.subr.bf16.mxu0 0
        %1636 = vmatpush1.bf16.msra.mxu0 0
        %1637 = vmatprep.subr.bf16.mxu0 0
        %1638 = vmatpush1.bf16.msra.mxu0 0
        %1639 = vmatprep.subr.bf16.mxu0 0
        %1640 = vmatpush1.bf16.msra.mxu0 0
        %1641 = vmatprep.subr.bf16.mxu0 0
        %1642 = vmatpush1.bf16.msra.mxu0 0
        %1643 = vmatprep.subr.bf16.mxu0 0
        %1644 = vmatpush1.bf16.msra.mxu0 0
        %1645 = vmatprep.subr.bf16.mxu0 0
        %1646 = vmatpush1.bf16.msra.mxu0 0
        %1647 = vmatprep.subr.bf16.mxu0 0
        %1648 = vmatpush1.bf16.msra.mxu0 0
        %1649 = vmatprep.subr.bf16.mxu0 0
        %1650 = vmatpush1.bf16.msra.mxu0 0
        %1651 = vmatprep.subr.bf16.mxu0 0
        %1652 = vmatpush1.bf16.msra.mxu0 0
        %1653 = vmatprep.subr.bf16.mxu0 0
        %1654 = vmatpush1.bf16.msra.mxu0 0
        %1655 = vmatprep.subr.bf16.mxu0 0
        %1656 = vmatpush1.bf16.msra.mxu0 0
        %1657 = vmatprep.subr.bf16.mxu0 0
        %1658 = vmatpush1.bf16.msra.mxu0 0
        %1659 = vmatprep.subr.bf16.mxu0 0
        %1660 = vmatpush1.bf16.msra.mxu0 0
        %1661 = vmatprep.subr.bf16.mxu0 0
        %1662 = vmatpush1.bf16.msra.mxu0 0
        %1663 = vmatprep.subr.bf16.mxu0 0
        %1664 = vmatpush1.bf16.msra.mxu0 0
        %1665 = vmatprep.mubr.bf16.mxu0 0
        %1666 = vmatmul.mubr.bf16.gmra.mrb[0].mxu0 %v1628
        %v1667 = vpop.f32.mrb[0].mxu0
        %v1668 = vadd.f32 0.0, %v1667
        %v1669 = vpop.f32.mrb[0].mxu0
        %v1670 = vpop.f32.mrb[0].mxu0
        %v1671 = vpop.f32.mrb[0].mxu0
        %1672 = vdwg.mxu0
        %v1674 = vsel %vm1579, %v1157, 0
        %v1677 = vsel %vm1583, %v1575, 0
        %1679 = vmatprep.subr.bf16.mxu0 0
        %1680 = vmatpush1.bf16.msra.mxu0 %v1677
        %1681 = vmatprep.subr.bf16.mxu0 0
        %1682 = vmatpush1.bf16.msra.mxu0 0
        %1683 = vmatprep.subr.bf16.mxu0 0
        %1684 = vmatpush1.bf16.msra.mxu0 0
        %1685 = vmatprep.subr.bf16.mxu0 0
        %1686 = vmatpush1.bf16.msra.mxu0 0
        %1687 = vmatprep.subr.bf16.mxu0 0
        %1688 = vmatpush1.bf16.msra.mxu0 0
        %1689 = vmatprep.subr.bf16.mxu0 0
        %1690 = vmatpush1.bf16.msra.mxu0 0
        %1691 = vmatprep.subr.bf16.mxu0 0
        %1692 = vmatpush1.bf16.msra.mxu0 0
        %1693 = vmatprep.subr.bf16.mxu0 0
        %1694 = vmatpush1.bf16.msra.mxu0 0
        %1695 = vmatprep.subr.bf16.mxu0 0
        %1696 = vmatpush1.bf16.msra.mxu0 0
        %1697 = vmatprep.subr.bf16.mxu0 0
        %1698 = vmatpush1.bf16.msra.mxu0 0
        %1699 = vmatprep.subr.bf16.mxu0 0
        %1700 = vmatpush1.bf16.msra.mxu0 0
        %1701 = vmatprep.subr.bf16.mxu0 0
        %1702 = vmatpush1.bf16.msra.mxu0 0
        %1703 = vmatprep.subr.bf16.mxu0 0
        %1704 = vmatpush1.bf16.msra.mxu0 0
        %1705 = vmatprep.subr.bf16.mxu0 0
        %1706 = vmatpush1.bf16.msra.mxu0 0
        %1707 = vmatprep.subr.bf16.mxu0 0
        %1708 = vmatpush1.bf16.msra.mxu0 0
        %1709 = vmatprep.subr.bf16.mxu0 0
        %1710 = vmatpush1.bf16.msra.mxu0 0
        %1711 = vmatprep.mubr.bf16.mxu0 0
        %1712 = vmatmul.mubr.bf16.gmra.mrb[0].mxu0 %v1674
        %v1713 = vpop.f32.mrb[0].mxu0
        %v1714 = vadd.f32 0.0, %v1713
        %v1715 = vpop.f32.mrb[0].mxu0
        %v1716 = vpop.f32.mrb[0].mxu0
        %v1717 = vpop.f32.mrb[0].mxu0
        %1718 = vdwg.mxu0
        %v1720 = vsel %vm1579, %v1160, 0
        %v1723 = vsel %vm1583, %v1578, 0
        %1725 = vmatprep.subr.bf16.mxu0 0
        %1726 = vmatpush1.bf16.msra.mxu0 %v1723
        %1727 = vmatprep.subr.bf16.mxu0 0
        %1728 = vmatpush1.bf16.msra.mxu0 0
        %1729 = vmatprep.subr.bf16.mxu0 0
        %1730 = vmatpush1.bf16.msra.mxu0 0
        %1731 = vmatprep.subr.bf16.mxu0 0
        %1732 = vmatpush1.bf16.msra.mxu0 0
        %1733 = vmatprep.subr.bf16.mxu0 0
        %1734 = vmatpush1.bf16.msra.mxu0 0
        %1735 = vmatprep.subr.bf16.mxu0 0
        %1736 = vmatpush1.bf16.msra.mxu0 0
        %1737 = vmatprep.subr.bf16.mxu0 0
        %1738 = vmatpush1.bf16.msra.mxu0 0
        %1739 = vmatprep.subr.bf16.mxu0 0
        %1740 = vmatpush1.bf16.msra.mxu0 0
        %1741 = vmatprep.subr.bf16.mxu0 0
        %1742 = vmatpush1.bf16.msra.mxu0 0
        %1743 = vmatprep.subr.bf16.mxu0 0
        %1744 = vmatpush1.bf16.msra.mxu0 0
        %1745 = vmatprep.subr.bf16.mxu0 0
        %1746 = vmatpush1.bf16.msra.mxu0 0
        %1747 = vmatprep.subr.bf16.mxu0 0
        %1748 = vmatpush1.bf16.msra.mxu0 0
        %1749 = vmatprep.subr.bf16.mxu0 0
        %1750 = vmatpush1.bf16.msra.mxu0 0
        %1751 = vmatprep.subr.bf16.mxu0 0
        %1752 = vmatpush1.bf16.msra.mxu0 0
        %1753 = vmatprep.subr.bf16.mxu0 0
        %1754 = vmatpush1.bf16.msra.mxu0 0
        %1755 = vmatprep.subr.bf16.mxu0 0
        %1756 = vmatpush1.bf16.msra.mxu0 0
        %1757 = vmatprep.mubr.bf16.mxu0 0
        %1758 = vmatmul.mubr.bf16.gmra.mrb[0].mxu0 %v1720
        %v1759 = vpop.f32.mrb[0].mxu0
        %v1760 = vadd.f32 0.0, %v1759
        %v1761 = vpop.f32.mrb[0].mxu0
        %v1762 = vpop.f32.mrb[0].mxu0
        %v1763 = vpop.f32.mrb[0].mxu0
        %1764 = vdwg.mxu0
        %v1765 = vsel %vm1579, %v1622, -inf
        %1766 = vmax.xlane.f32.xlu0 %v1765
        %v1767 = vpop.xlane.xlu0 %1766
        %v1768 = vsel %vm1579, %v1668, -inf
        %1769 = vmax.xlane.f32.xlu0 %v1768
        %v1770 = vpop.xlane.xlu0 %1769
        %v1771 = vsel %vm1579, %v1714, -inf
        %1772 = vmax.xlane.f32.xlu0 %v1771
        %v1773 = vpop.xlane.xlu0 %1772
        %v1774 = vsel %vm1579, %v1760, -inf
        %1775 = vmax.xlane.f32.xlu0 %v1774
        %v1776 = vpop.xlane.xlu0 %1775
        %v1777 = vsub.f32 %v1622, %v1767
        %v1778 = vsub.f32 %v1668, %v1770
        %v1779 = vsub.f32 %v1714, %v1773
        %v1780 = vsub.f32 %v1760, %v1776
        %v1781 = vmul.f32 %v1777, 1.442695
        %v1782 = vpow.pop %v1781
        %v1783 = vmul.f32 %v1778, 1.442695
        %v1784 = vpow.pop %v1783
        %v1785 = vmul.f32 %v1779, 1.442695
        %v1786 = vpow.pop %v1785
        %v1787 = vmul.f32 %v1780, 1.442695
        %v1788 = vpow.pop %v1787
        %v1789 = vsel %vm1579, %v1782, 0.0
        %1790 = vadd.xlane.f32.xlu0 %v1789
        %v1791 = vpop.xlane.xlu0 %1790
        %v1792 = vsel %vm1579, %v1784, 0.0
        %1793 = vadd.xlane.f32.xlu0 %v1792
        %v1794 = vpop.xlane.xlu0 %1793
        %v1795 = vsel %vm1579, %v1786, 0.0
        %1796 = vadd.xlane.f32.xlu0 %v1795
        %v1797 = vpop.xlane.xlu0 %1796
        %v1798 = vsel %vm1579, %v1788, 0.0
        %1799 = vadd.xlane.f32.xlu0 %v1798
        %v1800 = vpop.xlane.xlu0 %1799
        %v1801 = vrcp.pop %v1791
        %v1802 = vrcp.pop %v1794
        %v1803 = vrcp.pop %v1797
        %v1804 = vrcp.pop %v1800
        %v1805 = vmul.f32 %v1782, %v1801
        %v1806 = vmul.f32 %v1784, %v1802
        %v1807 = vmul.f32 %v1786, %v1803
        %v1808 = vmul.f32 %v1788, %v1804
        %v1809 = vpack.c.bf16 %v1805, %v1805
        %v1810 = vpack.c.bf16 %v1806, %v1806
        %v1811 = vpack.c.bf16 %v1807, %v1807
        %v1812 = vpack.c.bf16 %v1808, %v1808
        %1813 = vxpose.xlu0.c.b16.start [1/8] %v1091, 128
        %1814 = vxpose.xlu0.c.b16.cont [2/8] 0, 128
        %1815 = vxpose.xlu0.c.b16.cont [3/8] 0, 128
        %1816 = vxpose.xlu0.c.b16.cont [4/8] 0, 128
        %1817 = vxpose.xlu0.c.b16.cont [5/8] 0, 128
        %1818 = vxpose.xlu0.c.b16.cont [6/8] 0, 128
        %1819 = vxpose.xlu0.c.b16.cont [7/8] 0, 128
        %1820 = vxpose.xlu0.c.b16.end [8/8] 0, 128
        %v1821 = vpop.trf.xlu0
        %v1822 = vpop.trf.xlu0
        %v1823 = vpop.trf.xlu0
        %v1824 = vpop.trf.xlu0
        %v1825 = vpop.trf.xlu0
        %v1826 = vpop.trf.xlu0
        %v1827 = vpop.trf.xlu0
        %v1828 = vpop.trf.xlu0
        %1829 = vxpose.xlu0.c.b16.start [1/8] %v1092, 128
        %1830 = vxpose.xlu0.c.b16.cont [2/8] 0, 128
        %1831 = vxpose.xlu0.c.b16.cont [3/8] 0, 128
        %1832 = vxpose.xlu0.c.b16.cont [4/8] 0, 128
        %1833 = vxpose.xlu0.c.b16.cont [5/8] 0, 128
        %1834 = vxpose.xlu0.c.b16.cont [6/8] 0, 128
        %1835 = vxpose.xlu0.c.b16.cont [7/8] 0, 128
        %1836 = vxpose.xlu0.c.b16.end [8/8] 0, 128
        %v1837 = vpop.trf.xlu0
        %v1838 = vpop.trf.xlu0
        %v1839 = vpop.trf.xlu0
        %v1840 = vpop.trf.xlu0
        %v1841 = vpop.trf.xlu0
        %v1842 = vpop.trf.xlu0
        %v1843 = vpop.trf.xlu0
        %v1844 = vpop.trf.xlu0
        %1845 = vxpose.xlu0.c.b16.start [1/8] %v1093, 128
        %1846 = vxpose.xlu0.c.b16.cont [2/8] 0, 128
        %1847 = vxpose.xlu0.c.b16.cont [3/8] 0, 128
        %1848 = vxpose.xlu0.c.b16.cont [4/8] 0, 128
        %1849 = vxpose.xlu0.c.b16.cont [5/8] 0, 128
        %1850 = vxpose.xlu0.c.b16.cont [6/8] 0, 128
        %1851 = vxpose.xlu0.c.b16.cont [7/8] 0, 128
        %1852 = vxpose.xlu0.c.b16.end [8/8] 0, 128
        %v1853 = vpop.trf.xlu0
        %v1854 = vpop.trf.xlu0
        %v1855 = vpop.trf.xlu0
        %v1856 = vpop.trf.xlu0
        %v1857 = vpop.trf.xlu0
        %v1858 = vpop.trf.xlu0
        %v1859 = vpop.trf.xlu0
        %v1860 = vpop.trf.xlu0
        %1861 = vxpose.xlu0.c.b16.start [1/8] %v1094, 128
        %1862 = vxpose.xlu0.c.b16.cont [2/8] 0, 128
        %1863 = vxpose.xlu0.c.b16.cont [3/8] 0, 128
        %1864 = vxpose.xlu0.c.b16.cont [4/8] 0, 128
        %1865 = vxpose.xlu0.c.b16.cont [5/8] 0, 128
        %1866 = vxpose.xlu0.c.b16.cont [6/8] 0, 128
        %1867 = vxpose.xlu0.c.b16.cont [7/8] 0, 128
        %1868 = vxpose.xlu0.c.b16.end [8/8] 0, 128
        %v1869 = vpop.trf.xlu0
        %v1870 = vpop.trf.xlu0
        %v1871 = vpop.trf.xlu0
        %v1872 = vpop.trf.xlu0
        %v1873 = vpop.trf.xlu0
        %v1874 = vpop.trf.xlu0
        %v1875 = vpop.trf.xlu0
        %v1876 = vpop.trf.xlu0
        %1877 = vxpose.xlu0.c.b16.start [1/8] %v1095, 128
        %1878 = vxpose.xlu0.c.b16.cont [2/8] 0, 128
        %1879 = vxpose.xlu0.c.b16.cont [3/8] 0, 128
        %1880 = vxpose.xlu0.c.b16.cont [4/8] 0, 128
        %1881 = vxpose.xlu0.c.b16.cont [5/8] 0, 128
        %1882 = vxpose.xlu0.c.b16.cont [6/8] 0, 128
        %1883 = vxpose.xlu0.c.b16.cont [7/8] 0, 128
        %1884 = vxpose.xlu0.c.b16.end [8/8] 0, 128
        %v1885 = vpop.trf.xlu0
        %v1886 = vpop.trf.xlu0
        %v1887 = vpop.trf.xlu0
        %v1888 = vpop.trf.xlu0
        %v1889 = vpop.trf.xlu0
        %v1890 = vpop.trf.xlu0
        %v1891 = vpop.trf.xlu0
        %v1892 = vpop.trf.xlu0
        %1893 = vxpose.xlu0.c.b16.start [1/8] %v1096, 128
        %1894 = vxpose.xlu0.c.b16.cont [2/8] 0, 128
        %1895 = vxpose.xlu0.c.b16.cont [3/8] 0, 128
        %1896 = vxpose.xlu0.c.b16.cont [4/8] 0, 128
        %1897 = vxpose.xlu0.c.b16.cont [5/8] 0, 128
        %1898 = vxpose.xlu0.c.b16.cont [6/8] 0, 128
        %1899 = vxpose.xlu0.c.b16.cont [7/8] 0, 128
        %1900 = vxpose.xlu0.c.b16.end [8/8] 0, 128
        %v1901 = vpop.trf.xlu0
        %v1902 = vpop.trf.xlu0
        %v1903 = vpop.trf.xlu0
        %v1904 = vpop.trf.xlu0
        %v1905 = vpop.trf.xlu0
        %v1906 = vpop.trf.xlu0
        %v1907 = vpop.trf.xlu0
        %v1908 = vpop.trf.xlu0
        %1909 = vxpose.xlu0.c.b16.start [1/8] %v1097, 128
        %1910 = vxpose.xlu0.c.b16.cont [2/8] 0, 128
        %1911 = vxpose.xlu0.c.b16.cont [3/8] 0, 128
        %1912 = vxpose.xlu0.c.b16.cont [4/8] 0, 128
        %1913 = vxpose.xlu0.c.b16.cont [5/8] 0, 128
        %1914 = vxpose.xlu0.c.b16.cont [6/8] 0, 128
        %1915 = vxpose.xlu0.c.b16.cont [7/8] 0, 128
        %1916 = vxpose.xlu0.c.b16.end [8/8] 0, 128
        %v1917 = vpop.trf.xlu0
        %v1918 = vpop.trf.xlu0
        %v1919 = vpop.trf.xlu0
        %v1920 = vpop.trf.xlu0
        %v1921 = vpop.trf.xlu0
        %v1922 = vpop.trf.xlu0
        %v1923 = vpop.trf.xlu0
        %v1924 = vpop.trf.xlu0
        %1925 = vxpose.xlu0.c.b16.start [1/8] %v1098, 128
        %1926 = vxpose.xlu0.c.b16.cont [2/8] 0, 128
        %1927 = vxpose.xlu0.c.b16.cont [3/8] 0, 128
        %1928 = vxpose.xlu0.c.b16.cont [4/8] 0, 128
        %1929 = vxpose.xlu0.c.b16.cont [5/8] 0, 128
        %1930 = vxpose.xlu0.c.b16.cont [6/8] 0, 128
        %1931 = vxpose.xlu0.c.b16.cont [7/8] 0, 128
        %1932 = vxpose.xlu0.c.b16.end [8/8] 0, 128
        %v1933 = vpop.trf.xlu0
        %v1934 = vpop.trf.xlu0
        %v1935 = vpop.trf.xlu0
        %v1936 = vpop.trf.xlu0
        %v1937 = vpop.trf.xlu0
        %v1938 = vpop.trf.xlu0
        %v1939 = vpop.trf.xlu0
        %v1940 = vpop.trf.xlu0
        %v1941 = vcombine.low %v1821, %v1885
        %v1943 = vunpack.c.l.s4 1983009808
        %v1944 = vunpack.c.0.s8 %v1943
        %v1945 = vlaneseq
        %v1946 = vshrl.u32 %v1945, 7
        %v1947 = vsub.s32 %v1944, %v1946
        %v1948 = vrot.slane %v1941, %v1947
        %v1949 = vcombine.low %v1853, %v1917
        %v1951 = vunpack.c.l.s4 1983009808
        %v1952 = vunpack.c.0.s8 %v1951
        %v1953 = vlaneseq
        %v1954 = vshrl.u32 %v1953, 7
        %v1955 = vsub.s32 %v1952, %v1954
        %v1956 = vrot.slane %v1949, %v1955
        %v1957 = vcombine.low %v1948, %v1956
        %v1958 = vcombine.high %v1948, %v1956
        %v1960 = vunpack.c.l.s4 1934713408
        %v1961 = vunpack.c.0.s8 %v1960
        %v1962 = vlaneseq
        %v1963 = vshrl.u32 %v1962, 7
        %v1964 = vsub.s32 %v1961, %v1963
        %v1965 = vrot.slane %v1957, %v1964
        %v1967 = vunpack.c.l.s4 1934713408
        %v1968 = vunpack.c.0.s8 %v1967
        %v1969 = vlaneseq
        %v1970 = vshrl.u32 %v1969, 7
        %v1971 = vsub.s32 %v1968, %v1970
        %v1972 = vrot.slane %v1958, %v1971
        %v1973 = vcombine.high %v1965, 0
        %v1974 = vcombine.high %v1972, 0
        %v1975 = vcombine.low %v1837, %v1901
        %v1977 = vunpack.c.l.s4 1983009808
        %v1978 = vunpack.c.0.s8 %v1977
        %v1979 = vlaneseq
        %v1980 = vshrl.u32 %v1979, 7
        %v1981 = vsub.s32 %v1978, %v1980
        %v1982 = vrot.slane %v1975, %v1981
        %v1983 = vcombine.low %v1869, %v1933
        %v1985 = vunpack.c.l.s4 1983009808
        %v1986 = vunpack.c.0.s8 %v1985
        %v1987 = vlaneseq
        %v1988 = vshrl.u32 %v1987, 7
        %v1989 = vsub.s32 %v1986, %v1988
        %v1990 = vrot.slane %v1983, %v1989
        %v1991 = vcombine.low %v1982, %v1990
        %v1992 = vcombine.high %v1982, %v1990
        %v1994 = vunpack.c.l.s4 1934713408
        %v1995 = vunpack.c.0.s8 %v1994
        %v1996 = vlaneseq
        %v1997 = vshrl.u32 %v1996, 7
        %v1998 = vsub.s32 %v1995, %v1997
        %v1999 = vrot.slane %v1991, %v1998
        %v2001 = vunpack.c.l.s4 1934713408
        %v2002 = vunpack.c.0.s8 %v2001
        %v2003 = vlaneseq
        %v2004 = vshrl.u32 %v2003, 7
        %v2005 = vsub.s32 %v2002, %v2004
        %v2006 = vrot.slane %v1992, %v2005
        %v2007 = vcombine.high %v1999, 0
        %v2008 = vcombine.high %v2006, 0
        %v2011 = vpack.i.b16 %v1999, %v1965
        %v2013 = vshrl.u32 %v1965, 16
        %v2014 = vshrl.u32 %v1999, 16
        %v2015 = vpack.i.b16 %v2014, %v2013
        %v2019 = vpack.i.b16 %v2007, %v1973
        %v2021 = vshrl.u32 %v1973, 16
        %v2022 = vshrl.u32 %v2007, 16
        %v2023 = vpack.i.b16 %v2022, %v2021
        %v2027 = vpack.i.b16 %v2006, %v1972
        %v2029 = vshrl.u32 %v1972, 16
        %v2030 = vshrl.u32 %v2006, 16
        %v2031 = vpack.i.b16 %v2030, %v2029
        %v2035 = vpack.i.b16 %v2008, %v1974
        %v2037 = vshrl.u32 %v1974, 16
        %v2038 = vshrl.u32 %v2008, 16
        %v2039 = vpack.i.b16 %v2038, %v2037
        %2041 = vxpose.xlu0.c.b16.start [1/8] %v2011, 128
        %2042 = vxpose.xlu0.c.b16.cont [2/8] 0, 128
        %2043 = vxpose.xlu0.c.b16.cont [3/8] 0, 128
        %2044 = vxpose.xlu0.c.b16.cont [4/8] 0, 128
        %2045 = vxpose.xlu0.c.b16.cont [5/8] 0, 128
        %2046 = vxpose.xlu0.c.b16.cont [6/8] 0, 128
        %2047 = vxpose.xlu0.c.b16.cont [7/8] 0, 128
        %2048 = vxpose.xlu0.c.b16.end [8/8] 0, 128
        %v2049 = vpop.trf.xlu0
        %v2050 = vpop.trf.xlu0
        %v2051 = vpop.trf.xlu0
        %v2052 = vpop.trf.xlu0
        %v2053 = vpop.trf.xlu0
        %v2054 = vpop.trf.xlu0
        %v2055 = vpop.trf.xlu0
        %v2056 = vpop.trf.xlu0
        %2057 = vxpose.xlu0.c.b16.start [1/8] %v2015, 128
        %2058 = vxpose.xlu0.c.b16.cont [2/8] 0, 128
        %2059 = vxpose.xlu0.c.b16.cont [3/8] 0, 128
        %2060 = vxpose.xlu0.c.b16.cont [4/8] 0, 128
        %2061 = vxpose.xlu0.c.b16.cont [5/8] 0, 128
        %2062 = vxpose.xlu0.c.b16.cont [6/8] 0, 128
        %2063 = vxpose.xlu0.c.b16.cont [7/8] 0, 128
        %2064 = vxpose.xlu0.c.b16.end [8/8] 0, 128
        %v2065 = vpop.trf.xlu0
        %v2066 = vpop.trf.xlu0
        %v2067 = vpop.trf.xlu0
        %v2068 = vpop.trf.xlu0
        %v2069 = vpop.trf.xlu0
        %v2070 = vpop.trf.xlu0
        %v2071 = vpop.trf.xlu0
        %v2072 = vpop.trf.xlu0
        %2073 = vxpose.xlu0.c.b16.start [1/8] %v2019, 128
        %2074 = vxpose.xlu0.c.b16.cont [2/8] 0, 128
        %2075 = vxpose.xlu0.c.b16.cont [3/8] 0, 128
        %2076 = vxpose.xlu0.c.b16.cont [4/8] 0, 128
        %2077 = vxpose.xlu0.c.b16.cont [5/8] 0, 128
        %2078 = vxpose.xlu0.c.b16.cont [6/8] 0, 128
        %2079 = vxpose.xlu0.c.b16.cont [7/8] 0, 128
        %2080 = vxpose.xlu0.c.b16.end [8/8] 0, 128
        %v2081 = vpop.trf.xlu0
        %v2082 = vpop.trf.xlu0
        %v2083 = vpop.trf.xlu0
        %v2084 = vpop.trf.xlu0
        %v2085 = vpop.trf.xlu0
        %v2086 = vpop.trf.xlu0
        %v2087 = vpop.trf.xlu0
        %v2088 = vpop.trf.xlu0
        %2089 = vxpose.xlu0.c.b16.start [1/8] %v2023, 128
        %2090 = vxpose.xlu0.c.b16.cont [2/8] 0, 128
        %2091 = vxpose.xlu0.c.b16.cont [3/8] 0, 128
        %2092 = vxpose.xlu0.c.b16.cont [4/8] 0, 128
        %2093 = vxpose.xlu0.c.b16.cont [5/8] 0, 128
        %2094 = vxpose.xlu0.c.b16.cont [6/8] 0, 128
        %2095 = vxpose.xlu0.c.b16.cont [7/8] 0, 128
        %2096 = vxpose.xlu0.c.b16.end [8/8] 0, 128
        %v2097 = vpop.trf.xlu0
        %v2098 = vpop.trf.xlu0
        %v2099 = vpop.trf.xlu0
        %v2100 = vpop.trf.xlu0
        %v2101 = vpop.trf.xlu0
        %v2102 = vpop.trf.xlu0
        %v2103 = vpop.trf.xlu0
        %v2104 = vpop.trf.xlu0
        %2105 = vxpose.xlu0.c.b16.start [1/8] %v2027, 128
        %2106 = vxpose.xlu0.c.b16.cont [2/8] 0, 128
        %2107 = vxpose.xlu0.c.b16.cont [3/8] 0, 128
        %2108 = vxpose.xlu0.c.b16.cont [4/8] 0, 128
        %2109 = vxpose.xlu0.c.b16.cont [5/8] 0, 128
        %2110 = vxpose.xlu0.c.b16.cont [6/8] 0, 128
        %2111 = vxpose.xlu0.c.b16.cont [7/8] 0, 128
        %2112 = vxpose.xlu0.c.b16.end [8/8] 0, 128
        %v2113 = vpop.trf.xlu0
        %v2114 = vpop.trf.xlu0
        %v2115 = vpop.trf.xlu0
        %v2116 = vpop.trf.xlu0
        %v2117 = vpop.trf.xlu0
        %v2118 = vpop.trf.xlu0
        %v2119 = vpop.trf.xlu0
        %v2120 = vpop.trf.xlu0
        %2121 = vxpose.xlu0.c.b16.start [1/8] %v2031, 128
        %2122 = vxpose.xlu0.c.b16.cont [2/8] 0, 128
        %2123 = vxpose.xlu0.c.b16.cont [3/8] 0, 128
        %2124 = vxpose.xlu0.c.b16.cont [4/8] 0, 128
        %2125 = vxpose.xlu0.c.b16.cont [5/8] 0, 128
        %2126 = vxpose.xlu0.c.b16.cont [6/8] 0, 128
        %2127 = vxpose.xlu0.c.b16.cont [7/8] 0, 128
        %2128 = vxpose.xlu0.c.b16.end [8/8] 0, 128
        %v2129 = vpop.trf.xlu0
        %v2130 = vpop.trf.xlu0
        %v2131 = vpop.trf.xlu0
        %v2132 = vpop.trf.xlu0
        %v2133 = vpop.trf.xlu0
        %v2134 = vpop.trf.xlu0
        %v2135 = vpop.trf.xlu0
        %v2136 = vpop.trf.xlu0
        %2137 = vxpose.xlu0.c.b16.start [1/8] %v2035, 128
        %2138 = vxpose.xlu0.c.b16.cont [2/8] 0, 128
        %2139 = vxpose.xlu0.c.b16.cont [3/8] 0, 128
        %2140 = vxpose.xlu0.c.b16.cont [4/8] 0, 128
        %2141 = vxpose.xlu0.c.b16.cont [5/8] 0, 128
        %2142 = vxpose.xlu0.c.b16.cont [6/8] 0, 128
        %2143 = vxpose.xlu0.c.b16.cont [7/8] 0, 128
        %2144 = vxpose.xlu0.c.b16.end [8/8] 0, 128
        %v2145 = vpop.trf.xlu0
        %v2146 = vpop.trf.xlu0
        %v2147 = vpop.trf.xlu0
        %v2148 = vpop.trf.xlu0
        %v2149 = vpop.trf.xlu0
        %v2150 = vpop.trf.xlu0
        %v2151 = vpop.trf.xlu0
        %v2152 = vpop.trf.xlu0
        %2153 = vxpose.xlu0.c.b16.start [1/8] %v2039, 128
        %2154 = vxpose.xlu0.c.b16.cont [2/8] 0, 128
        %2155 = vxpose.xlu0.c.b16.cont [3/8] 0, 128
        %2156 = vxpose.xlu0.c.b16.cont [4/8] 0, 128
        %2157 = vxpose.xlu0.c.b16.cont [5/8] 0, 128
        %2158 = vxpose.xlu0.c.b16.cont [6/8] 0, 128
        %2159 = vxpose.xlu0.c.b16.cont [7/8] 0, 128
        %2160 = vxpose.xlu0.c.b16.end [8/8] 0, 128
        %v2161 = vpop.trf.xlu0
        %v2162 = vpop.trf.xlu0
        %v2163 = vpop.trf.xlu0
        %v2164 = vpop.trf.xlu0
        %v2165 = vpop.trf.xlu0
        %v2166 = vpop.trf.xlu0
        %v2167 = vpop.trf.xlu0
        %v2168 = vpop.trf.xlu0
        %v2169 = vcombine.low %v2049, %v2113
        %v2171 = vunpack.c.l.s4 1983009808
        %v2172 = vunpack.c.0.s8 %v2171
        %v2173 = vlaneseq
        %v2174 = vshrl.u32 %v2173, 7
        %v2175 = vsub.s32 %v2172, %v2174
        %v2176 = vrot.slane %v2169, %v2175
        %v2177 = vcombine.low %v2081, %v2145
        %v2179 = vunpack.c.l.s4 1983009808
        %v2180 = vunpack.c.0.s8 %v2179
        %v2181 = vlaneseq
        %v2182 = vshrl.u32 %v2181, 7
        %v2183 = vsub.s32 %v2180, %v2182
        %v2184 = vrot.slane %v2177, %v2183
        %v2185 = vcombine.low %v2176, %v2184
        %v2187 = vunpack.c.l.s4 1934713408
        %v2188 = vunpack.c.0.s8 %v2187
        %v2189 = vlaneseq
        %v2190 = vshrl.u32 %v2189, 7
        %v2191 = vsub.s32 %v2188, %v2190
        %v2192 = vrot.slane %v2185, %v2191
        %v2193 = vcombine.high %v2192, 0
        %v2194 = vcombine.low %v2065, %v2129
        %v2196 = vunpack.c.l.s4 1983009808
        %v2197 = vunpack.c.0.s8 %v2196
        %v2198 = vlaneseq
        %v2199 = vshrl.u32 %v2198, 7
        %v2200 = vsub.s32 %v2197, %v2199
        %v2201 = vrot.slane %v2194, %v2200
        %v2202 = vcombine.low %v2097, %v2161
        %v2204 = vunpack.c.l.s4 1983009808
        %v2205 = vunpack.c.0.s8 %v2204
        %v2206 = vlaneseq
        %v2207 = vshrl.u32 %v2206, 7
        %v2208 = vsub.s32 %v2205, %v2207
        %v2209 = vrot.slane %v2202, %v2208
        %v2210 = vcombine.low %v2201, %v2209
        %v2212 = vunpack.c.l.s4 1934713408
        %v2213 = vunpack.c.0.s8 %v2212
        %v2214 = vlaneseq
        %v2215 = vshrl.u32 %v2214, 7
        %v2216 = vsub.s32 %v2213, %v2215
        %v2217 = vrot.slane %v2210, %v2216
        %v2218 = vcombine.high %v2217, 0
        %v2221 = vpack.i.b16 %v2217, %v2192
        %v2222 = vshrl.u32 %v2192, 16
        %v2223 = vshrl.u32 %v2217, 16
        %v2224 = vpack.i.b16 %v2223, %v2222
        %v2227 = vpack.i.b16 %v2218, %v2193
        %v2228 = vshrl.u32 %v2193, 16
        %v2229 = vshrl.u32 %v2218, 16
        %v2230 = vpack.i.b16 %v2229, %v2228
        %v2232 = vsel %vm1579, %v2221, 0
        %v2235 = vsel %vm1579, %v1809, 0
        %2237 = vmatprep.subr.bf16.mxu0 0
        %2238 = vmatpush1.bf16.xpose.msra.mxu0 %v2235
        %2239 = vmatprep.subr.bf16.mxu0 0
        %2240 = vmatpush1.bf16.xpose.msra.mxu0 0
        %2241 = vmatprep.subr.bf16.mxu0 0
        %2242 = vmatpush1.bf16.xpose.msra.mxu0 0
        %2243 = vmatprep.subr.bf16.mxu0 0
        %2244 = vmatpush1.bf16.xpose.msra.mxu0 0
        %2245 = vmatprep.subr.bf16.mxu0 0
        %2246 = vmatpush1.bf16.xpose.msra.mxu0 0
        %2247 = vmatprep.subr.bf16.mxu0 0
        %2248 = vmatpush1.bf16.xpose.msra.mxu0 0
        %2249 = vmatprep.subr.bf16.mxu0 0
        %2250 = vmatpush1.bf16.xpose.msra.mxu0 0
        %2251 = vmatprep.subr.bf16.mxu0 0
        %2252 = vmatpush1.bf16.xpose.msra.mxu0 0
        %2253 = vmatprep.subr.bf16.mxu0 0
        %2254 = vmatpush1.bf16.xpose.msra.mxu0 0
        %2255 = vmatprep.subr.bf16.mxu0 0
        %2256 = vmatpush1.bf16.xpose.msra.mxu0 0
        %2257 = vmatprep.subr.bf16.mxu0 0
        %2258 = vmatpush1.bf16.xpose.msra.mxu0 0
        %2259 = vmatprep.subr.bf16.mxu0 0
        %2260 = vmatpush1.bf16.xpose.msra.mxu0 0
        %2261 = vmatprep.subr.bf16.mxu0 0
        %2262 = vmatpush1.bf16.xpose.msra.mxu0 0
        %2263 = vmatprep.subr.bf16.mxu0 0
        %2264 = vmatpush1.bf16.xpose.msra.mxu0 0
        %2265 = vmatprep.subr.bf16.mxu0 0
        %2266 = vmatpush1.bf16.xpose.msra.mxu0 0
        %2267 = vmatprep.subr.bf16.mxu0 0
        %2268 = vmatpush1.bf16.xpose.msra.mxu0 0
        %2269 = vmatprep.mubr.bf16.mxu0 0
        %2270 = vmatmul.mubr.bf16.gmra.mrb[0].mxu0 %v2232
        %v2271 = vpop.f32.mrb[0].mxu0
        %v2272 = vadd.f32 0.0, %v2271
        %v2273 = vpop.f32.mrb[0].mxu0
        %v2274 = vpop.f32.mrb[0].mxu0
        %v2275 = vpop.f32.mrb[0].mxu0
        %2276 = vdwg.mxu0
        %v2278 = vsel %vm1579, %v2224, 0
        %v2281 = vsel %vm1579, %v1810, 0
        %2283 = vmatprep.subr.bf16.mxu0 0
        %2284 = vmatpush1.bf16.xpose.msra.mxu0 %v2281
        %2285 = vmatprep.subr.bf16.mxu0 0
        %2286 = vmatpush1.bf16.xpose.msra.mxu0 0
        %2287 = vmatprep.subr.bf16.mxu0 0
        %2288 = vmatpush1.bf16.xpose.msra.mxu0 0
        %2289 = vmatprep.subr.bf16.mxu0 0
        %2290 = vmatpush1.bf16.xpose.msra.mxu0 0
        %2291 = vmatprep.subr.bf16.mxu0 0
        %2292 = vmatpush1.bf16.xpose.msra.mxu0 0
        %2293 = vmatprep.subr.bf16.mxu0 0
        %2294 = vmatpush1.bf16.xpose.msra.mxu0 0
        %2295 = vmatprep.subr.bf16.mxu0 0
        %2296 = vmatpush1.bf16.xpose.msra.mxu0 0
        %2297 = vmatprep.subr.bf16.mxu0 0
        %2298 = vmatpush1.bf16.xpose.msra.mxu0 0
        %2299 = vmatprep.subr.bf16.mxu0 0
        %2300 = vmatpush1.bf16.xpose.msra.mxu0 0
        %2301 = vmatprep.subr.bf16.mxu0 0
        %2302 = vmatpush1.bf16.xpose.msra.mxu0 0
        %2303 = vmatprep.subr.bf16.mxu0 0
        %2304 = vmatpush1.bf16.xpose.msra.mxu0 0
        %2305 = vmatprep.subr.bf16.mxu0 0
        %2306 = vmatpush1.bf16.xpose.msra.mxu0 0
        %2307 = vmatprep.subr.bf16.mxu0 0
        %2308 = vmatpush1.bf16.xpose.msra.mxu0 0
        %2309 = vmatprep.subr.bf16.mxu0 0
        %2310 = vmatpush1.bf16.xpose.msra.mxu0 0
        %2311 = vmatprep.subr.bf16.mxu0 0
        %2312 = vmatpush1.bf16.xpose.msra.mxu0 0
        %2313 = vmatprep.subr.bf16.mxu0 0
        %2314 = vmatpush1.bf16.xpose.msra.mxu0 0
        %2315 = vmatprep.mubr.bf16.mxu0 0
        %2316 = vmatmul.mubr.bf16.gmra.mrb[0].mxu0 %v2278
        %v2317 = vpop.f32.mrb[0].mxu0
        %v2318 = vadd.f32 0.0, %v2317
        %v2319 = vpop.f32.mrb[0].mxu0
        %v2320 = vpop.f32.mrb[0].mxu0
        %v2321 = vpop.f32.mrb[0].mxu0
        %2322 = vdwg.mxu0
        %v2324 = vsel %vm1579, %v2227, 0
        %v2327 = vsel %vm1579, %v1811, 0
        %2329 = vmatprep.subr.bf16.mxu0 0
        %2330 = vmatpush1.bf16.xpose.msra.mxu0 %v2327
        %2331 = vmatprep.subr.bf16.mxu0 0
        %2332 = vmatpush1.bf16.xpose.msra.mxu0 0
        %2333 = vmatprep.subr.bf16.mxu0 0
        %2334 = vmatpush1.bf16.xpose.msra.mxu0 0
        %2335 = vmatprep.subr.bf16.mxu0 0
        %2336 = vmatpush1.bf16.xpose.msra.mxu0 0
        %2337 = vmatprep.subr.bf16.mxu0 0
        %2338 = vmatpush1.bf16.xpose.msra.mxu0 0
        %2339 = vmatprep.subr.bf16.mxu0 0
        %2340 = vmatpush1.bf16.xpose.msra.mxu0 0
        %2341 = vmatprep.subr.bf16.mxu0 0
        %2342 = vmatpush1.bf16.xpose.msra.mxu0 0
        %2343 = vmatprep.subr.bf16.mxu0 0
        %2344 = vmatpush1.bf16.xpose.msra.mxu0 0
        %2345 = vmatprep.subr.bf16.mxu0 0
        %2346 = vmatpush1.bf16.xpose.msra.mxu0 0
        %2347 = vmatprep.subr.bf16.mxu0 0
        %2348 = vmatpush1.bf16.xpose.msra.mxu0 0
        %2349 = vmatprep.subr.bf16.mxu0 0
        %2350 = vmatpush1.bf16.xpose.msra.mxu0 0
        %2351 = vmatprep.subr.bf16.mxu0 0
        %2352 = vmatpush1.bf16.xpose.msra.mxu0 0
        %2353 = vmatprep.subr.bf16.mxu0 0
        %2354 = vmatpush1.bf16.xpose.msra.mxu0 0
        %2355 = vmatprep.subr.bf16.mxu0 0
        %2356 = vmatpush1.bf16.xpose.msra.mxu0 0
        %2357 = vmatprep.subr.bf16.mxu0 0
        %2358 = vmatpush1.bf16.xpose.msra.mxu0 0
        %2359 = vmatprep.subr.bf16.mxu0 0
        %2360 = vmatpush1.bf16.xpose.msra.mxu0 0
        %2361 = vmatprep.mubr.bf16.mxu0 0
        %2362 = vmatmul.mubr.bf16.gmra.mrb[0].mxu0 %v2324
        %v2363 = vpop.f32.mrb[0].mxu0
        %v2364 = vadd.f32 0.0, %v2363
        %v2365 = vpop.f32.mrb[0].mxu0
        %v2366 = vpop.f32.mrb[0].mxu0
        %v2367 = vpop.f32.mrb[0].mxu0
        %2368 = vdwg.mxu0
        %v2370 = vsel %vm1579, %v2230, 0
        %v2373 = vsel %vm1579, %v1812, 0
        %2375 = vmatprep.subr.bf16.mxu0 0
        %2376 = vmatpush1.bf16.xpose.msra.mxu0 %v2373
        %2377 = vmatprep.subr.bf16.mxu0 0
        %2378 = vmatpush1.bf16.xpose.msra.mxu0 0
        %2379 = vmatprep.subr.bf16.mxu0 0
        %2380 = vmatpush1.bf16.xpose.msra.mxu0 0
        %2381 = vmatprep.subr.bf16.mxu0 0
        %2382 = vmatpush1.bf16.xpose.msra.mxu0 0
        %2383 = vmatprep.subr.bf16.mxu0 0
        %2384 = vmatpush1.bf16.xpose.msra.mxu0 0
        %2385 = vmatprep.subr.bf16.mxu0 0
        %2386 = vmatpush1.bf16.xpose.msra.mxu0 0
        %2387 = vmatprep.subr.bf16.mxu0 0
        %2388 = vmatpush1.bf16.xpose.msra.mxu0 0
        %2389 = vmatprep.subr.bf16.mxu0 0
        %2390 = vmatpush1.bf16.xpose.msra.mxu0 0
        %2391 = vmatprep.subr.bf16.mxu0 0
        %2392 = vmatpush1.bf16.xpose.msra.mxu0 0
        %2393 = vmatprep.subr.bf16.mxu0 0
        %2394 = vmatpush1.bf16.xpose.msra.mxu0 0
        %2395 = vmatprep.subr.bf16.mxu0 0
        %2396 = vmatpush1.bf16.xpose.msra.mxu0 0
        %2397 = vmatprep.subr.bf16.mxu0 0
        %2398 = vmatpush1.bf16.xpose.msra.mxu0 0
        %2399 = vmatprep.subr.bf16.mxu0 0
        %2400 = vmatpush1.bf16.xpose.msra.mxu0 0
        %2401 = vmatprep.subr.bf16.mxu0 0
        %2402 = vmatpush1.bf16.xpose.msra.mxu0 0
        %2403 = vmatprep.subr.bf16.mxu0 0
        %2404 = vmatpush1.bf16.xpose.msra.mxu0 0
        %2405 = vmatprep.subr.bf16.mxu0 0
        %2406 = vmatpush1.bf16.xpose.msra.mxu0 0
        %2407 = vmatprep.mubr.bf16.mxu0 0
        %2408 = vmatmul.mubr.bf16.gmra.mrb[0].mxu0 %v2370
        %v2409 = vpop.f32.mrb[0].mxu0
        %v2410 = vadd.f32 0.0, %v2409
        %v2411 = vpop.f32.mrb[0].mxu0
        %v2412 = vpop.f32.mrb[0].mxu0
        %v2413 = vpop.f32.mrb[0].mxu0
        %2414 = vdwg.mxu0
        %2415 = vxpose.xlu0.b32.start [1/16] %v2272, 128
        %2416 = vxpose.xlu0.b32.cont [2/16] 0.0, 128
        %2417 = vxpose.xlu0.b32.cont [3/16] 0.0, 128
        %2418 = vxpose.xlu0.b32.cont [4/16] 0.0, 128
        %2419 = vxpose.xlu0.b32.cont [5/16] 0.0, 128
        %2420 = vxpose.xlu0.b32.cont [6/16] 0.0, 128
        %2421 = vxpose.xlu0.b32.cont [7/16] 0.0, 128
        %2422 = vxpose.xlu0.b32.cont [8/16] 0.0, 128
        %2423 = vxpose.xlu0.b32.cont [9/16] 0.0, 128
        %2424 = vxpose.xlu0.b32.cont [10/16] 0.0, 128
        %2425 = vxpose.xlu0.b32.cont [11/16] 0.0, 128
        %2426 = vxpose.xlu0.b32.cont [12/16] 0.0, 128
        %2427 = vxpose.xlu0.b32.cont [13/16] 0.0, 128
        %2428 = vxpose.xlu0.b32.cont [14/16] 0.0, 128
        %2429 = vxpose.xlu0.b32.cont [15/16] 0.0, 128
        %2430 = vxpose.xlu0.b32.end [16/16] 0.0, 128
        %v2431 = vpop.trf.xlu0
        %v2432 = vpop.trf.xlu0
        %v2433 = vpop.trf.xlu0
        %v2434 = vpop.trf.xlu0
        %v2435 = vpop.trf.xlu0
        %v2436 = vpop.trf.xlu0
        %v2437 = vpop.trf.xlu0
        %v2438 = vpop.trf.xlu0
        %v2439 = vpop.trf.xlu0
        %v2440 = vpop.trf.xlu0
        %v2441 = vpop.trf.xlu0
        %v2442 = vpop.trf.xlu0
        %v2443 = vpop.trf.xlu0
        %v2444 = vpop.trf.xlu0
        %v2445 = vpop.trf.xlu0
        %v2446 = vpop.trf.xlu0
        %2447 = vxpose.xlu0.b32.start [1/16] %v2318, 128
        %2448 = vxpose.xlu0.b32.cont [2/16] 0.0, 128
        %2449 = vxpose.xlu0.b32.cont [3/16] 0.0, 128
        %2450 = vxpose.xlu0.b32.cont [4/16] 0.0, 128
        %2451 = vxpose.xlu0.b32.cont [5/16] 0.0, 128
        %2452 = vxpose.xlu0.b32.cont [6/16] 0.0, 128
        %2453 = vxpose.xlu0.b32.cont [7/16] 0.0, 128
        %2454 = vxpose.xlu0.b32.cont [8/16] 0.0, 128
        %2455 = vxpose.xlu0.b32.cont [9/16] 0.0, 128
        %2456 = vxpose.xlu0.b32.cont [10/16] 0.0, 128
        %2457 = vxpose.xlu0.b32.cont [11/16] 0.0, 128
        %2458 = vxpose.xlu0.b32.cont [12/16] 0.0, 128
        %2459 = vxpose.xlu0.b32.cont [13/16] 0.0, 128
        %2460 = vxpose.xlu0.b32.cont [14/16] 0.0, 128
        %2461 = vxpose.xlu0.b32.cont [15/16] 0.0, 128
        %2462 = vxpose.xlu0.b32.end [16/16] 0.0, 128
        %v2463 = vpop.trf.xlu0
        %v2464 = vpop.trf.xlu0
        %v2465 = vpop.trf.xlu0
        %v2466 = vpop.trf.xlu0
        %v2467 = vpop.trf.xlu0
        %v2468 = vpop.trf.xlu0
        %v2469 = vpop.trf.xlu0
        %v2470 = vpop.trf.xlu0
        %v2471 = vpop.trf.xlu0
        %v2472 = vpop.trf.xlu0
        %v2473 = vpop.trf.xlu0
        %v2474 = vpop.trf.xlu0
        %v2475 = vpop.trf.xlu0
        %v2476 = vpop.trf.xlu0
        %v2477 = vpop.trf.xlu0
        %v2478 = vpop.trf.xlu0
        %2479 = vxpose.xlu0.b32.start [1/16] %v2364, 128
        %2480 = vxpose.xlu0.b32.cont [2/16] 0.0, 128
        %2481 = vxpose.xlu0.b32.cont [3/16] 0.0, 128
        %2482 = vxpose.xlu0.b32.cont [4/16] 0.0, 128
        %2483 = vxpose.xlu0.b32.cont [5/16] 0.0, 128
        %2484 = vxpose.xlu0.b32.cont [6/16] 0.0, 128
        %2485 = vxpose.xlu0.b32.cont [7/16] 0.0, 128
        %2486 = vxpose.xlu0.b32.cont [8/16] 0.0, 128
        %2487 = vxpose.xlu0.b32.cont [9/16] 0.0, 128
        %2488 = vxpose.xlu0.b32.cont [10/16] 0.0, 128
        %2489 = vxpose.xlu0.b32.cont [11/16] 0.0, 128
        %2490 = vxpose.xlu0.b32.cont [12/16] 0.0, 128
        %2491 = vxpose.xlu0.b32.cont [13/16] 0.0, 128
        %2492 = vxpose.xlu0.b32.cont [14/16] 0.0, 128
        %2493 = vxpose.xlu0.b32.cont [15/16] 0.0, 128
        %2494 = vxpose.xlu0.b32.end [16/16] 0.0, 128
        %v2495 = vpop.trf.xlu0
        %v2496 = vpop.trf.xlu0
        %v2497 = vpop.trf.xlu0
        %v2498 = vpop.trf.xlu0
        %v2499 = vpop.trf.xlu0
        %v2500 = vpop.trf.xlu0
        %v2501 = vpop.trf.xlu0
        %v2502 = vpop.trf.xlu0
        %v2503 = vpop.trf.xlu0
        %v2504 = vpop.trf.xlu0
        %v2505 = vpop.trf.xlu0
        %v2506 = vpop.trf.xlu0
        %v2507 = vpop.trf.xlu0
        %v2508 = vpop.trf.xlu0
        %v2509 = vpop.trf.xlu0
        %v2510 = vpop.trf.xlu0
        %2511 = vxpose.xlu0.b32.start [1/16] %v2410, 128
        %2512 = vxpose.xlu0.b32.cont [2/16] 0.0, 128
        %2513 = vxpose.xlu0.b32.cont [3/16] 0.0, 128
        %2514 = vxpose.xlu0.b32.cont [4/16] 0.0, 128
        %2515 = vxpose.xlu0.b32.cont [5/16] 0.0, 128
        %2516 = vxpose.xlu0.b32.cont [6/16] 0.0, 128
        %2517 = vxpose.xlu0.b32.cont [7/16] 0.0, 128
        %2518 = vxpose.xlu0.b32.cont [8/16] 0.0, 128
        %2519 = vxpose.xlu0.b32.cont [9/16] 0.0, 128
        %2520 = vxpose.xlu0.b32.cont [10/16] 0.0, 128
        %2521 = vxpose.xlu0.b32.cont [11/16] 0.0, 128
        %2522 = vxpose.xlu0.b32.cont [12/16] 0.0, 128
        %2523 = vxpose.xlu0.b32.cont [13/16] 0.0, 128
        %2524 = vxpose.xlu0.b32.cont [14/16] 0.0, 128
        %2525 = vxpose.xlu0.b32.cont [15/16] 0.0, 128
        %2526 = vxpose.xlu0.b32.end [16/16] 0.0, 128
        %v2527 = vpop.trf.xlu0
        %v2528 = vpop.trf.xlu0
        %v2529 = vpop.trf.xlu0
        %v2530 = vpop.trf.xlu0
        %v2531 = vpop.trf.xlu0
        %v2532 = vpop.trf.xlu0
        %v2533 = vpop.trf.xlu0
        %v2534 = vpop.trf.xlu0
        %v2535 = vpop.trf.xlu0
        %v2536 = vpop.trf.xlu0
        %v2537 = vpop.trf.xlu0
        %v2538 = vpop.trf.xlu0
        %v2539 = vpop.trf.xlu0
        %v2540 = vpop.trf.xlu0
        %v2541 = vpop.trf.xlu0
        %v2542 = vpop.trf.xlu0
        %v2543 = vcombine.low %v2431, %v2495
        %v2544 = vcombine.high %v2431, %v2495
        %v2546 = vunpack.c.l.s4 1983009808
        %v2547 = vunpack.c.0.s8 %v2546
        %v2548 = vlaneseq
        %v2549 = vshrl.u32 %v2548, 7
        %v2550 = vsub.s32 %v2547, %v2549
        %v2551 = vrot.slane %v2543, %v2550
        %v2553 = vunpack.c.l.s4 1983009808
        %v2554 = vunpack.c.0.s8 %v2553
        %v2555 = vlaneseq
        %v2556 = vshrl.u32 %v2555, 7
        %v2557 = vsub.s32 %v2554, %v2556
        %v2558 = vrot.slane %v2544, %v2557
        %v2559 = vcombine.low %v2463, %v2527
        %v2560 = vcombine.high %v2463, %v2527
        %v2562 = vunpack.c.l.s4 1983009808
        %v2563 = vunpack.c.0.s8 %v2562
        %v2564 = vlaneseq
        %v2565 = vshrl.u32 %v2564, 7
        %v2566 = vsub.s32 %v2563, %v2565
        %v2567 = vrot.slane %v2559, %v2566
        %v2569 = vunpack.c.l.s4 1983009808
        %v2570 = vunpack.c.0.s8 %v2569
        %v2571 = vlaneseq
        %v2572 = vshrl.u32 %v2571, 7
        %v2573 = vsub.s32 %v2570, %v2572
        %v2574 = vrot.slane %v2560, %v2573
        %v2575 = vcombine.low %v2551, %v2567
        %v2576 = vcombine.high %v2551, %v2567
        %v2578 = vunpack.c.l.s4 1934713408
        %v2579 = vunpack.c.0.s8 %v2578
        %v2580 = vlaneseq
        %v2581 = vshrl.u32 %v2580, 7
        %v2582 = vsub.s32 %v2579, %v2581
        %v2583 = vrot.slane %v2575, %v2582
        %v2585 = vunpack.c.l.s4 1934713408
        %v2586 = vunpack.c.0.s8 %v2585
        %v2587 = vlaneseq
        %v2588 = vshrl.u32 %v2587, 7
        %v2589 = vsub.s32 %v2586, %v2588
        %v2590 = vrot.slane %v2576, %v2589
        %v2591 = vcombine.low %v2558, %v2574
        %v2592 = vcombine.high %v2558, %v2574
        %v2594 = vunpack.c.l.s4 1934713408
        %v2595 = vunpack.c.0.s8 %v2594
        %v2596 = vlaneseq
        %v2597 = vshrl.u32 %v2596, 7
        %v2598 = vsub.s32 %v2595, %v2597
        %v2599 = vrot.slane %v2591, %v2598
        %v2601 = vunpack.c.l.s4 1934713408
        %v2602 = vunpack.c.0.s8 %v2601
        %v2603 = vlaneseq
        %v2604 = vshrl.u32 %v2603, 7
        %v2605 = vsub.s32 %v2602, %v2604
        %v2606 = vrot.slane %v2592, %v2605
        %v2607 = vcombine.high %v2583, 0.0
        %v2608 = vcombine.high %v2590, 0.0
        %v2609 = vcombine.high %v2599, 0.0
        %v2610 = vcombine.high %v2606, 0.0
        %v2611 = vcombine.low %v2583, %v2590
        %v2613 = vunpack.c.l.s4 1983009808
        %v2614 = vunpack.c.0.s8 %v2613
        %v2615 = vlaneseq
        %v2616 = vshrl.u32 %v2615, 7
        %v2617 = vsub.s32 %v2614, %v2616
        %v2618 = vrot.slane %v2611, %v2617
        %v2619 = vcombine.low %v2607, %v2608
        %v2621 = vunpack.c.l.s4 1983009808
        %v2622 = vunpack.c.0.s8 %v2621
        %v2623 = vlaneseq
        %v2624 = vshrl.u32 %v2623, 7
        %v2625 = vsub.s32 %v2622, %v2624
        %v2626 = vrot.slane %v2619, %v2625
        %v2627 = vcombine.low %v2599, %v2606
        %v2629 = vunpack.c.l.s4 1983009808
        %v2630 = vunpack.c.0.s8 %v2629
        %v2631 = vlaneseq
        %v2632 = vshrl.u32 %v2631, 7
        %v2633 = vsub.s32 %v2630, %v2632
        %v2634 = vrot.slane %v2627, %v2633
        %v2635 = vcombine.low %v2609, %v2610
        %v2637 = vunpack.c.l.s4 1983009808
        %v2638 = vunpack.c.0.s8 %v2637
        %v2639 = vlaneseq
        %v2640 = vshrl.u32 %v2639, 7
        %v2641 = vsub.s32 %v2638, %v2640
        %v2642 = vrot.slane %v2635, %v2641
        %v2643 = vcombine.low %v2618, %v2626
        %v2644 = vcombine.high %v2618, %v2626
        %v2646 = vunpack.c.l.s4 1934713408
        %v2647 = vunpack.c.0.s8 %v2646
        %v2648 = vlaneseq
        %v2649 = vshrl.u32 %v2648, 7
        %v2650 = vsub.s32 %v2647, %v2649
        %v2651 = vrot.slane %v2643, %v2650
        %v2653 = vunpack.c.l.s4 1934713408
        %v2654 = vunpack.c.0.s8 %v2653
        %v2655 = vlaneseq
        %v2656 = vshrl.u32 %v2655, 7
        %v2657 = vsub.s32 %v2654, %v2656
        %v2658 = vrot.slane %v2644, %v2657
        %v2659 = vcombine.low %v2634, %v2642
        %v2660 = vcombine.high %v2634, %v2642
        %v2662 = vunpack.c.l.s4 1934713408
        %v2663 = vunpack.c.0.s8 %v2662
        %v2664 = vlaneseq
        %v2665 = vshrl.u32 %v2664, 7
        %v2666 = vsub.s32 %v2663, %v2665
        %v2667 = vrot.slane %v2659, %v2666
        %v2669 = vunpack.c.l.s4 1934713408
        %v2670 = vunpack.c.0.s8 %v2669
        %v2671 = vlaneseq
        %v2672 = vshrl.u32 %v2671, 7
        %v2673 = vsub.s32 %v2670, %v2672
        %v2674 = vrot.slane %v2660, %v2673
        %v2675 = vcombine.low %v2651, %v2667
        %v2676 = vcombine.high %v2651, %v2667
        %v2677 = vcombine.low %v2658, %v2674
        %v2678 = vcombine.high %v2658, %v2674
        %2680 = vrot.lane.b32.xlu0 %v2676, 8
        %v2681 = vpop.permute.xlu0 %2680
        %2684 = vrot.lane.b32.xlu0 %v2677, 16
        %v2685 = vpop.permute.xlu0 %2684
        %2688 = vrot.lane.b32.xlu0 %v2678, 24
        %v2689 = vpop.permute.xlu0 %2688
        %v2691 = vsel %vm1579, %v2675, %v2681
        %vm2692 = vcmask 130048
        %v2693 = vsel %vm2692, %v2691, %v2685
        %vm2694 = vcmask 195584
        %v2695 = vsel %vm2694, %v2693, %v2689
        %v2696 = vpack.c.bf16 %v2695, %v2695
        %v2697 = vld [vmem:[%s8] sm:$0xf]
        %v2698 = vld [vmem:[%s8 + $0x4] sm:$0xf]
        %v2699 = vld [vmem:[%s8 + $0x8] sm:$0xf]
        %v2700 = vld [vmem:[%s8 + $0xc] sm:$0xf]
        %v2701 = vld [vmem:[#allocation11] sm:$0x1]
        %v2703 = vlaneseq
        %v2704 = vshrl.u32 %v2703, 7
        %v2705 = vsub.s32 0, %v2704
        %v2706 = vrot.slane %v2701, %v2705
        %v2712 = vunpack.c.l.b16 %v2697
        %v2713 = vunpack.c.l.b16 %v2698
        %v2714 = vunpack.c.l.b16 %v2699
        %v2715 = vunpack.c.l.b16 %v2700
        %v2716 = vpack.c.b16 %v2713, %v2712
        %v2717 = vpack.c.b16 %v2715, %v2714
        %v2721 = vsel %vm793, %v2696, 0
        %2723 = vmatprep.subr.bf16.mxu0 0
        %2724 = vmatpush1.bf16.msra.mxu0 %v2716
        %2725 = vmatprep.subr.bf16.mxu0 0
        %2726 = vmatpush1.bf16.msra.mxu0 %v2717
        %2727 = vmatprep.subr.bf16.mxu0 0
        %2728 = vmatpush1.bf16.msra.mxu0 0
        %2729 = vmatprep.subr.bf16.mxu0 0
        %2730 = vmatpush1.bf16.msra.mxu0 0
        %2731 = vmatprep.subr.bf16.mxu0 0
        %2732 = vmatpush1.bf16.msra.mxu0 0
        %2733 = vmatprep.subr.bf16.mxu0 0
        %2734 = vmatpush1.bf16.msra.mxu0 0
        %2735 = vmatprep.subr.bf16.mxu0 0
        %2736 = vmatpush1.bf16.msra.mxu0 0
        %2737 = vmatprep.subr.bf16.mxu0 0
        %2738 = vmatpush1.bf16.msra.mxu0 0
        %2739 = vmatprep.subr.bf16.mxu0 0
        %2740 = vmatpush1.bf16.msra.mxu0 0
        %2741 = vmatprep.subr.bf16.mxu0 0
        %2742 = vmatpush1.bf16.msra.mxu0 0
        %2743 = vmatprep.subr.bf16.mxu0 0
        %2744 = vmatpush1.bf16.msra.mxu0 0
        %2745 = vmatprep.subr.bf16.mxu0 0
        %2746 = vmatpush1.bf16.msra.mxu0 0
        %2747 = vmatprep.subr.bf16.mxu0 0
        %2748 = vmatpush1.bf16.msra.mxu0 0
        %2749 = vmatprep.subr.bf16.mxu0 0
        %2750 = vmatpush1.bf16.msra.mxu0 0
        %2751 = vmatprep.subr.bf16.mxu0 0
        %2752 = vmatpush1.bf16.msra.mxu0 0
        %2753 = vmatprep.subr.bf16.mxu0 0
        %2754 = vmatpush1.bf16.msra.mxu0 0
        %2755 = vmatprep.mubr.bf16.mxu0 0
        %2756 = vmatmul.mubr.bf16.gmra.mrb[0].mxu0 %v2721
        %v2757 = vpop.f32.mrb[0].mxu0
        %v2758 = vadd.f32 %v2706, %v2757
        %v2759 = vpop.f32.mrb[0].mxu0
        %v2760 = vpop.f32.mrb[0].mxu0
        %v2761 = vpop.f32.mrb[0].mxu0
        %2762 = vdwg.mxu0
        %v2763 = vadd.f32 %v2695, %v2758
        %v2764 = vld [vmem:[%s10] sm:$0x1]
        %v2765 = vld [vmem:[%s11] sm:$0x1]
        %v2766 = vsel %vm793, %v2763, 0.0
        %2767 = vadd.xlane.f32.xlu0 %v2766
        %v2768 = vpop.xlane.xlu0 %2767
        %v2769 = vmul.f32 %v2763, %v2763
        %v2770 = vsel %vm793, %v2769, 0.0
        %2771 = vadd.xlane.f32.xlu0 %v2770
        %v2772 = vpop.xlane.xlu0 %2771
        %v2773 = vmul.f32 %v2768, 0.03125
        %v2774 = vmul.f32 %v2772, 0.03125
        %v2775 = vmul.f32 %v2773, %v2773
        %v2776 = vsub.f32 %v2774, %v2775
        %v2777 = vmax.f32 %v2776, 0.0
        %v2778 = vsub.f32 %v2763, %v2773
        %v2779 = vadd.f32 %v2777, 1e-12
        %v2780 = vrsqrt.pop %v2779
        %v2781 = vmul.f32 %v2778, %v2780
        %v2783 = vlaneseq
        %v2784 = vshrl.u32 %v2783, 7
        %v2785 = vsub.s32 0, %v2784
        %v2786 = vrot.slane %v2764, %v2785
        %v2788 = vmul.f32 %v2786, %v2781
        %v2790 = vlaneseq
        %v2791 = vshrl.u32 %v2790, 7
        %v2792 = vsub.s32 0, %v2791
        %v2793 = vrot.slane %v2765, %v2792
        %v2795 = vadd.f32 %v2788, %v2793
        %v2796 = vpack.c.bf16 %v2795, %v2795
        %v2797 = vld [vmem:[%s12] sm:$0xf]
        %v2798 = vld [vmem:[%s12 + $0x4] sm:$0xf]
        %v2799 = vld [vmem:[%s12 + $0x8] sm:$0xf]
        %v2800 = vld [vmem:[%s12 + $0xc] sm:$0xf]
        %v2801 = vld [vmem:[%s13] sm:$0x1]
        %v2803 = vlaneseq
        %v2804 = vshrl.u32 %v2803, 7
        %v2805 = vsub.s32 0, %v2804
        %v2806 = vrot.slane %v2801, %v2805
        %v2812 = vunpack.c.l.b16 %v2797
        %v2813 = vunpack.c.l.b16 %v2798
        %v2814 = vunpack.c.l.b16 %v2799
        %v2815 = vunpack.c.l.b16 %v2800
        %v2816 = vpack.c.b16 %v2813, %v2812
        %v2817 = vpack.c.b16 %v2815, %v2814
        %v2821 = vsel %vm793, %v2796, 0
        %2823 = vmatprep.subr.bf16.mxu0 0
        %2824 = vmatpush1.bf16.msra.mxu0 %v2816
        %2825 = vmatprep.subr.bf16.mxu0 0
        %2826 = vmatpush1.bf16.msra.mxu0 %v2817
        %2827 = vmatprep.subr.bf16.mxu0 0
        %2828 = vmatpush1.bf16.msra.mxu0 0
        %2829 = vmatprep.subr.bf16.mxu0 0
        %2830 = vmatpush1.bf16.msra.mxu0 0
        %2831 = vmatprep.subr.bf16.mxu0 0
        %2832 = vmatpush1.bf16.msra.mxu0 0
        %2833 = vmatprep.subr.bf16.mxu0 0
        %2834 = vmatpush1.bf16.msra.mxu0 0
        %2835 = vmatprep.subr.bf16.mxu0 0
        %2836 = vmatpush1.bf16.msra.mxu0 0
        %2837 = vmatprep.subr.bf16.mxu0 0
        %2838 = vmatpush1.bf16.msra.mxu0 0
        %2839 = vmatprep.subr.bf16.mxu0 0
        %2840 = vmatpush1.bf16.msra.mxu0 0
        %2841 = vmatprep.subr.bf16.mxu0 0
        %2842 = vmatpush1.bf16.msra.mxu0 0
        %2843 = vmatprep.subr.bf16.mxu0 0
        %2844 = vmatpush1.bf16.msra.mxu0 0
        %2845 = vmatprep.subr.bf16.mxu0 0
        %2846 = vmatpush1.bf16.msra.mxu0 0
        %2847 = vmatprep.subr.bf16.mxu0 0
        %2848 = vmatpush1.bf16.msra.mxu0 0
        %2849 = vmatprep.subr.bf16.mxu0 0
        %2850 = vmatpush1.bf16.msra.mxu0 0
        %2851 = vmatprep.subr.bf16.mxu0 0
        %2852 = vmatpush1.bf16.msra.mxu0 0
        %2853 = vmatprep.subr.bf16.mxu0 0
        %2854 = vmatpush1.bf16.msra.mxu0 0
        %2855 = vmatprep.mubr.bf16.mxu0 0
        %2856 = vmatmul.mubr.bf16.gmra.mrb[0].mxu0 %v2821
        %v2857 = vpop.f32.mrb[0].mxu0
        %v2858 = vadd.f32 %v2806, %v2857
        %v2859 = vpop.f32.mrb[0].mxu0
        %v2860 = vpop.f32.mrb[0].mxu0
        %v2861 = vpop.f32.mrb[0].mxu0
        %2862 = vdwg.mxu0
        %v2863 = vmul.f32 %v2858, 0.5
        %v2864 = vmul.f32 %v2858, %v2858
        %v2865 = vmul.f32 %v2864, %v2858
        %v2866 = vmul.f32 %v2865, 0.044715
        %v2867 = vadd.f32 %v2858, %v2866
        %v2868 = vmul.f32 %v2867, 0.7978846
        %v2869 = vtanh.pop %v2868
        %v2870 = vadd.f32 %v2869, 1.0
        %v2871 = vmul.f32 %v2863, %v2870
        %v2872 = vpack.c.bf16 %v2871, %v2871
        %v2873 = vld [vmem:[%s14] sm:$0xf]
        %v2874 = vld [vmem:[%s14 + $0x4] sm:$0xf]
        %v2875 = vld [vmem:[%s14 + $0x8] sm:$0xf]
        %v2876 = vld [vmem:[%s14 + $0xc] sm:$0xf]
        %v2877 = vld [vmem:[%s14 + $0x10] sm:$0xf]
        %v2878 = vld [vmem:[%s14 + $0x14] sm:$0xf]
        %v2879 = vld [vmem:[%s14 + $0x18] sm:$0xf]
        %v2880 = vld [vmem:[%s14 + $0x1c] sm:$0xf]
        %v2881 = vld [vmem:[%s15] sm:$0x1]
        %v2883 = vlaneseq
        %v2884 = vshrl.u32 %v2883, 7
        %v2885 = vsub.s32 0, %v2884
        %v2886 = vrot.slane %v2881, %v2885
        %v2896 = vunpack.c.l.b16 %v2873
        %v2897 = vunpack.c.l.b16 %v2874
        %v2898 = vunpack.c.l.b16 %v2875
        %v2899 = vunpack.c.l.b16 %v2876
        %v2900 = vunpack.c.l.b16 %v2877
        %v2901 = vunpack.c.l.b16 %v2878
        %v2902 = vunpack.c.l.b16 %v2879
        %v2903 = vunpack.c.l.b16 %v2880
        %v2904 = vpack.c.b16 %v2897, %v2896
        %v2905 = vpack.c.b16 %v2899, %v2898
        %v2906 = vpack.c.b16 %v2901, %v2900
        %v2907 = vpack.c.b16 %v2903, %v2902
        %vm2912 = vcmask 523264
        %v2914 = vsel %vm2912, %v2872, 0
        %2916 = vmatprep.subr.bf16.mxu0 0
        %2917 = vmatpush1.bf16.msra.mxu0 %v2904
        %2918 = vmatprep.subr.bf16.mxu0 0
        %2919 = vmatpush1.bf16.msra.mxu0 %v2905
        %2920 = vmatprep.subr.bf16.mxu0 0
        %2921 = vmatpush1.bf16.msra.mxu0 %v2906
        %2922 = vmatprep.subr.bf16.mxu0 0
        %2923 = vmatpush1.bf16.msra.mxu0 %v2907
        %2924 = vmatprep.subr.bf16.mxu0 0
        %2925 = vmatpush1.bf16.msra.mxu0 0
        %2926 = vmatprep.subr.bf16.mxu0 0
        %2927 = vmatpush1.bf16.msra.mxu0 0
        %2928 = vmatprep.subr.bf16.mxu0 0
        %2929 = vmatpush1.bf16.msra.mxu0 0
        %2930 = vmatprep.subr.bf16.mxu0 0
        %2931 = vmatpush1.bf16.msra.mxu0 0
        %2932 = vmatprep.subr.bf16.mxu0 0
        %2933 = vmatpush1.bf16.msra.mxu0 0
        %2934 = vmatprep.subr.bf16.mxu0 0
        %2935 = vmatpush1.bf16.msra.mxu0 0
        %2936 = vmatprep.subr.bf16.mxu0 0
        %2937 = vmatpush1.bf16.msra.mxu0 0
        %2938 = vmatprep.subr.bf16.mxu0 0
        %2939 = vmatpush1.bf16.msra.mxu0 0
        %2940 = vmatprep.subr.bf16.mxu0 0
        %2941 = vmatpush1.bf16.msra.mxu0 0
        %2942 = vmatprep.subr.bf16.mxu0 0
        %2943 = vmatpush1.bf16.msra.mxu0 0
        %2944 = vmatprep.subr.bf16.mxu0 0
        %2945 = vmatpush1.bf16.msra.mxu0 0
        %2946 = vmatprep.subr.bf16.mxu0 0
        %2947 = vmatpush1.bf16.msra.mxu0 0
        %2948 = vmatprep.mubr.bf16.mxu0 0
        %2949 = vmatmul.mubr.bf16.gmra.mrb[0].mxu0 %v2914
        %v2950 = vpop.f32.mrb[0].mxu0
        %v2951 = vadd.f32 %v2886, %v2950
        %v2952 = vpop.f32.mrb[0].mxu0
        %v2953 = vpop.f32.mrb[0].mxu0
        %v2954 = vpop.f32.mrb[0].mxu0
        %2955 = vdwg.mxu0
        %v2956 = vadd.f32 %v2795, %v2951
        %v2957 = vld [vmem:[%s16] sm:$0x1]
        %v2958 = vld [vmem:[%s17] sm:$0x1]
        %v2959 = vsel %vm793, %v2956, 0.0
        %2960 = vadd.xlane.f32.xlu0 %v2959
        %v2961 = vpop.xlane.xlu0 %2960
        %v2962 = vmul.f32 %v2956, %v2956
        %v2963 = vsel %vm793, %v2962, 0.0
        %2964 = vadd.xlane.f32.xlu0 %v2963
        %v2965 = vpop.xlane.xlu0 %2964
        %v2966 = vmul.f32 %v2961, 0.03125
        %v2967 = vmul.f32 %v2965, 0.03125
        %v2968 = vmul.f32 %v2966, %v2966
        %v2969 = vsub.f32 %v2967, %v2968
        %v2970 = vmax.f32 %v2969, 0.0
        %v2971 = vsub.f32 %v2956, %v2966
        %v2972 = vadd.f32 %v2970, 1e-12
        %v2973 = vrsqrt.pop %v2972
        %v2974 = vmul.f32 %v2971, %v2973
        %v2976 = vlaneseq
        %v2977 = vshrl.u32 %v2976, 7
        %v2978 = vsub.s32 0, %v2977
        %v2979 = vrot.slane %v2957, %v2978
        %v2981 = vmul.f32 %v2979, %v2974
        %v2983 = vlaneseq
        %v2984 = vshrl.u32 %v2983, 7
        %v2985 = vsub.s32 0, %v2984
        %v2986 = vrot.slane %v2958, %v2985
        %v2988 = vadd.f32 %v2981, %v2986
        %2989 = vst.msk [vmem:[#allocation2] sm:$0xff] %vm793, %v2988
        %p2990 = scmp.eq.s32.totalorder %s40, 1
        // Predicated region
        $region117: #{tpu_custom_call.1} parent=91 // pred_check
          %p2991 = pneg %p2990
        $region118: #{tpu_custom_call.1} parent=91 // pred_check_branch
          %2993 = sbr.rel (%p2991) target = $region120
        $region119: #{tpu_custom_call.1} parent=91 // pred_region
          %2994 = vst.msk [vmem:[%s643] sm:$0xff] %vm793, %v2988
        $region120: #{tpu_custom_call.1} parent=91 // pred_fallthru
          _
        %s2995 = sand.u32 %s438, 1
        %s2996 = scalar_lea.sflag [#allocation5], %s2995
        %s2997 = sand.u32 %s438, 1
        %s2998 = smul.addr %s2997, 8
        %s2999 = scalar_lea.vmem [#allocation12], %s2998
        // Predicated region
        $region121: #{tpu_custom_call.1} parent=91 // pred_check
          %p3000 = pneg %p448
        $region122: #{tpu_custom_call.1} parent=91 // pred_check_branch
          %3002 = sbr.rel (%p3000) target = $region124
        $region123: #{tpu_custom_call.1} parent=91 // pred_region
          %s3004 = ssub.s32 128, 128
          %3005 = vsyncadd %s2996, %s3004
          %s3006 = smul.addr %s39, 128
          %s3007 = scalar_lea.hbm %s18, %s3006
          %s3009 = sshll.u32 %s2999, 4
          %s3010 = int_to_ptr.vmem [resolvable:$true] %s3009
          %3012 = dma.vmem_to_hbm [thread:$0]  %s3010, 128, %s3007, %s2996
        $region124: #{tpu_custom_call.1} parent=91 // pred_fallthru
          _
      $region92: #{tpu_custom_call.1} parent=5 // pred_fallthru
        _
      %p3013 = scmp.le.s32.totalorder 2, %s30
      // Predicated region
      $region125: #{tpu_custom_call.1} parent=5 // pred_check
        %p3014 = pneg %p3013
      $region126: #{tpu_custom_call.1} parent=5 // pred_check_branch
        %3016 = sbr.rel (%p3014) target = $region128
      $region127: #{tpu_custom_call.1} parent=5 // pred_region
        %s3017 = ssub.s32 %s30, 2
        // Predicated region
        $region129: #{tpu_custom_call.1} parent=127 // pred_check
          %p3018 = pneg %p454
        $region130: #{tpu_custom_call.1} parent=127 // pred_check_branch
          %3020 = sbr.rel (%p3018) target = $region132
        $region131: #{tpu_custom_call.1} parent=127 // pred_region
          %s3021 = sand.u32 %s439, 1
          %s3022 = scalar_lea.sflag [#allocation5], %s3021
          %s3023 = sand.u32 %s439, 1
          %s3024 = smul.addr %s3023, 8
          %s3025 = scalar_lea.vmem [#allocation12], %s3024
          %3026 = dma.done %s3022, 128
        $region132: #{tpu_custom_call.1} parent=127 // pred_fallthru
          _
      $region128: #{tpu_custom_call.1} parent=5 // pred_fallthru
        _
    $region6: #{tpu_custom_call.1} parent=1 // loop_footer
      %s34 = sadd.s32 1, %s30
    $region7: #{tpu_custom_call.1} parent=1 // loop_footer_branch
      %29 = sbr.rel target = $region3
    $region8: #{tpu_custom_call.1} parent=1 // loop_exit
      _
    %3027 = vsyncpa [#allocation4], 1
    %s3028 = scalar_lea.sflag [#allocation4], 1
    %3029 = vsyncpa %s3028, 1
    %3030 = vsyncpa [#allocation7], 1
    %3031 = vsyncpa [#allocation10], 1
    %3032 = vsyncpa [#allocation5], 1
    %s3033 = scalar_lea.sflag [#allocation5], 1
    %3034 = vsyncpa %s3033, 1

</llo_original>
